<compile_context>
chip_gen: v6e
topology: v6e:2x2x1
jax: 0.10.0
libtpu: 0.0.40
codegen_flags: <defaults>
</compile_context>

<pallas_src>
import functools

import jax
import jax.numpy as jnp
from jax.experimental import pallas as pl

# ---- small, module-consistent dimensions -----------------------------------
B = 2              # batch (number of prompts)
L_SEQ = 8          # context length
D_MODEL = 32       # transformer width
N_HEADS = 4
D_HEAD = D_MODEL // N_HEADS
D_MLP = 4 * D_MODEL
EMBED_DIM = 16     # text_projection output dim
N_CTX = 2          # MaPLe learnable context slots (positions 1 .. 1+N_CTX)
N_LAYERS = 3
PROMPT_DEPTH = 2   # number of compound (deeper) text prompts
LN_EPS = 1e-5

# Packed small-vector operand: one (8, VEC_W) slab per layer.
VEC_W = max(D_MLP, 3 * D_MODEL, D_MODEL)          # 128
(ROW_LN1_G, ROW_LN1_B, ROW_LN2_G, ROW_LN2_B,
 ROW_BQKV, ROW_BO, ROW_BFC, ROW_BPR) = range(8)


def _layernorm(x, g, b, eps=LN_EPS):
    mu = jnp.mean(x, axis=-1, keepdims=True)
    var = jnp.mean(jnp.square(x - mu), axis=-1, keepdims=True)
    return (x - mu) * jax.lax.rsqrt(var + eps) * g + b


# ---------------- the single fused kernel ------------------------------------
def _text_encoder_kernel(prompts_ref, pos_ref, ctx_ref, sel_ref, vecs_ref,
                         wqkv_ref, wo_ref, wfc_ref, wpr_ref,
                         lnf_ref, proj_ref, out_ref, *, n_layers, depth):
    # x = prompts + positional_embedding, carried as a (B*L, D) slab in VMEM.
    x = (prompts_ref[...] + pos_ref[...]).reshape(B * L_SEQ, D_MODEL)

    # Causal mask / scale / compound-prompt row mask: built once, shared by
    # every (unrolled) layer.
    rows = jax.lax.broadcasted_iota(jnp.int32, (L_SEQ, L_SEQ), 0)
    cols = jax.lax.broadcasted_iota(jnp.int32, (L_SEQ, L_SEQ), 1)
    causal = jnp.where(cols <= rows, 0.0, -1e9).astype(jnp.float32)
    scale = 1.0 / (D_HEAD ** 0.5)
    pos_in_seq = jax.lax.broadcasted_iota(
        jnp.int32, (B, L_SEQ, 1), 1).reshape(B * L_SEQ, 1)
    ctx_mask = (pos_in_seq >= 1) & (pos_in_seq < 1 + N_CTX)   # (B*L, 1) bool

    for i in range(n_layers):
        if 0 < i <= depth:
            # MaPLe compound-prompt splice of slots [1 : 1+N_CTX]: one vselect.
            x = jnp.where(ctx_mask, ctx_ref[i - 1], x)

        vec = vecs_ref[i]                                     # (8, VEC_W)
        row = lambda r, w: vec[r:r + 1, :w]                   # (1, w) slices
        ln1_g, ln1_b = row(ROW_LN1_G, D_MODEL), row(ROW_LN1_B, D_MODEL)
        ln2_g, ln2_b = row(ROW_LN2_G, D_MODEL), row(ROW_LN2_B, D_MODEL)
        bqkv = row(ROW_BQKV, 3 * D_MODEL)
        bo = row(ROW_BO, D_MODEL)
        bfc = row(ROW_BFC, D_MLP)
        bpr = row(ROW_BPR, D_MODEL)

        # ---- multi-head self-attention (pre-LN, CLIP causal mask) ----
        h = _layernorm(x, ln1_g, ln1_b)                       # (B*L, D)
        # One fused (B*L, D) @ (D, 3D) projection for Q, K and V.
        qkv = jnp.dot(h, wqkv_ref[i],
                      preferred_element_type=jnp.float32) + bqkv   # (B*L, 3D)

        head_ctx = []
        for hd in range(N_HEADS):
            lo = hd * D_HEAD
            q_h = qkv[:, lo:lo + D_HEAD].reshape(B, L_SEQ, D_HEAD)
            k_h = qkv[:, D_MODEL + lo:D_MODEL + lo + D_HEAD
                      ].reshape(B, L_SEQ, D_HEAD)
            v_h = qkv[:, 2 * D_MODEL + lo:2 * D_MODEL + lo + D_HEAD
                      ].reshape(B, L_SEQ, D_HEAD)
            s = jnp.einsum('bqe,bke->bqk', q_h, k_h,
                           preferred_element_type=jnp.float32) * scale
            s = s + causal[None]
            s = s - jnp.max(s, axis=-1, keepdims=True)
            p = jnp.exp(s)
            p = p * pl.reciprocal(jnp.sum(p, axis=-1, keepdims=True),
                                  approx=False)
            head_ctx.append(
                jnp.einsum('bqk,bke->bqe', p, v_h,
                           preferred_element_type=jnp.float32)
                .reshape(B * L_SEQ, D_HEAD))
        # Heads contiguous on lanes -> single (B*L, D) @ (D, D) out projection.
        attn = jnp.concatenate(head_ctx, axis=-1)             # (B*L, D)
        x = x + jnp.dot(attn, wo_ref[i],
                        preferred_element_type=jnp.float32) + bo

        # ---- MLP with QuickGELU (as in CLIP) ----
        h2 = _layernorm(x, ln2_g, ln2_b)
        f = jnp.dot(h2, wfc_ref[i],
                    preferred_element_type=jnp.float32) + bfc
        f = f * jax.nn.sigmoid(1.702 * f)
        x = x + jnp.dot(f, wpr_ref[i],
                        preferred_element_type=jnp.float32) + bpr

    # ---- EOT gather (commutes with per-row LN) + ln_final + projection ----
    pooled = jnp.sum(x.reshape(B, L_SEQ, D_MODEL) * sel_ref[...], axis=1)
    pooled = _layernorm(pooled, lnf_ref[0:1, :], lnf_ref[1:2, :])   # (B, D)
    out_ref[...] = jnp.dot(pooled, proj_ref[...],
                           preferred_element_type=jnp.float32
                           ).astype(out_ref.dtype)


# ---------------- wrapper-side weight packing ---------------------------------
def _pack_layer_params(layers):
    """Stack per-layer weights along a leading layer axis (no replication over
    batch or heads) and pack all tiny per-layer vectors into one
    (n_layers, 8, VEC_W) operand so the pallas_call issues few DMAs."""
    def pad_row(v):
        v = v.reshape(-1).astype(jnp.float32)
        return jnp.pad(v, (0, VEC_W - v.shape[0]))

    vec_rows = []
    for lp in layers:
        vec_rows.append(jnp.stack([
            pad_row(lp['ln1_g']), pad_row(lp['ln1_b']),
            pad_row(lp['ln2_g']), pad_row(lp['ln2_b']),
            pad_row(lp['bqkv']), pad_row(lp['bo']),
            pad_row(lp['bfc']), pad_row(lp['bpr'])], axis=0))
    vecs = jnp.stack(vec_rows, axis=0)                 # (n_layers, 8, VEC_W)

    stk = lambda key: jnp.stack([lp[key] for lp in layers], axis=0)
    return vecs, stk('wqkv'), stk('wo'), stk('wfc'), stk('wpr')


# ---------------- full TextEncoder.forward -----------------------------------
@jax.jit
def text_encoder_forward(params, prompts, tokenized_prompts,
                         compound_prompts_deeper_text):
    depth = len(compound_prompts_deeper_text)
    n_layers = len(params['layers'])
    vecs, wqkv, wo, wfc, wpr = _pack_layer_params(params['layers'])

    # Compound prompts pre-placed on their target rows of the flat (B*L, D)
    # activation slab (slots [b*L + 1 : b*L + 1 + N_CTX] for every b).
    if depth > 0:
        def place(cp):
            r = jnp.zeros((L_SEQ, D_MODEL), jnp.float32)
            r = r.at[1:1 + N_CTX].set(cp.astype(jnp.float32))
            return jnp.tile(r, (B, 1))
        ctx_full = jnp.stack([place(cp)
                              for cp in compound_prompts_deeper_text], axis=0)
    else:
        ctx_full = jnp.zeros((1, B * L_SEQ, D_MODEL), jnp.float32)

    # EOT one-hot selector (tokenized_prompts.argmax(-1)); the gather itself
    # runs inside the kernel as a masked sum.
    eot = jnp.argmax(tokenized_prompts, axis=-1)
    sel = jax.nn.one_hot(eot, L_SEQ, dtype=jnp.float32)[:, :, None]  # (B,L,1)

    lnf = jnp.stack([params['ln_f_g'].reshape(-1),
                     params['ln_f_b'].reshape(-1)], axis=0)           # (2, D)

    kernel = functools.partial(_text_encoder_kernel,
                               n_layers=n_layers, depth=depth)
    return pl.pallas_call(
        kernel,
        out_shape=jax.ShapeDtypeStruct((B, EMBED_DIM), jnp.float32),
    )(prompts, params['positional_embedding'], ctx_full, sel, vecs,
      wqkv, wo, wfc, wpr, lnf, params['text_projection'])


# ---------------- deterministic synthetic parameters --------------------------
def init_params(key):
    keys = jax.random.split(key, 4 + N_LAYERS)

    def rnd(k, shape, scale=0.02):
        return scale * jax.random.normal(k, shape, jnp.float32)

    params = {
        'positional_embedding': rnd(keys[0], (L_SEQ, D_MODEL)),
        'text_projection': rnd(keys[1], (D_MODEL, EMBED_DIM)),
        'ln_f_g': 1.0 + rnd(keys[2], (1, D_MODEL)),
        'ln_f_b': rnd(keys[3], (1, D_MODEL)),
        'layers': [],
    }
    for i in range(N_LAYERS):
        lk = jax.random.split(keys[4 + i], 12)
        params['layers'].append({
            'ln1_g': 1.0 + rnd(lk[0], (1, D_MODEL)),
            'ln1_b': rnd(lk[1], (1, D_MODEL)),
            'wqkv': rnd(lk[2], (D_MODEL, 3 * D_MODEL)),
            'bqkv': rnd(lk[3], (1, 3 * D_MODEL)),
            'wo': rnd(lk[4], (D_MODEL, D_MODEL)),
            'bo': rnd(lk[5], (1, D_MODEL)),
            'ln2_g': 1.0 + rnd(lk[6], (1, D_MODEL)),
            'ln2_b': rnd(lk[7], (1, D_MODEL)),
            'wfc': rnd(lk[8], (D_MODEL, D_MLP)),
            'bfc': rnd(lk[9], (1, D_MLP)),
            'wpr': rnd(lk[10], (D_MLP, D_MODEL)),
            'bpr': rnd(lk[11], (1, D_MODEL)),
        })
    return params


# ---------------- pure-JAX reference (for a sanity check) --------------------
def reference_forward(params, prompts, tokenized_prompts, compound):
    x = prompts + params['positional_embedding']
    for i, lp in enumerate(params['layers']):
        if i > 0 and (i - 1) < len(compound):
            ctx = jnp.broadcast_to(compound[i - 1][None],
                                   (x.shape[0], N_CTX, x.shape[2]))
            x = jnp.concatenate([x[:, :1], ctx, x[:, 1 + N_CTX:]], axis=1)
        h = _layernorm(x, lp['ln1_g'], lp['ln1_b'])
        qkv = h @ lp['wqkv'] + lp['bqkv']
        q, k, v = jnp.split(qkv, 3, axis=-1)
        rs = lambda t: t.reshape(t.shape[0], t.shape[1], N_HEADS, D_HEAD)
        qh, kh, vh = rs(q), rs(k), rs(v)
        s = jnp.einsum('bqhd,bkhd->bhqk', qh, kh) / (D_HEAD ** 0.5)
        L = x.shape[1]
        mask = jnp.where(jnp.arange(L)[None, :] <= jnp.arange(L)[:, None],
                         0.0, -1e9)
        p = jax.nn.softmax(s + mask, axis=-1)
        attn = jnp.einsum('bhqk,bkhd->bqhd', p, vh).reshape(x.shape)
        x = x + attn @ lp['wo'] + lp['bo']
        h2 = _layernorm(x, lp['ln2_g'], lp['ln2_b'])
        f = h2 @ lp['wfc'] + lp['bfc']
        f = f * jax.nn.sigmoid(1.702 * f)
        x = x + f @ lp['wpr'] + lp['bpr']
    x = _layernorm(x, params['ln_f_g'], params['ln_f_b'])
    eot = jnp.argmax(tokenized_prompts, axis=-1)
    return x[jnp.arange(x.shape[0]), eot] @ params['text_projection']


if __name__ == "__main__":
    key = jax.random.PRNGKey(0)
    k_params, k_prompts, k_tok, k_cp = jax.random.split(key, 4)

    params = init_params(k_params)
    prompts = 0.02 * jax.random.normal(k_prompts, (B, L_SEQ, D_MODEL), jnp.float32)
    tokenized_prompts = jax.random.randint(k_tok, (B, L_SEQ), 0, 1000, jnp.int32)
    cp_keys = jax.random.split(k_cp, PROMPT_DEPTH)
    compound_prompts = [0.02 * jax.random.normal(k, (N_CTX, D_MODEL), jnp.float32)
                        for k in cp_keys]

    out = text_encoder_forward(params, prompts, tokenized_prompts,
                               compound_prompts)
    out = jax.block_until_ready(out)

    # Accurate f32 reference: the in-kernel softmax now uses the exact
    # reciprocal, so the only remaining numerical gap is MXU-vs-XLA f32
    # matmul pass reassociation (amplified by ln_final); keep modest headroom.
    with jax.default_matmul_precision('highest'):
        ref = reference_forward(params, prompts, tokenized_prompts,
                                compound_prompts)
    assert out.shape == (B, EMBED_DIM)
    assert bool(jnp.allclose(out, ref, atol=2e-3, rtol=2e-3)), \
        f"max abs err {float(jnp.max(jnp.abs(out - ref)))}"
    print("KERNEL_OK")
</pallas_src>

<mosaic_0001>
module attributes {stable_mosaic.version = 11 : i64} {
  func.func @_text_encoder_kernel(%arg0: memref<2x8x32xf32, #tpu.memory_space<vmem>>, %arg1: memref<8x32xf32, #tpu.memory_space<vmem>>, %arg2: memref<2x16x32xf32, #tpu.memory_space<vmem>>, %arg3: memref<2x8x1xf32, #tpu.memory_space<vmem>>, %arg4: memref<3x8x128xf32, #tpu.memory_space<vmem>>, %arg5: memref<3x32x96xf32, #tpu.memory_space<vmem>>, %arg6: memref<3x32x32xf32, #tpu.memory_space<vmem>>, %arg7: memref<3x32x128xf32, #tpu.memory_space<vmem>>, %arg8: memref<3x128x32xf32, #tpu.memory_space<vmem>>, %arg9: memref<2x32xf32, #tpu.memory_space<vmem>>, %arg10: memref<32x16xf32, #tpu.memory_space<vmem>>, %arg11: memref<2x16xf32, #tpu.memory_space<vmem>>) attributes {dimension_semantics = [], scalar_prefetch = 0 : i64, scratch_operands = 0 : i64, tpu.core_type = #tpu.core_type<tc>} {
    %c0 = arith.constant 0 : index
    %c0_0 = arith.constant 0 : index
    %c0_1 = arith.constant 0 : index
    %0 = vector.load %arg0[%c0, %c0_0, %c0_1] : memref<2x8x32xf32, #tpu.memory_space<vmem>>, vector<2x8x32xf32>
    %c0_2 = arith.constant 0 : index
    %c0_3 = arith.constant 0 : index
    %1 = vector.load %arg1[%c0_2, %c0_3] : memref<8x32xf32, #tpu.memory_space<vmem>>, vector<8x32xf32>
    %2 = vector.shape_cast %1 : vector<8x32xf32> to vector<1x8x32xf32>
    %3 = vector.broadcast %2 : vector<1x8x32xf32> to vector<2x8x32xf32>
    %4 = arith.addf %0, %3 : vector<2x8x32xf32>
    %5 = vector.shape_cast %4 : vector<2x8x32xf32> to vector<16x32xf32>
    %6 = tpu.iota {dimensions = array<i32: 0>} : vector<8x8xi32>
    %7 = tpu.iota {dimensions = array<i32: 1>} : vector<8x8xi32>
    %8 = arith.cmpi sle, %7, %6 : vector<8x8xi32>
    %cst = arith.constant 0.000000e+00 : f32
    %cst_4 = arith.constant -1.000000e+09 : f32
    %9 = vector.broadcast %cst : f32 to vector<8x8xf32>
    %10 = vector.broadcast %cst_4 : f32 to vector<8x8xf32>
    %11 = arith.select %8, %9, %10 : vector<8x8xi1>, vector<8x8xf32>
    %12 = tpu.iota {dimensions = array<i32: 1>} : vector<2x8x1xi32>
    %13 = vector.shape_cast %12 : vector<2x8x1xi32> to vector<16x1xi32>
    %c1_i32 = arith.constant 1 : i32
    %14 = vector.broadcast %c1_i32 : i32 to vector<16x1xi32>
    %15 = arith.cmpi sge, %13, %14 : vector<16x1xi32>
    %c3_i32 = arith.constant 3 : i32
    %16 = vector.broadcast %c3_i32 : i32 to vector<16x1xi32>
    %17 = arith.cmpi slt, %13, %16 : vector<16x1xi32>
    %18 = arith.andi %15, %17 : vector<16x1xi1>
    %c0_5 = arith.constant 0 : index
    %c0_6 = arith.constant 0 : index
    %c0_7 = arith.constant 0 : index
    %19 = vector.load %arg4[%c0_5, %c0_6, %c0_7] : memref<3x8x128xf32, #tpu.memory_space<vmem>>, vector<1x8x128xf32>
    %20 = vector.shape_cast %19 : vector<1x8x128xf32> to vector<8x128xf32>
    %21 = vector.extract_strided_slice %20 {offsets = [0, 0], sizes = [1, 32], strides = [1, 1]} : vector<8x128xf32> to vector<1x32xf32>
    %22 = vector.extract_strided_slice %20 {offsets = [1, 0], sizes = [1, 32], strides = [1, 1]} : vector<8x128xf32> to vector<1x32xf32>
    %23 = vector.extract_strided_slice %20 {offsets = [2, 0], sizes = [1, 32], strides = [1, 1]} : vector<8x128xf32> to vector<1x32xf32>
    %24 = vector.extract_strided_slice %20 {offsets = [3, 0], sizes = [1, 32], strides = [1, 1]} : vector<8x128xf32> to vector<1x32xf32>
    %25 = vector.extract_strided_slice %20 {offsets = [4, 0], sizes = [1, 96], strides = [1, 1]} : vector<8x128xf32> to vector<1x96xf32>
    %26 = vector.extract_strided_slice %20 {offsets = [5, 0], sizes = [1, 32], strides = [1, 1]} : vector<8x128xf32> to vector<1x32xf32>
    %27 = vector.extract_strided_slice %20 {offsets = [6, 0], sizes = [1, 128], strides = [1, 1]} : vector<8x128xf32> to vector<1x128xf32>
    %28 = vector.extract_strided_slice %20 {offsets = [7, 0], sizes = [1, 32], strides = [1, 1]} : vector<8x128xf32> to vector<1x32xf32>
    %cst_8 = arith.constant dense<0.000000e+00> : vector<16xf32>
    %29 = vector.multi_reduction <add>, %5, %cst_8 [1] : vector<16x32xf32> to vector<16xf32>
    %30 = vector.shape_cast %29 : vector<16xf32> to vector<16x1xf32>
    %cst_9 = arith.constant 3.200000e+01 : f32
    %31 = vector.broadcast %cst_9 : f32 to vector<16x1xf32>
    %32 = arith.divf %30, %31 : vector<16x1xf32>
    %33 = vector.broadcast %32 : vector<16x1xf32> to vector<16x32xf32>
    %34 = arith.subf %5, %33 : vector<16x32xf32>
    %35 = arith.mulf %34, %34 : vector<16x32xf32>
    %cst_10 = arith.constant dense<0.000000e+00> : vector<16xf32>
    %36 = vector.multi_reduction <add>, %35, %cst_10 [1] : vector<16x32xf32> to vector<16xf32>
    %37 = vector.shape_cast %36 : vector<16xf32> to vector<16x1xf32>
    %cst_11 = arith.constant 3.200000e+01 : f32
    %38 = vector.broadcast %cst_11 : f32 to vector<16x1xf32>
    %39 = arith.divf %37, %38 : vector<16x1xf32>
    %40 = vector.broadcast %32 : vector<16x1xf32> to vector<16x32xf32>
    %41 = arith.subf %5, %40 : vector<16x32xf32>
    %cst_12 = arith.constant 9.99999974E-6 : f32
    %42 = vector.broadcast %cst_12 : f32 to vector<16x1xf32>
    %43 = arith.addf %39, %42 : vector<16x1xf32>
    %44 = math.rsqrt %43 : vector<16x1xf32>
    %45 = vector.broadcast %44 : vector<16x1xf32> to vector<16x32xf32>
    %46 = arith.mulf %41, %45 : vector<16x32xf32>
    %47 = vector.broadcast %21 : vector<1x32xf32> to vector<16x32xf32>
    %48 = arith.mulf %46, %47 : vector<16x32xf32>
    %49 = vector.broadcast %22 : vector<1x32xf32> to vector<16x32xf32>
    %50 = arith.addf %48, %49 : vector<16x32xf32>
    %c0_13 = arith.constant 0 : index
    %c0_14 = arith.constant 0 : index
    %c0_15 = arith.constant 0 : index
    %51 = vector.load %arg5[%c0_13, %c0_14, %c0_15] : memref<3x32x96xf32, #tpu.memory_space<vmem>>, vector<1x32x96xf32>
    %52 = vector.shape_cast %51 : vector<1x32x96xf32> to vector<32x96xf32>
    %cst_16 = arith.constant dense<0.000000e+00> : vector<16x96xf32>
    %53 = tpu.matmul %50, %52, %cst_16 {dimension_numbers = #tpu.dot_dimension_numbers<[1], [0], [0], [1], [0, 0, 1, 1], [], []>} : vector<16x32xf32>, vector<32x96xf32>, vector<16x96xf32> -> vector<16x96xf32>
    %54 = vector.broadcast %25 : vector<1x96xf32> to vector<16x96xf32>
    %55 = arith.addf %53, %54 : vector<16x96xf32>
    %56 = vector.extract_strided_slice %55 {offsets = [0, 0], sizes = [16, 8], strides = [1, 1]} : vector<16x96xf32> to vector<16x8xf32>
    %57 = vector.shape_cast %56 : vector<16x8xf32> to vector<2x8x8xf32>
    %58 = vector.extract_strided_slice %55 {offsets = [0, 32], sizes = [16, 8], strides = [1, 1]} : vector<16x96xf32> to vector<16x8xf32>
    %59 = vector.shape_cast %58 : vector<16x8xf32> to vector<2x8x8xf32>
    %60 = vector.extract_strided_slice %55 {offsets = [0, 64], sizes = [16, 8], strides = [1, 1]} : vector<16x96xf32> to vector<16x8xf32>
    %61 = vector.shape_cast %60 : vector<16x8xf32> to vector<2x8x8xf32>
    "tpu.trace_start"() <{level = 10 : i32, message = "bqe,bke->bqk"}> : () -> ()
    %cst_17 = arith.constant dense<0.000000e+00> : vector<2x8x8xf32>
    %62 = tpu.matmul %57, %59, %cst_17 {dimension_numbers = #tpu.dot_dimension_numbers<[2], [2], [1], [1], [0, 0, 0, 1, 1, 1], [0], [0]>} : vector<2x8x8xf32>, vector<2x8x8xf32>, vector<2x8x8xf32> -> vector<2x8x8xf32>
    "tpu.trace_stop"() : () -> ()
    %cst_18 = arith.constant 0.353553385 : f32
    %63 = vector.broadcast %cst_18 : f32 to vector<2x8x8xf32>
    %64 = arith.mulf %62, %63 : vector<2x8x8xf32>
    %65 = vector.shape_cast %11 : vector<8x8xf32> to vector<1x8x8xf32>
    %66 = vector.broadcast %65 : vector<1x8x8xf32> to vector<2x8x8xf32>
    %67 = arith.addf %64, %66 : vector<2x8x8xf32>
    %cst_19 = arith.constant dense<0xFF800000> : vector<2x8xf32>
    %68 = vector.multi_reduction <maximumf>, %67, %cst_19 [2] : vector<2x8x8xf32> to vector<2x8xf32>
    %69 = vector.shape_cast %68 : vector<2x8xf32> to vector<2x8x1xf32>
    %70 = vector.broadcast %69 : vector<2x8x1xf32> to vector<2x8x8xf32>
    %71 = arith.subf %67, %70 : vector<2x8x8xf32>
    %72 = math.exp %71 : vector<2x8x8xf32>
    %cst_20 = arith.constant dense<0.000000e+00> : vector<2x8xf32>
    %73 = vector.multi_reduction <add>, %72, %cst_20 [2] : vector<2x8x8xf32> to vector<2x8xf32>
    %74 = vector.shape_cast %73 : vector<2x8xf32> to vector<2x8x1xf32>
    %75 = tpu.reciprocal %74 : vector<2x8x1xf32> -> vector<2x8x1xf32>
    %76 = vector.broadcast %75 : vector<2x8x1xf32> to vector<2x8x8xf32>
    %77 = arith.mulf %72, %76 : vector<2x8x8xf32>
    "tpu.trace_start"() <{level = 10 : i32, message = "bqk,bke->bqe"}> : () -> ()
    %cst_21 = arith.constant dense<0.000000e+00> : vector<2x8x8xf32>
    %78 = tpu.matmul %77, %61, %cst_21 {dimension_numbers = #tpu.dot_dimension_numbers<[2], [1], [1], [2], [0, 0, 0, 1, 1, 2], [0], [0]>} : vector<2x8x8xf32>, vector<2x8x8xf32>, vector<2x8x8xf32> -> vector<2x8x8xf32>
    "tpu.trace_stop"() : () -> ()
    %79 = vector.shape_cast %78 : vector<2x8x8xf32> to vector<16x8xf32>
    %80 = vector.extract_strided_slice %55 {offsets = [0, 8], sizes = [16, 8], strides = [1, 1]} : vector<16x96xf32> to vector<16x8xf32>
    %81 = vector.shape_cast %80 : vector<16x8xf32> to vector<2x8x8xf32>
    %82 = vector.extract_strided_slice %55 {offsets = [0, 40], sizes = [16, 8], strides = [1, 1]} : vector<16x96xf32> to vector<16x8xf32>
    %83 = vector.shape_cast %82 : vector<16x8xf32> to vector<2x8x8xf32>
    %84 = vector.extract_strided_slice %55 {offsets = [0, 72], sizes = [16, 8], strides = [1, 1]} : vector<16x96xf32> to vector<16x8xf32>
    %85 = vector.shape_cast %84 : vector<16x8xf32> to vector<2x8x8xf32>
    "tpu.trace_start"() <{level = 10 : i32, message = "bqe,bke->bqk"}> : () -> ()
    %cst_22 = arith.constant dense<0.000000e+00> : vector<2x8x8xf32>
    %86 = tpu.matmul %81, %83, %cst_22 {dimension_numbers = #tpu.dot_dimension_numbers<[2], [2], [1], [1], [0, 0, 0, 1, 1, 1], [0], [0]>} : vector<2x8x8xf32>, vector<2x8x8xf32>, vector<2x8x8xf32> -> vector<2x8x8xf32>
    "tpu.trace_stop"() : () -> ()
    %cst_23 = arith.constant 0.353553385 : f32
    %87 = vector.broadcast %cst_23 : f32 to vector<2x8x8xf32>
    %88 = arith.mulf %86, %87 : vector<2x8x8xf32>
    %89 = vector.shape_cast %11 : vector<8x8xf32> to vector<1x8x8xf32>
    %90 = vector.broadcast %89 : vector<1x8x8xf32> to vector<2x8x8xf32>
    %91 = arith.addf %88, %90 : vector<2x8x8xf32>
    %cst_24 = arith.constant dense<0xFF800000> : vector<2x8xf32>
    %92 = vector.multi_reduction <maximumf>, %91, %cst_24 [2] : vector<2x8x8xf32> to vector<2x8xf32>
    %93 = vector.shape_cast %92 : vector<2x8xf32> to vector<2x8x1xf32>
    %94 = vector.broadcast %93 : vector<2x8x1xf32> to vector<2x8x8xf32>
    %95 = arith.subf %91, %94 : vector<2x8x8xf32>
    %96 = math.exp %95 : vector<2x8x8xf32>
    %cst_25 = arith.constant dense<0.000000e+00> : vector<2x8xf32>
    %97 = vector.multi_reduction <add>, %96, %cst_25 [2] : vector<2x8x8xf32> to vector<2x8xf32>
    %98 = vector.shape_cast %97 : vector<2x8xf32> to vector<2x8x1xf32>
    %99 = tpu.reciprocal %98 : vector<2x8x1xf32> -> vector<2x8x1xf32>
    %100 = vector.broadcast %99 : vector<2x8x1xf32> to vector<2x8x8xf32>
    %101 = arith.mulf %96, %100 : vector<2x8x8xf32>
    "tpu.trace_start"() <{level = 10 : i32, message = "bqk,bke->bqe"}> : () -> ()
    %cst_26 = arith.constant dense<0.000000e+00> : vector<2x8x8xf32>
    %102 = tpu.matmul %101, %85, %cst_26 {dimension_numbers = #tpu.dot_dimension_numbers<[2], [1], [1], [2], [0, 0, 0, 1, 1, 2], [0], [0]>} : vector<2x8x8xf32>, vector<2x8x8xf32>, vector<2x8x8xf32> -> vector<2x8x8xf32>
    "tpu.trace_stop"() : () -> ()
    %103 = vector.shape_cast %102 : vector<2x8x8xf32> to vector<16x8xf32>
    %104 = vector.extract_strided_slice %55 {offsets = [0, 16], sizes = [16, 8], strides = [1, 1]} : vector<16x96xf32> to vector<16x8xf32>
    %105 = vector.shape_cast %104 : vector<16x8xf32> to vector<2x8x8xf32>
    %106 = vector.extract_strided_slice %55 {offsets = [0, 48], sizes = [16, 8], strides = [1, 1]} : vector<16x96xf32> to vector<16x8xf32>
    %107 = vector.shape_cast %106 : vector<16x8xf32> to vector<2x8x8xf32>
    %108 = vector.extract_strided_slice %55 {offsets = [0, 80], sizes = [16, 8], strides = [1, 1]} : vector<16x96xf32> to vector<16x8xf32>
    %109 = vector.shape_cast %108 : vector<16x8xf32> to vector<2x8x8xf32>
    "tpu.trace_start"() <{level = 10 : i32, message = "bqe,bke->bqk"}> : () -> ()
    %cst_27 = arith.constant dense<0.000000e+00> : vector<2x8x8xf32>
    %110 = tpu.matmul %105, %107, %cst_27 {dimension_numbers = #tpu.dot_dimension_numbers<[2], [2], [1], [1], [0, 0, 0, 1, 1, 1], [0], [0]>} : vector<2x8x8xf32>, vector<2x8x8xf32>, vector<2x8x8xf32> -> vector<2x8x8xf32>
    "tpu.trace_stop"() : () -> ()
    %cst_28 = arith.constant 0.353553385 : f32
    %111 = vector.broadcast %cst_28 : f32 to vector<2x8x8xf32>
    %112 = arith.mulf %110, %111 : vector<2x8x8xf32>
    %113 = vector.shape_cast %11 : vector<8x8xf32> to vector<1x8x8xf32>
    %114 = vector.broadcast %113 : vector<1x8x8xf32> to vector<2x8x8xf32>
    %115 = arith.addf %112, %114 : vector<2x8x8xf32>
    %cst_29 = arith.constant dense<0xFF800000> : vector<2x8xf32>
    %116 = vector.multi_reduction <maximumf>, %115, %cst_29 [2] : vector<2x8x8xf32> to vector<2x8xf32>
    %117 = vector.shape_cast %116 : vector<2x8xf32> to vector<2x8x1xf32>
    %118 = vector.broadcast %117 : vector<2x8x1xf32> to vector<2x8x8xf32>
    %119 = arith.subf %115, %118 : vector<2x8x8xf32>
    %120 = math.exp %119 : vector<2x8x8xf32>
    %cst_30 = arith.constant dense<0.000000e+00> : vector<2x8xf32>
    %121 = vector.multi_reduction <add>, %120, %cst_30 [2] : vector<2x8x8xf32> to vector<2x8xf32>
    %122 = vector.shape_cast %121 : vector<2x8xf32> to vector<2x8x1xf32>
    %123 = tpu.reciprocal %122 : vector<2x8x1xf32> -> vector<2x8x1xf32>
    %124 = vector.broadcast %123 : vector<2x8x1xf32> to vector<2x8x8xf32>
    %125 = arith.mulf %120, %124 : vector<2x8x8xf32>
    "tpu.trace_start"() <{level = 10 : i32, message = "bqk,bke->bqe"}> : () -> ()
    %cst_31 = arith.constant dense<0.000000e+00> : vector<2x8x8xf32>
    %126 = tpu.matmul %125, %109, %cst_31 {dimension_numbers = #tpu.dot_dimension_numbers<[2], [1], [1], [2], [0, 0, 0, 1, 1, 2], [0], [0]>} : vector<2x8x8xf32>, vector<2x8x8xf32>, vector<2x8x8xf32> -> vector<2x8x8xf32>
    "tpu.trace_stop"() : () -> ()
    %127 = vector.shape_cast %126 : vector<2x8x8xf32> to vector<16x8xf32>
    %128 = vector.extract_strided_slice %55 {offsets = [0, 24], sizes = [16, 8], strides = [1, 1]} : vector<16x96xf32> to vector<16x8xf32>
    %129 = vector.shape_cast %128 : vector<16x8xf32> to vector<2x8x8xf32>
    %130 = vector.extract_strided_slice %55 {offsets = [0, 56], sizes = [16, 8], strides = [1, 1]} : vector<16x96xf32> to vector<16x8xf32>
    %131 = vector.shape_cast %130 : vector<16x8xf32> to vector<2x8x8xf32>
    %132 = vector.extract_strided_slice %55 {offsets = [0, 88], sizes = [16, 8], strides = [1, 1]} : vector<16x96xf32> to vector<16x8xf32>
    %133 = vector.shape_cast %132 : vector<16x8xf32> to vector<2x8x8xf32>
    "tpu.trace_start"() <{level = 10 : i32, message = "bqe,bke->bqk"}> : () -> ()
    %cst_32 = arith.constant dense<0.000000e+00> : vector<2x8x8xf32>
    %134 = tpu.matmul %129, %131, %cst_32 {dimension_numbers = #tpu.dot_dimension_numbers<[2], [2], [1], [1], [0, 0, 0, 1, 1, 1], [0], [0]>} : vector<2x8x8xf32>, vector<2x8x8xf32>, vector<2x8x8xf32> -> vector<2x8x8xf32>
    "tpu.trace_stop"() : () -> ()
    %cst_33 = arith.constant 0.353553385 : f32
    %135 = vector.broadcast %cst_33 : f32 to vector<2x8x8xf32>
    %136 = arith.mulf %134, %135 : vector<2x8x8xf32>
    %137 = vector.shape_cast %11 : vector<8x8xf32> to vector<1x8x8xf32>
    %138 = vector.broadcast %137 : vector<1x8x8xf32> to vector<2x8x8xf32>
    %139 = arith.addf %136, %138 : vector<2x8x8xf32>
    %cst_34 = arith.constant dense<0xFF800000> : vector<2x8xf32>
    %140 = vector.multi_reduction <maximumf>, %139, %cst_34 [2] : vector<2x8x8xf32> to vector<2x8xf32>
    %141 = vector.shape_cast %140 : vector<2x8xf32> to vector<2x8x1xf32>
    %142 = vector.broadcast %141 : vector<2x8x1xf32> to vector<2x8x8xf32>
    %143 = arith.subf %139, %142 : vector<2x8x8xf32>
    %144 = math.exp %143 : vector<2x8x8xf32>
    %cst_35 = arith.constant dense<0.000000e+00> : vector<2x8xf32>
    %145 = vector.multi_reduction <add>, %144, %cst_35 [2] : vector<2x8x8xf32> to vector<2x8xf32>
    %146 = vector.shape_cast %145 : vector<2x8xf32> to vector<2x8x1xf32>
    %147 = tpu.reciprocal %146 : vector<2x8x1xf32> -> vector<2x8x1xf32>
    %148 = vector.broadcast %147 : vector<2x8x1xf32> to vector<2x8x8xf32>
    %149 = arith.mulf %144, %148 : vector<2x8x8xf32>
    "tpu.trace_start"() <{level = 10 : i32, message = "bqk,bke->bqe"}> : () -> ()
    %cst_36 = arith.constant dense<0.000000e+00> : vector<2x8x8xf32>
    %150 = tpu.matmul %149, %133, %cst_36 {dimension_numbers = #tpu.dot_dimension_numbers<[2], [1], [1], [2], [0, 0, 0, 1, 1, 2], [0], [0]>} : vector<2x8x8xf32>, vector<2x8x8xf32>, vector<2x8x8xf32> -> vector<2x8x8xf32>
    "tpu.trace_stop"() : () -> ()
    %151 = vector.shape_cast %150 : vector<2x8x8xf32> to vector<16x8xf32>
    %152 = tpu.concatenate %79, %103, %127, %151 in 1 : vector<16x8xf32>, vector<16x8xf32>, vector<16x8xf32>, vector<16x8xf32> -> vector<16x32xf32>
    %c0_37 = arith.constant 0 : index
    %c0_38 = arith.constant 0 : index
    %c0_39 = arith.constant 0 : index
    %153 = vector.load %arg6[%c0_37, %c0_38, %c0_39] : memref<3x32x32xf32, #tpu.memory_space<vmem>>, vector<1x32x32xf32>
    %154 = vector.shape_cast %153 : vector<1x32x32xf32> to vector<32x32xf32>
    %cst_40 = arith.constant dense<0.000000e+00> : vector<16x32xf32>
    %155 = tpu.matmul %152, %154, %cst_40 {dimension_numbers = #tpu.dot_dimension_numbers<[1], [0], [0], [1], [0, 0, 1, 1], [], []>} : vector<16x32xf32>, vector<32x32xf32>, vector<16x32xf32> -> vector<16x32xf32>
    %156 = arith.addf %5, %155 : vector<16x32xf32>
    %157 = vector.broadcast %26 : vector<1x32xf32> to vector<16x32xf32>
    %158 = arith.addf %156, %157 : vector<16x32xf32>
    %cst_41 = arith.constant dense<0.000000e+00> : vector<16xf32>
    %159 = vector.multi_reduction <add>, %158, %cst_41 [1] : vector<16x32xf32> to vector<16xf32>
    %160 = vector.shape_cast %159 : vector<16xf32> to vector<16x1xf32>
    %cst_42 = arith.constant 3.200000e+01 : f32
    %161 = vector.broadcast %cst_42 : f32 to vector<16x1xf32>
    %162 = arith.divf %160, %161 : vector<16x1xf32>
    %163 = vector.broadcast %162 : vector<16x1xf32> to vector<16x32xf32>
    %164 = arith.subf %158, %163 : vector<16x32xf32>
    %165 = arith.mulf %164, %164 : vector<16x32xf32>
    %cst_43 = arith.constant dense<0.000000e+00> : vector<16xf32>
    %166 = vector.multi_reduction <add>, %165, %cst_43 [1] : vector<16x32xf32> to vector<16xf32>
    %167 = vector.shape_cast %166 : vector<16xf32> to vector<16x1xf32>
    %cst_44 = arith.constant 3.200000e+01 : f32
    %168 = vector.broadcast %cst_44 : f32 to vector<16x1xf32>
    %169 = arith.divf %167, %168 : vector<16x1xf32>
    %170 = vector.broadcast %162 : vector<16x1xf32> to vector<16x32xf32>
    %171 = arith.subf %158, %170 : vector<16x32xf32>
    %cst_45 = arith.constant 9.99999974E-6 : f32
    %172 = vector.broadcast %cst_45 : f32 to vector<16x1xf32>
    %173 = arith.addf %169, %172 : vector<16x1xf32>
    %174 = math.rsqrt %173 : vector<16x1xf32>
    %175 = vector.broadcast %174 : vector<16x1xf32> to vector<16x32xf32>
    %176 = arith.mulf %171, %175 : vector<16x32xf32>
    %177 = vector.broadcast %23 : vector<1x32xf32> to vector<16x32xf32>
    %178 = arith.mulf %176, %177 : vector<16x32xf32>
    %179 = vector.broadcast %24 : vector<1x32xf32> to vector<16x32xf32>
    %180 = arith.addf %178, %179 : vector<16x32xf32>
    %c0_46 = arith.constant 0 : index
    %c0_47 = arith.constant 0 : index
    %c0_48 = arith.constant 0 : index
    %181 = vector.load %arg7[%c0_46, %c0_47, %c0_48] : memref<3x32x128xf32, #tpu.memory_space<vmem>>, vector<1x32x128xf32>
    %182 = vector.shape_cast %181 : vector<1x32x128xf32> to vector<32x128xf32>
    %cst_49 = arith.constant dense<0.000000e+00> : vector<16x128xf32>
    %183 = tpu.matmul %180, %182, %cst_49 {dimension_numbers = #tpu.dot_dimension_numbers<[1], [0], [0], [1], [0, 0, 1, 1], [], []>} : vector<16x32xf32>, vector<32x128xf32>, vector<16x128xf32> -> vector<16x128xf32>
    %184 = vector.broadcast %27 : vector<1x128xf32> to vector<16x128xf32>
    %185 = arith.addf %183, %184 : vector<16x128xf32>
    %cst_50 = arith.constant 1.702000e+00 : f32
    %186 = vector.broadcast %cst_50 : f32 to vector<16x128xf32>
    %187 = arith.mulf %186, %185 : vector<16x128xf32>
    %188 = arith.negf %187 : vector<16x128xf32>
    %189 = math.exp %188 : vector<16x128xf32>
    %cst_51 = arith.constant 1.000000e+00 : f32
    %190 = vector.broadcast %cst_51 : f32 to vector<16x128xf32>
    %191 = arith.addf %190, %189 : vector<16x128xf32>
    %192 = arith.divf %190, %191 : vector<16x128xf32>
    %193 = arith.mulf %185, %192 : vector<16x128xf32>
    %c0_52 = arith.constant 0 : index
    %c0_53 = arith.constant 0 : index
    %c0_54 = arith.constant 0 : index
    %194 = vector.load %arg8[%c0_52, %c0_53, %c0_54] : memref<3x128x32xf32, #tpu.memory_space<vmem>>, vector<1x128x32xf32>
    %195 = vector.shape_cast %194 : vector<1x128x32xf32> to vector<128x32xf32>
    %cst_55 = arith.constant dense<0.000000e+00> : vector<16x32xf32>
    %196 = tpu.matmul %193, %195, %cst_55 {dimension_numbers = #tpu.dot_dimension_numbers<[1], [0], [0], [1], [0, 0, 1, 1], [], []>} : vector<16x128xf32>, vector<128x32xf32>, vector<16x32xf32> -> vector<16x32xf32>
    %197 = arith.addf %158, %196 : vector<16x32xf32>
    %198 = vector.broadcast %28 : vector<1x32xf32> to vector<16x32xf32>
    %199 = arith.addf %197, %198 : vector<16x32xf32>
    %c0_56 = arith.constant 0 : index
    %c0_57 = arith.constant 0 : index
    %c0_58 = arith.constant 0 : index
    %200 = vector.load %arg2[%c0_56, %c0_57, %c0_58] : memref<2x16x32xf32, #tpu.memory_space<vmem>>, vector<1x16x32xf32>
    %201 = vector.shape_cast %200 : vector<1x16x32xf32> to vector<16x32xf32>
    %202 = vector.shape_cast %18 : vector<16x1xi1> to vector<16x1xi1>
    %203 = vector.broadcast %202 : vector<16x1xi1> to vector<16x32xi1>
    %204 = arith.select %203, %201, %199 : vector<16x32xi1>, vector<16x32xf32>
    %c1 = arith.constant 1 : index
    %c0_59 = arith.constant 0 : index
    %c0_60 = arith.constant 0 : index
    %205 = vector.load %arg4[%c1, %c0_59, %c0_60] : memref<3x8x128xf32, #tpu.memory_space<vmem>>, vector<1x8x128xf32>
    %206 = vector.shape_cast %205 : vector<1x8x128xf32> to vector<8x128xf32>
    %207 = vector.extract_strided_slice %206 {offsets = [0, 0], sizes = [1, 32], strides = [1, 1]} : vector<8x128xf32> to vector<1x32xf32>
    %208 = vector.extract_strided_slice %206 {offsets = [1, 0], sizes = [1, 32], strides = [1, 1]} : vector<8x128xf32> to vector<1x32xf32>
    %209 = vector.extract_strided_slice %206 {offsets = [2, 0], sizes = [1, 32], strides = [1, 1]} : vector<8x128xf32> to vector<1x32xf32>
    %210 = vector.extract_strided_slice %206 {offsets = [3, 0], sizes = [1, 32], strides = [1, 1]} : vector<8x128xf32> to vector<1x32xf32>
    %211 = vector.extract_strided_slice %206 {offsets = [4, 0], sizes = [1, 96], strides = [1, 1]} : vector<8x128xf32> to vector<1x96xf32>
    %212 = vector.extract_strided_slice %206 {offsets = [5, 0], sizes = [1, 32], strides = [1, 1]} : vector<8x128xf32> to vector<1x32xf32>
    %213 = vector.extract_strided_slice %206 {offsets = [6, 0], sizes = [1, 128], strides = [1, 1]} : vector<8x128xf32> to vector<1x128xf32>
    %214 = vector.extract_strided_slice %206 {offsets = [7, 0], sizes = [1, 32], strides = [1, 1]} : vector<8x128xf32> to vector<1x32xf32>
    %cst_61 = arith.constant dense<0.000000e+00> : vector<16xf32>
    %215 = vector.multi_reduction <add>, %204, %cst_61 [1] : vector<16x32xf32> to vector<16xf32>
    %216 = vector.shape_cast %215 : vector<16xf32> to vector<16x1xf32>
    %cst_62 = arith.constant 3.200000e+01 : f32
    %217 = vector.broadcast %cst_62 : f32 to vector<16x1xf32>
    %218 = arith.divf %216, %217 : vector<16x1xf32>
    %219 = vector.broadcast %218 : vector<16x1xf32> to vector<16x32xf32>
    %220 = arith.subf %204, %219 : vector<16x32xf32>
    %221 = arith.mulf %220, %220 : vector<16x32xf32>
    %cst_63 = arith.constant dense<0.000000e+00> : vector<16xf32>
    %222 = vector.multi_reduction <add>, %221, %cst_63 [1] : vector<16x32xf32> to vector<16xf32>
    %223 = vector.shape_cast %222 : vector<16xf32> to vector<16x1xf32>
    %cst_64 = arith.constant 3.200000e+01 : f32
    %224 = vector.broadcast %cst_64 : f32 to vector<16x1xf32>
    %225 = arith.divf %223, %224 : vector<16x1xf32>
    %226 = vector.broadcast %218 : vector<16x1xf32> to vector<16x32xf32>
    %227 = arith.subf %204, %226 : vector<16x32xf32>
    %cst_65 = arith.constant 9.99999974E-6 : f32
    %228 = vector.broadcast %cst_65 : f32 to vector<16x1xf32>
    %229 = arith.addf %225, %228 : vector<16x1xf32>
    %230 = math.rsqrt %229 : vector<16x1xf32>
    %231 = vector.broadcast %230 : vector<16x1xf32> to vector<16x32xf32>
    %232 = arith.mulf %227, %231 : vector<16x32xf32>
    %233 = vector.broadcast %207 : vector<1x32xf32> to vector<16x32xf32>
    %234 = arith.mulf %232, %233 : vector<16x32xf32>
    %235 = vector.broadcast %208 : vector<1x32xf32> to vector<16x32xf32>
    %236 = arith.addf %234, %235 : vector<16x32xf32>
    %c1_66 = arith.constant 1 : index
    %c0_67 = arith.constant 0 : index
    %c0_68 = arith.constant 0 : index
    %237 = vector.load %arg5[%c1_66, %c0_67, %c0_68] : memref<3x32x96xf32, #tpu.memory_space<vmem>>, vector<1x32x96xf32>
    %238 = vector.shape_cast %237 : vector<1x32x96xf32> to vector<32x96xf32>
    %cst_69 = arith.constant dense<0.000000e+00> : vector<16x96xf32>
    %239 = tpu.matmul %236, %238, %cst_69 {dimension_numbers = #tpu.dot_dimension_numbers<[1], [0], [0], [1], [0, 0, 1, 1], [], []>} : vector<16x32xf32>, vector<32x96xf32>, vector<16x96xf32> -> vector<16x96xf32>
    %240 = vector.broadcast %211 : vector<1x96xf32> to vector<16x96xf32>
    %241 = arith.addf %239, %240 : vector<16x96xf32>
    %242 = vector.extract_strided_slice %241 {offsets = [0, 0], sizes = [16, 8], strides = [1, 1]} : vector<16x96xf32> to vector<16x8xf32>
    %243 = vector.shape_cast %242 : vector<16x8xf32> to vector<2x8x8xf32>
    %244 = vector.extract_strided_slice %241 {offsets = [0, 32], sizes = [16, 8], strides = [1, 1]} : vector<16x96xf32> to vector<16x8xf32>
    %245 = vector.shape_cast %244 : vector<16x8xf32> to vector<2x8x8xf32>
    %246 = vector.extract_strided_slice %241 {offsets = [0, 64], sizes = [16, 8], strides = [1, 1]} : vector<16x96xf32> to vector<16x8xf32>
    %247 = vector.shape_cast %246 : vector<16x8xf32> to vector<2x8x8xf32>
    "tpu.trace_start"() <{level = 10 : i32, message = "bqe,bke->bqk"}> : () -> ()
    %cst_70 = arith.constant dense<0.000000e+00> : vector<2x8x8xf32>
    %248 = tpu.matmul %243, %245, %cst_70 {dimension_numbers = #tpu.dot_dimension_numbers<[2], [2], [1], [1], [0, 0, 0, 1, 1, 1], [0], [0]>} : vector<2x8x8xf32>, vector<2x8x8xf32>, vector<2x8x8xf32> -> vector<2x8x8xf32>
    "tpu.trace_stop"() : () -> ()
    %cst_71 = arith.constant 0.353553385 : f32
    %249 = vector.broadcast %cst_71 : f32 to vector<2x8x8xf32>
    %250 = arith.mulf %248, %249 : vector<2x8x8xf32>
    %251 = vector.shape_cast %11 : vector<8x8xf32> to vector<1x8x8xf32>
    %252 = vector.broadcast %251 : vector<1x8x8xf32> to vector<2x8x8xf32>
    %253 = arith.addf %250, %252 : vector<2x8x8xf32>
    %cst_72 = arith.constant dense<0xFF800000> : vector<2x8xf32>
    %254 = vector.multi_reduction <maximumf>, %253, %cst_72 [2] : vector<2x8x8xf32> to vector<2x8xf32>
    %255 = vector.shape_cast %254 : vector<2x8xf32> to vector<2x8x1xf32>
    %256 = vector.broadcast %255 : vector<2x8x1xf32> to vector<2x8x8xf32>
    %257 = arith.subf %253, %256 : vector<2x8x8xf32>
    %258 = math.exp %257 : vector<2x8x8xf32>
    %cst_73 = arith.constant dense<0.000000e+00> : vector<2x8xf32>
    %259 = vector.multi_reduction <add>, %258, %cst_73 [2] : vector<2x8x8xf32> to vector<2x8xf32>
    %260 = vector.shape_cast %259 : vector<2x8xf32> to vector<2x8x1xf32>
    %261 = tpu.reciprocal %260 : vector<2x8x1xf32> -> vector<2x8x1xf32>
    %262 = vector.broadcast %261 : vector<2x8x1xf32> to vector<2x8x8xf32>
    %263 = arith.mulf %258, %262 : vector<2x8x8xf32>
    "tpu.trace_start"() <{level = 10 : i32, message = "bqk,bke->bqe"}> : () -> ()
    %cst_74 = arith.constant dense<0.000000e+00> : vector<2x8x8xf32>
    %264 = tpu.matmul %263, %247, %cst_74 {dimension_numbers = #tpu.dot_dimension_numbers<[2], [1], [1], [2], [0, 0, 0, 1, 1, 2], [0], [0]>} : vector<2x8x8xf32>, vector<2x8x8xf32>, vector<2x8x8xf32> -> vector<2x8x8xf32>
    "tpu.trace_stop"() : () -> ()
    %265 = vector.shape_cast %264 : vector<2x8x8xf32> to vector<16x8xf32>
    %266 = vector.extract_strided_slice %241 {offsets = [0, 8], sizes = [16, 8], strides = [1, 1]} : vector<16x96xf32> to vector<16x8xf32>
    %267 = vector.shape_cast %266 : vector<16x8xf32> to vector<2x8x8xf32>
    %268 = vector.extract_strided_slice %241 {offsets = [0, 40], sizes = [16, 8], strides = [1, 1]} : vector<16x96xf32> to vector<16x8xf32>
    %269 = vector.shape_cast %268 : vector<16x8xf32> to vector<2x8x8xf32>
    %270 = vector.extract_strided_slice %241 {offsets = [0, 72], sizes = [16, 8], strides = [1, 1]} : vector<16x96xf32> to vector<16x8xf32>
    %271 = vector.shape_cast %270 : vector<16x8xf32> to vector<2x8x8xf32>
    "tpu.trace_start"() <{level = 10 : i32, message = "bqe,bke->bqk"}> : () -> ()
    %cst_75 = arith.constant dense<0.000000e+00> : vector<2x8x8xf32>
    %272 = tpu.matmul %267, %269, %cst_75 {dimension_numbers = #tpu.dot_dimension_numbers<[2], [2], [1], [1], [0, 0, 0, 1, 1, 1], [0], [0]>} : vector<2x8x8xf32>, vector<2x8x8xf32>, vector<2x8x8xf32> -> vector<2x8x8xf32>
    "tpu.trace_stop"() : () -> ()
    %cst_76 = arith.constant 0.353553385 : f32
    %273 = vector.broadcast %cst_76 : f32 to vector<2x8x8xf32>
    %274 = arith.mulf %272, %273 : vector<2x8x8xf32>
    %275 = vector.shape_cast %11 : vector<8x8xf32> to vector<1x8x8xf32>
    %276 = vector.broadcast %275 : vector<1x8x8xf32> to vector<2x8x8xf32>
    %277 = arith.addf %274, %276 : vector<2x8x8xf32>
    %cst_77 = arith.constant dense<0xFF800000> : vector<2x8xf32>
    %278 = vector.multi_reduction <maximumf>, %277, %cst_77 [2] : vector<2x8x8xf32> to vector<2x8xf32>
    %279 = vector.shape_cast %278 : vector<2x8xf32> to vector<2x8x1xf32>
    %280 = vector.broadcast %279 : vector<2x8x1xf32> to vector<2x8x8xf32>
    %281 = arith.subf %277, %280 : vector<2x8x8xf32>
    %282 = math.exp %281 : vector<2x8x8xf32>
    %cst_78 = arith.constant dense<0.000000e+00> : vector<2x8xf32>
    %283 = vector.multi_reduction <add>, %282, %cst_78 [2] : vector<2x8x8xf32> to vector<2x8xf32>
    %284 = vector.shape_cast %283 : vector<2x8xf32> to vector<2x8x1xf32>
    %285 = tpu.reciprocal %284 : vector<2x8x1xf32> -> vector<2x8x1xf32>
    %286 = vector.broadcast %285 : vector<2x8x1xf32> to vector<2x8x8xf32>
    %287 = arith.mulf %282, %286 : vector<2x8x8xf32>
    "tpu.trace_start"() <{level = 10 : i32, message = "bqk,bke->bqe"}> : () -> ()
    %cst_79 = arith.constant dense<0.000000e+00> : vector<2x8x8xf32>
    %288 = tpu.matmul %287, %271, %cst_79 {dimension_numbers = #tpu.dot_dimension_numbers<[2], [1], [1], [2], [0, 0, 0, 1, 1, 2], [0], [0]>} : vector<2x8x8xf32>, vector<2x8x8xf32>, vector<2x8x8xf32> -> vector<2x8x8xf32>
    "tpu.trace_stop"() : () -> ()
    %289 = vector.shape_cast %288 : vector<2x8x8xf32> to vector<16x8xf32>
    %290 = vector.extract_strided_slice %241 {offsets = [0, 16], sizes = [16, 8], strides = [1, 1]} : vector<16x96xf32> to vector<16x8xf32>
    %291 = vector.shape_cast %290 : vector<16x8xf32> to vector<2x8x8xf32>
    %292 = vector.extract_strided_slice %241 {offsets = [0, 48], sizes = [16, 8], strides = [1, 1]} : vector<16x96xf32> to vector<16x8xf32>
    %293 = vector.shape_cast %292 : vector<16x8xf32> to vector<2x8x8xf32>
    %294 = vector.extract_strided_slice %241 {offsets = [0, 80], sizes = [16, 8], strides = [1, 1]} : vector<16x96xf32> to vector<16x8xf32>
    %295 = vector.shape_cast %294 : vector<16x8xf32> to vector<2x8x8xf32>
    "tpu.trace_start"() <{level = 10 : i32, message = "bqe,bke->bqk"}> : () -> ()
    %cst_80 = arith.constant dense<0.000000e+00> : vector<2x8x8xf32>
    %296 = tpu.matmul %291, %293, %cst_80 {dimension_numbers = #tpu.dot_dimension_numbers<[2], [2], [1], [1], [0, 0, 0, 1, 1, 1], [0], [0]>} : vector<2x8x8xf32>, vector<2x8x8xf32>, vector<2x8x8xf32> -> vector<2x8x8xf32>
    "tpu.trace_stop"() : () -> ()
    %cst_81 = arith.constant 0.353553385 : f32
    %297 = vector.broadcast %cst_81 : f32 to vector<2x8x8xf32>
    %298 = arith.mulf %296, %297 : vector<2x8x8xf32>
    %299 = vector.shape_cast %11 : vector<8x8xf32> to vector<1x8x8xf32>
    %300 = vector.broadcast %299 : vector<1x8x8xf32> to vector<2x8x8xf32>
    %301 = arith.addf %298, %300 : vector<2x8x8xf32>
    %cst_82 = arith.constant dense<0xFF800000> : vector<2x8xf32>
    %302 = vector.multi_reduction <maximumf>, %301, %cst_82 [2] : vector<2x8x8xf32> to vector<2x8xf32>
    %303 = vector.shape_cast %302 : vector<2x8xf32> to vector<2x8x1xf32>
    %304 = vector.broadcast %303 : vector<2x8x1xf32> to vector<2x8x8xf32>
    %305 = arith.subf %301, %304 : vector<2x8x8xf32>
    %306 = math.exp %305 : vector<2x8x8xf32>
    %cst_83 = arith.constant dense<0.000000e+00> : vector<2x8xf32>
    %307 = vector.multi_reduction <add>, %306, %cst_83 [2] : vector<2x8x8xf32> to vector<2x8xf32>
    %308 = vector.shape_cast %307 : vector<2x8xf32> to vector<2x8x1xf32>
    %309 = tpu.reciprocal %308 : vector<2x8x1xf32> -> vector<2x8x1xf32>
    %310 = vector.broadcast %309 : vector<2x8x1xf32> to vector<2x8x8xf32>
    %311 = arith.mulf %306, %310 : vector<2x8x8xf32>
    "tpu.trace_start"() <{level = 10 : i32, message = "bqk,bke->bqe"}> : () -> ()
    %cst_84 = arith.constant dense<0.000000e+00> : vector<2x8x8xf32>
    %312 = tpu.matmul %311, %295, %cst_84 {dimension_numbers = #tpu.dot_dimension_numbers<[2], [1], [1], [2], [0, 0, 0, 1, 1, 2], [0], [0]>} : vector<2x8x8xf32>, vector<2x8x8xf32>, vector<2x8x8xf32> -> vector<2x8x8xf32>
    "tpu.trace_stop"() : () -> ()
    %313 = vector.shape_cast %312 : vector<2x8x8xf32> to vector<16x8xf32>
    %314 = vector.extract_strided_slice %241 {offsets = [0, 24], sizes = [16, 8], strides = [1, 1]} : vector<16x96xf32> to vector<16x8xf32>
    %315 = vector.shape_cast %314 : vector<16x8xf32> to vector<2x8x8xf32>
    %316 = vector.extract_strided_slice %241 {offsets = [0, 56], sizes = [16, 8], strides = [1, 1]} : vector<16x96xf32> to vector<16x8xf32>
    %317 = vector.shape_cast %316 : vector<16x8xf32> to vector<2x8x8xf32>
    %318 = vector.extract_strided_slice %241 {offsets = [0, 88], sizes = [16, 8], strides = [1, 1]} : vector<16x96xf32> to vector<16x8xf32>
    %319 = vector.shape_cast %318 : vector<16x8xf32> to vector<2x8x8xf32>
    "tpu.trace_start"() <{level = 10 : i32, message = "bqe,bke->bqk"}> : () -> ()
    %cst_85 = arith.constant dense<0.000000e+00> : vector<2x8x8xf32>
    %320 = tpu.matmul %315, %317, %cst_85 {dimension_numbers = #tpu.dot_dimension_numbers<[2], [2], [1], [1], [0, 0, 0, 1, 1, 1], [0], [0]>} : vector<2x8x8xf32>, vector<2x8x8xf32>, vector<2x8x8xf32> -> vector<2x8x8xf32>
    "tpu.trace_stop"() : () -> ()
    %cst_86 = arith.constant 0.353553385 : f32
    %321 = vector.broadcast %cst_86 : f32 to vector<2x8x8xf32>
    %322 = arith.mulf %320, %321 : vector<2x8x8xf32>
    %323 = vector.shape_cast %11 : vector<8x8xf32> to vector<1x8x8xf32>
    %324 = vector.broadcast %323 : vector<1x8x8xf32> to vector<2x8x8xf32>
    %325 = arith.addf %322, %324 : vector<2x8x8xf32>
    %cst_87 = arith.constant dense<0xFF800000> : vector<2x8xf32>
    %326 = vector.multi_reduction <maximumf>, %325, %cst_87 [2] : vector<2x8x8xf32> to vector<2x8xf32>
    %327 = vector.shape_cast %326 : vector<2x8xf32> to vector<2x8x1xf32>
    %328 = vector.broadcast %327 : vector<2x8x1xf32> to vector<2x8x8xf32>
    %329 = arith.subf %325, %328 : vector<2x8x8xf32>
    %330 = math.exp %329 : vector<2x8x8xf32>
    %cst_88 = arith.constant dense<0.000000e+00> : vector<2x8xf32>
    %331 = vector.multi_reduction <add>, %330, %cst_88 [2] : vector<2x8x8xf32> to vector<2x8xf32>
    %332 = vector.shape_cast %331 : vector<2x8xf32> to vector<2x8x1xf32>
    %333 = tpu.reciprocal %332 : vector<2x8x1xf32> -> vector<2x8x1xf32>
    %334 = vector.broadcast %333 : vector<2x8x1xf32> to vector<2x8x8xf32>
    %335 = arith.mulf %330, %334 : vector<2x8x8xf32>
    "tpu.trace_start"() <{level = 10 : i32, message = "bqk,bke->bqe"}> : () -> ()
    %cst_89 = arith.constant dense<0.000000e+00> : vector<2x8x8xf32>
    %336 = tpu.matmul %335, %319, %cst_89 {dimension_numbers = #tpu.dot_dimension_numbers<[2], [1], [1], [2], [0, 0, 0, 1, 1, 2], [0], [0]>} : vector<2x8x8xf32>, vector<2x8x8xf32>, vector<2x8x8xf32> -> vector<2x8x8xf32>
    "tpu.trace_stop"() : () -> ()
    %337 = vector.shape_cast %336 : vector<2x8x8xf32> to vector<16x8xf32>
    %338 = tpu.concatenate %265, %289, %313, %337 in 1 : vector<16x8xf32>, vector<16x8xf32>, vector<16x8xf32>, vector<16x8xf32> -> vector<16x32xf32>
    %c1_90 = arith.constant 1 : index
    %c0_91 = arith.constant 0 : index
    %c0_92 = arith.constant 0 : index
    %339 = vector.load %arg6[%c1_90, %c0_91, %c0_92] : memref<3x32x32xf32, #tpu.memory_space<vmem>>, vector<1x32x32xf32>
    %340 = vector.shape_cast %339 : vector<1x32x32xf32> to vector<32x32xf32>
    %cst_93 = arith.constant dense<0.000000e+00> : vector<16x32xf32>
    %341 = tpu.matmul %338, %340, %cst_93 {dimension_numbers = #tpu.dot_dimension_numbers<[1], [0], [0], [1], [0, 0, 1, 1], [], []>} : vector<16x32xf32>, vector<32x32xf32>, vector<16x32xf32> -> vector<16x32xf32>
    %342 = arith.addf %204, %341 : vector<16x32xf32>
    %343 = vector.broadcast %212 : vector<1x32xf32> to vector<16x32xf32>
    %344 = arith.addf %342, %343 : vector<16x32xf32>
    %cst_94 = arith.constant dense<0.000000e+00> : vector<16xf32>
    %345 = vector.multi_reduction <add>, %344, %cst_94 [1] : vector<16x32xf32> to vector<16xf32>
    %346 = vector.shape_cast %345 : vector<16xf32> to vector<16x1xf32>
    %cst_95 = arith.constant 3.200000e+01 : f32
    %347 = vector.broadcast %cst_95 : f32 to vector<16x1xf32>
    %348 = arith.divf %346, %347 : vector<16x1xf32>
    %349 = vector.broadcast %348 : vector<16x1xf32> to vector<16x32xf32>
    %350 = arith.subf %344, %349 : vector<16x32xf32>
    %351 = arith.mulf %350, %350 : vector<16x32xf32>
    %cst_96 = arith.constant dense<0.000000e+00> : vector<16xf32>
    %352 = vector.multi_reduction <add>, %351, %cst_96 [1] : vector<16x32xf32> to vector<16xf32>
    %353 = vector.shape_cast %352 : vector<16xf32> to vector<16x1xf32>
    %cst_97 = arith.constant 3.200000e+01 : f32
    %354 = vector.broadcast %cst_97 : f32 to vector<16x1xf32>
    %355 = arith.divf %353, %354 : vector<16x1xf32>
    %356 = vector.broadcast %348 : vector<16x1xf32> to vector<16x32xf32>
    %357 = arith.subf %344, %356 : vector<16x32xf32>
    %cst_98 = arith.constant 9.99999974E-6 : f32
    %358 = vector.broadcast %cst_98 : f32 to vector<16x1xf32>
    %359 = arith.addf %355, %358 : vector<16x1xf32>
    %360 = math.rsqrt %359 : vector<16x1xf32>
    %361 = vector.broadcast %360 : vector<16x1xf32> to vector<16x32xf32>
    %362 = arith.mulf %357, %361 : vector<16x32xf32>
    %363 = vector.broadcast %209 : vector<1x32xf32> to vector<16x32xf32>
    %364 = arith.mulf %362, %363 : vector<16x32xf32>
    %365 = vector.broadcast %210 : vector<1x32xf32> to vector<16x32xf32>
    %366 = arith.addf %364, %365 : vector<16x32xf32>
    %c1_99 = arith.constant 1 : index
    %c0_100 = arith.constant 0 : index
    %c0_101 = arith.constant 0 : index
    %367 = vector.load %arg7[%c1_99, %c0_100, %c0_101] : memref<3x32x128xf32, #tpu.memory_space<vmem>>, vector<1x32x128xf32>
    %368 = vector.shape_cast %367 : vector<1x32x128xf32> to vector<32x128xf32>
    %cst_102 = arith.constant dense<0.000000e+00> : vector<16x128xf32>
    %369 = tpu.matmul %366, %368, %cst_102 {dimension_numbers = #tpu.dot_dimension_numbers<[1], [0], [0], [1], [0, 0, 1, 1], [], []>} : vector<16x32xf32>, vector<32x128xf32>, vector<16x128xf32> -> vector<16x128xf32>
    %370 = vector.broadcast %213 : vector<1x128xf32> to vector<16x128xf32>
    %371 = arith.addf %369, %370 : vector<16x128xf32>
    %cst_103 = arith.constant 1.702000e+00 : f32
    %372 = vector.broadcast %cst_103 : f32 to vector<16x128xf32>
    %373 = arith.mulf %372, %371 : vector<16x128xf32>
    %374 = arith.negf %373 : vector<16x128xf32>
    %375 = math.exp %374 : vector<16x128xf32>
    %cst_104 = arith.constant 1.000000e+00 : f32
    %376 = vector.broadcast %cst_104 : f32 to vector<16x128xf32>
    %377 = arith.addf %376, %375 : vector<16x128xf32>
    %378 = arith.divf %376, %377 : vector<16x128xf32>
    %379 = arith.mulf %371, %378 : vector<16x128xf32>
    %c1_105 = arith.constant 1 : index
    %c0_106 = arith.constant 0 : index
    %c0_107 = arith.constant 0 : index
    %380 = vector.load %arg8[%c1_105, %c0_106, %c0_107] : memref<3x128x32xf32, #tpu.memory_space<vmem>>, vector<1x128x32xf32>
    %381 = vector.shape_cast %380 : vector<1x128x32xf32> to vector<128x32xf32>
    %cst_108 = arith.constant dense<0.000000e+00> : vector<16x32xf32>
    %382 = tpu.matmul %379, %381, %cst_108 {dimension_numbers = #tpu.dot_dimension_numbers<[1], [0], [0], [1], [0, 0, 1, 1], [], []>} : vector<16x128xf32>, vector<128x32xf32>, vector<16x32xf32> -> vector<16x32xf32>
    %383 = arith.addf %344, %382 : vector<16x32xf32>
    %384 = vector.broadcast %214 : vector<1x32xf32> to vector<16x32xf32>
    %385 = arith.addf %383, %384 : vector<16x32xf32>
    %c1_109 = arith.constant 1 : index
    %c0_110 = arith.constant 0 : index
    %c0_111 = arith.constant 0 : index
    %386 = vector.load %arg2[%c1_109, %c0_110, %c0_111] : memref<2x16x32xf32, #tpu.memory_space<vmem>>, vector<1x16x32xf32>
    %387 = vector.shape_cast %386 : vector<1x16x32xf32> to vector<16x32xf32>
    %388 = vector.shape_cast %18 : vector<16x1xi1> to vector<16x1xi1>
    %389 = vector.broadcast %388 : vector<16x1xi1> to vector<16x32xi1>
    %390 = arith.select %389, %387, %385 : vector<16x32xi1>, vector<16x32xf32>
    %c2 = arith.constant 2 : index
    %c0_112 = arith.constant 0 : index
    %c0_113 = arith.constant 0 : index
    %391 = vector.load %arg4[%c2, %c0_112, %c0_113] : memref<3x8x128xf32, #tpu.memory_space<vmem>>, vector<1x8x128xf32>
    %392 = vector.shape_cast %391 : vector<1x8x128xf32> to vector<8x128xf32>
    %393 = vector.extract_strided_slice %392 {offsets = [0, 0], sizes = [1, 32], strides = [1, 1]} : vector<8x128xf32> to vector<1x32xf32>
    %394 = vector.extract_strided_slice %392 {offsets = [1, 0], sizes = [1, 32], strides = [1, 1]} : vector<8x128xf32> to vector<1x32xf32>
    %395 = vector.extract_strided_slice %392 {offsets = [2, 0], sizes = [1, 32], strides = [1, 1]} : vector<8x128xf32> to vector<1x32xf32>
    %396 = vector.extract_strided_slice %392 {offsets = [3, 0], sizes = [1, 32], strides = [1, 1]} : vector<8x128xf32> to vector<1x32xf32>
    %397 = vector.extract_strided_slice %392 {offsets = [4, 0], sizes = [1, 96], strides = [1, 1]} : vector<8x128xf32> to vector<1x96xf32>
    %398 = vector.extract_strided_slice %392 {offsets = [5, 0], sizes = [1, 32], strides = [1, 1]} : vector<8x128xf32> to vector<1x32xf32>
    %399 = vector.extract_strided_slice %392 {offsets = [6, 0], sizes = [1, 128], strides = [1, 1]} : vector<8x128xf32> to vector<1x128xf32>
    %400 = vector.extract_strided_slice %392 {offsets = [7, 0], sizes = [1, 32], strides = [1, 1]} : vector<8x128xf32> to vector<1x32xf32>
    %cst_114 = arith.constant dense<0.000000e+00> : vector<16xf32>
    %401 = vector.multi_reduction <add>, %390, %cst_114 [1] : vector<16x32xf32> to vector<16xf32>
    %402 = vector.shape_cast %401 : vector<16xf32> to vector<16x1xf32>
    %cst_115 = arith.constant 3.200000e+01 : f32
    %403 = vector.broadcast %cst_115 : f32 to vector<16x1xf32>
    %404 = arith.divf %402, %403 : vector<16x1xf32>
    %405 = vector.broadcast %404 : vector<16x1xf32> to vector<16x32xf32>
    %406 = arith.subf %390, %405 : vector<16x32xf32>
    %407 = arith.mulf %406, %406 : vector<16x32xf32>
    %cst_116 = arith.constant dense<0.000000e+00> : vector<16xf32>
    %408 = vector.multi_reduction <add>, %407, %cst_116 [1] : vector<16x32xf32> to vector<16xf32>
    %409 = vector.shape_cast %408 : vector<16xf32> to vector<16x1xf32>
    %cst_117 = arith.constant 3.200000e+01 : f32
    %410 = vector.broadcast %cst_117 : f32 to vector<16x1xf32>
    %411 = arith.divf %409, %410 : vector<16x1xf32>
    %412 = vector.broadcast %404 : vector<16x1xf32> to vector<16x32xf32>
    %413 = arith.subf %390, %412 : vector<16x32xf32>
    %cst_118 = arith.constant 9.99999974E-6 : f32
    %414 = vector.broadcast %cst_118 : f32 to vector<16x1xf32>
    %415 = arith.addf %411, %414 : vector<16x1xf32>
    %416 = math.rsqrt %415 : vector<16x1xf32>
    %417 = vector.broadcast %416 : vector<16x1xf32> to vector<16x32xf32>
    %418 = arith.mulf %413, %417 : vector<16x32xf32>
    %419 = vector.broadcast %393 : vector<1x32xf32> to vector<16x32xf32>
    %420 = arith.mulf %418, %419 : vector<16x32xf32>
    %421 = vector.broadcast %394 : vector<1x32xf32> to vector<16x32xf32>
    %422 = arith.addf %420, %421 : vector<16x32xf32>
    %c2_119 = arith.constant 2 : index
    %c0_120 = arith.constant 0 : index
    %c0_121 = arith.constant 0 : index
    %423 = vector.load %arg5[%c2_119, %c0_120, %c0_121] : memref<3x32x96xf32, #tpu.memory_space<vmem>>, vector<1x32x96xf32>
    %424 = vector.shape_cast %423 : vector<1x32x96xf32> to vector<32x96xf32>
    %cst_122 = arith.constant dense<0.000000e+00> : vector<16x96xf32>
    %425 = tpu.matmul %422, %424, %cst_122 {dimension_numbers = #tpu.dot_dimension_numbers<[1], [0], [0], [1], [0, 0, 1, 1], [], []>} : vector<16x32xf32>, vector<32x96xf32>, vector<16x96xf32> -> vector<16x96xf32>
    %426 = vector.broadcast %397 : vector<1x96xf32> to vector<16x96xf32>
    %427 = arith.addf %425, %426 : vector<16x96xf32>
    %428 = vector.extract_strided_slice %427 {offsets = [0, 0], sizes = [16, 8], strides = [1, 1]} : vector<16x96xf32> to vector<16x8xf32>
    %429 = vector.shape_cast %428 : vector<16x8xf32> to vector<2x8x8xf32>
    %430 = vector.extract_strided_slice %427 {offsets = [0, 32], sizes = [16, 8], strides = [1, 1]} : vector<16x96xf32> to vector<16x8xf32>
    %431 = vector.shape_cast %430 : vector<16x8xf32> to vector<2x8x8xf32>
    %432 = vector.extract_strided_slice %427 {offsets = [0, 64], sizes = [16, 8], strides = [1, 1]} : vector<16x96xf32> to vector<16x8xf32>
    %433 = vector.shape_cast %432 : vector<16x8xf32> to vector<2x8x8xf32>
    "tpu.trace_start"() <{level = 10 : i32, message = "bqe,bke->bqk"}> : () -> ()
    %cst_123 = arith.constant dense<0.000000e+00> : vector<2x8x8xf32>
    %434 = tpu.matmul %429, %431, %cst_123 {dimension_numbers = #tpu.dot_dimension_numbers<[2], [2], [1], [1], [0, 0, 0, 1, 1, 1], [0], [0]>} : vector<2x8x8xf32>, vector<2x8x8xf32>, vector<2x8x8xf32> -> vector<2x8x8xf32>
    "tpu.trace_stop"() : () -> ()
    %cst_124 = arith.constant 0.353553385 : f32
    %435 = vector.broadcast %cst_124 : f32 to vector<2x8x8xf32>
    %436 = arith.mulf %434, %435 : vector<2x8x8xf32>
    %437 = vector.shape_cast %11 : vector<8x8xf32> to vector<1x8x8xf32>
    %438 = vector.broadcast %437 : vector<1x8x8xf32> to vector<2x8x8xf32>
    %439 = arith.addf %436, %438 : vector<2x8x8xf32>
    %cst_125 = arith.constant dense<0xFF800000> : vector<2x8xf32>
    %440 = vector.multi_reduction <maximumf>, %439, %cst_125 [2] : vector<2x8x8xf32> to vector<2x8xf32>
    %441 = vector.shape_cast %440 : vector<2x8xf32> to vector<2x8x1xf32>
    %442 = vector.broadcast %441 : vector<2x8x1xf32> to vector<2x8x8xf32>
    %443 = arith.subf %439, %442 : vector<2x8x8xf32>
    %444 = math.exp %443 : vector<2x8x8xf32>
    %cst_126 = arith.constant dense<0.000000e+00> : vector<2x8xf32>
    %445 = vector.multi_reduction <add>, %444, %cst_126 [2] : vector<2x8x8xf32> to vector<2x8xf32>
    %446 = vector.shape_cast %445 : vector<2x8xf32> to vector<2x8x1xf32>
    %447 = tpu.reciprocal %446 : vector<2x8x1xf32> -> vector<2x8x1xf32>
    %448 = vector.broadcast %447 : vector<2x8x1xf32> to vector<2x8x8xf32>
    %449 = arith.mulf %444, %448 : vector<2x8x8xf32>
    "tpu.trace_start"() <{level = 10 : i32, message = "bqk,bke->bqe"}> : () -> ()
    %cst_127 = arith.constant dense<0.000000e+00> : vector<2x8x8xf32>
    %450 = tpu.matmul %449, %433, %cst_127 {dimension_numbers = #tpu.dot_dimension_numbers<[2], [1], [1], [2], [0, 0, 0, 1, 1, 2], [0], [0]>} : vector<2x8x8xf32>, vector<2x8x8xf32>, vector<2x8x8xf32> -> vector<2x8x8xf32>
    "tpu.trace_stop"() : () -> ()
    %451 = vector.shape_cast %450 : vector<2x8x8xf32> to vector<16x8xf32>
    %452 = vector.extract_strided_slice %427 {offsets = [0, 8], sizes = [16, 8], strides = [1, 1]} : vector<16x96xf32> to vector<16x8xf32>
    %453 = vector.shape_cast %452 : vector<16x8xf32> to vector<2x8x8xf32>
    %454 = vector.extract_strided_slice %427 {offsets = [0, 40], sizes = [16, 8], strides = [1, 1]} : vector<16x96xf32> to vector<16x8xf32>
    %455 = vector.shape_cast %454 : vector<16x8xf32> to vector<2x8x8xf32>
    %456 = vector.extract_strided_slice %427 {offsets = [0, 72], sizes = [16, 8], strides = [1, 1]} : vector<16x96xf32> to vector<16x8xf32>
    %457 = vector.shape_cast %456 : vector<16x8xf32> to vector<2x8x8xf32>
    "tpu.trace_start"() <{level = 10 : i32, message = "bqe,bke->bqk"}> : () -> ()
    %cst_128 = arith.constant dense<0.000000e+00> : vector<2x8x8xf32>
    %458 = tpu.matmul %453, %455, %cst_128 {dimension_numbers = #tpu.dot_dimension_numbers<[2], [2], [1], [1], [0, 0, 0, 1, 1, 1], [0], [0]>} : vector<2x8x8xf32>, vector<2x8x8xf32>, vector<2x8x8xf32> -> vector<2x8x8xf32>
    "tpu.trace_stop"() : () -> ()
    %cst_129 = arith.constant 0.353553385 : f32
    %459 = vector.broadcast %cst_129 : f32 to vector<2x8x8xf32>
    %460 = arith.mulf %458, %459 : vector<2x8x8xf32>
    %461 = vector.shape_cast %11 : vector<8x8xf32> to vector<1x8x8xf32>
    %462 = vector.broadcast %461 : vector<1x8x8xf32> to vector<2x8x8xf32>
    %463 = arith.addf %460, %462 : vector<2x8x8xf32>
    %cst_130 = arith.constant dense<0xFF800000> : vector<2x8xf32>
    %464 = vector.multi_reduction <maximumf>, %463, %cst_130 [2] : vector<2x8x8xf32> to vector<2x8xf32>
    %465 = vector.shape_cast %464 : vector<2x8xf32> to vector<2x8x1xf32>
    %466 = vector.broadcast %465 : vector<2x8x1xf32> to vector<2x8x8xf32>
    %467 = arith.subf %463, %466 : vector<2x8x8xf32>
    %468 = math.exp %467 : vector<2x8x8xf32>
    %cst_131 = arith.constant dense<0.000000e+00> : vector<2x8xf32>
    %469 = vector.multi_reduction <add>, %468, %cst_131 [2] : vector<2x8x8xf32> to vector<2x8xf32>
    %470 = vector.shape_cast %469 : vector<2x8xf32> to vector<2x8x1xf32>
    %471 = tpu.reciprocal %470 : vector<2x8x1xf32> -> vector<2x8x1xf32>
    %472 = vector.broadcast %471 : vector<2x8x1xf32> to vector<2x8x8xf32>
    %473 = arith.mulf %468, %472 : vector<2x8x8xf32>
    "tpu.trace_start"() <{level = 10 : i32, message = "bqk,bke->bqe"}> : () -> ()
    %cst_132 = arith.constant dense<0.000000e+00> : vector<2x8x8xf32>
    %474 = tpu.matmul %473, %457, %cst_132 {dimension_numbers = #tpu.dot_dimension_numbers<[2], [1], [1], [2], [0, 0, 0, 1, 1, 2], [0], [0]>} : vector<2x8x8xf32>, vector<2x8x8xf32>, vector<2x8x8xf32> -> vector<2x8x8xf32>
    "tpu.trace_stop"() : () -> ()
    %475 = vector.shape_cast %474 : vector<2x8x8xf32> to vector<16x8xf32>
    %476 = vector.extract_strided_slice %427 {offsets = [0, 16], sizes = [16, 8], strides = [1, 1]} : vector<16x96xf32> to vector<16x8xf32>
    %477 = vector.shape_cast %476 : vector<16x8xf32> to vector<2x8x8xf32>
    %478 = vector.extract_strided_slice %427 {offsets = [0, 48], sizes = [16, 8], strides = [1, 1]} : vector<16x96xf32> to vector<16x8xf32>
    %479 = vector.shape_cast %478 : vector<16x8xf32> to vector<2x8x8xf32>
    %480 = vector.extract_strided_slice %427 {offsets = [0, 80], sizes = [16, 8], strides = [1, 1]} : vector<16x96xf32> to vector<16x8xf32>
    %481 = vector.shape_cast %480 : vector<16x8xf32> to vector<2x8x8xf32>
    "tpu.trace_start"() <{level = 10 : i32, message = "bqe,bke->bqk"}> : () -> ()
    %cst_133 = arith.constant dense<0.000000e+00> : vector<2x8x8xf32>
    %482 = tpu.matmul %477, %479, %cst_133 {dimension_numbers = #tpu.dot_dimension_numbers<[2], [2], [1], [1], [0, 0, 0, 1, 1, 1], [0], [0]>} : vector<2x8x8xf32>, vector<2x8x8xf32>, vector<2x8x8xf32> -> vector<2x8x8xf32>
    "tpu.trace_stop"() : () -> ()
    %cst_134 = arith.constant 0.353553385 : f32
    %483 = vector.broadcast %cst_134 : f32 to vector<2x8x8xf32>
    %484 = arith.mulf %482, %483 : vector<2x8x8xf32>
    %485 = vector.shape_cast %11 : vector<8x8xf32> to vector<1x8x8xf32>
    %486 = vector.broadcast %485 : vector<1x8x8xf32> to vector<2x8x8xf32>
    %487 = arith.addf %484, %486 : vector<2x8x8xf32>
    %cst_135 = arith.constant dense<0xFF800000> : vector<2x8xf32>
    %488 = vector.multi_reduction <maximumf>, %487, %cst_135 [2] : vector<2x8x8xf32> to vector<2x8xf32>
    %489 = vector.shape_cast %488 : vector<2x8xf32> to vector<2x8x1xf32>
    %490 = vector.broadcast %489 : vector<2x8x1xf32> to vector<2x8x8xf32>
    %491 = arith.subf %487, %490 : vector<2x8x8xf32>
    %492 = math.exp %491 : vector<2x8x8xf32>
    %cst_136 = arith.constant dense<0.000000e+00> : vector<2x8xf32>
    %493 = vector.multi_reduction <add>, %492, %cst_136 [2] : vector<2x8x8xf32> to vector<2x8xf32>
    %494 = vector.shape_cast %493 : vector<2x8xf32> to vector<2x8x1xf32>
    %495 = tpu.reciprocal %494 : vector<2x8x1xf32> -> vector<2x8x1xf32>
    %496 = vector.broadcast %495 : vector<2x8x1xf32> to vector<2x8x8xf32>
    %497 = arith.mulf %492, %496 : vector<2x8x8xf32>
    "tpu.trace_start"() <{level = 10 : i32, message = "bqk,bke->bqe"}> : () -> ()
    %cst_137 = arith.constant dense<0.000000e+00> : vector<2x8x8xf32>
    %498 = tpu.matmul %497, %481, %cst_137 {dimension_numbers = #tpu.dot_dimension_numbers<[2], [1], [1], [2], [0, 0, 0, 1, 1, 2], [0], [0]>} : vector<2x8x8xf32>, vector<2x8x8xf32>, vector<2x8x8xf32> -> vector<2x8x8xf32>
    "tpu.trace_stop"() : () -> ()
    %499 = vector.shape_cast %498 : vector<2x8x8xf32> to vector<16x8xf32>
    %500 = vector.extract_strided_slice %427 {offsets = [0, 24], sizes = [16, 8], strides = [1, 1]} : vector<16x96xf32> to vector<16x8xf32>
    %501 = vector.shape_cast %500 : vector<16x8xf32> to vector<2x8x8xf32>
    %502 = vector.extract_strided_slice %427 {offsets = [0, 56], sizes = [16, 8], strides = [1, 1]} : vector<16x96xf32> to vector<16x8xf32>
    %503 = vector.shape_cast %502 : vector<16x8xf32> to vector<2x8x8xf32>
    %504 = vector.extract_strided_slice %427 {offsets = [0, 88], sizes = [16, 8], strides = [1, 1]} : vector<16x96xf32> to vector<16x8xf32>
    %505 = vector.shape_cast %504 : vector<16x8xf32> to vector<2x8x8xf32>
    "tpu.trace_start"() <{level = 10 : i32, message = "bqe,bke->bqk"}> : () -> ()
    %cst_138 = arith.constant dense<0.000000e+00> : vector<2x8x8xf32>
    %506 = tpu.matmul %501, %503, %cst_138 {dimension_numbers = #tpu.dot_dimension_numbers<[2], [2], [1], [1], [0, 0, 0, 1, 1, 1], [0], [0]>} : vector<2x8x8xf32>, vector<2x8x8xf32>, vector<2x8x8xf32> -> vector<2x8x8xf32>
    "tpu.trace_stop"() : () -> ()
    %cst_139 = arith.constant 0.353553385 : f32
    %507 = vector.broadcast %cst_139 : f32 to vector<2x8x8xf32>
    %508 = arith.mulf %506, %507 : vector<2x8x8xf32>
    %509 = vector.shape_cast %11 : vector<8x8xf32> to vector<1x8x8xf32>
    %510 = vector.broadcast %509 : vector<1x8x8xf32> to vector<2x8x8xf32>
    %511 = arith.addf %508, %510 : vector<2x8x8xf32>
    %cst_140 = arith.constant dense<0xFF800000> : vector<2x8xf32>
    %512 = vector.multi_reduction <maximumf>, %511, %cst_140 [2] : vector<2x8x8xf32> to vector<2x8xf32>
    %513 = vector.shape_cast %512 : vector<2x8xf32> to vector<2x8x1xf32>
    %514 = vector.broadcast %513 : vector<2x8x1xf32> to vector<2x8x8xf32>
    %515 = arith.subf %511, %514 : vector<2x8x8xf32>
    %516 = math.exp %515 : vector<2x8x8xf32>
    %cst_141 = arith.constant dense<0.000000e+00> : vector<2x8xf32>
    %517 = vector.multi_reduction <add>, %516, %cst_141 [2] : vector<2x8x8xf32> to vector<2x8xf32>
    %518 = vector.shape_cast %517 : vector<2x8xf32> to vector<2x8x1xf32>
    %519 = tpu.reciprocal %518 : vector<2x8x1xf32> -> vector<2x8x1xf32>
    %520 = vector.broadcast %519 : vector<2x8x1xf32> to vector<2x8x8xf32>
    %521 = arith.mulf %516, %520 : vector<2x8x8xf32>
    "tpu.trace_start"() <{level = 10 : i32, message = "bqk,bke->bqe"}> : () -> ()
    %cst_142 = arith.constant dense<0.000000e+00> : vector<2x8x8xf32>
    %522 = tpu.matmul %521, %505, %cst_142 {dimension_numbers = #tpu.dot_dimension_numbers<[2], [1], [1], [2], [0, 0, 0, 1, 1, 2], [0], [0]>} : vector<2x8x8xf32>, vector<2x8x8xf32>, vector<2x8x8xf32> -> vector<2x8x8xf32>
    "tpu.trace_stop"() : () -> ()
    %523 = vector.shape_cast %522 : vector<2x8x8xf32> to vector<16x8xf32>
    %524 = tpu.concatenate %451, %475, %499, %523 in 1 : vector<16x8xf32>, vector<16x8xf32>, vector<16x8xf32>, vector<16x8xf32> -> vector<16x32xf32>
    %c2_143 = arith.constant 2 : index
    %c0_144 = arith.constant 0 : index
    %c0_145 = arith.constant 0 : index
    %525 = vector.load %arg6[%c2_143, %c0_144, %c0_145] : memref<3x32x32xf32, #tpu.memory_space<vmem>>, vector<1x32x32xf32>
    %526 = vector.shape_cast %525 : vector<1x32x32xf32> to vector<32x32xf32>
    %cst_146 = arith.constant dense<0.000000e+00> : vector<16x32xf32>
    %527 = tpu.matmul %524, %526, %cst_146 {dimension_numbers = #tpu.dot_dimension_numbers<[1], [0], [0], [1], [0, 0, 1, 1], [], []>} : vector<16x32xf32>, vector<32x32xf32>, vector<16x32xf32> -> vector<16x32xf32>
    %528 = arith.addf %390, %527 : vector<16x32xf32>
    %529 = vector.broadcast %398 : vector<1x32xf32> to vector<16x32xf32>
    %530 = arith.addf %528, %529 : vector<16x32xf32>
    %cst_147 = arith.constant dense<0.000000e+00> : vector<16xf32>
    %531 = vector.multi_reduction <add>, %530, %cst_147 [1] : vector<16x32xf32> to vector<16xf32>
    %532 = vector.shape_cast %531 : vector<16xf32> to vector<16x1xf32>
    %cst_148 = arith.constant 3.200000e+01 : f32
    %533 = vector.broadcast %cst_148 : f32 to vector<16x1xf32>
    %534 = arith.divf %532, %533 : vector<16x1xf32>
    %535 = vector.broadcast %534 : vector<16x1xf32> to vector<16x32xf32>
    %536 = arith.subf %530, %535 : vector<16x32xf32>
    %537 = arith.mulf %536, %536 : vector<16x32xf32>
    %cst_149 = arith.constant dense<0.000000e+00> : vector<16xf32>
    %538 = vector.multi_reduction <add>, %537, %cst_149 [1] : vector<16x32xf32> to vector<16xf32>
    %539 = vector.shape_cast %538 : vector<16xf32> to vector<16x1xf32>
    %cst_150 = arith.constant 3.200000e+01 : f32
    %540 = vector.broadcast %cst_150 : f32 to vector<16x1xf32>
    %541 = arith.divf %539, %540 : vector<16x1xf32>
    %542 = vector.broadcast %534 : vector<16x1xf32> to vector<16x32xf32>
    %543 = arith.subf %530, %542 : vector<16x32xf32>
    %cst_151 = arith.constant 9.99999974E-6 : f32
    %544 = vector.broadcast %cst_151 : f32 to vector<16x1xf32>
    %545 = arith.addf %541, %544 : vector<16x1xf32>
    %546 = math.rsqrt %545 : vector<16x1xf32>
    %547 = vector.broadcast %546 : vector<16x1xf32> to vector<16x32xf32>
    %548 = arith.mulf %543, %547 : vector<16x32xf32>
    %549 = vector.broadcast %395 : vector<1x32xf32> to vector<16x32xf32>
    %550 = arith.mulf %548, %549 : vector<16x32xf32>
    %551 = vector.broadcast %396 : vector<1x32xf32> to vector<16x32xf32>
    %552 = arith.addf %550, %551 : vector<16x32xf32>
    %c2_152 = arith.constant 2 : index
    %c0_153 = arith.constant 0 : index
    %c0_154 = arith.constant 0 : index
    %553 = vector.load %arg7[%c2_152, %c0_153, %c0_154] : memref<3x32x128xf32, #tpu.memory_space<vmem>>, vector<1x32x128xf32>
    %554 = vector.shape_cast %553 : vector<1x32x128xf32> to vector<32x128xf32>
    %cst_155 = arith.constant dense<0.000000e+00> : vector<16x128xf32>
    %555 = tpu.matmul %552, %554, %cst_155 {dimension_numbers = #tpu.dot_dimension_numbers<[1], [0], [0], [1], [0, 0, 1, 1], [], []>} : vector<16x32xf32>, vector<32x128xf32>, vector<16x128xf32> -> vector<16x128xf32>
    %556 = vector.broadcast %399 : vector<1x128xf32> to vector<16x128xf32>
    %557 = arith.addf %555, %556 : vector<16x128xf32>
    %cst_156 = arith.constant 1.702000e+00 : f32
    %558 = vector.broadcast %cst_156 : f32 to vector<16x128xf32>
    %559 = arith.mulf %558, %557 : vector<16x128xf32>
    %560 = arith.negf %559 : vector<16x128xf32>
    %561 = math.exp %560 : vector<16x128xf32>
    %cst_157 = arith.constant 1.000000e+00 : f32
    %562 = vector.broadcast %cst_157 : f32 to vector<16x128xf32>
    %563 = arith.addf %562, %561 : vector<16x128xf32>
    %564 = arith.divf %562, %563 : vector<16x128xf32>
    %565 = arith.mulf %557, %564 : vector<16x128xf32>
    %c2_158 = arith.constant 2 : index
    %c0_159 = arith.constant 0 : index
    %c0_160 = arith.constant 0 : index
    %566 = vector.load %arg8[%c2_158, %c0_159, %c0_160] : memref<3x128x32xf32, #tpu.memory_space<vmem>>, vector<1x128x32xf32>
    %567 = vector.shape_cast %566 : vector<1x128x32xf32> to vector<128x32xf32>
    %cst_161 = arith.constant dense<0.000000e+00> : vector<16x32xf32>
    %568 = tpu.matmul %565, %567, %cst_161 {dimension_numbers = #tpu.dot_dimension_numbers<[1], [0], [0], [1], [0, 0, 1, 1], [], []>} : vector<16x128xf32>, vector<128x32xf32>, vector<16x32xf32> -> vector<16x32xf32>
    %569 = arith.addf %530, %568 : vector<16x32xf32>
    %570 = vector.broadcast %400 : vector<1x32xf32> to vector<16x32xf32>
    %571 = arith.addf %569, %570 : vector<16x32xf32>
    %572 = vector.shape_cast %571 : vector<16x32xf32> to vector<2x8x32xf32>
    %c0_162 = arith.constant 0 : index
    %c0_163 = arith.constant 0 : index
    %c0_164 = arith.constant 0 : index
    %573 = vector.load %arg3[%c0_162, %c0_163, %c0_164] : memref<2x8x1xf32, #tpu.memory_space<vmem>>, vector<2x8x1xf32>
    %574 = vector.broadcast %573 : vector<2x8x1xf32> to vector<2x8x32xf32>
    %575 = arith.mulf %572, %574 : vector<2x8x32xf32>
    %cst_165 = arith.constant dense<0.000000e+00> : vector<2x32xf32>
    %576 = vector.multi_reduction <add>, %575, %cst_165 [1] : vector<2x8x32xf32> to vector<2x32xf32>
    %c0_166 = arith.constant 0 : index
    %c0_167 = arith.constant 0 : index
    %577 = vector.load %arg9[%c0_166, %c0_167] : memref<2x32xf32, #tpu.memory_space<vmem>>, vector<1x32xf32>
    %c1_168 = arith.constant 1 : index
    %c0_169 = arith.constant 0 : index
    %578 = vector.load %arg9[%c1_168, %c0_169] : memref<2x32xf32, #tpu.memory_space<vmem>>, vector<1x32xf32>
    %cst_170 = arith.constant dense<0.000000e+00> : vector<2xf32>
    %579 = vector.multi_reduction <add>, %576, %cst_170 [1] : vector<2x32xf32> to vector<2xf32>
    %580 = vector.shape_cast %579 : vector<2xf32> to vector<2x1xf32>
    %cst_171 = arith.constant 3.200000e+01 : f32
    %581 = vector.broadcast %cst_171 : f32 to vector<2x1xf32>
    %582 = arith.divf %580, %581 : vector<2x1xf32>
    %583 = vector.broadcast %582 : vector<2x1xf32> to vector<2x32xf32>
    %584 = arith.subf %576, %583 : vector<2x32xf32>
    %585 = arith.mulf %584, %584 : vector<2x32xf32>
    %cst_172 = arith.constant dense<0.000000e+00> : vector<2xf32>
    %586 = vector.multi_reduction <add>, %585, %cst_172 [1] : vector<2x32xf32> to vector<2xf32>
    %587 = vector.shape_cast %586 : vector<2xf32> to vector<2x1xf32>
    %cst_173 = arith.constant 3.200000e+01 : f32
    %588 = vector.broadcast %cst_173 : f32 to vector<2x1xf32>
    %589 = arith.divf %587, %588 : vector<2x1xf32>
    %590 = vector.broadcast %582 : vector<2x1xf32> to vector<2x32xf32>
    %591 = arith.subf %576, %590 : vector<2x32xf32>
    %cst_174 = arith.constant 9.99999974E-6 : f32
    %592 = vector.broadcast %cst_174 : f32 to vector<2x1xf32>
    %593 = arith.addf %589, %592 : vector<2x1xf32>
    %594 = math.rsqrt %593 : vector<2x1xf32>
    %595 = vector.broadcast %594 : vector<2x1xf32> to vector<2x32xf32>
    %596 = arith.mulf %591, %595 : vector<2x32xf32>
    %597 = vector.broadcast %577 : vector<1x32xf32> to vector<2x32xf32>
    %598 = arith.mulf %596, %597 : vector<2x32xf32>
    %599 = vector.broadcast %578 : vector<1x32xf32> to vector<2x32xf32>
    %600 = arith.addf %598, %599 : vector<2x32xf32>
    %c0_175 = arith.constant 0 : index
    %c0_176 = arith.constant 0 : index
    %601 = vector.load %arg10[%c0_175, %c0_176] : memref<32x16xf32, #tpu.memory_space<vmem>>, vector<32x16xf32>
    %cst_177 = arith.constant dense<0.000000e+00> : vector<2x16xf32>
    %602 = tpu.matmul %600, %601, %cst_177 {dimension_numbers = #tpu.dot_dimension_numbers<[1], [0], [0], [1], [0, 0, 1, 1], [], []>} : vector<2x32xf32>, vector<32x16xf32>, vector<2x16xf32> -> vector<2x16xf32>
    %c0_178 = arith.constant 0 : index
    %c0_179 = arith.constant 0 : index
    %603 = vector.load %arg11[%c0_178, %c0_179] : memref<2x16xf32, #tpu.memory_space<vmem>>, vector<2x16xf32>
    tpu.vector_store %arg11[%c0_178, %c0_179], %602 {strides = array<i32>} : memref<2x16xf32, #tpu.memory_space<vmem>>, vector<2x16xf32>,
    return
  }
}

</mosaic_0001>

<llo_original>
// kernel: text_encoder_forward.1
$region0: #{text_encoder_forward.1}
  #allocation0 [shape = 'u32[]', space=smem, size = 0x4, offset = 0x4, fixed_abs, tag = 'smem constant byte address 0x4 - core index']
  #allocation1 [shape = 'u32[144,128]{1,0:T(1,128)}', space=vmem, size = 0x12000, scoped, tag = 'internal scratch']
  %s0 = inlined_call_operand.vmem [shape: f32[2,8,32], index: 0, kind: input, shape index: {}]
  %s1 = inlined_call_operand.vmem [shape: f32[8,32], index: 1, kind: input, shape index: {}]
  %s2 = inlined_call_operand.vmem [shape: f32[2,16,32], index: 2, kind: input, shape index: {}]
  %s3 = inlined_call_operand.vmem [shape: f32[2,8,1], index: 3, kind: input, shape index: {}]
  %s4 = inlined_call_operand.vmem [shape: f32[3,8,128], index: 4, kind: input, shape index: {}]
  %s5 = inlined_call_operand.vmem [shape: f32[3,32,96], index: 5, kind: input, shape index: {}]
  %s6 = inlined_call_operand.vmem [shape: f32[3,32,32], index: 6, kind: input, shape index: {}]
  %s7 = inlined_call_operand.vmem [shape: f32[3,32,128], index: 7, kind: input, shape index: {}]
  %s8 = inlined_call_operand.vmem [shape: f32[3,128,32], index: 8, kind: input, shape index: {}]
  %s9 = inlined_call_operand.vmem [shape: f32[2,32], index: 9, kind: input, shape index: {}]
  %s10 = inlined_call_operand.vmem [shape: f32[32,16], index: 10, kind: input, shape index: {}]
  %s11 = inlined_call_operand.hbm [shape: f32[2,16], index: 11, kind: output, shape index: {}]
  %s12 = sld [smem:[#allocation0]]
  $region54: #{text_encoder_forward.1} parent=0
    _
  %s14 = ssub.s32 1, %s12
  %s15 = scalar_select 0, %s14, %s12
  $region1: #{text_encoder_forward.1} parent=0
    #allocation2 [shape = 'u8[1024]{0}', space=vmem, size = 0x400, scoped, tag = 'output window, operand 0, single buffered']
    #allocation3 [shape = 's32[1]{0}', space=sflag, size = 0x4, scoped, tag = 'scoped memory for text_encoder_forward.1']
    %16 = vsyncpa [#allocation3], 0
    // Predicated region
    $region2: #{text_encoder_forward.1} parent=1 // pred_check
      _
    $region3: #{text_encoder_forward.1} parent=1 // pred_check_branch
      %18 = sbr.rel (0) target = $region5
    $region4: #{text_encoder_forward.1} parent=1 // pred_region
      _
    $region5: #{text_encoder_forward.1} parent=1 // pred_fallthru
      _
    // Predicated region
    $region6: #{text_encoder_forward.1} parent=1 // pred_check
      _
    $region7: #{text_encoder_forward.1} parent=1 // pred_check_branch
      %20 = sbr.rel (0) target = $region9
    $region8: #{text_encoder_forward.1} parent=1 // pred_region
      _
    $region9: #{text_encoder_forward.1} parent=1 // pred_fallthru
      _
    // Predicated region
    $region10: #{text_encoder_forward.1} parent=1 // pred_check
      _
    $region11: #{text_encoder_forward.1} parent=1 // pred_check_branch
      %22 = sbr.rel (0) target = $region13
    $region12: #{text_encoder_forward.1} parent=1 // pred_region
      _
    $region13: #{text_encoder_forward.1} parent=1 // pred_fallthru
      _
    // Predicated region
    $region14: #{text_encoder_forward.1} parent=1 // pred_check
      _
    $region15: #{text_encoder_forward.1} parent=1 // pred_check_branch
      %24 = sbr.rel (0) target = $region17
    $region16: #{text_encoder_forward.1} parent=1 // pred_region
      _
    $region17: #{text_encoder_forward.1} parent=1 // pred_fallthru
      _
    // Predicated region
    $region18: #{text_encoder_forward.1} parent=1 // pred_check
      _
    $region19: #{text_encoder_forward.1} parent=1 // pred_check_branch
      %26 = sbr.rel (0) target = $region21
    $region20: #{text_encoder_forward.1} parent=1 // pred_region
      _
    $region21: #{text_encoder_forward.1} parent=1 // pred_fallthru
      _
    // Predicated region
    $region22: #{text_encoder_forward.1} parent=1 // pred_check
      _
    $region23: #{text_encoder_forward.1} parent=1 // pred_check_branch
      %28 = sbr.rel (0) target = $region25
    $region24: #{text_encoder_forward.1} parent=1 // pred_region
      _
    $region25: #{text_encoder_forward.1} parent=1 // pred_fallthru
      _
    // Predicated region
    $region26: #{text_encoder_forward.1} parent=1 // pred_check
      _
    $region27: #{text_encoder_forward.1} parent=1 // pred_check_branch
      %30 = sbr.rel (0) target = $region29
    $region28: #{text_encoder_forward.1} parent=1 // pred_region
      _
    $region29: #{text_encoder_forward.1} parent=1 // pred_fallthru
      _
    // Predicated region
    $region30: #{text_encoder_forward.1} parent=1 // pred_check
      _
    $region31: #{text_encoder_forward.1} parent=1 // pred_check_branch
      %32 = sbr.rel (0) target = $region33
    $region32: #{text_encoder_forward.1} parent=1 // pred_region
      _
    $region33: #{text_encoder_forward.1} parent=1 // pred_fallthru
      _
    // Predicated region
    $region34: #{text_encoder_forward.1} parent=1 // pred_check
      _
    $region35: #{text_encoder_forward.1} parent=1 // pred_check_branch
      %34 = sbr.rel (0) target = $region37
    $region36: #{text_encoder_forward.1} parent=1 // pred_region
      _
    $region37: #{text_encoder_forward.1} parent=1 // pred_fallthru
      _
    // Predicated region
    $region38: #{text_encoder_forward.1} parent=1 // pred_check
      _
    $region39: #{text_encoder_forward.1} parent=1 // pred_check_branch
      %36 = sbr.rel (0) target = $region41
    $region40: #{text_encoder_forward.1} parent=1 // pred_region
      _
    $region41: #{text_encoder_forward.1} parent=1 // pred_fallthru
      _
    // Predicated region
    $region42: #{text_encoder_forward.1} parent=1 // pred_check
      _
    $region43: #{text_encoder_forward.1} parent=1 // pred_check_branch
      %38 = sbr.rel (0) target = $region45
    $region44: #{text_encoder_forward.1} parent=1 // pred_region
      _
    $region45: #{text_encoder_forward.1} parent=1 // pred_fallthru
      _
    %v39 = vld [vmem:[%s0] sm:$0xff]
    %v40 = vld [vmem:[%s0 + $0x8] sm:$0xff]
    %v41 = vld [vmem:[%s1] sm:$0xff]
    %v42 = vadd.f32 %v39, %v41
    %v43 = vadd.f32 %v40, %v41
    %v44 = vlaneseq
    %v45 = vshrl.u32 %v44, 7
    %v46 = vlaneseq
    %v47 = vand.u32 %v46, 127
    %vm48 = vcmp.le.s32.totalorder %v47, %v45
    %v49 = vsel %vm48, 0.0, -1e+09
    %vm50 = vcmp.ge.s32.totalorder %v45, 1
    %vm51 = vcmp.lt.s32.totalorder %v45, 3
    %vm52 = vmand %vm50, %vm51
    %v53 = vld [vmem:[%s4] sm:$0xff]
    %vm54 = vcmask 261120
    %v55 = vsel %vm54, %v42, 0.0
    %56 = vadd.xlane.f32.xlu0 %v55
    %v57 = vpop.xlane.xlu0 %56
    %v58 = vsel %vm54, %v43, 0.0
    %59 = vadd.xlane.f32.xlu0 %v58
    %v60 = vpop.xlane.xlu0 %59
    %v61 = vrcp.pop 32.0
    %v62 = vmul.f32 %v57, %v61
    %v63 = vmul.f32 %v60, %v61
    %v64 = vsub.f32 %v42, %v62
    %v65 = vsub.f32 %v43, %v63
    %v66 = vmul.f32 %v64, %v64
    %v67 = vmul.f32 %v65, %v65
    %v68 = vsel %vm54, %v66, 0.0
    %69 = vadd.xlane.f32.xlu0 %v68
    %v70 = vpop.xlane.xlu0 %69
    %v71 = vsel %vm54, %v67, 0.0
    %72 = vadd.xlane.f32.xlu0 %v71
    %v73 = vpop.xlane.xlu0 %72
    %v74 = vmul.f32 %v70, %v61
    %v75 = vmul.f32 %v73, %v61
    %v76 = vadd.f32 %v74, 1e-05
    %v77 = vadd.f32 %v75, 1e-05
    %v78 = vrsqrt.pop %v76
    %v79 = vrsqrt.pop %v77
    %v80 = vmul.f32 %v64, %v78
    %v81 = vmul.f32 %v65, %v79
    %v82 = vlaneseq
    %v83 = vshrl.u32 %v82, 7
    %v84 = vsub.s32 0, %v83
    %v85 = vrot.slane %v53, %v84
    %v86 = vmul.f32 %v80, %v85
    %v87 = vmul.f32 %v81, %v85
    %v88 = vlaneseq
    %v89 = vshrl.u32 %v88, 7
    %v90 = vsub.s32 1, %v89
    %v91 = vrot.slane %v53, %v90
    %v92 = vadd.f32 %v86, %v91
    %v93 = vadd.f32 %v87, %v91
    %v94 = vld [vmem:[%s5] sm:$0xff]
    %v95 = vld [vmem:[%s5 + $0x8] sm:$0xff]
    %v96 = vld [vmem:[%s5 + $0x10] sm:$0xff]
    %v97 = vld [vmem:[%s5 + $0x18] sm:$0xff]
    %v98 = vlaneseq
    %v99 = vshrl.u32 %v98, 7
    %v100 = vsub.s32 4, %v99
    %v101 = vrot.slane %v53, %v100
    %v103 = vsel %vm54, %v92, 0
    %v106 = vsel %vm54, %v93, 0
    %108 = vmatprep.subr.mxu0 0.0
    %109 = vmatpush1.msra.mxu0 0.0
    %110 = vmatprep.subr.mxu0 0.0
    %111 = vmatpush1.msra.mxu0 0.0
    %112 = vmatprep.subr.mxu0 0.0
    %113 = vmatpush1.msra.mxu0 0.0
    %114 = vmatprep.subr.mxu0 0.0
    %115 = vmatpush1.msra.mxu0 0.0
    %116 = vmatprep.subr.mxu0 0.0
    %117 = vmatpush1.msra.mxu0 0.0
    %118 = vmatprep.subr.mxu0 0.0
    %119 = vmatpush1.msra.mxu0 0.0
    %120 = vmatprep.subr.mxu0 0.0
    %121 = vmatpush1.msra.mxu0 0.0
    %122 = vmatprep.subr.mxu0 0.0
    %123 = vmatpush1.msra.mxu0 0.0
    %124 = vmatprep.subr.mxu0 0.0
    %125 = vmatpush1.msra.mxu0 0.0
    %126 = vmatprep.subr.mxu0 0.0
    %127 = vmatpush1.msra.mxu0 0.0
    %128 = vmatprep.subr.mxu0 0.0
    %129 = vmatpush1.msra.mxu0 0.0
    %130 = vmatprep.subr.mxu0 0.0
    %131 = vmatpush1.msra.mxu0 0.0
    %132 = vmatprep.subr.mxu0 0.0
    %133 = vmatpush1.msra.mxu0 %v97
    %134 = vmatprep.subr.mxu0 0.0
    %135 = vmatpush1.msra.mxu0 %v96
    %136 = vmatprep.subr.mxu0 0.0
    %137 = vmatpush1.msra.mxu0 %v95
    %138 = vmatprep.subr.mxu0 0.0
    %139 = vmatpush1.msra.mxu0 %v94
    %140 = vmatprep.subr.mxu0 0.0
    %141 = vmatpush2.msra.mxu0 0.0
    %142 = vmatprep.subr.mxu0 0.0
    %143 = vmatpush2.msra.mxu0 0.0
    %144 = vmatprep.subr.mxu0 0.0
    %145 = vmatpush2.msra.mxu0 0.0
    %146 = vmatprep.subr.mxu0 0.0
    %147 = vmatpush2.msra.mxu0 0.0
    %148 = vmatprep.subr.mxu0 0.0
    %149 = vmatpush2.msra.mxu0 0.0
    %150 = vmatprep.subr.mxu0 0.0
    %151 = vmatpush2.msra.mxu0 0.0
    %152 = vmatprep.subr.mxu0 0.0
    %153 = vmatpush2.msra.mxu0 0.0
    %154 = vmatprep.subr.mxu0 0.0
    %155 = vmatpush2.msra.mxu0 0.0
    %156 = vmatprep.subr.mxu0 0.0
    %157 = vmatpush2.msra.mxu0 0.0
    %158 = vmatprep.subr.mxu0 0.0
    %159 = vmatpush2.msra.mxu0 0.0
    %160 = vmatprep.subr.mxu0 0.0
    %161 = vmatpush2.msra.mxu0 0.0
    %162 = vmatprep.subr.mxu0 0.0
    %163 = vmatpush2.msra.mxu0 0.0
    %164 = vmatprep.subr.mxu0 0.0
    %165 = vmatpush2.msra.mxu0 0.0
    %166 = vmatprep.subr.mxu0 0.0
    %167 = vmatpush2.msra.mxu0 0.0
    %168 = vmatprep.subr.mxu0 0.0
    %169 = vmatpush2.msra.mxu0 0.0
    %170 = vmatprep.subr.mxu0 0.0
    %171 = vmatpush2.msra.mxu0 0.0
    %172 = vmatprep.mubr.f32.mxu0 0.0
    %173 = vmatmul.mubr.f32.gmra.mxu0 %v103
    %v174 = vpop.f32.mrf.mxu0
    %v175 = vadd.f32 %v101, %v174
    %v176 = vpop.f32.mrf.mxu0
    %177 = vmatprep.mubr.f32.mxu0 0.0
    %178 = vmatmul.mubr.f32.gmra.mxu0 %v106
    %v179 = vpop.f32.mrf.mxu0
    %v180 = vadd.f32 %v101, %v179
    %v181 = vpop.f32.mrf.mxu0
    %182 = vdwg.mxu0
    %184 = vrot.lane.b32.xlu0 %v175, 96
    %v185 = vpop.permute.xlu0 %184
    %vm186 = vcmask 64512
    %v187 = vsel %vm186, %v175, 0
    %v189 = vsel %vm186, %v185, 0
    %191 = vmatprep.subr.mxu0 0.0
    %192 = vmatpush1.xpose.msra.mxu0 0.0
    %193 = vmatprep.subr.mxu0 0.0
    %194 = vmatpush1.xpose.msra.mxu0 0.0
    %195 = vmatprep.subr.mxu0 0.0
    %196 = vmatpush1.xpose.msra.mxu0 0.0
    %197 = vmatprep.subr.mxu0 0.0
    %198 = vmatpush1.xpose.msra.mxu0 0.0
    %199 = vmatprep.subr.mxu0 0.0
    %200 = vmatpush1.xpose.msra.mxu0 0.0
    %201 = vmatprep.subr.mxu0 0.0
    %202 = vmatpush1.xpose.msra.mxu0 0.0
    %203 = vmatprep.subr.mxu0 0.0
    %204 = vmatpush1.xpose.msra.mxu0 0.0
    %205 = vmatprep.subr.mxu0 0.0
    %206 = vmatpush1.xpose.msra.mxu0 0.0
    %207 = vmatprep.subr.mxu0 0.0
    %208 = vmatpush1.xpose.msra.mxu0 0.0
    %209 = vmatprep.subr.mxu0 0.0
    %210 = vmatpush1.xpose.msra.mxu0 0.0
    %211 = vmatprep.subr.mxu0 0.0
    %212 = vmatpush1.xpose.msra.mxu0 0.0
    %213 = vmatprep.subr.mxu0 0.0
    %214 = vmatpush1.xpose.msra.mxu0 0.0
    %215 = vmatprep.subr.mxu0 0.0
    %216 = vmatpush1.xpose.msra.mxu0 0.0
    %217 = vmatprep.subr.mxu0 0.0
    %218 = vmatpush1.xpose.msra.mxu0 0.0
    %219 = vmatprep.subr.mxu0 0.0
    %220 = vmatpush1.xpose.msra.mxu0 0.0
    %221 = vmatprep.subr.mxu0 0.0
    %222 = vmatpush1.xpose.msra.mxu0 %v189
    %223 = vmatprep.subr.mxu0 0.0
    %224 = vmatpush2.xpose.msra.mxu0 0.0
    %225 = vmatprep.subr.mxu0 0.0
    %226 = vmatpush2.xpose.msra.mxu0 0.0
    %227 = vmatprep.subr.mxu0 0.0
    %228 = vmatpush2.xpose.msra.mxu0 0.0
    %229 = vmatprep.subr.mxu0 0.0
    %230 = vmatpush2.xpose.msra.mxu0 0.0
    %231 = vmatprep.subr.mxu0 0.0
    %232 = vmatpush2.xpose.msra.mxu0 0.0
    %233 = vmatprep.subr.mxu0 0.0
    %234 = vmatpush2.xpose.msra.mxu0 0.0
    %235 = vmatprep.subr.mxu0 0.0
    %236 = vmatpush2.xpose.msra.mxu0 0.0
    %237 = vmatprep.subr.mxu0 0.0
    %238 = vmatpush2.xpose.msra.mxu0 0.0
    %239 = vmatprep.subr.mxu0 0.0
    %240 = vmatpush2.xpose.msra.mxu0 0.0
    %241 = vmatprep.subr.mxu0 0.0
    %242 = vmatpush2.xpose.msra.mxu0 0.0
    %243 = vmatprep.subr.mxu0 0.0
    %244 = vmatpush2.xpose.msra.mxu0 0.0
    %245 = vmatprep.subr.mxu0 0.0
    %246 = vmatpush2.xpose.msra.mxu0 0.0
    %247 = vmatprep.subr.mxu0 0.0
    %248 = vmatpush2.xpose.msra.mxu0 0.0
    %249 = vmatprep.subr.mxu0 0.0
    %250 = vmatpush2.xpose.msra.mxu0 0.0
    %251 = vmatprep.subr.mxu0 0.0
    %252 = vmatpush2.xpose.msra.mxu0 0.0
    %253 = vmatprep.subr.mxu0 0.0
    %254 = vmatpush2.xpose.msra.mxu0 0.0
    %255 = vmatprep.mubr.f32.mxu0 0.0
    %256 = vmatmul.mubr.f32.gmra.mxu0 %v187
    %v257 = vpop.f32.mrf.mxu0
    %v258 = vadd.f32 0.0, %v257
    %v259 = vpop.f32.mrf.mxu0
    %260 = vdwg.mxu0
    %262 = vrot.lane.b32.xlu0 %v180, 96
    %v263 = vpop.permute.xlu0 %262
    %v264 = vsel %vm186, %v180, 0
    %v266 = vsel %vm186, %v263, 0
    %268 = vmatprep.subr.mxu0 0.0
    %269 = vmatpush1.xpose.msra.mxu0 0.0
    %270 = vmatprep.subr.mxu0 0.0
    %271 = vmatpush1.xpose.msra.mxu0 0.0
    %272 = vmatprep.subr.mxu0 0.0
    %273 = vmatpush1.xpose.msra.mxu0 0.0
    %274 = vmatprep.subr.mxu0 0.0
    %275 = vmatpush1.xpose.msra.mxu0 0.0
    %276 = vmatprep.subr.mxu0 0.0
    %277 = vmatpush1.xpose.msra.mxu0 0.0
    %278 = vmatprep.subr.mxu0 0.0
    %279 = vmatpush1.xpose.msra.mxu0 0.0
    %280 = vmatprep.subr.mxu0 0.0
    %281 = vmatpush1.xpose.msra.mxu0 0.0
    %282 = vmatprep.subr.mxu0 0.0
    %283 = vmatpush1.xpose.msra.mxu0 0.0
    %284 = vmatprep.subr.mxu0 0.0
    %285 = vmatpush1.xpose.msra.mxu0 0.0
    %286 = vmatprep.subr.mxu0 0.0
    %287 = vmatpush1.xpose.msra.mxu0 0.0
    %288 = vmatprep.subr.mxu0 0.0
    %289 = vmatpush1.xpose.msra.mxu0 0.0
    %290 = vmatprep.subr.mxu0 0.0
    %291 = vmatpush1.xpose.msra.mxu0 0.0
    %292 = vmatprep.subr.mxu0 0.0
    %293 = vmatpush1.xpose.msra.mxu0 0.0
    %294 = vmatprep.subr.mxu0 0.0
    %295 = vmatpush1.xpose.msra.mxu0 0.0
    %296 = vmatprep.subr.mxu0 0.0
    %297 = vmatpush1.xpose.msra.mxu0 0.0
    %298 = vmatprep.subr.mxu0 0.0
    %299 = vmatpush1.xpose.msra.mxu0 %v266
    %300 = vmatprep.subr.mxu0 0.0
    %301 = vmatpush2.xpose.msra.mxu0 0.0
    %302 = vmatprep.subr.mxu0 0.0
    %303 = vmatpush2.xpose.msra.mxu0 0.0
    %304 = vmatprep.subr.mxu0 0.0
    %305 = vmatpush2.xpose.msra.mxu0 0.0
    %306 = vmatprep.subr.mxu0 0.0
    %307 = vmatpush2.xpose.msra.mxu0 0.0
    %308 = vmatprep.subr.mxu0 0.0
    %309 = vmatpush2.xpose.msra.mxu0 0.0
    %310 = vmatprep.subr.mxu0 0.0
    %311 = vmatpush2.xpose.msra.mxu0 0.0
    %312 = vmatprep.subr.mxu0 0.0
    %313 = vmatpush2.xpose.msra.mxu0 0.0
    %314 = vmatprep.subr.mxu0 0.0
    %315 = vmatpush2.xpose.msra.mxu0 0.0
    %316 = vmatprep.subr.mxu0 0.0
    %317 = vmatpush2.xpose.msra.mxu0 0.0
    %318 = vmatprep.subr.mxu0 0.0
    %319 = vmatpush2.xpose.msra.mxu0 0.0
    %320 = vmatprep.subr.mxu0 0.0
    %321 = vmatpush2.xpose.msra.mxu0 0.0
    %322 = vmatprep.subr.mxu0 0.0
    %323 = vmatpush2.xpose.msra.mxu0 0.0
    %324 = vmatprep.subr.mxu0 0.0
    %325 = vmatpush2.xpose.msra.mxu0 0.0
    %326 = vmatprep.subr.mxu0 0.0
    %327 = vmatpush2.xpose.msra.mxu0 0.0
    %328 = vmatprep.subr.mxu0 0.0
    %329 = vmatpush2.xpose.msra.mxu0 0.0
    %330 = vmatprep.subr.mxu0 0.0
    %331 = vmatpush2.xpose.msra.mxu0 0.0
    %332 = vmatprep.mubr.f32.mxu0 0.0
    %333 = vmatmul.mubr.f32.gmra.mxu0 %v264
    %v334 = vpop.f32.mrf.mxu0
    %v335 = vadd.f32 0.0, %v334
    %v336 = vpop.f32.mrf.mxu0
    %337 = vdwg.mxu0
    %v338 = vmul.f32 %v258, 0.35355338
    %v339 = vmul.f32 %v335, 0.35355338
    %v340 = vadd.f32 %v338, %v49
    %v341 = vadd.f32 %v339, %v49
    %v342 = vsel %vm186, %v340, -inf
    %343 = vmax.xlane.f32.xlu0 %v342
    %v344 = vpop.xlane.xlu0 %343
    %v345 = vsel %vm186, %v341, -inf
    %346 = vmax.xlane.f32.xlu0 %v345
    %v347 = vpop.xlane.xlu0 %346
    %v348 = vsub.f32 %v340, %v344
    %v349 = vsub.f32 %v341, %v347
    %v350 = vmul.f32 %v348, 1.442695
    %v351 = vpow.pop %v350
    %v352 = vmul.f32 %v349, 1.442695
    %v353 = vpow.pop %v352
    %v354 = vsel %vm186, %v351, 0.0
    %355 = vadd.xlane.f32.xlu0 %v354
    %v356 = vpop.xlane.xlu0 %355
    %v357 = vsel %vm186, %v353, 0.0
    %358 = vadd.xlane.f32.xlu0 %v357
    %v359 = vpop.xlane.xlu0 %358
    %v360 = vrcp.pop %v356
    %v361 = vrcp.pop %v359
    %v362 = vmul.f32 %v351, %v360
    %v363 = vmul.f32 %v353, %v361
    %364 = vrot.lane.b32.xlu0 %v175, 64
    %v365 = vpop.permute.xlu0 %364
    %v368 = vsel %vm186, %v362, 0
    %370 = vmatprep.subr.mxu0 0.0
    %371 = vmatpush1.msra.mxu0 0.0
    %372 = vmatprep.subr.mxu0 0.0
    %373 = vmatpush1.msra.mxu0 0.0
    %374 = vmatprep.subr.mxu0 0.0
    %375 = vmatpush1.msra.mxu0 0.0
    %376 = vmatprep.subr.mxu0 0.0
    %377 = vmatpush1.msra.mxu0 0.0
    %378 = vmatprep.subr.mxu0 0.0
    %379 = vmatpush1.msra.mxu0 0.0
    %380 = vmatprep.subr.mxu0 0.0
    %381 = vmatpush1.msra.mxu0 0.0
    %382 = vmatprep.subr.mxu0 0.0
    %383 = vmatpush1.msra.mxu0 0.0
    %384 = vmatprep.subr.mxu0 0.0
    %385 = vmatpush1.msra.mxu0 0.0
    %386 = vmatprep.subr.mxu0 0.0
    %387 = vmatpush1.msra.mxu0 0.0
    %388 = vmatprep.subr.mxu0 0.0
    %389 = vmatpush1.msra.mxu0 0.0
    %390 = vmatprep.subr.mxu0 0.0
    %391 = vmatpush1.msra.mxu0 0.0
    %392 = vmatprep.subr.mxu0 0.0
    %393 = vmatpush1.msra.mxu0 0.0
    %394 = vmatprep.subr.mxu0 0.0
    %395 = vmatpush1.msra.mxu0 0.0
    %396 = vmatprep.subr.mxu0 0.0
    %397 = vmatpush1.msra.mxu0 0.0
    %398 = vmatprep.subr.mxu0 0.0
    %399 = vmatpush1.msra.mxu0 0.0
    %400 = vmatprep.subr.mxu0 0.0
    %401 = vmatpush1.msra.mxu0 %v365
    %402 = vmatprep.subr.mxu0 0.0
    %403 = vmatpush2.msra.mxu0 0.0
    %404 = vmatprep.subr.mxu0 0.0
    %405 = vmatpush2.msra.mxu0 0.0
    %406 = vmatprep.subr.mxu0 0.0
    %407 = vmatpush2.msra.mxu0 0.0
    %408 = vmatprep.subr.mxu0 0.0
    %409 = vmatpush2.msra.mxu0 0.0
    %410 = vmatprep.subr.mxu0 0.0
    %411 = vmatpush2.msra.mxu0 0.0
    %412 = vmatprep.subr.mxu0 0.0
    %413 = vmatpush2.msra.mxu0 0.0
    %414 = vmatprep.subr.mxu0 0.0
    %415 = vmatpush2.msra.mxu0 0.0
    %416 = vmatprep.subr.mxu0 0.0
    %417 = vmatpush2.msra.mxu0 0.0
    %418 = vmatprep.subr.mxu0 0.0
    %419 = vmatpush2.msra.mxu0 0.0
    %420 = vmatprep.subr.mxu0 0.0
    %421 = vmatpush2.msra.mxu0 0.0
    %422 = vmatprep.subr.mxu0 0.0
    %423 = vmatpush2.msra.mxu0 0.0
    %424 = vmatprep.subr.mxu0 0.0
    %425 = vmatpush2.msra.mxu0 0.0
    %426 = vmatprep.subr.mxu0 0.0
    %427 = vmatpush2.msra.mxu0 0.0
    %428 = vmatprep.subr.mxu0 0.0
    %429 = vmatpush2.msra.mxu0 0.0
    %430 = vmatprep.subr.mxu0 0.0
    %431 = vmatpush2.msra.mxu0 0.0
    %432 = vmatprep.subr.mxu0 0.0
    %433 = vmatpush2.msra.mxu0 0.0
    %434 = vmatprep.mubr.f32.mxu0 0.0
    %435 = vmatmul.mubr.f32.gmra.mxu0 %v368
    %v436 = vpop.f32.mrf.mxu0
    %v437 = vadd.f32 0.0, %v436
    %v438 = vpop.f32.mrf.mxu0
    %439 = vdwg.mxu0
    %440 = vrot.lane.b32.xlu0 %v180, 64
    %v441 = vpop.permute.xlu0 %440
    %v444 = vsel %vm186, %v363, 0
    %446 = vmatprep.subr.mxu0 0.0
    %447 = vmatpush1.msra.mxu0 0.0
    %448 = vmatprep.subr.mxu0 0.0
    %449 = vmatpush1.msra.mxu0 0.0
    %450 = vmatprep.subr.mxu0 0.0
    %451 = vmatpush1.msra.mxu0 0.0
    %452 = vmatprep.subr.mxu0 0.0
    %453 = vmatpush1.msra.mxu0 0.0
    %454 = vmatprep.subr.mxu0 0.0
    %455 = vmatpush1.msra.mxu0 0.0
    %456 = vmatprep.subr.mxu0 0.0
    %457 = vmatpush1.msra.mxu0 0.0
    %458 = vmatprep.subr.mxu0 0.0
    %459 = vmatpush1.msra.mxu0 0.0
    %460 = vmatprep.subr.mxu0 0.0
    %461 = vmatpush1.msra.mxu0 0.0
    %462 = vmatprep.subr.mxu0 0.0
    %463 = vmatpush1.msra.mxu0 0.0
    %464 = vmatprep.subr.mxu0 0.0
    %465 = vmatpush1.msra.mxu0 0.0
    %466 = vmatprep.subr.mxu0 0.0
    %467 = vmatpush1.msra.mxu0 0.0
    %468 = vmatprep.subr.mxu0 0.0
    %469 = vmatpush1.msra.mxu0 0.0
    %470 = vmatprep.subr.mxu0 0.0
    %471 = vmatpush1.msra.mxu0 0.0
    %472 = vmatprep.subr.mxu0 0.0
    %473 = vmatpush1.msra.mxu0 0.0
    %474 = vmatprep.subr.mxu0 0.0
    %475 = vmatpush1.msra.mxu0 0.0
    %476 = vmatprep.subr.mxu0 0.0
    %477 = vmatpush1.msra.mxu0 %v441
    %478 = vmatprep.subr.mxu0 0.0
    %479 = vmatpush2.msra.mxu0 0.0
    %480 = vmatprep.subr.mxu0 0.0
    %481 = vmatpush2.msra.mxu0 0.0
    %482 = vmatprep.subr.mxu0 0.0
    %483 = vmatpush2.msra.mxu0 0.0
    %484 = vmatprep.subr.mxu0 0.0
    %485 = vmatpush2.msra.mxu0 0.0
    %486 = vmatprep.subr.mxu0 0.0
    %487 = vmatpush2.msra.mxu0 0.0
    %488 = vmatprep.subr.mxu0 0.0
    %489 = vmatpush2.msra.mxu0 0.0
    %490 = vmatprep.subr.mxu0 0.0
    %491 = vmatpush2.msra.mxu0 0.0
    %492 = vmatprep.subr.mxu0 0.0
    %493 = vmatpush2.msra.mxu0 0.0
    %494 = vmatprep.subr.mxu0 0.0
    %495 = vmatpush2.msra.mxu0 0.0
    %496 = vmatprep.subr.mxu0 0.0
    %497 = vmatpush2.msra.mxu0 0.0
    %498 = vmatprep.subr.mxu0 0.0
    %499 = vmatpush2.msra.mxu0 0.0
    %500 = vmatprep.subr.mxu0 0.0
    %501 = vmatpush2.msra.mxu0 0.0
    %502 = vmatprep.subr.mxu0 0.0
    %503 = vmatpush2.msra.mxu0 0.0
    %504 = vmatprep.subr.mxu0 0.0
    %505 = vmatpush2.msra.mxu0 0.0
    %506 = vmatprep.subr.mxu0 0.0
    %507 = vmatpush2.msra.mxu0 0.0
    %508 = vmatprep.subr.mxu0 0.0
    %509 = vmatpush2.msra.mxu0 0.0
    %510 = vmatprep.mubr.f32.mxu0 0.0
    %511 = vmatmul.mubr.f32.gmra.mxu0 %v444
    %v512 = vpop.f32.mrf.mxu0
    %v513 = vadd.f32 0.0, %v512
    %v514 = vpop.f32.mrf.mxu0
    %515 = vdwg.mxu0
    %516 = vrot.lane.b32.xlu0 %v175, 120
    %v517 = vpop.permute.xlu0 %516
    %518 = vrot.lane.b32.xlu0 %v175, 88
    %v519 = vpop.permute.xlu0 %518
    %v520 = vsel %vm186, %v517, 0
    %v522 = vsel %vm186, %v519, 0
    %524 = vmatprep.subr.mxu0 0.0
    %525 = vmatpush1.xpose.msra.mxu0 0.0
    %526 = vmatprep.subr.mxu0 0.0
    %527 = vmatpush1.xpose.msra.mxu0 0.0
    %528 = vmatprep.subr.mxu0 0.0
    %529 = vmatpush1.xpose.msra.mxu0 0.0
    %530 = vmatprep.subr.mxu0 0.0
    %531 = vmatpush1.xpose.msra.mxu0 0.0
    %532 = vmatprep.subr.mxu0 0.0
    %533 = vmatpush1.xpose.msra.mxu0 0.0
    %534 = vmatprep.subr.mxu0 0.0
    %535 = vmatpush1.xpose.msra.mxu0 0.0
    %536 = vmatprep.subr.mxu0 0.0
    %537 = vmatpush1.xpose.msra.mxu0 0.0
    %538 = vmatprep.subr.mxu0 0.0
    %539 = vmatpush1.xpose.msra.mxu0 0.0
    %540 = vmatprep.subr.mxu0 0.0
    %541 = vmatpush1.xpose.msra.mxu0 0.0
    %542 = vmatprep.subr.mxu0 0.0
    %543 = vmatpush1.xpose.msra.mxu0 0.0
    %544 = vmatprep.subr.mxu0 0.0
    %545 = vmatpush1.xpose.msra.mxu0 0.0
    %546 = vmatprep.subr.mxu0 0.0
    %547 = vmatpush1.xpose.msra.mxu0 0.0
    %548 = vmatprep.subr.mxu0 0.0
    %549 = vmatpush1.xpose.msra.mxu0 0.0
    %550 = vmatprep.subr.mxu0 0.0
    %551 = vmatpush1.xpose.msra.mxu0 0.0
    %552 = vmatprep.subr.mxu0 0.0
    %553 = vmatpush1.xpose.msra.mxu0 0.0
    %554 = vmatprep.subr.mxu0 0.0
    %555 = vmatpush1.xpose.msra.mxu0 %v522
    %556 = vmatprep.subr.mxu0 0.0
    %557 = vmatpush2.xpose.msra.mxu0 0.0
    %558 = vmatprep.subr.mxu0 0.0
    %559 = vmatpush2.xpose.msra.mxu0 0.0
    %560 = vmatprep.subr.mxu0 0.0
    %561 = vmatpush2.xpose.msra.mxu0 0.0
    %562 = vmatprep.subr.mxu0 0.0
    %563 = vmatpush2.xpose.msra.mxu0 0.0
    %564 = vmatprep.subr.mxu0 0.0
    %565 = vmatpush2.xpose.msra.mxu0 0.0
    %566 = vmatprep.subr.mxu0 0.0
    %567 = vmatpush2.xpose.msra.mxu0 0.0
    %568 = vmatprep.subr.mxu0 0.0
    %569 = vmatpush2.xpose.msra.mxu0 0.0
    %570 = vmatprep.subr.mxu0 0.0
    %571 = vmatpush2.xpose.msra.mxu0 0.0
    %572 = vmatprep.subr.mxu0 0.0
    %573 = vmatpush2.xpose.msra.mxu0 0.0
    %574 = vmatprep.subr.mxu0 0.0
    %575 = vmatpush2.xpose.msra.mxu0 0.0
    %576 = vmatprep.subr.mxu0 0.0
    %577 = vmatpush2.xpose.msra.mxu0 0.0
    %578 = vmatprep.subr.mxu0 0.0
    %579 = vmatpush2.xpose.msra.mxu0 0.0
    %580 = vmatprep.subr.mxu0 0.0
    %581 = vmatpush2.xpose.msra.mxu0 0.0
    %582 = vmatprep.subr.mxu0 0.0
    %583 = vmatpush2.xpose.msra.mxu0 0.0
    %584 = vmatprep.subr.mxu0 0.0
    %585 = vmatpush2.xpose.msra.mxu0 0.0
    %586 = vmatprep.subr.mxu0 0.0
    %587 = vmatpush2.xpose.msra.mxu0 0.0
    %588 = vmatprep.mubr.f32.mxu0 0.0
    %589 = vmatmul.mubr.f32.gmra.mxu0 %v520
    %v590 = vpop.f32.mrf.mxu0
    %v591 = vadd.f32 0.0, %v590
    %v592 = vpop.f32.mrf.mxu0
    %593 = vdwg.mxu0
    %594 = vrot.lane.b32.xlu0 %v180, 120
    %v595 = vpop.permute.xlu0 %594
    %596 = vrot.lane.b32.xlu0 %v180, 88
    %v597 = vpop.permute.xlu0 %596
    %v598 = vsel %vm186, %v595, 0
    %v600 = vsel %vm186, %v597, 0
    %602 = vmatprep.subr.mxu0 0.0
    %603 = vmatpush1.xpose.msra.mxu0 0.0
    %604 = vmatprep.subr.mxu0 0.0
    %605 = vmatpush1.xpose.msra.mxu0 0.0
    %606 = vmatprep.subr.mxu0 0.0
    %607 = vmatpush1.xpose.msra.mxu0 0.0
    %608 = vmatprep.subr.mxu0 0.0
    %609 = vmatpush1.xpose.msra.mxu0 0.0
    %610 = vmatprep.subr.mxu0 0.0
    %611 = vmatpush1.xpose.msra.mxu0 0.0
    %612 = vmatprep.subr.mxu0 0.0
    %613 = vmatpush1.xpose.msra.mxu0 0.0
    %614 = vmatprep.subr.mxu0 0.0
    %615 = vmatpush1.xpose.msra.mxu0 0.0
    %616 = vmatprep.subr.mxu0 0.0
    %617 = vmatpush1.xpose.msra.mxu0 0.0
    %618 = vmatprep.subr.mxu0 0.0
    %619 = vmatpush1.xpose.msra.mxu0 0.0
    %620 = vmatprep.subr.mxu0 0.0
    %621 = vmatpush1.xpose.msra.mxu0 0.0
    %622 = vmatprep.subr.mxu0 0.0
    %623 = vmatpush1.xpose.msra.mxu0 0.0
    %624 = vmatprep.subr.mxu0 0.0
    %625 = vmatpush1.xpose.msra.mxu0 0.0
    %626 = vmatprep.subr.mxu0 0.0
    %627 = vmatpush1.xpose.msra.mxu0 0.0
    %628 = vmatprep.subr.mxu0 0.0
    %629 = vmatpush1.xpose.msra.mxu0 0.0
    %630 = vmatprep.subr.mxu0 0.0
    %631 = vmatpush1.xpose.msra.mxu0 0.0
    %632 = vmatprep.subr.mxu0 0.0
    %633 = vmatpush1.xpose.msra.mxu0 %v600
    %634 = vmatprep.subr.mxu0 0.0
    %635 = vmatpush2.xpose.msra.mxu0 0.0
    %636 = vmatprep.subr.mxu0 0.0
    %637 = vmatpush2.xpose.msra.mxu0 0.0
    %638 = vmatprep.subr.mxu0 0.0
    %639 = vmatpush2.xpose.msra.mxu0 0.0
    %640 = vmatprep.subr.mxu0 0.0
    %641 = vmatpush2.xpose.msra.mxu0 0.0
    %642 = vmatprep.subr.mxu0 0.0
    %643 = vmatpush2.xpose.msra.mxu0 0.0
    %644 = vmatprep.subr.mxu0 0.0
    %645 = vmatpush2.xpose.msra.mxu0 0.0
    %646 = vmatprep.subr.mxu0 0.0
    %647 = vmatpush2.xpose.msra.mxu0 0.0
    %648 = vmatprep.subr.mxu0 0.0
    %649 = vmatpush2.xpose.msra.mxu0 0.0
    %650 = vmatprep.subr.mxu0 0.0
    %651 = vmatpush2.xpose.msra.mxu0 0.0
    %652 = vmatprep.subr.mxu0 0.0
    %653 = vmatpush2.xpose.msra.mxu0 0.0
    %654 = vmatprep.subr.mxu0 0.0
    %655 = vmatpush2.xpose.msra.mxu0 0.0
    %656 = vmatprep.subr.mxu0 0.0
    %657 = vmatpush2.xpose.msra.mxu0 0.0
    %658 = vmatprep.subr.mxu0 0.0
    %659 = vmatpush2.xpose.msra.mxu0 0.0
    %660 = vmatprep.subr.mxu0 0.0
    %661 = vmatpush2.xpose.msra.mxu0 0.0
    %662 = vmatprep.subr.mxu0 0.0
    %663 = vmatpush2.xpose.msra.mxu0 0.0
    %664 = vmatprep.subr.mxu0 0.0
    %665 = vmatpush2.xpose.msra.mxu0 0.0
    %666 = vmatprep.mubr.f32.mxu0 0.0
    %667 = vmatmul.mubr.f32.gmra.mxu0 %v598
    %v668 = vpop.f32.mrf.mxu0
    %v669 = vadd.f32 0.0, %v668
    %v670 = vpop.f32.mrf.mxu0
    %671 = vdwg.mxu0
    %v672 = vmul.f32 %v591, 0.35355338
    %v673 = vmul.f32 %v669, 0.35355338
    %v674 = vadd.f32 %v672, %v49
    %v675 = vadd.f32 %v673, %v49
    %v676 = vsel %vm186, %v674, -inf
    %677 = vmax.xlane.f32.xlu0 %v676
    %v678 = vpop.xlane.xlu0 %677
    %v679 = vsel %vm186, %v675, -inf
    %680 = vmax.xlane.f32.xlu0 %v679
    %v681 = vpop.xlane.xlu0 %680
    %v682 = vsub.f32 %v674, %v678
    %v683 = vsub.f32 %v675, %v681
    %v684 = vmul.f32 %v682, 1.442695
    %v685 = vpow.pop %v684
    %v686 = vmul.f32 %v683, 1.442695
    %v687 = vpow.pop %v686
    %v688 = vsel %vm186, %v685, 0.0
    %689 = vadd.xlane.f32.xlu0 %v688
    %v690 = vpop.xlane.xlu0 %689
    %v691 = vsel %vm186, %v687, 0.0
    %692 = vadd.xlane.f32.xlu0 %v691
    %v693 = vpop.xlane.xlu0 %692
    %v694 = vrcp.pop %v690
    %v695 = vrcp.pop %v693
    %v696 = vmul.f32 %v685, %v694
    %v697 = vmul.f32 %v687, %v695
    %698 = vrot.lane.b32.xlu0 %v175, 56
    %v699 = vpop.permute.xlu0 %698
    %v702 = vsel %vm186, %v696, 0
    %704 = vmatprep.subr.mxu0 0.0
    %705 = vmatpush1.msra.mxu0 0.0
    %706 = vmatprep.subr.mxu0 0.0
    %707 = vmatpush1.msra.mxu0 0.0
    %708 = vmatprep.subr.mxu0 0.0
    %709 = vmatpush1.msra.mxu0 0.0
    %710 = vmatprep.subr.mxu0 0.0
    %711 = vmatpush1.msra.mxu0 0.0
    %712 = vmatprep.subr.mxu0 0.0
    %713 = vmatpush1.msra.mxu0 0.0
    %714 = vmatprep.subr.mxu0 0.0
    %715 = vmatpush1.msra.mxu0 0.0
    %716 = vmatprep.subr.mxu0 0.0
    %717 = vmatpush1.msra.mxu0 0.0
    %718 = vmatprep.subr.mxu0 0.0
    %719 = vmatpush1.msra.mxu0 0.0
    %720 = vmatprep.subr.mxu0 0.0
    %721 = vmatpush1.msra.mxu0 0.0
    %722 = vmatprep.subr.mxu0 0.0
    %723 = vmatpush1.msra.mxu0 0.0
    %724 = vmatprep.subr.mxu0 0.0
    %725 = vmatpush1.msra.mxu0 0.0
    %726 = vmatprep.subr.mxu0 0.0
    %727 = vmatpush1.msra.mxu0 0.0
    %728 = vmatprep.subr.mxu0 0.0
    %729 = vmatpush1.msra.mxu0 0.0
    %730 = vmatprep.subr.mxu0 0.0
    %731 = vmatpush1.msra.mxu0 0.0
    %732 = vmatprep.subr.mxu0 0.0
    %733 = vmatpush1.msra.mxu0 0.0
    %734 = vmatprep.subr.mxu0 0.0
    %735 = vmatpush1.msra.mxu0 %v699
    %736 = vmatprep.subr.mxu0 0.0
    %737 = vmatpush2.msra.mxu0 0.0
    %738 = vmatprep.subr.mxu0 0.0
    %739 = vmatpush2.msra.mxu0 0.0
    %740 = vmatprep.subr.mxu0 0.0
    %741 = vmatpush2.msra.mxu0 0.0
    %742 = vmatprep.subr.mxu0 0.0
    %743 = vmatpush2.msra.mxu0 0.0
    %744 = vmatprep.subr.mxu0 0.0
    %745 = vmatpush2.msra.mxu0 0.0
    %746 = vmatprep.subr.mxu0 0.0
    %747 = vmatpush2.msra.mxu0 0.0
    %748 = vmatprep.subr.mxu0 0.0
    %749 = vmatpush2.msra.mxu0 0.0
    %750 = vmatprep.subr.mxu0 0.0
    %751 = vmatpush2.msra.mxu0 0.0
    %752 = vmatprep.subr.mxu0 0.0
    %753 = vmatpush2.msra.mxu0 0.0
    %754 = vmatprep.subr.mxu0 0.0
    %755 = vmatpush2.msra.mxu0 0.0
    %756 = vmatprep.subr.mxu0 0.0
    %757 = vmatpush2.msra.mxu0 0.0
    %758 = vmatprep.subr.mxu0 0.0
    %759 = vmatpush2.msra.mxu0 0.0
    %760 = vmatprep.subr.mxu0 0.0
    %761 = vmatpush2.msra.mxu0 0.0
    %762 = vmatprep.subr.mxu0 0.0
    %763 = vmatpush2.msra.mxu0 0.0
    %764 = vmatprep.subr.mxu0 0.0
    %765 = vmatpush2.msra.mxu0 0.0
    %766 = vmatprep.subr.mxu0 0.0
    %767 = vmatpush2.msra.mxu0 0.0
    %768 = vmatprep.mubr.f32.mxu0 0.0
    %769 = vmatmul.mubr.f32.gmra.mxu0 %v702
    %v770 = vpop.f32.mrf.mxu0
    %v771 = vadd.f32 0.0, %v770
    %v772 = vpop.f32.mrf.mxu0
    %773 = vdwg.mxu0
    %774 = vrot.lane.b32.xlu0 %v180, 56
    %v775 = vpop.permute.xlu0 %774
    %v778 = vsel %vm186, %v697, 0
    %780 = vmatprep.subr.mxu0 0.0
    %781 = vmatpush1.msra.mxu0 0.0
    %782 = vmatprep.subr.mxu0 0.0
    %783 = vmatpush1.msra.mxu0 0.0
    %784 = vmatprep.subr.mxu0 0.0
    %785 = vmatpush1.msra.mxu0 0.0
    %786 = vmatprep.subr.mxu0 0.0
    %787 = vmatpush1.msra.mxu0 0.0
    %788 = vmatprep.subr.mxu0 0.0
    %789 = vmatpush1.msra.mxu0 0.0
    %790 = vmatprep.subr.mxu0 0.0
    %791 = vmatpush1.msra.mxu0 0.0
    %792 = vmatprep.subr.mxu0 0.0
    %793 = vmatpush1.msra.mxu0 0.0
    %794 = vmatprep.subr.mxu0 0.0
    %795 = vmatpush1.msra.mxu0 0.0
    %796 = vmatprep.subr.mxu0 0.0
    %797 = vmatpush1.msra.mxu0 0.0
    %798 = vmatprep.subr.mxu0 0.0
    %799 = vmatpush1.msra.mxu0 0.0
    %800 = vmatprep.subr.mxu0 0.0
    %801 = vmatpush1.msra.mxu0 0.0
    %802 = vmatprep.subr.mxu0 0.0
    %803 = vmatpush1.msra.mxu0 0.0
    %804 = vmatprep.subr.mxu0 0.0
    %805 = vmatpush1.msra.mxu0 0.0
    %806 = vmatprep.subr.mxu0 0.0
    %807 = vmatpush1.msra.mxu0 0.0
    %808 = vmatprep.subr.mxu0 0.0
    %809 = vmatpush1.msra.mxu0 0.0
    %810 = vmatprep.subr.mxu0 0.0
    %811 = vmatpush1.msra.mxu0 %v775
    %812 = vmatprep.subr.mxu0 0.0
    %813 = vmatpush2.msra.mxu0 0.0
    %814 = vmatprep.subr.mxu0 0.0
    %815 = vmatpush2.msra.mxu0 0.0
    %816 = vmatprep.subr.mxu0 0.0
    %817 = vmatpush2.msra.mxu0 0.0
    %818 = vmatprep.subr.mxu0 0.0
    %819 = vmatpush2.msra.mxu0 0.0
    %820 = vmatprep.subr.mxu0 0.0
    %821 = vmatpush2.msra.mxu0 0.0
    %822 = vmatprep.subr.mxu0 0.0
    %823 = vmatpush2.msra.mxu0 0.0
    %824 = vmatprep.subr.mxu0 0.0
    %825 = vmatpush2.msra.mxu0 0.0
    %826 = vmatprep.subr.mxu0 0.0
    %827 = vmatpush2.msra.mxu0 0.0
    %828 = vmatprep.subr.mxu0 0.0
    %829 = vmatpush2.msra.mxu0 0.0
    %830 = vmatprep.subr.mxu0 0.0
    %831 = vmatpush2.msra.mxu0 0.0
    %832 = vmatprep.subr.mxu0 0.0
    %833 = vmatpush2.msra.mxu0 0.0
    %834 = vmatprep.subr.mxu0 0.0
    %835 = vmatpush2.msra.mxu0 0.0
    %836 = vmatprep.subr.mxu0 0.0
    %837 = vmatpush2.msra.mxu0 0.0
    %838 = vmatprep.subr.mxu0 0.0
    %839 = vmatpush2.msra.mxu0 0.0
    %840 = vmatprep.subr.mxu0 0.0
    %841 = vmatpush2.msra.mxu0 0.0
    %842 = vmatprep.subr.mxu0 0.0
    %843 = vmatpush2.msra.mxu0 0.0
    %844 = vmatprep.mubr.f32.mxu0 0.0
    %845 = vmatmul.mubr.f32.gmra.mxu0 %v778
    %v846 = vpop.f32.mrf.mxu0
    %v847 = vadd.f32 0.0, %v846
    %v848 = vpop.f32.mrf.mxu0
    %849 = vdwg.mxu0
    %850 = vrot.lane.b32.xlu0 %v175, 112
    %v851 = vpop.permute.xlu0 %850
    %852 = vrot.lane.b32.xlu0 %v175, 80
    %v853 = vpop.permute.xlu0 %852
    %v854 = vsel %vm186, %v851, 0
    %v856 = vsel %vm186, %v853, 0
    %858 = vmatprep.subr.mxu0 0.0
    %859 = vmatpush1.xpose.msra.mxu0 0.0
    %860 = vmatprep.subr.mxu0 0.0
    %861 = vmatpush1.xpose.msra.mxu0 0.0
    %862 = vmatprep.subr.mxu0 0.0
    %863 = vmatpush1.xpose.msra.mxu0 0.0
    %864 = vmatprep.subr.mxu0 0.0
    %865 = vmatpush1.xpose.msra.mxu0 0.0
    %866 = vmatprep.subr.mxu0 0.0
    %867 = vmatpush1.xpose.msra.mxu0 0.0
    %868 = vmatprep.subr.mxu0 0.0
    %869 = vmatpush1.xpose.msra.mxu0 0.0
    %870 = vmatprep.subr.mxu0 0.0
    %871 = vmatpush1.xpose.msra.mxu0 0.0
    %872 = vmatprep.subr.mxu0 0.0
    %873 = vmatpush1.xpose.msra.mxu0 0.0
    %874 = vmatprep.subr.mxu0 0.0
    %875 = vmatpush1.xpose.msra.mxu0 0.0
    %876 = vmatprep.subr.mxu0 0.0
    %877 = vmatpush1.xpose.msra.mxu0 0.0
    %878 = vmatprep.subr.mxu0 0.0
    %879 = vmatpush1.xpose.msra.mxu0 0.0
    %880 = vmatprep.subr.mxu0 0.0
    %881 = vmatpush1.xpose.msra.mxu0 0.0
    %882 = vmatprep.subr.mxu0 0.0
    %883 = vmatpush1.xpose.msra.mxu0 0.0
    %884 = vmatprep.subr.mxu0 0.0
    %885 = vmatpush1.xpose.msra.mxu0 0.0
    %886 = vmatprep.subr.mxu0 0.0
    %887 = vmatpush1.xpose.msra.mxu0 0.0
    %888 = vmatprep.subr.mxu0 0.0
    %889 = vmatpush1.xpose.msra.mxu0 %v856
    %890 = vmatprep.subr.mxu0 0.0
    %891 = vmatpush2.xpose.msra.mxu0 0.0
    %892 = vmatprep.subr.mxu0 0.0
    %893 = vmatpush2.xpose.msra.mxu0 0.0
    %894 = vmatprep.subr.mxu0 0.0
    %895 = vmatpush2.xpose.msra.mxu0 0.0
    %896 = vmatprep.subr.mxu0 0.0
    %897 = vmatpush2.xpose.msra.mxu0 0.0
    %898 = vmatprep.subr.mxu0 0.0
    %899 = vmatpush2.xpose.msra.mxu0 0.0
    %900 = vmatprep.subr.mxu0 0.0
    %901 = vmatpush2.xpose.msra.mxu0 0.0
    %902 = vmatprep.subr.mxu0 0.0
    %903 = vmatpush2.xpose.msra.mxu0 0.0
    %904 = vmatprep.subr.mxu0 0.0
    %905 = vmatpush2.xpose.msra.mxu0 0.0
    %906 = vmatprep.subr.mxu0 0.0
    %907 = vmatpush2.xpose.msra.mxu0 0.0
    %908 = vmatprep.subr.mxu0 0.0
    %909 = vmatpush2.xpose.msra.mxu0 0.0
    %910 = vmatprep.subr.mxu0 0.0
    %911 = vmatpush2.xpose.msra.mxu0 0.0
    %912 = vmatprep.subr.mxu0 0.0
    %913 = vmatpush2.xpose.msra.mxu0 0.0
    %914 = vmatprep.subr.mxu0 0.0
    %915 = vmatpush2.xpose.msra.mxu0 0.0
    %916 = vmatprep.subr.mxu0 0.0
    %917 = vmatpush2.xpose.msra.mxu0 0.0
    %918 = vmatprep.subr.mxu0 0.0
    %919 = vmatpush2.xpose.msra.mxu0 0.0
    %920 = vmatprep.subr.mxu0 0.0
    %921 = vmatpush2.xpose.msra.mxu0 0.0
    %922 = vmatprep.mubr.f32.mxu0 0.0
    %923 = vmatmul.mubr.f32.gmra.mxu0 %v854
    %v924 = vpop.f32.mrf.mxu0
    %v925 = vadd.f32 0.0, %v924
    %v926 = vpop.f32.mrf.mxu0
    %927 = vdwg.mxu0
    %928 = vrot.lane.b32.xlu0 %v180, 112
    %v929 = vpop.permute.xlu0 %928
    %930 = vrot.lane.b32.xlu0 %v180, 80
    %v931 = vpop.permute.xlu0 %930
    %v932 = vsel %vm186, %v929, 0
    %v934 = vsel %vm186, %v931, 0
    %936 = vmatprep.subr.mxu0 0.0
    %937 = vmatpush1.xpose.msra.mxu0 0.0
    %938 = vmatprep.subr.mxu0 0.0
    %939 = vmatpush1.xpose.msra.mxu0 0.0
    %940 = vmatprep.subr.mxu0 0.0
    %941 = vmatpush1.xpose.msra.mxu0 0.0
    %942 = vmatprep.subr.mxu0 0.0
    %943 = vmatpush1.xpose.msra.mxu0 0.0
    %944 = vmatprep.subr.mxu0 0.0
    %945 = vmatpush1.xpose.msra.mxu0 0.0
    %946 = vmatprep.subr.mxu0 0.0
    %947 = vmatpush1.xpose.msra.mxu0 0.0
    %948 = vmatprep.subr.mxu0 0.0
    %949 = vmatpush1.xpose.msra.mxu0 0.0
    %950 = vmatprep.subr.mxu0 0.0
    %951 = vmatpush1.xpose.msra.mxu0 0.0
    %952 = vmatprep.subr.mxu0 0.0
    %953 = vmatpush1.xpose.msra.mxu0 0.0
    %954 = vmatprep.subr.mxu0 0.0
    %955 = vmatpush1.xpose.msra.mxu0 0.0
    %956 = vmatprep.subr.mxu0 0.0
    %957 = vmatpush1.xpose.msra.mxu0 0.0
    %958 = vmatprep.subr.mxu0 0.0
    %959 = vmatpush1.xpose.msra.mxu0 0.0
    %960 = vmatprep.subr.mxu0 0.0
    %961 = vmatpush1.xpose.msra.mxu0 0.0
    %962 = vmatprep.subr.mxu0 0.0
    %963 = vmatpush1.xpose.msra.mxu0 0.0
    %964 = vmatprep.subr.mxu0 0.0
    %965 = vmatpush1.xpose.msra.mxu0 0.0
    %966 = vmatprep.subr.mxu0 0.0
    %967 = vmatpush1.xpose.msra.mxu0 %v934
    %968 = vmatprep.subr.mxu0 0.0
    %969 = vmatpush2.xpose.msra.mxu0 0.0
    %970 = vmatprep.subr.mxu0 0.0
    %971 = vmatpush2.xpose.msra.mxu0 0.0
    %972 = vmatprep.subr.mxu0 0.0
    %973 = vmatpush2.xpose.msra.mxu0 0.0
    %974 = vmatprep.subr.mxu0 0.0
    %975 = vmatpush2.xpose.msra.mxu0 0.0
    %976 = vmatprep.subr.mxu0 0.0
    %977 = vmatpush2.xpose.msra.mxu0 0.0
    %978 = vmatprep.subr.mxu0 0.0
    %979 = vmatpush2.xpose.msra.mxu0 0.0
    %980 = vmatprep.subr.mxu0 0.0
    %981 = vmatpush2.xpose.msra.mxu0 0.0
    %982 = vmatprep.subr.mxu0 0.0
    %983 = vmatpush2.xpose.msra.mxu0 0.0
    %984 = vmatprep.subr.mxu0 0.0
    %985 = vmatpush2.xpose.msra.mxu0 0.0
    %986 = vmatprep.subr.mxu0 0.0
    %987 = vmatpush2.xpose.msra.mxu0 0.0
    %988 = vmatprep.subr.mxu0 0.0
    %989 = vmatpush2.xpose.msra.mxu0 0.0
    %990 = vmatprep.subr.mxu0 0.0
    %991 = vmatpush2.xpose.msra.mxu0 0.0
    %992 = vmatprep.subr.mxu0 0.0
    %993 = vmatpush2.xpose.msra.mxu0 0.0
    %994 = vmatprep.subr.mxu0 0.0
    %995 = vmatpush2.xpose.msra.mxu0 0.0
    %996 = vmatprep.subr.mxu0 0.0
    %997 = vmatpush2.xpose.msra.mxu0 0.0
    %998 = vmatprep.subr.mxu0 0.0
    %999 = vmatpush2.xpose.msra.mxu0 0.0
    %1000 = vmatprep.mubr.f32.mxu0 0.0
    %1001 = vmatmul.mubr.f32.gmra.mxu0 %v932
    %v1002 = vpop.f32.mrf.mxu0
    %v1003 = vadd.f32 0.0, %v1002
    %v1004 = vpop.f32.mrf.mxu0
    %1005 = vdwg.mxu0
    %v1006 = vmul.f32 %v925, 0.35355338
    %v1007 = vmul.f32 %v1003, 0.35355338
    %v1008 = vadd.f32 %v1006, %v49
    %v1009 = vadd.f32 %v1007, %v49
    %v1010 = vsel %vm186, %v1008, -inf
    %1011 = vmax.xlane.f32.xlu0 %v1010
    %v1012 = vpop.xlane.xlu0 %1011
    %v1013 = vsel %vm186, %v1009, -inf
    %1014 = vmax.xlane.f32.xlu0 %v1013
    %v1015 = vpop.xlane.xlu0 %1014
    %v1016 = vsub.f32 %v1008, %v1012
    %v1017 = vsub.f32 %v1009, %v1015
    %v1018 = vmul.f32 %v1016, 1.442695
    %v1019 = vpow.pop %v1018
    %v1020 = vmul.f32 %v1017, 1.442695
    %v1021 = vpow.pop %v1020
    %v1022 = vsel %vm186, %v1019, 0.0
    %1023 = vadd.xlane.f32.xlu0 %v1022
    %v1024 = vpop.xlane.xlu0 %1023
    %v1025 = vsel %vm186, %v1021, 0.0
    %1026 = vadd.xlane.f32.xlu0 %v1025
    %v1027 = vpop.xlane.xlu0 %1026
    %v1028 = vrcp.pop %v1024
    %v1029 = vrcp.pop %v1027
    %v1030 = vmul.f32 %v1019, %v1028
    %v1031 = vmul.f32 %v1021, %v1029
    %1032 = vrot.lane.b32.xlu0 %v175, 48
    %v1033 = vpop.permute.xlu0 %1032
    %v1036 = vsel %vm186, %v1030, 0
    %1038 = vmatprep.subr.mxu0 0.0
    %1039 = vmatpush1.msra.mxu0 0.0
    %1040 = vmatprep.subr.mxu0 0.0
    %1041 = vmatpush1.msra.mxu0 0.0
    %1042 = vmatprep.subr.mxu0 0.0
    %1043 = vmatpush1.msra.mxu0 0.0
    %1044 = vmatprep.subr.mxu0 0.0
    %1045 = vmatpush1.msra.mxu0 0.0
    %1046 = vmatprep.subr.mxu0 0.0
    %1047 = vmatpush1.msra.mxu0 0.0
    %1048 = vmatprep.subr.mxu0 0.0
    %1049 = vmatpush1.msra.mxu0 0.0
    %1050 = vmatprep.subr.mxu0 0.0
    %1051 = vmatpush1.msra.mxu0 0.0
    %1052 = vmatprep.subr.mxu0 0.0
    %1053 = vmatpush1.msra.mxu0 0.0
    %1054 = vmatprep.subr.mxu0 0.0
    %1055 = vmatpush1.msra.mxu0 0.0
    %1056 = vmatprep.subr.mxu0 0.0
    %1057 = vmatpush1.msra.mxu0 0.0
    %1058 = vmatprep.subr.mxu0 0.0
    %1059 = vmatpush1.msra.mxu0 0.0
    %1060 = vmatprep.subr.mxu0 0.0
    %1061 = vmatpush1.msra.mxu0 0.0
    %1062 = vmatprep.subr.mxu0 0.0
    %1063 = vmatpush1.msra.mxu0 0.0
    %1064 = vmatprep.subr.mxu0 0.0
    %1065 = vmatpush1.msra.mxu0 0.0
    %1066 = vmatprep.subr.mxu0 0.0
    %1067 = vmatpush1.msra.mxu0 0.0
    %1068 = vmatprep.subr.mxu0 0.0
    %1069 = vmatpush1.msra.mxu0 %v1033
    %1070 = vmatprep.subr.mxu0 0.0
    %1071 = vmatpush2.msra.mxu0 0.0
    %1072 = vmatprep.subr.mxu0 0.0
    %1073 = vmatpush2.msra.mxu0 0.0
    %1074 = vmatprep.subr.mxu0 0.0
    %1075 = vmatpush2.msra.mxu0 0.0
    %1076 = vmatprep.subr.mxu0 0.0
    %1077 = vmatpush2.msra.mxu0 0.0
    %1078 = vmatprep.subr.mxu0 0.0
    %1079 = vmatpush2.msra.mxu0 0.0
    %1080 = vmatprep.subr.mxu0 0.0
    %1081 = vmatpush2.msra.mxu0 0.0
    %1082 = vmatprep.subr.mxu0 0.0
    %1083 = vmatpush2.msra.mxu0 0.0
    %1084 = vmatprep.subr.mxu0 0.0
    %1085 = vmatpush2.msra.mxu0 0.0
    %1086 = vmatprep.subr.mxu0 0.0
    %1087 = vmatpush2.msra.mxu0 0.0
    %1088 = vmatprep.subr.mxu0 0.0
    %1089 = vmatpush2.msra.mxu0 0.0
    %1090 = vmatprep.subr.mxu0 0.0
    %1091 = vmatpush2.msra.mxu0 0.0
    %1092 = vmatprep.subr.mxu0 0.0
    %1093 = vmatpush2.msra.mxu0 0.0
    %1094 = vmatprep.subr.mxu0 0.0
    %1095 = vmatpush2.msra.mxu0 0.0
    %1096 = vmatprep.subr.mxu0 0.0
    %1097 = vmatpush2.msra.mxu0 0.0
    %1098 = vmatprep.subr.mxu0 0.0
    %1099 = vmatpush2.msra.mxu0 0.0
    %1100 = vmatprep.subr.mxu0 0.0
    %1101 = vmatpush2.msra.mxu0 0.0
    %1102 = vmatprep.mubr.f32.mxu0 0.0
    %1103 = vmatmul.mubr.f32.gmra.mxu0 %v1036
    %v1104 = vpop.f32.mrf.mxu0
    %v1105 = vadd.f32 0.0, %v1104
    %v1106 = vpop.f32.mrf.mxu0
    %1107 = vdwg.mxu0
    %1108 = vrot.lane.b32.xlu0 %v180, 48
    %v1109 = vpop.permute.xlu0 %1108
    %v1112 = vsel %vm186, %v1031, 0
    %1114 = vmatprep.subr.mxu0 0.0
    %1115 = vmatpush1.msra.mxu0 0.0
    %1116 = vmatprep.subr.mxu0 0.0
    %1117 = vmatpush1.msra.mxu0 0.0
    %1118 = vmatprep.subr.mxu0 0.0
    %1119 = vmatpush1.msra.mxu0 0.0
    %1120 = vmatprep.subr.mxu0 0.0
    %1121 = vmatpush1.msra.mxu0 0.0
    %1122 = vmatprep.subr.mxu0 0.0
    %1123 = vmatpush1.msra.mxu0 0.0
    %1124 = vmatprep.subr.mxu0 0.0
    %1125 = vmatpush1.msra.mxu0 0.0
    %1126 = vmatprep.subr.mxu0 0.0
    %1127 = vmatpush1.msra.mxu0 0.0
    %1128 = vmatprep.subr.mxu0 0.0
    %1129 = vmatpush1.msra.mxu0 0.0
    %1130 = vmatprep.subr.mxu0 0.0
    %1131 = vmatpush1.msra.mxu0 0.0
    %1132 = vmatprep.subr.mxu0 0.0
    %1133 = vmatpush1.msra.mxu0 0.0
    %1134 = vmatprep.subr.mxu0 0.0
    %1135 = vmatpush1.msra.mxu0 0.0
    %1136 = vmatprep.subr.mxu0 0.0
    %1137 = vmatpush1.msra.mxu0 0.0
    %1138 = vmatprep.subr.mxu0 0.0
    %1139 = vmatpush1.msra.mxu0 0.0
    %1140 = vmatprep.subr.mxu0 0.0
    %1141 = vmatpush1.msra.mxu0 0.0
    %1142 = vmatprep.subr.mxu0 0.0
    %1143 = vmatpush1.msra.mxu0 0.0
    %1144 = vmatprep.subr.mxu0 0.0
    %1145 = vmatpush1.msra.mxu0 %v1109
    %1146 = vmatprep.subr.mxu0 0.0
    %1147 = vmatpush2.msra.mxu0 0.0
    %1148 = vmatprep.subr.mxu0 0.0
    %1149 = vmatpush2.msra.mxu0 0.0
    %1150 = vmatprep.subr.mxu0 0.0
    %1151 = vmatpush2.msra.mxu0 0.0
    %1152 = vmatprep.subr.mxu0 0.0
    %1153 = vmatpush2.msra.mxu0 0.0
    %1154 = vmatprep.subr.mxu0 0.0
    %1155 = vmatpush2.msra.mxu0 0.0
    %1156 = vmatprep.subr.mxu0 0.0
    %1157 = vmatpush2.msra.mxu0 0.0
    %1158 = vmatprep.subr.mxu0 0.0
    %1159 = vmatpush2.msra.mxu0 0.0
    %1160 = vmatprep.subr.mxu0 0.0
    %1161 = vmatpush2.msra.mxu0 0.0
    %1162 = vmatprep.subr.mxu0 0.0
    %1163 = vmatpush2.msra.mxu0 0.0
    %1164 = vmatprep.subr.mxu0 0.0
    %1165 = vmatpush2.msra.mxu0 0.0
    %1166 = vmatprep.subr.mxu0 0.0
    %1167 = vmatpush2.msra.mxu0 0.0
    %1168 = vmatprep.subr.mxu0 0.0
    %1169 = vmatpush2.msra.mxu0 0.0
    %1170 = vmatprep.subr.mxu0 0.0
    %1171 = vmatpush2.msra.mxu0 0.0
    %1172 = vmatprep.subr.mxu0 0.0
    %1173 = vmatpush2.msra.mxu0 0.0
    %1174 = vmatprep.subr.mxu0 0.0
    %1175 = vmatpush2.msra.mxu0 0.0
    %1176 = vmatprep.subr.mxu0 0.0
    %1177 = vmatpush2.msra.mxu0 0.0
    %1178 = vmatprep.mubr.f32.mxu0 0.0
    %1179 = vmatmul.mubr.f32.gmra.mxu0 %v1112
    %v1180 = vpop.f32.mrf.mxu0
    %v1181 = vadd.f32 0.0, %v1180
    %v1182 = vpop.f32.mrf.mxu0
    %1183 = vdwg.mxu0
    %1184 = vrot.lane.b32.xlu0 %v175, 104
    %v1185 = vpop.permute.xlu0 %1184
    %1186 = vrot.lane.b32.xlu0 %v175, 72
    %v1187 = vpop.permute.xlu0 %1186
    %v1188 = vsel %vm186, %v1185, 0
    %v1190 = vsel %vm186, %v1187, 0
    %1192 = vmatprep.subr.mxu0 0.0
    %1193 = vmatpush1.xpose.msra.mxu0 0.0
    %1194 = vmatprep.subr.mxu0 0.0
    %1195 = vmatpush1.xpose.msra.mxu0 0.0
    %1196 = vmatprep.subr.mxu0 0.0
    %1197 = vmatpush1.xpose.msra.mxu0 0.0
    %1198 = vmatprep.subr.mxu0 0.0
    %1199 = vmatpush1.xpose.msra.mxu0 0.0
    %1200 = vmatprep.subr.mxu0 0.0
    %1201 = vmatpush1.xpose.msra.mxu0 0.0
    %1202 = vmatprep.subr.mxu0 0.0
    %1203 = vmatpush1.xpose.msra.mxu0 0.0
    %1204 = vmatprep.subr.mxu0 0.0
    %1205 = vmatpush1.xpose.msra.mxu0 0.0
    %1206 = vmatprep.subr.mxu0 0.0
    %1207 = vmatpush1.xpose.msra.mxu0 0.0
    %1208 = vmatprep.subr.mxu0 0.0
    %1209 = vmatpush1.xpose.msra.mxu0 0.0
    %1210 = vmatprep.subr.mxu0 0.0
    %1211 = vmatpush1.xpose.msra.mxu0 0.0
    %1212 = vmatprep.subr.mxu0 0.0
    %1213 = vmatpush1.xpose.msra.mxu0 0.0
    %1214 = vmatprep.subr.mxu0 0.0
    %1215 = vmatpush1.xpose.msra.mxu0 0.0
    %1216 = vmatprep.subr.mxu0 0.0
    %1217 = vmatpush1.xpose.msra.mxu0 0.0
    %1218 = vmatprep.subr.mxu0 0.0
    %1219 = vmatpush1.xpose.msra.mxu0 0.0
    %1220 = vmatprep.subr.mxu0 0.0
    %1221 = vmatpush1.xpose.msra.mxu0 0.0
    %1222 = vmatprep.subr.mxu0 0.0
    %1223 = vmatpush1.xpose.msra.mxu0 %v1190
    %1224 = vmatprep.subr.mxu0 0.0
    %1225 = vmatpush2.xpose.msra.mxu0 0.0
    %1226 = vmatprep.subr.mxu0 0.0
    %1227 = vmatpush2.xpose.msra.mxu0 0.0
    %1228 = vmatprep.subr.mxu0 0.0
    %1229 = vmatpush2.xpose.msra.mxu0 0.0
    %1230 = vmatprep.subr.mxu0 0.0
    %1231 = vmatpush2.xpose.msra.mxu0 0.0
    %1232 = vmatprep.subr.mxu0 0.0
    %1233 = vmatpush2.xpose.msra.mxu0 0.0
    %1234 = vmatprep.subr.mxu0 0.0
    %1235 = vmatpush2.xpose.msra.mxu0 0.0
    %1236 = vmatprep.subr.mxu0 0.0
    %1237 = vmatpush2.xpose.msra.mxu0 0.0
    %1238 = vmatprep.subr.mxu0 0.0
    %1239 = vmatpush2.xpose.msra.mxu0 0.0
    %1240 = vmatprep.subr.mxu0 0.0
    %1241 = vmatpush2.xpose.msra.mxu0 0.0
    %1242 = vmatprep.subr.mxu0 0.0
    %1243 = vmatpush2.xpose.msra.mxu0 0.0
    %1244 = vmatprep.subr.mxu0 0.0
    %1245 = vmatpush2.xpose.msra.mxu0 0.0
    %1246 = vmatprep.subr.mxu0 0.0
    %1247 = vmatpush2.xpose.msra.mxu0 0.0
    %1248 = vmatprep.subr.mxu0 0.0
    %1249 = vmatpush2.xpose.msra.mxu0 0.0
    %1250 = vmatprep.subr.mxu0 0.0
    %1251 = vmatpush2.xpose.msra.mxu0 0.0
    %1252 = vmatprep.subr.mxu0 0.0
    %1253 = vmatpush2.xpose.msra.mxu0 0.0
    %1254 = vmatprep.subr.mxu0 0.0
    %1255 = vmatpush2.xpose.msra.mxu0 0.0
    %1256 = vmatprep.mubr.f32.mxu0 0.0
    %1257 = vmatmul.mubr.f32.gmra.mxu0 %v1188
    %v1258 = vpop.f32.mrf.mxu0
    %v1259 = vadd.f32 0.0, %v1258
    %v1260 = vpop.f32.mrf.mxu0
    %1261 = vdwg.mxu0
    %1262 = vrot.lane.b32.xlu0 %v180, 104
    %v1263 = vpop.permute.xlu0 %1262
    %1264 = vrot.lane.b32.xlu0 %v180, 72
    %v1265 = vpop.permute.xlu0 %1264
    %v1266 = vsel %vm186, %v1263, 0
    %v1268 = vsel %vm186, %v1265, 0
    %1270 = vmatprep.subr.mxu0 0.0
    %1271 = vmatpush1.xpose.msra.mxu0 0.0
    %1272 = vmatprep.subr.mxu0 0.0
    %1273 = vmatpush1.xpose.msra.mxu0 0.0
    %1274 = vmatprep.subr.mxu0 0.0
    %1275 = vmatpush1.xpose.msra.mxu0 0.0
    %1276 = vmatprep.subr.mxu0 0.0
    %1277 = vmatpush1.xpose.msra.mxu0 0.0
    %1278 = vmatprep.subr.mxu0 0.0
    %1279 = vmatpush1.xpose.msra.mxu0 0.0
    %1280 = vmatprep.subr.mxu0 0.0
    %1281 = vmatpush1.xpose.msra.mxu0 0.0
    %1282 = vmatprep.subr.mxu0 0.0
    %1283 = vmatpush1.xpose.msra.mxu0 0.0
    %1284 = vmatprep.subr.mxu0 0.0
    %1285 = vmatpush1.xpose.msra.mxu0 0.0
    %1286 = vmatprep.subr.mxu0 0.0
    %1287 = vmatpush1.xpose.msra.mxu0 0.0
    %1288 = vmatprep.subr.mxu0 0.0
    %1289 = vmatpush1.xpose.msra.mxu0 0.0
    %1290 = vmatprep.subr.mxu0 0.0
    %1291 = vmatpush1.xpose.msra.mxu0 0.0
    %1292 = vmatprep.subr.mxu0 0.0
    %1293 = vmatpush1.xpose.msra.mxu0 0.0
    %1294 = vmatprep.subr.mxu0 0.0
    %1295 = vmatpush1.xpose.msra.mxu0 0.0
    %1296 = vmatprep.subr.mxu0 0.0
    %1297 = vmatpush1.xpose.msra.mxu0 0.0
    %1298 = vmatprep.subr.mxu0 0.0
    %1299 = vmatpush1.xpose.msra.mxu0 0.0
    %1300 = vmatprep.subr.mxu0 0.0
    %1301 = vmatpush1.xpose.msra.mxu0 %v1268
    %1302 = vmatprep.subr.mxu0 0.0
    %1303 = vmatpush2.xpose.msra.mxu0 0.0
    %1304 = vmatprep.subr.mxu0 0.0
    %1305 = vmatpush2.xpose.msra.mxu0 0.0
    %1306 = vmatprep.subr.mxu0 0.0
    %1307 = vmatpush2.xpose.msra.mxu0 0.0
    %1308 = vmatprep.subr.mxu0 0.0
    %1309 = vmatpush2.xpose.msra.mxu0 0.0
    %1310 = vmatprep.subr.mxu0 0.0
    %1311 = vmatpush2.xpose.msra.mxu0 0.0
    %1312 = vmatprep.subr.mxu0 0.0
    %1313 = vmatpush2.xpose.msra.mxu0 0.0
    %1314 = vmatprep.subr.mxu0 0.0
    %1315 = vmatpush2.xpose.msra.mxu0 0.0
    %1316 = vmatprep.subr.mxu0 0.0
    %1317 = vmatpush2.xpose.msra.mxu0 0.0
    %1318 = vmatprep.subr.mxu0 0.0
    %1319 = vmatpush2.xpose.msra.mxu0 0.0
    %1320 = vmatprep.subr.mxu0 0.0
    %1321 = vmatpush2.xpose.msra.mxu0 0.0
    %1322 = vmatprep.subr.mxu0 0.0
    %1323 = vmatpush2.xpose.msra.mxu0 0.0
    %1324 = vmatprep.subr.mxu0 0.0
    %1325 = vmatpush2.xpose.msra.mxu0 0.0
    %1326 = vmatprep.subr.mxu0 0.0
    %1327 = vmatpush2.xpose.msra.mxu0 0.0
    %1328 = vmatprep.subr.mxu0 0.0
    %1329 = vmatpush2.xpose.msra.mxu0 0.0
    %1330 = vmatprep.subr.mxu0 0.0
    %1331 = vmatpush2.xpose.msra.mxu0 0.0
    %1332 = vmatprep.subr.mxu0 0.0
    %1333 = vmatpush2.xpose.msra.mxu0 0.0
    %1334 = vmatprep.mubr.f32.mxu0 0.0
    %1335 = vmatmul.mubr.f32.gmra.mxu0 %v1266
    %v1336 = vpop.f32.mrf.mxu0
    %v1337 = vadd.f32 0.0, %v1336
    %v1338 = vpop.f32.mrf.mxu0
    %1339 = vdwg.mxu0
    %v1340 = vmul.f32 %v1259, 0.35355338
    %v1341 = vmul.f32 %v1337, 0.35355338
    %v1342 = vadd.f32 %v1340, %v49
    %v1343 = vadd.f32 %v1341, %v49
    %v1344 = vsel %vm186, %v1342, -inf
    %1345 = vmax.xlane.f32.xlu0 %v1344
    %v1346 = vpop.xlane.xlu0 %1345
    %v1347 = vsel %vm186, %v1343, -inf
    %1348 = vmax.xlane.f32.xlu0 %v1347
    %v1349 = vpop.xlane.xlu0 %1348
    %v1350 = vsub.f32 %v1342, %v1346
    %v1351 = vsub.f32 %v1343, %v1349
    %v1352 = vmul.f32 %v1350, 1.442695
    %v1353 = vpow.pop %v1352
    %v1354 = vmul.f32 %v1351, 1.442695
    %v1355 = vpow.pop %v1354
    %v1356 = vsel %vm186, %v1353, 0.0
    %1357 = vadd.xlane.f32.xlu0 %v1356
    %v1358 = vpop.xlane.xlu0 %1357
    %v1359 = vsel %vm186, %v1355, 0.0
    %1360 = vadd.xlane.f32.xlu0 %v1359
    %v1361 = vpop.xlane.xlu0 %1360
    %v1362 = vrcp.pop %v1358
    %v1363 = vrcp.pop %v1361
    %v1364 = vmul.f32 %v1353, %v1362
    %v1365 = vmul.f32 %v1355, %v1363
    %1366 = vrot.lane.b32.xlu0 %v175, 40
    %v1367 = vpop.permute.xlu0 %1366
    %v1370 = vsel %vm186, %v1364, 0
    %1372 = vmatprep.subr.mxu0 0.0
    %1373 = vmatpush1.msra.mxu0 0.0
    %1374 = vmatprep.subr.mxu0 0.0
    %1375 = vmatpush1.msra.mxu0 0.0
    %1376 = vmatprep.subr.mxu0 0.0
    %1377 = vmatpush1.msra.mxu0 0.0
    %1378 = vmatprep.subr.mxu0 0.0
    %1379 = vmatpush1.msra.mxu0 0.0
    %1380 = vmatprep.subr.mxu0 0.0
    %1381 = vmatpush1.msra.mxu0 0.0
    %1382 = vmatprep.subr.mxu0 0.0
    %1383 = vmatpush1.msra.mxu0 0.0
    %1384 = vmatprep.subr.mxu0 0.0
    %1385 = vmatpush1.msra.mxu0 0.0
    %1386 = vmatprep.subr.mxu0 0.0
    %1387 = vmatpush1.msra.mxu0 0.0
    %1388 = vmatprep.subr.mxu0 0.0
    %1389 = vmatpush1.msra.mxu0 0.0
    %1390 = vmatprep.subr.mxu0 0.0
    %1391 = vmatpush1.msra.mxu0 0.0
    %1392 = vmatprep.subr.mxu0 0.0
    %1393 = vmatpush1.msra.mxu0 0.0
    %1394 = vmatprep.subr.mxu0 0.0
    %1395 = vmatpush1.msra.mxu0 0.0
    %1396 = vmatprep.subr.mxu0 0.0
    %1397 = vmatpush1.msra.mxu0 0.0
    %1398 = vmatprep.subr.mxu0 0.0
    %1399 = vmatpush1.msra.mxu0 0.0
    %1400 = vmatprep.subr.mxu0 0.0
    %1401 = vmatpush1.msra.mxu0 0.0
    %1402 = vmatprep.subr.mxu0 0.0
    %1403 = vmatpush1.msra.mxu0 %v1367
    %1404 = vmatprep.subr.mxu0 0.0
    %1405 = vmatpush2.msra.mxu0 0.0
    %1406 = vmatprep.subr.mxu0 0.0
    %1407 = vmatpush2.msra.mxu0 0.0
    %1408 = vmatprep.subr.mxu0 0.0
    %1409 = vmatpush2.msra.mxu0 0.0
    %1410 = vmatprep.subr.mxu0 0.0
    %1411 = vmatpush2.msra.mxu0 0.0
    %1412 = vmatprep.subr.mxu0 0.0
    %1413 = vmatpush2.msra.mxu0 0.0
    %1414 = vmatprep.subr.mxu0 0.0
    %1415 = vmatpush2.msra.mxu0 0.0
    %1416 = vmatprep.subr.mxu0 0.0
    %1417 = vmatpush2.msra.mxu0 0.0
    %1418 = vmatprep.subr.mxu0 0.0
    %1419 = vmatpush2.msra.mxu0 0.0
    %1420 = vmatprep.subr.mxu0 0.0
    %1421 = vmatpush2.msra.mxu0 0.0
    %1422 = vmatprep.subr.mxu0 0.0
    %1423 = vmatpush2.msra.mxu0 0.0
    %1424 = vmatprep.subr.mxu0 0.0
    %1425 = vmatpush2.msra.mxu0 0.0
    %1426 = vmatprep.subr.mxu0 0.0
    %1427 = vmatpush2.msra.mxu0 0.0
    %1428 = vmatprep.subr.mxu0 0.0
    %1429 = vmatpush2.msra.mxu0 0.0
    %1430 = vmatprep.subr.mxu0 0.0
    %1431 = vmatpush2.msra.mxu0 0.0
    %1432 = vmatprep.subr.mxu0 0.0
    %1433 = vmatpush2.msra.mxu0 0.0
    %1434 = vmatprep.subr.mxu0 0.0
    %1435 = vmatpush2.msra.mxu0 0.0
    %1436 = vmatprep.mubr.f32.mxu0 0.0
    %1437 = vmatmul.mubr.f32.gmra.mxu0 %v1370
    %v1438 = vpop.f32.mrf.mxu0
    %v1439 = vadd.f32 0.0, %v1438
    %v1440 = vpop.f32.mrf.mxu0
    %1441 = vdwg.mxu0
    %1442 = vrot.lane.b32.xlu0 %v180, 40
    %v1443 = vpop.permute.xlu0 %1442
    %v1446 = vsel %vm186, %v1365, 0
    %1448 = vmatprep.subr.mxu0 0.0
    %1449 = vmatpush1.msra.mxu0 0.0
    %1450 = vmatprep.subr.mxu0 0.0
    %1451 = vmatpush1.msra.mxu0 0.0
    %1452 = vmatprep.subr.mxu0 0.0
    %1453 = vmatpush1.msra.mxu0 0.0
    %1454 = vmatprep.subr.mxu0 0.0
    %1455 = vmatpush1.msra.mxu0 0.0
    %1456 = vmatprep.subr.mxu0 0.0
    %1457 = vmatpush1.msra.mxu0 0.0
    %1458 = vmatprep.subr.mxu0 0.0
    %1459 = vmatpush1.msra.mxu0 0.0
    %1460 = vmatprep.subr.mxu0 0.0
    %1461 = vmatpush1.msra.mxu0 0.0
    %1462 = vmatprep.subr.mxu0 0.0
    %1463 = vmatpush1.msra.mxu0 0.0
    %1464 = vmatprep.subr.mxu0 0.0
    %1465 = vmatpush1.msra.mxu0 0.0
    %1466 = vmatprep.subr.mxu0 0.0
    %1467 = vmatpush1.msra.mxu0 0.0
    %1468 = vmatprep.subr.mxu0 0.0
    %1469 = vmatpush1.msra.mxu0 0.0
    %1470 = vmatprep.subr.mxu0 0.0
    %1471 = vmatpush1.msra.mxu0 0.0
    %1472 = vmatprep.subr.mxu0 0.0
    %1473 = vmatpush1.msra.mxu0 0.0
    %1474 = vmatprep.subr.mxu0 0.0
    %1475 = vmatpush1.msra.mxu0 0.0
    %1476 = vmatprep.subr.mxu0 0.0
    %1477 = vmatpush1.msra.mxu0 0.0
    %1478 = vmatprep.subr.mxu0 0.0
    %1479 = vmatpush1.msra.mxu0 %v1443
    %1480 = vmatprep.subr.mxu0 0.0
    %1481 = vmatpush2.msra.mxu0 0.0
    %1482 = vmatprep.subr.mxu0 0.0
    %1483 = vmatpush2.msra.mxu0 0.0
    %1484 = vmatprep.subr.mxu0 0.0
    %1485 = vmatpush2.msra.mxu0 0.0
    %1486 = vmatprep.subr.mxu0 0.0
    %1487 = vmatpush2.msra.mxu0 0.0
    %1488 = vmatprep.subr.mxu0 0.0
    %1489 = vmatpush2.msra.mxu0 0.0
    %1490 = vmatprep.subr.mxu0 0.0
    %1491 = vmatpush2.msra.mxu0 0.0
    %1492 = vmatprep.subr.mxu0 0.0
    %1493 = vmatpush2.msra.mxu0 0.0
    %1494 = vmatprep.subr.mxu0 0.0
    %1495 = vmatpush2.msra.mxu0 0.0
    %1496 = vmatprep.subr.mxu0 0.0
    %1497 = vmatpush2.msra.mxu0 0.0
    %1498 = vmatprep.subr.mxu0 0.0
    %1499 = vmatpush2.msra.mxu0 0.0
    %1500 = vmatprep.subr.mxu0 0.0
    %1501 = vmatpush2.msra.mxu0 0.0
    %1502 = vmatprep.subr.mxu0 0.0
    %1503 = vmatpush2.msra.mxu0 0.0
    %1504 = vmatprep.subr.mxu0 0.0
    %1505 = vmatpush2.msra.mxu0 0.0
    %1506 = vmatprep.subr.mxu0 0.0
    %1507 = vmatpush2.msra.mxu0 0.0
    %1508 = vmatprep.subr.mxu0 0.0
    %1509 = vmatpush2.msra.mxu0 0.0
    %1510 = vmatprep.subr.mxu0 0.0
    %1511 = vmatpush2.msra.mxu0 0.0
    %1512 = vmatprep.mubr.f32.mxu0 0.0
    %1513 = vmatmul.mubr.f32.gmra.mxu0 %v1446
    %v1514 = vpop.f32.mrf.mxu0
    %v1515 = vadd.f32 0.0, %v1514
    %v1516 = vpop.f32.mrf.mxu0
    %1517 = vdwg.mxu0
    %1520 = vrot.lane.b32.xlu0 %v771, 8
    %v1521 = vpop.permute.xlu0 %1520
    %1522 = vrot.lane.b32.xlu0 %v847, 8
    %v1523 = vpop.permute.xlu0 %1522
    %1528 = vrot.lane.b32.xlu0 %v1105, 16
    %v1529 = vpop.permute.xlu0 %1528
    %1530 = vrot.lane.b32.xlu0 %v1181, 16
    %v1531 = vpop.permute.xlu0 %1530
    %1536 = vrot.lane.b32.xlu0 %v1439, 24
    %v1537 = vpop.permute.xlu0 %1536
    %1538 = vrot.lane.b32.xlu0 %v1515, 24
    %v1539 = vpop.permute.xlu0 %1538
    %v1542 = vsel %vm186, %v437, %v1521
    %v1543 = vsel %vm186, %v513, %v1523
    %vm1544 = vcmask 130048
    %v1545 = vsel %vm1544, %v1542, %v1529
    %v1546 = vsel %vm1544, %v1543, %v1531
    %vm1547 = vcmask 195584
    %v1548 = vsel %vm1547, %v1545, %v1537
    %v1549 = vsel %vm1547, %v1546, %v1539
    %v1550 = vld [vmem:[%s6] sm:$0xff]
    %v1551 = vld [vmem:[%s6 + $0x8] sm:$0xff]
    %v1552 = vld [vmem:[%s6 + $0x10] sm:$0xff]
    %v1553 = vld [vmem:[%s6 + $0x18] sm:$0xff]
    %v1555 = vsel %vm54, %v1548, 0
    %v1558 = vsel %vm54, %v1549, 0
    %1560 = vmatprep.subr.mxu0 0.0
    %1561 = vmatpush1.msra.mxu0 0.0
    %1562 = vmatprep.subr.mxu0 0.0
    %1563 = vmatpush1.msra.mxu0 0.0
    %1564 = vmatprep.subr.mxu0 0.0
    %1565 = vmatpush1.msra.mxu0 0.0
    %1566 = vmatprep.subr.mxu0 0.0
    %1567 = vmatpush1.msra.mxu0 0.0
    %1568 = vmatprep.subr.mxu0 0.0
    %1569 = vmatpush1.msra.mxu0 0.0
    %1570 = vmatprep.subr.mxu0 0.0
    %1571 = vmatpush1.msra.mxu0 0.0
    %1572 = vmatprep.subr.mxu0 0.0
    %1573 = vmatpush1.msra.mxu0 0.0
    %1574 = vmatprep.subr.mxu0 0.0
    %1575 = vmatpush1.msra.mxu0 0.0
    %1576 = vmatprep.subr.mxu0 0.0
    %1577 = vmatpush1.msra.mxu0 0.0
    %1578 = vmatprep.subr.mxu0 0.0
    %1579 = vmatpush1.msra.mxu0 0.0
    %1580 = vmatprep.subr.mxu0 0.0
    %1581 = vmatpush1.msra.mxu0 0.0
    %1582 = vmatprep.subr.mxu0 0.0
    %1583 = vmatpush1.msra.mxu0 0.0
    %1584 = vmatprep.subr.mxu0 0.0
    %1585 = vmatpush1.msra.mxu0 %v1553
    %1586 = vmatprep.subr.mxu0 0.0
    %1587 = vmatpush1.msra.mxu0 %v1552
    %1588 = vmatprep.subr.mxu0 0.0
    %1589 = vmatpush1.msra.mxu0 %v1551
    %1590 = vmatprep.subr.mxu0 0.0
    %1591 = vmatpush1.msra.mxu0 %v1550
    %1592 = vmatprep.subr.mxu0 0.0
    %1593 = vmatpush2.msra.mxu0 0.0
    %1594 = vmatprep.subr.mxu0 0.0
    %1595 = vmatpush2.msra.mxu0 0.0
    %1596 = vmatprep.subr.mxu0 0.0
    %1597 = vmatpush2.msra.mxu0 0.0
    %1598 = vmatprep.subr.mxu0 0.0
    %1599 = vmatpush2.msra.mxu0 0.0
    %1600 = vmatprep.subr.mxu0 0.0
    %1601 = vmatpush2.msra.mxu0 0.0
    %1602 = vmatprep.subr.mxu0 0.0
    %1603 = vmatpush2.msra.mxu0 0.0
    %1604 = vmatprep.subr.mxu0 0.0
    %1605 = vmatpush2.msra.mxu0 0.0
    %1606 = vmatprep.subr.mxu0 0.0
    %1607 = vmatpush2.msra.mxu0 0.0
    %1608 = vmatprep.subr.mxu0 0.0
    %1609 = vmatpush2.msra.mxu0 0.0
    %1610 = vmatprep.subr.mxu0 0.0
    %1611 = vmatpush2.msra.mxu0 0.0
    %1612 = vmatprep.subr.mxu0 0.0
    %1613 = vmatpush2.msra.mxu0 0.0
    %1614 = vmatprep.subr.mxu0 0.0
    %1615 = vmatpush2.msra.mxu0 0.0
    %1616 = vmatprep.subr.mxu0 0.0
    %1617 = vmatpush2.msra.mxu0 0.0
    %1618 = vmatprep.subr.mxu0 0.0
    %1619 = vmatpush2.msra.mxu0 0.0
    %1620 = vmatprep.subr.mxu0 0.0
    %1621 = vmatpush2.msra.mxu0 0.0
    %1622 = vmatprep.subr.mxu0 0.0
    %1623 = vmatpush2.msra.mxu0 0.0
    %1624 = vmatprep.mubr.f32.mxu0 0.0
    %1625 = vmatmul.mubr.f32.gmra.mxu0 %v1555
    %v1626 = vpop.f32.mrf.mxu0
    %v1627 = vadd.f32 0.0, %v1626
    %v1628 = vpop.f32.mrf.mxu0
    %1629 = vmatprep.mubr.f32.mxu0 0.0
    %1630 = vmatmul.mubr.f32.gmra.mxu0 %v1558
    %v1631 = vpop.f32.mrf.mxu0
    %v1632 = vadd.f32 0.0, %v1631
    %v1633 = vpop.f32.mrf.mxu0
    %1634 = vdwg.mxu0
    %v1635 = vadd.f32 %v42, %v1627
    %v1636 = vadd.f32 %v43, %v1632
    %v1637 = vlaneseq
    %v1638 = vshrl.u32 %v1637, 7
    %v1639 = vsub.s32 5, %v1638
    %v1640 = vrot.slane %v53, %v1639
    %v1641 = vadd.f32 %v1635, %v1640
    %v1642 = vadd.f32 %v1636, %v1640
    %v1643 = vsel %vm54, %v1641, 0.0
    %1644 = vadd.xlane.f32.xlu0 %v1643
    %v1645 = vpop.xlane.xlu0 %1644
    %v1646 = vsel %vm54, %v1642, 0.0
    %1647 = vadd.xlane.f32.xlu0 %v1646
    %v1648 = vpop.xlane.xlu0 %1647
    %v1649 = vmul.f32 %v1645, %v61
    %v1650 = vmul.f32 %v1648, %v61
    %v1651 = vsub.f32 %v1641, %v1649
    %v1652 = vsub.f32 %v1642, %v1650
    %v1653 = vmul.f32 %v1651, %v1651
    %v1654 = vmul.f32 %v1652, %v1652
    %v1655 = vsel %vm54, %v1653, 0.0
    %1656 = vadd.xlane.f32.xlu0 %v1655
    %v1657 = vpop.xlane.xlu0 %1656
    %v1658 = vsel %vm54, %v1654, 0.0
    %1659 = vadd.xlane.f32.xlu0 %v1658
    %v1660 = vpop.xlane.xlu0 %1659
    %v1661 = vmul.f32 %v1657, %v61
    %v1662 = vmul.f32 %v1660, %v61
    %v1663 = vadd.f32 %v1661, 1e-05
    %v1664 = vadd.f32 %v1662, 1e-05
    %v1665 = vrsqrt.pop %v1663
    %v1666 = vrsqrt.pop %v1664
    %v1667 = vmul.f32 %v1651, %v1665
    %v1668 = vmul.f32 %v1652, %v1666
    %v1669 = vlaneseq
    %v1670 = vshrl.u32 %v1669, 7
    %v1671 = vsub.s32 2, %v1670
    %v1672 = vrot.slane %v53, %v1671
    %v1673 = vmul.f32 %v1667, %v1672
    %v1674 = vmul.f32 %v1668, %v1672
    %v1675 = vlaneseq
    %v1676 = vshrl.u32 %v1675, 7
    %v1677 = vsub.s32 3, %v1676
    %v1678 = vrot.slane %v53, %v1677
    %v1679 = vadd.f32 %v1673, %v1678
    %v1680 = vadd.f32 %v1674, %v1678
    %v1681 = vld [vmem:[%s7] sm:$0xff]
    %v1682 = vld [vmem:[%s7 + $0x8] sm:$0xff]
    %v1683 = vld [vmem:[%s7 + $0x10] sm:$0xff]
    %v1684 = vld [vmem:[%s7 + $0x18] sm:$0xff]
    %v1685 = vlaneseq
    %v1686 = vshrl.u32 %v1685, 7
    %v1687 = vsub.s32 6, %v1686
    %v1688 = vrot.slane %v53, %v1687
    %v1690 = vsel %vm54, %v1679, 0
    %v1693 = vsel %vm54, %v1680, 0
    %1695 = vmatprep.subr.mxu0 0.0
    %1696 = vmatpush1.msra.mxu0 0.0
    %1697 = vmatprep.subr.mxu0 0.0
    %1698 = vmatpush1.msra.mxu0 0.0
    %1699 = vmatprep.subr.mxu0 0.0
    %1700 = vmatpush1.msra.mxu0 0.0
    %1701 = vmatprep.subr.mxu0 0.0
    %1702 = vmatpush1.msra.mxu0 0.0
    %1703 = vmatprep.subr.mxu0 0.0
    %1704 = vmatpush1.msra.mxu0 0.0
    %1705 = vmatprep.subr.mxu0 0.0
    %1706 = vmatpush1.msra.mxu0 0.0
    %1707 = vmatprep.subr.mxu0 0.0
    %1708 = vmatpush1.msra.mxu0 0.0
    %1709 = vmatprep.subr.mxu0 0.0
    %1710 = vmatpush1.msra.mxu0 0.0
    %1711 = vmatprep.subr.mxu0 0.0
    %1712 = vmatpush1.msra.mxu0 0.0
    %1713 = vmatprep.subr.mxu0 0.0
    %1714 = vmatpush1.msra.mxu0 0.0
    %1715 = vmatprep.subr.mxu0 0.0
    %1716 = vmatpush1.msra.mxu0 0.0
    %1717 = vmatprep.subr.mxu0 0.0
    %1718 = vmatpush1.msra.mxu0 0.0
    %1719 = vmatprep.subr.mxu0 0.0
    %1720 = vmatpush1.msra.mxu0 %v1684
    %1721 = vmatprep.subr.mxu0 0.0
    %1722 = vmatpush1.msra.mxu0 %v1683
    %1723 = vmatprep.subr.mxu0 0.0
    %1724 = vmatpush1.msra.mxu0 %v1682
    %1725 = vmatprep.subr.mxu0 0.0
    %1726 = vmatpush1.msra.mxu0 %v1681
    %1727 = vmatprep.subr.mxu0 0.0
    %1728 = vmatpush2.msra.mxu0 0.0
    %1729 = vmatprep.subr.mxu0 0.0
    %1730 = vmatpush2.msra.mxu0 0.0
    %1731 = vmatprep.subr.mxu0 0.0
    %1732 = vmatpush2.msra.mxu0 0.0
    %1733 = vmatprep.subr.mxu0 0.0
    %1734 = vmatpush2.msra.mxu0 0.0
    %1735 = vmatprep.subr.mxu0 0.0
    %1736 = vmatpush2.msra.mxu0 0.0
    %1737 = vmatprep.subr.mxu0 0.0
    %1738 = vmatpush2.msra.mxu0 0.0
    %1739 = vmatprep.subr.mxu0 0.0
    %1740 = vmatpush2.msra.mxu0 0.0
    %1741 = vmatprep.subr.mxu0 0.0
    %1742 = vmatpush2.msra.mxu0 0.0
    %1743 = vmatprep.subr.mxu0 0.0
    %1744 = vmatpush2.msra.mxu0 0.0
    %1745 = vmatprep.subr.mxu0 0.0
    %1746 = vmatpush2.msra.mxu0 0.0
    %1747 = vmatprep.subr.mxu0 0.0
    %1748 = vmatpush2.msra.mxu0 0.0
    %1749 = vmatprep.subr.mxu0 0.0
    %1750 = vmatpush2.msra.mxu0 0.0
    %1751 = vmatprep.subr.mxu0 0.0
    %1752 = vmatpush2.msra.mxu0 0.0
    %1753 = vmatprep.subr.mxu0 0.0
    %1754 = vmatpush2.msra.mxu0 0.0
    %1755 = vmatprep.subr.mxu0 0.0
    %1756 = vmatpush2.msra.mxu0 0.0
    %1757 = vmatprep.subr.mxu0 0.0
    %1758 = vmatpush2.msra.mxu0 0.0
    %1759 = vmatprep.mubr.f32.mxu0 0.0
    %1760 = vmatmul.mubr.f32.gmra.mxu0 %v1690
    %v1761 = vpop.f32.mrf.mxu0
    %v1762 = vadd.f32 %v1688, %v1761
    %v1763 = vpop.f32.mrf.mxu0
    %1764 = vmatprep.mubr.f32.mxu0 0.0
    %1765 = vmatmul.mubr.f32.gmra.mxu0 %v1693
    %v1766 = vpop.f32.mrf.mxu0
    %v1767 = vadd.f32 %v1688, %v1766
    %v1768 = vpop.f32.mrf.mxu0
    %1769 = vdwg.mxu0
    %v1770 = vmul.f32 %v1762, 1.702
    %v1771 = vmul.f32 %v1767, 1.702
    %v1772 = vxor.u32 %v1770, 2147483648
    %v1773 = vxor.u32 %v1771, 2147483648
    %v1774 = vmul.f32 %v1772, 1.442695
    %v1775 = vpow.pop %v1774
    %v1776 = vmul.f32 %v1773, 1.442695
    %v1777 = vpow.pop %v1776
    %v1778 = vadd.f32 %v1775, 1.0
    %v1779 = vadd.f32 %v1777, 1.0
    %v1780 = vrcp.pop %v1778
    %v1781 = vmul.f32 1.0, %v1780
    %v1782 = vrcp.pop %v1779
    %v1783 = vmul.f32 1.0, %v1782
    %v1784 = vmul.f32 %v1762, %v1781
    %v1785 = vmul.f32 %v1767, %v1783
    %v1786 = vld [vmem:[%s8] sm:$0xff]
    %v1787 = vld [vmem:[%s8 + $0x8] sm:$0xff]
    %v1788 = vld [vmem:[%s8 + $0x10] sm:$0xff]
    %v1789 = vld [vmem:[%s8 + $0x18] sm:$0xff]
    %v1790 = vld [vmem:[%s8 + $0x20] sm:$0xff]
    %v1791 = vld [vmem:[%s8 + $0x28] sm:$0xff]
    %v1792 = vld [vmem:[%s8 + $0x30] sm:$0xff]
    %v1793 = vld [vmem:[%s8 + $0x38] sm:$0xff]
    %v1794 = vld [vmem:[%s8 + $0x40] sm:$0xff]
    %v1795 = vld [vmem:[%s8 + $0x48] sm:$0xff]
    %v1796 = vld [vmem:[%s8 + $0x50] sm:$0xff]
    %v1797 = vld [vmem:[%s8 + $0x58] sm:$0xff]
    %v1798 = vld [vmem:[%s8 + $0x60] sm:$0xff]
    %v1799 = vld [vmem:[%s8 + $0x68] sm:$0xff]
    %v1800 = vld [vmem:[%s8 + $0x70] sm:$0xff]
    %v1801 = vld [vmem:[%s8 + $0x78] sm:$0xff]
    %1802 = vmatprep.subr.mxu0 0.0
    %1803 = vmatpush1.msra.mxu0 %v1801
    %1804 = vmatprep.subr.mxu0 0.0
    %1805 = vmatpush1.msra.mxu0 %v1800
    %1806 = vmatprep.subr.mxu0 0.0
    %1807 = vmatpush1.msra.mxu0 %v1799
    %1808 = vmatprep.subr.mxu0 0.0
    %1809 = vmatpush1.msra.mxu0 %v1798
    %1810 = vmatprep.subr.mxu0 0.0
    %1811 = vmatpush1.msra.mxu0 %v1797
    %1812 = vmatprep.subr.mxu0 0.0
    %1813 = vmatpush1.msra.mxu0 %v1796
    %1814 = vmatprep.subr.mxu0 0.0
    %1815 = vmatpush1.msra.mxu0 %v1795
    %1816 = vmatprep.subr.mxu0 0.0
    %1817 = vmatpush1.msra.mxu0 %v1794
    %1818 = vmatprep.subr.mxu0 0.0
    %1819 = vmatpush1.msra.mxu0 %v1793
    %1820 = vmatprep.subr.mxu0 0.0
    %1821 = vmatpush1.msra.mxu0 %v1792
    %1822 = vmatprep.subr.mxu0 0.0
    %1823 = vmatpush1.msra.mxu0 %v1791
    %1824 = vmatprep.subr.mxu0 0.0
    %1825 = vmatpush1.msra.mxu0 %v1790
    %1826 = vmatprep.subr.mxu0 0.0
    %1827 = vmatpush1.msra.mxu0 %v1789
    %1828 = vmatprep.subr.mxu0 0.0
    %1829 = vmatpush1.msra.mxu0 %v1788
    %1830 = vmatprep.subr.mxu0 0.0
    %1831 = vmatpush1.msra.mxu0 %v1787
    %1832 = vmatprep.subr.mxu0 0.0
    %1833 = vmatpush1.msra.mxu0 %v1786
    %1834 = vmatprep.subr.mxu0 0.0
    %1835 = vmatpush2.msra.mxu0 0.0
    %1836 = vmatprep.subr.mxu0 0.0
    %1837 = vmatpush2.msra.mxu0 0.0
    %1838 = vmatprep.subr.mxu0 0.0
    %1839 = vmatpush2.msra.mxu0 0.0
    %1840 = vmatprep.subr.mxu0 0.0
    %1841 = vmatpush2.msra.mxu0 0.0
    %1842 = vmatprep.subr.mxu0 0.0
    %1843 = vmatpush2.msra.mxu0 0.0
    %1844 = vmatprep.subr.mxu0 0.0
    %1845 = vmatpush2.msra.mxu0 0.0
    %1846 = vmatprep.subr.mxu0 0.0
    %1847 = vmatpush2.msra.mxu0 0.0
    %1848 = vmatprep.subr.mxu0 0.0
    %1849 = vmatpush2.msra.mxu0 0.0
    %1850 = vmatprep.subr.mxu0 0.0
    %1851 = vmatpush2.msra.mxu0 0.0
    %1852 = vmatprep.subr.mxu0 0.0
    %1853 = vmatpush2.msra.mxu0 0.0
    %1854 = vmatprep.subr.mxu0 0.0
    %1855 = vmatpush2.msra.mxu0 0.0
    %1856 = vmatprep.subr.mxu0 0.0
    %1857 = vmatpush2.msra.mxu0 0.0
    %1858 = vmatprep.subr.mxu0 0.0
    %1859 = vmatpush2.msra.mxu0 0.0
    %1860 = vmatprep.subr.mxu0 0.0
    %1861 = vmatpush2.msra.mxu0 0.0
    %1862 = vmatprep.subr.mxu0 0.0
    %1863 = vmatpush2.msra.mxu0 0.0
    %1864 = vmatprep.subr.mxu0 0.0
    %1865 = vmatpush2.msra.mxu0 0.0
    %1866 = vmatprep.mubr.f32.mxu0 0.0
    %1867 = vmatmul.mubr.f32.gmra.mxu0 %v1784
    %v1868 = vpop.f32.mrf.mxu0
    %v1869 = vadd.f32 0.0, %v1868
    %v1870 = vpop.f32.mrf.mxu0
    %1871 = vmatprep.mubr.f32.mxu0 0.0
    %1872 = vmatmul.mubr.f32.gmra.mxu0 %v1785
    %v1873 = vpop.f32.mrf.mxu0
    %v1874 = vadd.f32 0.0, %v1873
    %v1875 = vpop.f32.mrf.mxu0
    %1876 = vdwg.mxu0
    %v1877 = vadd.f32 %v1641, %v1869
    %v1878 = vadd.f32 %v1642, %v1874
    %v1879 = vlaneseq
    %v1880 = vshrl.u32 %v1879, 7
    %v1881 = vsub.s32 7, %v1880
    %v1882 = vrot.slane %v53, %v1881
    %v1883 = vadd.f32 %v1877, %v1882
    %v1884 = vadd.f32 %v1878, %v1882
    %v1885 = vld [vmem:[%s2] sm:$0xff]
    %v1886 = vld [vmem:[%s2 + $0x8] sm:$0xff]
    %v1887 = vsel %vm52, 1, 0
    %vm1888 = vcmp.eq.s32.totalorder %v1887, 1
    %v1889 = vsel %vm1888, %v1885, %v1883
    %v1890 = vsel %vm1888, %v1886, %v1884
    %s1891 = scalar_lea.vmem %s4, 8
    %v1892 = vld [vmem:[%s1891] sm:$0xff]
    %v1893 = vsel %vm54, %v1889, 0.0
    %1894 = vadd.xlane.f32.xlu0 %v1893
    %v1895 = vpop.xlane.xlu0 %1894
    %v1896 = vsel %vm54, %v1890, 0.0
    %1897 = vadd.xlane.f32.xlu0 %v1896
    %v1898 = vpop.xlane.xlu0 %1897
    %v1899 = vmul.f32 %v1895, %v61
    %v1900 = vmul.f32 %v1898, %v61
    %v1901 = vsub.f32 %v1889, %v1899
    %v1902 = vsub.f32 %v1890, %v1900
    %v1903 = vmul.f32 %v1901, %v1901
    %v1904 = vmul.f32 %v1902, %v1902
    %v1905 = vsel %vm54, %v1903, 0.0
    %1906 = vadd.xlane.f32.xlu0 %v1905
    %v1907 = vpop.xlane.xlu0 %1906
    %v1908 = vsel %vm54, %v1904, 0.0
    %1909 = vadd.xlane.f32.xlu0 %v1908
    %v1910 = vpop.xlane.xlu0 %1909
    %v1911 = vmul.f32 %v1907, %v61
    %v1912 = vmul.f32 %v1910, %v61
    %v1913 = vadd.f32 %v1911, 1e-05
    %v1914 = vadd.f32 %v1912, 1e-05
    %v1915 = vrsqrt.pop %v1913
    %v1916 = vrsqrt.pop %v1914
    %v1917 = vmul.f32 %v1901, %v1915
    %v1918 = vmul.f32 %v1902, %v1916
    %v1919 = vlaneseq
    %v1920 = vshrl.u32 %v1919, 7
    %v1921 = vsub.s32 0, %v1920
    %v1922 = vrot.slane %v1892, %v1921
    %v1923 = vmul.f32 %v1917, %v1922
    %v1924 = vmul.f32 %v1918, %v1922
    %v1925 = vlaneseq
    %v1926 = vshrl.u32 %v1925, 7
    %v1927 = vsub.s32 1, %v1926
    %v1928 = vrot.slane %v1892, %v1927
    %v1929 = vadd.f32 %v1923, %v1928
    %v1930 = vadd.f32 %v1924, %v1928
    %s1931 = scalar_lea.vmem %s5, 32
    %v1932 = vld [vmem:[%s1931] sm:$0xff]
    %v1933 = vld [vmem:[%s1931 + $0x8] sm:$0xff]
    %v1934 = vld [vmem:[%s1931 + $0x10] sm:$0xff]
    %v1935 = vld [vmem:[%s1931 + $0x18] sm:$0xff]
    %v1936 = vlaneseq
    %v1937 = vshrl.u32 %v1936, 7
    %v1938 = vsub.s32 4, %v1937
    %v1939 = vrot.slane %v1892, %v1938
    %v1941 = vsel %vm54, %v1929, 0
    %v1944 = vsel %vm54, %v1930, 0
    %1946 = vmatprep.subr.mxu0 0.0
    %1947 = vmatpush1.msra.mxu0 0.0
    %1948 = vmatprep.subr.mxu0 0.0
    %1949 = vmatpush1.msra.mxu0 0.0
    %1950 = vmatprep.subr.mxu0 0.0
    %1951 = vmatpush1.msra.mxu0 0.0
    %1952 = vmatprep.subr.mxu0 0.0
    %1953 = vmatpush1.msra.mxu0 0.0
    %1954 = vmatprep.subr.mxu0 0.0
    %1955 = vmatpush1.msra.mxu0 0.0
    %1956 = vmatprep.subr.mxu0 0.0
    %1957 = vmatpush1.msra.mxu0 0.0
    %1958 = vmatprep.subr.mxu0 0.0
    %1959 = vmatpush1.msra.mxu0 0.0
    %1960 = vmatprep.subr.mxu0 0.0
    %1961 = vmatpush1.msra.mxu0 0.0
    %1962 = vmatprep.subr.mxu0 0.0
    %1963 = vmatpush1.msra.mxu0 0.0
    %1964 = vmatprep.subr.mxu0 0.0
    %1965 = vmatpush1.msra.mxu0 0.0
    %1966 = vmatprep.subr.mxu0 0.0
    %1967 = vmatpush1.msra.mxu0 0.0
    %1968 = vmatprep.subr.mxu0 0.0
    %1969 = vmatpush1.msra.mxu0 0.0
    %1970 = vmatprep.subr.mxu0 0.0
    %1971 = vmatpush1.msra.mxu0 %v1935
    %1972 = vmatprep.subr.mxu0 0.0
    %1973 = vmatpush1.msra.mxu0 %v1934
    %1974 = vmatprep.subr.mxu0 0.0
    %1975 = vmatpush1.msra.mxu0 %v1933
    %1976 = vmatprep.subr.mxu0 0.0
    %1977 = vmatpush1.msra.mxu0 %v1932
    %1978 = vmatprep.subr.mxu0 0.0
    %1979 = vmatpush2.msra.mxu0 0.0
    %1980 = vmatprep.subr.mxu0 0.0
    %1981 = vmatpush2.msra.mxu0 0.0
    %1982 = vmatprep.subr.mxu0 0.0
    %1983 = vmatpush2.msra.mxu0 0.0
    %1984 = vmatprep.subr.mxu0 0.0
    %1985 = vmatpush2.msra.mxu0 0.0
    %1986 = vmatprep.subr.mxu0 0.0
    %1987 = vmatpush2.msra.mxu0 0.0
    %1988 = vmatprep.subr.mxu0 0.0
    %1989 = vmatpush2.msra.mxu0 0.0
    %1990 = vmatprep.subr.mxu0 0.0
    %1991 = vmatpush2.msra.mxu0 0.0
    %1992 = vmatprep.subr.mxu0 0.0
    %1993 = vmatpush2.msra.mxu0 0.0
    %1994 = vmatprep.subr.mxu0 0.0
    %1995 = vmatpush2.msra.mxu0 0.0
    %1996 = vmatprep.subr.mxu0 0.0
    %1997 = vmatpush2.msra.mxu0 0.0
    %1998 = vmatprep.subr.mxu0 0.0
    %1999 = vmatpush2.msra.mxu0 0.0
    %2000 = vmatprep.subr.mxu0 0.0
    %2001 = vmatpush2.msra.mxu0 0.0
    %2002 = vmatprep.subr.mxu0 0.0
    %2003 = vmatpush2.msra.mxu0 0.0
    %2004 = vmatprep.subr.mxu0 0.0
    %2005 = vmatpush2.msra.mxu0 0.0
    %2006 = vmatprep.subr.mxu0 0.0
    %2007 = vmatpush2.msra.mxu0 0.0
    %2008 = vmatprep.subr.mxu0 0.0
    %2009 = vmatpush2.msra.mxu0 0.0
    %2010 = vmatprep.mubr.f32.mxu0 0.0
    %2011 = vmatmul.mubr.f32.gmra.mxu0 %v1941
    %v2012 = vpop.f32.mrf.mxu0
    %v2013 = vadd.f32 %v1939, %v2012
    %v2014 = vpop.f32.mrf.mxu0
    %2015 = vmatprep.mubr.f32.mxu0 0.0
    %2016 = vmatmul.mubr.f32.gmra.mxu0 %v1944
    %v2017 = vpop.f32.mrf.mxu0
    %v2018 = vadd.f32 %v1939, %v2017
    %v2019 = vpop.f32.mrf.mxu0
    %2020 = vdwg.mxu0
    %2022 = vrot.lane.b32.xlu0 %v2013, 96
    %v2023 = vpop.permute.xlu0 %2022
    %v2024 = vsel %vm186, %v2013, 0
    %v2026 = vsel %vm186, %v2023, 0
    %2028 = vmatprep.subr.mxu0 0.0
    %2029 = vmatpush1.xpose.msra.mxu0 0.0
    %2030 = vmatprep.subr.mxu0 0.0
    %2031 = vmatpush1.xpose.msra.mxu0 0.0
    %2032 = vmatprep.subr.mxu0 0.0
    %2033 = vmatpush1.xpose.msra.mxu0 0.0
    %2034 = vmatprep.subr.mxu0 0.0
    %2035 = vmatpush1.xpose.msra.mxu0 0.0
    %2036 = vmatprep.subr.mxu0 0.0
    %2037 = vmatpush1.xpose.msra.mxu0 0.0
    %2038 = vmatprep.subr.mxu0 0.0
    %2039 = vmatpush1.xpose.msra.mxu0 0.0
    %2040 = vmatprep.subr.mxu0 0.0
    %2041 = vmatpush1.xpose.msra.mxu0 0.0
    %2042 = vmatprep.subr.mxu0 0.0
    %2043 = vmatpush1.xpose.msra.mxu0 0.0
    %2044 = vmatprep.subr.mxu0 0.0
    %2045 = vmatpush1.xpose.msra.mxu0 0.0
    %2046 = vmatprep.subr.mxu0 0.0
    %2047 = vmatpush1.xpose.msra.mxu0 0.0
    %2048 = vmatprep.subr.mxu0 0.0
    %2049 = vmatpush1.xpose.msra.mxu0 0.0
    %2050 = vmatprep.subr.mxu0 0.0
    %2051 = vmatpush1.xpose.msra.mxu0 0.0
    %2052 = vmatprep.subr.mxu0 0.0
    %2053 = vmatpush1.xpose.msra.mxu0 0.0
    %2054 = vmatprep.subr.mxu0 0.0
    %2055 = vmatpush1.xpose.msra.mxu0 0.0
    %2056 = vmatprep.subr.mxu0 0.0
    %2057 = vmatpush1.xpose.msra.mxu0 0.0
    %2058 = vmatprep.subr.mxu0 0.0
    %2059 = vmatpush1.xpose.msra.mxu0 %v2026
    %2060 = vmatprep.subr.mxu0 0.0
    %2061 = vmatpush2.xpose.msra.mxu0 0.0
    %2062 = vmatprep.subr.mxu0 0.0
    %2063 = vmatpush2.xpose.msra.mxu0 0.0
    %2064 = vmatprep.subr.mxu0 0.0
    %2065 = vmatpush2.xpose.msra.mxu0 0.0
    %2066 = vmatprep.subr.mxu0 0.0
    %2067 = vmatpush2.xpose.msra.mxu0 0.0
    %2068 = vmatprep.subr.mxu0 0.0
    %2069 = vmatpush2.xpose.msra.mxu0 0.0
    %2070 = vmatprep.subr.mxu0 0.0
    %2071 = vmatpush2.xpose.msra.mxu0 0.0
    %2072 = vmatprep.subr.mxu0 0.0
    %2073 = vmatpush2.xpose.msra.mxu0 0.0
    %2074 = vmatprep.subr.mxu0 0.0
    %2075 = vmatpush2.xpose.msra.mxu0 0.0
    %2076 = vmatprep.subr.mxu0 0.0
    %2077 = vmatpush2.xpose.msra.mxu0 0.0
    %2078 = vmatprep.subr.mxu0 0.0
    %2079 = vmatpush2.xpose.msra.mxu0 0.0
    %2080 = vmatprep.subr.mxu0 0.0
    %2081 = vmatpush2.xpose.msra.mxu0 0.0
    %2082 = vmatprep.subr.mxu0 0.0
    %2083 = vmatpush2.xpose.msra.mxu0 0.0
    %2084 = vmatprep.subr.mxu0 0.0
    %2085 = vmatpush2.xpose.msra.mxu0 0.0
    %2086 = vmatprep.subr.mxu0 0.0
    %2087 = vmatpush2.xpose.msra.mxu0 0.0
    %2088 = vmatprep.subr.mxu0 0.0
    %2089 = vmatpush2.xpose.msra.mxu0 0.0
    %2090 = vmatprep.subr.mxu0 0.0
    %2091 = vmatpush2.xpose.msra.mxu0 0.0
    %2092 = vmatprep.mubr.f32.mxu0 0.0
    %2093 = vmatmul.mubr.f32.gmra.mxu0 %v2024
    %v2094 = vpop.f32.mrf.mxu0
    %v2095 = vadd.f32 0.0, %v2094
    %v2096 = vpop.f32.mrf.mxu0
    %2097 = vdwg.mxu0
    %2099 = vrot.lane.b32.xlu0 %v2018, 96
    %v2100 = vpop.permute.xlu0 %2099
    %v2101 = vsel %vm186, %v2018, 0
    %v2103 = vsel %vm186, %v2100, 0
    %2105 = vmatprep.subr.mxu0 0.0
    %2106 = vmatpush1.xpose.msra.mxu0 0.0
    %2107 = vmatprep.subr.mxu0 0.0
    %2108 = vmatpush1.xpose.msra.mxu0 0.0
    %2109 = vmatprep.subr.mxu0 0.0
    %2110 = vmatpush1.xpose.msra.mxu0 0.0
    %2111 = vmatprep.subr.mxu0 0.0
    %2112 = vmatpush1.xpose.msra.mxu0 0.0
    %2113 = vmatprep.subr.mxu0 0.0
    %2114 = vmatpush1.xpose.msra.mxu0 0.0
    %2115 = vmatprep.subr.mxu0 0.0
    %2116 = vmatpush1.xpose.msra.mxu0 0.0
    %2117 = vmatprep.subr.mxu0 0.0
    %2118 = vmatpush1.xpose.msra.mxu0 0.0
    %2119 = vmatprep.subr.mxu0 0.0
    %2120 = vmatpush1.xpose.msra.mxu0 0.0
    %2121 = vmatprep.subr.mxu0 0.0
    %2122 = vmatpush1.xpose.msra.mxu0 0.0
    %2123 = vmatprep.subr.mxu0 0.0
    %2124 = vmatpush1.xpose.msra.mxu0 0.0
    %2125 = vmatprep.subr.mxu0 0.0
    %2126 = vmatpush1.xpose.msra.mxu0 0.0
    %2127 = vmatprep.subr.mxu0 0.0
    %2128 = vmatpush1.xpose.msra.mxu0 0.0
    %2129 = vmatprep.subr.mxu0 0.0
    %2130 = vmatpush1.xpose.msra.mxu0 0.0
    %2131 = vmatprep.subr.mxu0 0.0
    %2132 = vmatpush1.xpose.msra.mxu0 0.0
    %2133 = vmatprep.subr.mxu0 0.0
    %2134 = vmatpush1.xpose.msra.mxu0 0.0
    %2135 = vmatprep.subr.mxu0 0.0
    %2136 = vmatpush1.xpose.msra.mxu0 %v2103
    %2137 = vmatprep.subr.mxu0 0.0
    %2138 = vmatpush2.xpose.msra.mxu0 0.0
    %2139 = vmatprep.subr.mxu0 0.0
    %2140 = vmatpush2.xpose.msra.mxu0 0.0
    %2141 = vmatprep.subr.mxu0 0.0
    %2142 = vmatpush2.xpose.msra.mxu0 0.0
    %2143 = vmatprep.subr.mxu0 0.0
    %2144 = vmatpush2.xpose.msra.mxu0 0.0
    %2145 = vmatprep.subr.mxu0 0.0
    %2146 = vmatpush2.xpose.msra.mxu0 0.0
    %2147 = vmatprep.subr.mxu0 0.0
    %2148 = vmatpush2.xpose.msra.mxu0 0.0
    %2149 = vmatprep.subr.mxu0 0.0
    %2150 = vmatpush2.xpose.msra.mxu0 0.0
    %2151 = vmatprep.subr.mxu0 0.0
    %2152 = vmatpush2.xpose.msra.mxu0 0.0
    %2153 = vmatprep.subr.mxu0 0.0
    %2154 = vmatpush2.xpose.msra.mxu0 0.0
    %2155 = vmatprep.subr.mxu0 0.0
    %2156 = vmatpush2.xpose.msra.mxu0 0.0
    %2157 = vmatprep.subr.mxu0 0.0
    %2158 = vmatpush2.xpose.msra.mxu0 0.0
    %2159 = vmatprep.subr.mxu0 0.0
    %2160 = vmatpush2.xpose.msra.mxu0 0.0
    %2161 = vmatprep.subr.mxu0 0.0
    %2162 = vmatpush2.xpose.msra.mxu0 0.0
    %2163 = vmatprep.subr.mxu0 0.0
    %2164 = vmatpush2.xpose.msra.mxu0 0.0
    %2165 = vmatprep.subr.mxu0 0.0
    %2166 = vmatpush2.xpose.msra.mxu0 0.0
    %2167 = vmatprep.subr.mxu0 0.0
    %2168 = vmatpush2.xpose.msra.mxu0 0.0
    %2169 = vmatprep.mubr.f32.mxu0 0.0
    %2170 = vmatmul.mubr.f32.gmra.mxu0 %v2101
    %v2171 = vpop.f32.mrf.mxu0
    %v2172 = vadd.f32 0.0, %v2171
    %v2173 = vpop.f32.mrf.mxu0
    %2174 = vdwg.mxu0
    %v2175 = vmul.f32 %v2095, 0.35355338
    %v2176 = vmul.f32 %v2172, 0.35355338
    %v2177 = vadd.f32 %v2175, %v49
    %v2178 = vadd.f32 %v2176, %v49
    %v2179 = vsel %vm186, %v2177, -inf
    %2180 = vmax.xlane.f32.xlu0 %v2179
    %v2181 = vpop.xlane.xlu0 %2180
    %v2182 = vsel %vm186, %v2178, -inf
    %2183 = vmax.xlane.f32.xlu0 %v2182
    %v2184 = vpop.xlane.xlu0 %2183
    %v2185 = vsub.f32 %v2177, %v2181
    %v2186 = vsub.f32 %v2178, %v2184
    %v2187 = vmul.f32 %v2185, 1.442695
    %v2188 = vpow.pop %v2187
    %v2189 = vmul.f32 %v2186, 1.442695
    %v2190 = vpow.pop %v2189
    %v2191 = vsel %vm186, %v2188, 0.0
    %2192 = vadd.xlane.f32.xlu0 %v2191
    %v2193 = vpop.xlane.xlu0 %2192
    %v2194 = vsel %vm186, %v2190, 0.0
    %2195 = vadd.xlane.f32.xlu0 %v2194
    %v2196 = vpop.xlane.xlu0 %2195
    %v2197 = vrcp.pop %v2193
    %v2198 = vrcp.pop %v2196
    %v2199 = vmul.f32 %v2188, %v2197
    %v2200 = vmul.f32 %v2190, %v2198
    %2201 = vrot.lane.b32.xlu0 %v2013, 64
    %v2202 = vpop.permute.xlu0 %2201
    %v2205 = vsel %vm186, %v2199, 0
    %2207 = vmatprep.subr.mxu0 0.0
    %2208 = vmatpush1.msra.mxu0 0.0
    %2209 = vmatprep.subr.mxu0 0.0
    %2210 = vmatpush1.msra.mxu0 0.0
    %2211 = vmatprep.subr.mxu0 0.0
    %2212 = vmatpush1.msra.mxu0 0.0
    %2213 = vmatprep.subr.mxu0 0.0
    %2214 = vmatpush1.msra.mxu0 0.0
    %2215 = vmatprep.subr.mxu0 0.0
    %2216 = vmatpush1.msra.mxu0 0.0
    %2217 = vmatprep.subr.mxu0 0.0
    %2218 = vmatpush1.msra.mxu0 0.0
    %2219 = vmatprep.subr.mxu0 0.0
    %2220 = vmatpush1.msra.mxu0 0.0
    %2221 = vmatprep.subr.mxu0 0.0
    %2222 = vmatpush1.msra.mxu0 0.0
    %2223 = vmatprep.subr.mxu0 0.0
    %2224 = vmatpush1.msra.mxu0 0.0
    %2225 = vmatprep.subr.mxu0 0.0
    %2226 = vmatpush1.msra.mxu0 0.0
    %2227 = vmatprep.subr.mxu0 0.0
    %2228 = vmatpush1.msra.mxu0 0.0
    %2229 = vmatprep.subr.mxu0 0.0
    %2230 = vmatpush1.msra.mxu0 0.0
    %2231 = vmatprep.subr.mxu0 0.0
    %2232 = vmatpush1.msra.mxu0 0.0
    %2233 = vmatprep.subr.mxu0 0.0
    %2234 = vmatpush1.msra.mxu0 0.0
    %2235 = vmatprep.subr.mxu0 0.0
    %2236 = vmatpush1.msra.mxu0 0.0
    %2237 = vmatprep.subr.mxu0 0.0
    %2238 = vmatpush1.msra.mxu0 %v2202
    %2239 = vmatprep.subr.mxu0 0.0
    %2240 = vmatpush2.msra.mxu0 0.0
    %2241 = vmatprep.subr.mxu0 0.0
    %2242 = vmatpush2.msra.mxu0 0.0
    %2243 = vmatprep.subr.mxu0 0.0
    %2244 = vmatpush2.msra.mxu0 0.0
    %2245 = vmatprep.subr.mxu0 0.0
    %2246 = vmatpush2.msra.mxu0 0.0
    %2247 = vmatprep.subr.mxu0 0.0
    %2248 = vmatpush2.msra.mxu0 0.0
    %2249 = vmatprep.subr.mxu0 0.0
    %2250 = vmatpush2.msra.mxu0 0.0
    %2251 = vmatprep.subr.mxu0 0.0
    %2252 = vmatpush2.msra.mxu0 0.0
    %2253 = vmatprep.subr.mxu0 0.0
    %2254 = vmatpush2.msra.mxu0 0.0
    %2255 = vmatprep.subr.mxu0 0.0
    %2256 = vmatpush2.msra.mxu0 0.0
    %2257 = vmatprep.subr.mxu0 0.0
    %2258 = vmatpush2.msra.mxu0 0.0
    %2259 = vmatprep.subr.mxu0 0.0
    %2260 = vmatpush2.msra.mxu0 0.0
    %2261 = vmatprep.subr.mxu0 0.0
    %2262 = vmatpush2.msra.mxu0 0.0
    %2263 = vmatprep.subr.mxu0 0.0
    %2264 = vmatpush2.msra.mxu0 0.0
    %2265 = vmatprep.subr.mxu0 0.0
    %2266 = vmatpush2.msra.mxu0 0.0
    %2267 = vmatprep.subr.mxu0 0.0
    %2268 = vmatpush2.msra.mxu0 0.0
    %2269 = vmatprep.subr.mxu0 0.0
    %2270 = vmatpush2.msra.mxu0 0.0
    %2271 = vmatprep.mubr.f32.mxu0 0.0
    %2272 = vmatmul.mubr.f32.gmra.mxu0 %v2205
    %v2273 = vpop.f32.mrf.mxu0
    %v2274 = vadd.f32 0.0, %v2273
    %v2275 = vpop.f32.mrf.mxu0
    %2276 = vdwg.mxu0
    %2277 = vrot.lane.b32.xlu0 %v2018, 64
    %v2278 = vpop.permute.xlu0 %2277
    %v2281 = vsel %vm186, %v2200, 0
    %2283 = vmatprep.subr.mxu0 0.0
    %2284 = vmatpush1.msra.mxu0 0.0
    %2285 = vmatprep.subr.mxu0 0.0
    %2286 = vmatpush1.msra.mxu0 0.0
    %2287 = vmatprep.subr.mxu0 0.0
    %2288 = vmatpush1.msra.mxu0 0.0
    %2289 = vmatprep.subr.mxu0 0.0
    %2290 = vmatpush1.msra.mxu0 0.0
    %2291 = vmatprep.subr.mxu0 0.0
    %2292 = vmatpush1.msra.mxu0 0.0
    %2293 = vmatprep.subr.mxu0 0.0
    %2294 = vmatpush1.msra.mxu0 0.0
    %2295 = vmatprep.subr.mxu0 0.0
    %2296 = vmatpush1.msra.mxu0 0.0
    %2297 = vmatprep.subr.mxu0 0.0
    %2298 = vmatpush1.msra.mxu0 0.0
    %2299 = vmatprep.subr.mxu0 0.0
    %2300 = vmatpush1.msra.mxu0 0.0
    %2301 = vmatprep.subr.mxu0 0.0
    %2302 = vmatpush1.msra.mxu0 0.0
    %2303 = vmatprep.subr.mxu0 0.0
    %2304 = vmatpush1.msra.mxu0 0.0
    %2305 = vmatprep.subr.mxu0 0.0
    %2306 = vmatpush1.msra.mxu0 0.0
    %2307 = vmatprep.subr.mxu0 0.0
    %2308 = vmatpush1.msra.mxu0 0.0
    %2309 = vmatprep.subr.mxu0 0.0
    %2310 = vmatpush1.msra.mxu0 0.0
    %2311 = vmatprep.subr.mxu0 0.0
    %2312 = vmatpush1.msra.mxu0 0.0
    %2313 = vmatprep.subr.mxu0 0.0
    %2314 = vmatpush1.msra.mxu0 %v2278
    %2315 = vmatprep.subr.mxu0 0.0
    %2316 = vmatpush2.msra.mxu0 0.0
    %2317 = vmatprep.subr.mxu0 0.0
    %2318 = vmatpush2.msra.mxu0 0.0
    %2319 = vmatprep.subr.mxu0 0.0
    %2320 = vmatpush2.msra.mxu0 0.0
    %2321 = vmatprep.subr.mxu0 0.0
    %2322 = vmatpush2.msra.mxu0 0.0
    %2323 = vmatprep.subr.mxu0 0.0
    %2324 = vmatpush2.msra.mxu0 0.0
    %2325 = vmatprep.subr.mxu0 0.0
    %2326 = vmatpush2.msra.mxu0 0.0
    %2327 = vmatprep.subr.mxu0 0.0
    %2328 = vmatpush2.msra.mxu0 0.0
    %2329 = vmatprep.subr.mxu0 0.0
    %2330 = vmatpush2.msra.mxu0 0.0
    %2331 = vmatprep.subr.mxu0 0.0
    %2332 = vmatpush2.msra.mxu0 0.0
    %2333 = vmatprep.subr.mxu0 0.0
    %2334 = vmatpush2.msra.mxu0 0.0
    %2335 = vmatprep.subr.mxu0 0.0
    %2336 = vmatpush2.msra.mxu0 0.0
    %2337 = vmatprep.subr.mxu0 0.0
    %2338 = vmatpush2.msra.mxu0 0.0
    %2339 = vmatprep.subr.mxu0 0.0
    %2340 = vmatpush2.msra.mxu0 0.0
    %2341 = vmatprep.subr.mxu0 0.0
    %2342 = vmatpush2.msra.mxu0 0.0
    %2343 = vmatprep.subr.mxu0 0.0
    %2344 = vmatpush2.msra.mxu0 0.0
    %2345 = vmatprep.subr.mxu0 0.0
    %2346 = vmatpush2.msra.mxu0 0.0
    %2347 = vmatprep.mubr.f32.mxu0 0.0
    %2348 = vmatmul.mubr.f32.gmra.mxu0 %v2281
    %v2349 = vpop.f32.mrf.mxu0
    %v2350 = vadd.f32 0.0, %v2349
    %v2351 = vpop.f32.mrf.mxu0
    %2352 = vdwg.mxu0
    %2353 = vrot.lane.b32.xlu0 %v2013, 120
    %v2354 = vpop.permute.xlu0 %2353
    %2355 = vrot.lane.b32.xlu0 %v2013, 88
    %v2356 = vpop.permute.xlu0 %2355
    %v2357 = vsel %vm186, %v2354, 0
    %v2359 = vsel %vm186, %v2356, 0
    %2361 = vmatprep.subr.mxu0 0.0
    %2362 = vmatpush1.xpose.msra.mxu0 0.0
    %2363 = vmatprep.subr.mxu0 0.0
    %2364 = vmatpush1.xpose.msra.mxu0 0.0
    %2365 = vmatprep.subr.mxu0 0.0
    %2366 = vmatpush1.xpose.msra.mxu0 0.0
    %2367 = vmatprep.subr.mxu0 0.0
    %2368 = vmatpush1.xpose.msra.mxu0 0.0
    %2369 = vmatprep.subr.mxu0 0.0
    %2370 = vmatpush1.xpose.msra.mxu0 0.0
    %2371 = vmatprep.subr.mxu0 0.0
    %2372 = vmatpush1.xpose.msra.mxu0 0.0
    %2373 = vmatprep.subr.mxu0 0.0
    %2374 = vmatpush1.xpose.msra.mxu0 0.0
    %2375 = vmatprep.subr.mxu0 0.0
    %2376 = vmatpush1.xpose.msra.mxu0 0.0
    %2377 = vmatprep.subr.mxu0 0.0
    %2378 = vmatpush1.xpose.msra.mxu0 0.0
    %2379 = vmatprep.subr.mxu0 0.0
    %2380 = vmatpush1.xpose.msra.mxu0 0.0
    %2381 = vmatprep.subr.mxu0 0.0
    %2382 = vmatpush1.xpose.msra.mxu0 0.0
    %2383 = vmatprep.subr.mxu0 0.0
    %2384 = vmatpush1.xpose.msra.mxu0 0.0
    %2385 = vmatprep.subr.mxu0 0.0
    %2386 = vmatpush1.xpose.msra.mxu0 0.0
    %2387 = vmatprep.subr.mxu0 0.0
    %2388 = vmatpush1.xpose.msra.mxu0 0.0
    %2389 = vmatprep.subr.mxu0 0.0
    %2390 = vmatpush1.xpose.msra.mxu0 0.0
    %2391 = vmatprep.subr.mxu0 0.0
    %2392 = vmatpush1.xpose.msra.mxu0 %v2359
    %2393 = vmatprep.subr.mxu0 0.0
    %2394 = vmatpush2.xpose.msra.mxu0 0.0
    %2395 = vmatprep.subr.mxu0 0.0
    %2396 = vmatpush2.xpose.msra.mxu0 0.0
    %2397 = vmatprep.subr.mxu0 0.0
    %2398 = vmatpush2.xpose.msra.mxu0 0.0
    %2399 = vmatprep.subr.mxu0 0.0
    %2400 = vmatpush2.xpose.msra.mxu0 0.0
    %2401 = vmatprep.subr.mxu0 0.0
    %2402 = vmatpush2.xpose.msra.mxu0 0.0
    %2403 = vmatprep.subr.mxu0 0.0
    %2404 = vmatpush2.xpose.msra.mxu0 0.0
    %2405 = vmatprep.subr.mxu0 0.0
    %2406 = vmatpush2.xpose.msra.mxu0 0.0
    %2407 = vmatprep.subr.mxu0 0.0
    %2408 = vmatpush2.xpose.msra.mxu0 0.0
    %2409 = vmatprep.subr.mxu0 0.0
    %2410 = vmatpush2.xpose.msra.mxu0 0.0
    %2411 = vmatprep.subr.mxu0 0.0
    %2412 = vmatpush2.xpose.msra.mxu0 0.0
    %2413 = vmatprep.subr.mxu0 0.0
    %2414 = vmatpush2.xpose.msra.mxu0 0.0
    %2415 = vmatprep.subr.mxu0 0.0
    %2416 = vmatpush2.xpose.msra.mxu0 0.0
    %2417 = vmatprep.subr.mxu0 0.0
    %2418 = vmatpush2.xpose.msra.mxu0 0.0
    %2419 = vmatprep.subr.mxu0 0.0
    %2420 = vmatpush2.xpose.msra.mxu0 0.0
    %2421 = vmatprep.subr.mxu0 0.0
    %2422 = vmatpush2.xpose.msra.mxu0 0.0
    %2423 = vmatprep.subr.mxu0 0.0
    %2424 = vmatpush2.xpose.msra.mxu0 0.0
    %2425 = vmatprep.mubr.f32.mxu0 0.0
    %2426 = vmatmul.mubr.f32.gmra.mxu0 %v2357
    %v2427 = vpop.f32.mrf.mxu0
    %v2428 = vadd.f32 0.0, %v2427
    %v2429 = vpop.f32.mrf.mxu0
    %2430 = vdwg.mxu0
    %2431 = vrot.lane.b32.xlu0 %v2018, 120
    %v2432 = vpop.permute.xlu0 %2431
    %2433 = vrot.lane.b32.xlu0 %v2018, 88
    %v2434 = vpop.permute.xlu0 %2433
    %v2435 = vsel %vm186, %v2432, 0
    %v2437 = vsel %vm186, %v2434, 0
    %2439 = vmatprep.subr.mxu0 0.0
    %2440 = vmatpush1.xpose.msra.mxu0 0.0
    %2441 = vmatprep.subr.mxu0 0.0
    %2442 = vmatpush1.xpose.msra.mxu0 0.0
    %2443 = vmatprep.subr.mxu0 0.0
    %2444 = vmatpush1.xpose.msra.mxu0 0.0
    %2445 = vmatprep.subr.mxu0 0.0
    %2446 = vmatpush1.xpose.msra.mxu0 0.0
    %2447 = vmatprep.subr.mxu0 0.0
    %2448 = vmatpush1.xpose.msra.mxu0 0.0
    %2449 = vmatprep.subr.mxu0 0.0
    %2450 = vmatpush1.xpose.msra.mxu0 0.0
    %2451 = vmatprep.subr.mxu0 0.0
    %2452 = vmatpush1.xpose.msra.mxu0 0.0
    %2453 = vmatprep.subr.mxu0 0.0
    %2454 = vmatpush1.xpose.msra.mxu0 0.0
    %2455 = vmatprep.subr.mxu0 0.0
    %2456 = vmatpush1.xpose.msra.mxu0 0.0
    %2457 = vmatprep.subr.mxu0 0.0
    %2458 = vmatpush1.xpose.msra.mxu0 0.0
    %2459 = vmatprep.subr.mxu0 0.0
    %2460 = vmatpush1.xpose.msra.mxu0 0.0
    %2461 = vmatprep.subr.mxu0 0.0
    %2462 = vmatpush1.xpose.msra.mxu0 0.0
    %2463 = vmatprep.subr.mxu0 0.0
    %2464 = vmatpush1.xpose.msra.mxu0 0.0
    %2465 = vmatprep.subr.mxu0 0.0
    %2466 = vmatpush1.xpose.msra.mxu0 0.0
    %2467 = vmatprep.subr.mxu0 0.0
    %2468 = vmatpush1.xpose.msra.mxu0 0.0
    %2469 = vmatprep.subr.mxu0 0.0
    %2470 = vmatpush1.xpose.msra.mxu0 %v2437
    %2471 = vmatprep.subr.mxu0 0.0
    %2472 = vmatpush2.xpose.msra.mxu0 0.0
    %2473 = vmatprep.subr.mxu0 0.0
    %2474 = vmatpush2.xpose.msra.mxu0 0.0
    %2475 = vmatprep.subr.mxu0 0.0
    %2476 = vmatpush2.xpose.msra.mxu0 0.0
    %2477 = vmatprep.subr.mxu0 0.0
    %2478 = vmatpush2.xpose.msra.mxu0 0.0
    %2479 = vmatprep.subr.mxu0 0.0
    %2480 = vmatpush2.xpose.msra.mxu0 0.0
    %2481 = vmatprep.subr.mxu0 0.0
    %2482 = vmatpush2.xpose.msra.mxu0 0.0
    %2483 = vmatprep.subr.mxu0 0.0
    %2484 = vmatpush2.xpose.msra.mxu0 0.0
    %2485 = vmatprep.subr.mxu0 0.0
    %2486 = vmatpush2.xpose.msra.mxu0 0.0
    %2487 = vmatprep.subr.mxu0 0.0
    %2488 = vmatpush2.xpose.msra.mxu0 0.0
    %2489 = vmatprep.subr.mxu0 0.0
    %2490 = vmatpush2.xpose.msra.mxu0 0.0
    %2491 = vmatprep.subr.mxu0 0.0
    %2492 = vmatpush2.xpose.msra.mxu0 0.0
    %2493 = vmatprep.subr.mxu0 0.0
    %2494 = vmatpush2.xpose.msra.mxu0 0.0
    %2495 = vmatprep.subr.mxu0 0.0
    %2496 = vmatpush2.xpose.msra.mxu0 0.0
    %2497 = vmatprep.subr.mxu0 0.0
    %2498 = vmatpush2.xpose.msra.mxu0 0.0
    %2499 = vmatprep.subr.mxu0 0.0
    %2500 = vmatpush2.xpose.msra.mxu0 0.0
    %2501 = vmatprep.subr.mxu0 0.0
    %2502 = vmatpush2.xpose.msra.mxu0 0.0
    %2503 = vmatprep.mubr.f32.mxu0 0.0
    %2504 = vmatmul.mubr.f32.gmra.mxu0 %v2435
    %v2505 = vpop.f32.mrf.mxu0
    %v2506 = vadd.f32 0.0, %v2505
    %v2507 = vpop.f32.mrf.mxu0
    %2508 = vdwg.mxu0
    %v2509 = vmul.f32 %v2428, 0.35355338
    %v2510 = vmul.f32 %v2506, 0.35355338
    %v2511 = vadd.f32 %v2509, %v49
    %v2512 = vadd.f32 %v2510, %v49
    %v2513 = vsel %vm186, %v2511, -inf
    %2514 = vmax.xlane.f32.xlu0 %v2513
    %v2515 = vpop.xlane.xlu0 %2514
    %v2516 = vsel %vm186, %v2512, -inf
    %2517 = vmax.xlane.f32.xlu0 %v2516
    %v2518 = vpop.xlane.xlu0 %2517
    %v2519 = vsub.f32 %v2511, %v2515
    %v2520 = vsub.f32 %v2512, %v2518
    %v2521 = vmul.f32 %v2519, 1.442695
    %v2522 = vpow.pop %v2521
    %v2523 = vmul.f32 %v2520, 1.442695
    %v2524 = vpow.pop %v2523
    %v2525 = vsel %vm186, %v2522, 0.0
    %2526 = vadd.xlane.f32.xlu0 %v2525
    %v2527 = vpop.xlane.xlu0 %2526
    %v2528 = vsel %vm186, %v2524, 0.0
    %2529 = vadd.xlane.f32.xlu0 %v2528
    %v2530 = vpop.xlane.xlu0 %2529
    %v2531 = vrcp.pop %v2527
    %v2532 = vrcp.pop %v2530
    %v2533 = vmul.f32 %v2522, %v2531
    %v2534 = vmul.f32 %v2524, %v2532
    %2535 = vrot.lane.b32.xlu0 %v2013, 56
    %v2536 = vpop.permute.xlu0 %2535
    %v2539 = vsel %vm186, %v2533, 0
    %2541 = vmatprep.subr.mxu0 0.0
    %2542 = vmatpush1.msra.mxu0 0.0
    %2543 = vmatprep.subr.mxu0 0.0
    %2544 = vmatpush1.msra.mxu0 0.0
    %2545 = vmatprep.subr.mxu0 0.0
    %2546 = vmatpush1.msra.mxu0 0.0
    %2547 = vmatprep.subr.mxu0 0.0
    %2548 = vmatpush1.msra.mxu0 0.0
    %2549 = vmatprep.subr.mxu0 0.0
    %2550 = vmatpush1.msra.mxu0 0.0
    %2551 = vmatprep.subr.mxu0 0.0
    %2552 = vmatpush1.msra.mxu0 0.0
    %2553 = vmatprep.subr.mxu0 0.0
    %2554 = vmatpush1.msra.mxu0 0.0
    %2555 = vmatprep.subr.mxu0 0.0
    %2556 = vmatpush1.msra.mxu0 0.0
    %2557 = vmatprep.subr.mxu0 0.0
    %2558 = vmatpush1.msra.mxu0 0.0
    %2559 = vmatprep.subr.mxu0 0.0
    %2560 = vmatpush1.msra.mxu0 0.0
    %2561 = vmatprep.subr.mxu0 0.0
    %2562 = vmatpush1.msra.mxu0 0.0
    %2563 = vmatprep.subr.mxu0 0.0
    %2564 = vmatpush1.msra.mxu0 0.0
    %2565 = vmatprep.subr.mxu0 0.0
    %2566 = vmatpush1.msra.mxu0 0.0
    %2567 = vmatprep.subr.mxu0 0.0
    %2568 = vmatpush1.msra.mxu0 0.0
    %2569 = vmatprep.subr.mxu0 0.0
    %2570 = vmatpush1.msra.mxu0 0.0
    %2571 = vmatprep.subr.mxu0 0.0
    %2572 = vmatpush1.msra.mxu0 %v2536
    %2573 = vmatprep.subr.mxu0 0.0
    %2574 = vmatpush2.msra.mxu0 0.0
    %2575 = vmatprep.subr.mxu0 0.0
    %2576 = vmatpush2.msra.mxu0 0.0
    %2577 = vmatprep.subr.mxu0 0.0
    %2578 = vmatpush2.msra.mxu0 0.0
    %2579 = vmatprep.subr.mxu0 0.0
    %2580 = vmatpush2.msra.mxu0 0.0
    %2581 = vmatprep.subr.mxu0 0.0
    %2582 = vmatpush2.msra.mxu0 0.0
    %2583 = vmatprep.subr.mxu0 0.0
    %2584 = vmatpush2.msra.mxu0 0.0
    %2585 = vmatprep.subr.mxu0 0.0
    %2586 = vmatpush2.msra.mxu0 0.0
    %2587 = vmatprep.subr.mxu0 0.0
    %2588 = vmatpush2.msra.mxu0 0.0
    %2589 = vmatprep.subr.mxu0 0.0
    %2590 = vmatpush2.msra.mxu0 0.0
    %2591 = vmatprep.subr.mxu0 0.0
    %2592 = vmatpush2.msra.mxu0 0.0
    %2593 = vmatprep.subr.mxu0 0.0
    %2594 = vmatpush2.msra.mxu0 0.0
    %2595 = vmatprep.subr.mxu0 0.0
    %2596 = vmatpush2.msra.mxu0 0.0
    %2597 = vmatprep.subr.mxu0 0.0
    %2598 = vmatpush2.msra.mxu0 0.0
    %2599 = vmatprep.subr.mxu0 0.0
    %2600 = vmatpush2.msra.mxu0 0.0
    %2601 = vmatprep.subr.mxu0 0.0
    %2602 = vmatpush2.msra.mxu0 0.0
    %2603 = vmatprep.subr.mxu0 0.0
    %2604 = vmatpush2.msra.mxu0 0.0
    %2605 = vmatprep.mubr.f32.mxu0 0.0
    %2606 = vmatmul.mubr.f32.gmra.mxu0 %v2539
    %v2607 = vpop.f32.mrf.mxu0
    %v2608 = vadd.f32 0.0, %v2607
    %v2609 = vpop.f32.mrf.mxu0
    %2610 = vdwg.mxu0
    %2611 = vrot.lane.b32.xlu0 %v2018, 56
    %v2612 = vpop.permute.xlu0 %2611
    %v2615 = vsel %vm186, %v2534, 0
    %2617 = vmatprep.subr.mxu0 0.0
    %2618 = vmatpush1.msra.mxu0 0.0
    %2619 = vmatprep.subr.mxu0 0.0
    %2620 = vmatpush1.msra.mxu0 0.0
    %2621 = vmatprep.subr.mxu0 0.0
    %2622 = vmatpush1.msra.mxu0 0.0
    %2623 = vmatprep.subr.mxu0 0.0
    %2624 = vmatpush1.msra.mxu0 0.0
    %2625 = vmatprep.subr.mxu0 0.0
    %2626 = vmatpush1.msra.mxu0 0.0
    %2627 = vmatprep.subr.mxu0 0.0
    %2628 = vmatpush1.msra.mxu0 0.0
    %2629 = vmatprep.subr.mxu0 0.0
    %2630 = vmatpush1.msra.mxu0 0.0
    %2631 = vmatprep.subr.mxu0 0.0
    %2632 = vmatpush1.msra.mxu0 0.0
    %2633 = vmatprep.subr.mxu0 0.0
    %2634 = vmatpush1.msra.mxu0 0.0
    %2635 = vmatprep.subr.mxu0 0.0
    %2636 = vmatpush1.msra.mxu0 0.0
    %2637 = vmatprep.subr.mxu0 0.0
    %2638 = vmatpush1.msra.mxu0 0.0
    %2639 = vmatprep.subr.mxu0 0.0
    %2640 = vmatpush1.msra.mxu0 0.0
    %2641 = vmatprep.subr.mxu0 0.0
    %2642 = vmatpush1.msra.mxu0 0.0
    %2643 = vmatprep.subr.mxu0 0.0
    %2644 = vmatpush1.msra.mxu0 0.0
    %2645 = vmatprep.subr.mxu0 0.0
    %2646 = vmatpush1.msra.mxu0 0.0
    %2647 = vmatprep.subr.mxu0 0.0
    %2648 = vmatpush1.msra.mxu0 %v2612
    %2649 = vmatprep.subr.mxu0 0.0
    %2650 = vmatpush2.msra.mxu0 0.0
    %2651 = vmatprep.subr.mxu0 0.0
    %2652 = vmatpush2.msra.mxu0 0.0
    %2653 = vmatprep.subr.mxu0 0.0
    %2654 = vmatpush2.msra.mxu0 0.0
    %2655 = vmatprep.subr.mxu0 0.0
    %2656 = vmatpush2.msra.mxu0 0.0
    %2657 = vmatprep.subr.mxu0 0.0
    %2658 = vmatpush2.msra.mxu0 0.0
    %2659 = vmatprep.subr.mxu0 0.0
    %2660 = vmatpush2.msra.mxu0 0.0
    %2661 = vmatprep.subr.mxu0 0.0
    %2662 = vmatpush2.msra.mxu0 0.0
    %2663 = vmatprep.subr.mxu0 0.0
    %2664 = vmatpush2.msra.mxu0 0.0
    %2665 = vmatprep.subr.mxu0 0.0
    %2666 = vmatpush2.msra.mxu0 0.0
    %2667 = vmatprep.subr.mxu0 0.0
    %2668 = vmatpush2.msra.mxu0 0.0
    %2669 = vmatprep.subr.mxu0 0.0
    %2670 = vmatpush2.msra.mxu0 0.0
    %2671 = vmatprep.subr.mxu0 0.0
    %2672 = vmatpush2.msra.mxu0 0.0
    %2673 = vmatprep.subr.mxu0 0.0
    %2674 = vmatpush2.msra.mxu0 0.0
    %2675 = vmatprep.subr.mxu0 0.0
    %2676 = vmatpush2.msra.mxu0 0.0
    %2677 = vmatprep.subr.mxu0 0.0
    %2678 = vmatpush2.msra.mxu0 0.0
    %2679 = vmatprep.subr.mxu0 0.0
    %2680 = vmatpush2.msra.mxu0 0.0
    %2681 = vmatprep.mubr.f32.mxu0 0.0
    %2682 = vmatmul.mubr.f32.gmra.mxu0 %v2615
    %v2683 = vpop.f32.mrf.mxu0
    %v2684 = vadd.f32 0.0, %v2683
    %v2685 = vpop.f32.mrf.mxu0
    %2686 = vdwg.mxu0
    %2687 = vrot.lane.b32.xlu0 %v2013, 112
    %v2688 = vpop.permute.xlu0 %2687
    %2689 = vrot.lane.b32.xlu0 %v2013, 80
    %v2690 = vpop.permute.xlu0 %2689
    %v2691 = vsel %vm186, %v2688, 0
    %v2693 = vsel %vm186, %v2690, 0
    %2695 = vmatprep.subr.mxu0 0.0
    %2696 = vmatpush1.xpose.msra.mxu0 0.0
    %2697 = vmatprep.subr.mxu0 0.0
    %2698 = vmatpush1.xpose.msra.mxu0 0.0
    %2699 = vmatprep.subr.mxu0 0.0
    %2700 = vmatpush1.xpose.msra.mxu0 0.0
    %2701 = vmatprep.subr.mxu0 0.0
    %2702 = vmatpush1.xpose.msra.mxu0 0.0
    %2703 = vmatprep.subr.mxu0 0.0
    %2704 = vmatpush1.xpose.msra.mxu0 0.0
    %2705 = vmatprep.subr.mxu0 0.0
    %2706 = vmatpush1.xpose.msra.mxu0 0.0
    %2707 = vmatprep.subr.mxu0 0.0
    %2708 = vmatpush1.xpose.msra.mxu0 0.0
    %2709 = vmatprep.subr.mxu0 0.0
    %2710 = vmatpush1.xpose.msra.mxu0 0.0
    %2711 = vmatprep.subr.mxu0 0.0
    %2712 = vmatpush1.xpose.msra.mxu0 0.0
    %2713 = vmatprep.subr.mxu0 0.0
    %2714 = vmatpush1.xpose.msra.mxu0 0.0
    %2715 = vmatprep.subr.mxu0 0.0
    %2716 = vmatpush1.xpose.msra.mxu0 0.0
    %2717 = vmatprep.subr.mxu0 0.0
    %2718 = vmatpush1.xpose.msra.mxu0 0.0
    %2719 = vmatprep.subr.mxu0 0.0
    %2720 = vmatpush1.xpose.msra.mxu0 0.0
    %2721 = vmatprep.subr.mxu0 0.0
    %2722 = vmatpush1.xpose.msra.mxu0 0.0
    %2723 = vmatprep.subr.mxu0 0.0
    %2724 = vmatpush1.xpose.msra.mxu0 0.0
    %2725 = vmatprep.subr.mxu0 0.0
    %2726 = vmatpush1.xpose.msra.mxu0 %v2693
    %2727 = vmatprep.subr.mxu0 0.0
    %2728 = vmatpush2.xpose.msra.mxu0 0.0
    %2729 = vmatprep.subr.mxu0 0.0
    %2730 = vmatpush2.xpose.msra.mxu0 0.0
    %2731 = vmatprep.subr.mxu0 0.0
    %2732 = vmatpush2.xpose.msra.mxu0 0.0
    %2733 = vmatprep.subr.mxu0 0.0
    %2734 = vmatpush2.xpose.msra.mxu0 0.0
    %2735 = vmatprep.subr.mxu0 0.0
    %2736 = vmatpush2.xpose.msra.mxu0 0.0
    %2737 = vmatprep.subr.mxu0 0.0
    %2738 = vmatpush2.xpose.msra.mxu0 0.0
    %2739 = vmatprep.subr.mxu0 0.0
    %2740 = vmatpush2.xpose.msra.mxu0 0.0
    %2741 = vmatprep.subr.mxu0 0.0
    %2742 = vmatpush2.xpose.msra.mxu0 0.0
    %2743 = vmatprep.subr.mxu0 0.0
    %2744 = vmatpush2.xpose.msra.mxu0 0.0
    %2745 = vmatprep.subr.mxu0 0.0
    %2746 = vmatpush2.xpose.msra.mxu0 0.0
    %2747 = vmatprep.subr.mxu0 0.0
    %2748 = vmatpush2.xpose.msra.mxu0 0.0
    %2749 = vmatprep.subr.mxu0 0.0
    %2750 = vmatpush2.xpose.msra.mxu0 0.0
    %2751 = vmatprep.subr.mxu0 0.0
    %2752 = vmatpush2.xpose.msra.mxu0 0.0
    %2753 = vmatprep.subr.mxu0 0.0
    %2754 = vmatpush2.xpose.msra.mxu0 0.0
    %2755 = vmatprep.subr.mxu0 0.0
    %2756 = vmatpush2.xpose.msra.mxu0 0.0
    %2757 = vmatprep.subr.mxu0 0.0
    %2758 = vmatpush2.xpose.msra.mxu0 0.0
    %2759 = vmatprep.mubr.f32.mxu0 0.0
    %2760 = vmatmul.mubr.f32.gmra.mxu0 %v2691
    %v2761 = vpop.f32.mrf.mxu0
    %v2762 = vadd.f32 0.0, %v2761
    %v2763 = vpop.f32.mrf.mxu0
    %2764 = vdwg.mxu0
    %2765 = vrot.lane.b32.xlu0 %v2018, 112
    %v2766 = vpop.permute.xlu0 %2765
    %2767 = vrot.lane.b32.xlu0 %v2018, 80
    %v2768 = vpop.permute.xlu0 %2767
    %v2769 = vsel %vm186, %v2766, 0
    %v2771 = vsel %vm186, %v2768, 0
    %2773 = vmatprep.subr.mxu0 0.0
    %2774 = vmatpush1.xpose.msra.mxu0 0.0
    %2775 = vmatprep.subr.mxu0 0.0
    %2776 = vmatpush1.xpose.msra.mxu0 0.0
    %2777 = vmatprep.subr.mxu0 0.0
    %2778 = vmatpush1.xpose.msra.mxu0 0.0
    %2779 = vmatprep.subr.mxu0 0.0
    %2780 = vmatpush1.xpose.msra.mxu0 0.0
    %2781 = vmatprep.subr.mxu0 0.0
    %2782 = vmatpush1.xpose.msra.mxu0 0.0
    %2783 = vmatprep.subr.mxu0 0.0
    %2784 = vmatpush1.xpose.msra.mxu0 0.0
    %2785 = vmatprep.subr.mxu0 0.0
    %2786 = vmatpush1.xpose.msra.mxu0 0.0
    %2787 = vmatprep.subr.mxu0 0.0
    %2788 = vmatpush1.xpose.msra.mxu0 0.0
    %2789 = vmatprep.subr.mxu0 0.0
    %2790 = vmatpush1.xpose.msra.mxu0 0.0
    %2791 = vmatprep.subr.mxu0 0.0
    %2792 = vmatpush1.xpose.msra.mxu0 0.0
    %2793 = vmatprep.subr.mxu0 0.0
    %2794 = vmatpush1.xpose.msra.mxu0 0.0
    %2795 = vmatprep.subr.mxu0 0.0
    %2796 = vmatpush1.xpose.msra.mxu0 0.0
    %2797 = vmatprep.subr.mxu0 0.0
    %2798 = vmatpush1.xpose.msra.mxu0 0.0
    %2799 = vmatprep.subr.mxu0 0.0
    %2800 = vmatpush1.xpose.msra.mxu0 0.0
    %2801 = vmatprep.subr.mxu0 0.0
    %2802 = vmatpush1.xpose.msra.mxu0 0.0
    %2803 = vmatprep.subr.mxu0 0.0
    %2804 = vmatpush1.xpose.msra.mxu0 %v2771
    %2805 = vmatprep.subr.mxu0 0.0
    %2806 = vmatpush2.xpose.msra.mxu0 0.0
    %2807 = vmatprep.subr.mxu0 0.0
    %2808 = vmatpush2.xpose.msra.mxu0 0.0
    %2809 = vmatprep.subr.mxu0 0.0
    %2810 = vmatpush2.xpose.msra.mxu0 0.0
    %2811 = vmatprep.subr.mxu0 0.0
    %2812 = vmatpush2.xpose.msra.mxu0 0.0
    %2813 = vmatprep.subr.mxu0 0.0
    %2814 = vmatpush2.xpose.msra.mxu0 0.0
    %2815 = vmatprep.subr.mxu0 0.0
    %2816 = vmatpush2.xpose.msra.mxu0 0.0
    %2817 = vmatprep.subr.mxu0 0.0
    %2818 = vmatpush2.xpose.msra.mxu0 0.0
    %2819 = vmatprep.subr.mxu0 0.0
    %2820 = vmatpush2.xpose.msra.mxu0 0.0
    %2821 = vmatprep.subr.mxu0 0.0
    %2822 = vmatpush2.xpose.msra.mxu0 0.0
    %2823 = vmatprep.subr.mxu0 0.0
    %2824 = vmatpush2.xpose.msra.mxu0 0.0
    %2825 = vmatprep.subr.mxu0 0.0
    %2826 = vmatpush2.xpose.msra.mxu0 0.0
    %2827 = vmatprep.subr.mxu0 0.0
    %2828 = vmatpush2.xpose.msra.mxu0 0.0
    %2829 = vmatprep.subr.mxu0 0.0
    %2830 = vmatpush2.xpose.msra.mxu0 0.0
    %2831 = vmatprep.subr.mxu0 0.0
    %2832 = vmatpush2.xpose.msra.mxu0 0.0
    %2833 = vmatprep.subr.mxu0 0.0
    %2834 = vmatpush2.xpose.msra.mxu0 0.0
    %2835 = vmatprep.subr.mxu0 0.0
    %2836 = vmatpush2.xpose.msra.mxu0 0.0
    %2837 = vmatprep.mubr.f32.mxu0 0.0
    %2838 = vmatmul.mubr.f32.gmra.mxu0 %v2769
    %v2839 = vpop.f32.mrf.mxu0
    %v2840 = vadd.f32 0.0, %v2839
    %v2841 = vpop.f32.mrf.mxu0
    %2842 = vdwg.mxu0
    %v2843 = vmul.f32 %v2762, 0.35355338
    %v2844 = vmul.f32 %v2840, 0.35355338
    %v2845 = vadd.f32 %v2843, %v49
    %v2846 = vadd.f32 %v2844, %v49
    %v2847 = vsel %vm186, %v2845, -inf
    %2848 = vmax.xlane.f32.xlu0 %v2847
    %v2849 = vpop.xlane.xlu0 %2848
    %v2850 = vsel %vm186, %v2846, -inf
    %2851 = vmax.xlane.f32.xlu0 %v2850
    %v2852 = vpop.xlane.xlu0 %2851
    %v2853 = vsub.f32 %v2845, %v2849
    %v2854 = vsub.f32 %v2846, %v2852
    %v2855 = vmul.f32 %v2853, 1.442695
    %v2856 = vpow.pop %v2855
    %v2857 = vmul.f32 %v2854, 1.442695
    %v2858 = vpow.pop %v2857
    %v2859 = vsel %vm186, %v2856, 0.0
    %2860 = vadd.xlane.f32.xlu0 %v2859
    %v2861 = vpop.xlane.xlu0 %2860
    %v2862 = vsel %vm186, %v2858, 0.0
    %2863 = vadd.xlane.f32.xlu0 %v2862
    %v2864 = vpop.xlane.xlu0 %2863
    %v2865 = vrcp.pop %v2861
    %v2866 = vrcp.pop %v2864
    %v2867 = vmul.f32 %v2856, %v2865
    %v2868 = vmul.f32 %v2858, %v2866
    %2869 = vrot.lane.b32.xlu0 %v2013, 48
    %v2870 = vpop.permute.xlu0 %2869
    %v2873 = vsel %vm186, %v2867, 0
    %2875 = vmatprep.subr.mxu0 0.0
    %2876 = vmatpush1.msra.mxu0 0.0
    %2877 = vmatprep.subr.mxu0 0.0
    %2878 = vmatpush1.msra.mxu0 0.0
    %2879 = vmatprep.subr.mxu0 0.0
    %2880 = vmatpush1.msra.mxu0 0.0
    %2881 = vmatprep.subr.mxu0 0.0
    %2882 = vmatpush1.msra.mxu0 0.0
    %2883 = vmatprep.subr.mxu0 0.0
    %2884 = vmatpush1.msra.mxu0 0.0
    %2885 = vmatprep.subr.mxu0 0.0
    %2886 = vmatpush1.msra.mxu0 0.0
    %2887 = vmatprep.subr.mxu0 0.0
    %2888 = vmatpush1.msra.mxu0 0.0
    %2889 = vmatprep.subr.mxu0 0.0
    %2890 = vmatpush1.msra.mxu0 0.0
    %2891 = vmatprep.subr.mxu0 0.0
    %2892 = vmatpush1.msra.mxu0 0.0
    %2893 = vmatprep.subr.mxu0 0.0
    %2894 = vmatpush1.msra.mxu0 0.0
    %2895 = vmatprep.subr.mxu0 0.0
    %2896 = vmatpush1.msra.mxu0 0.0
    %2897 = vmatprep.subr.mxu0 0.0
    %2898 = vmatpush1.msra.mxu0 0.0
    %2899 = vmatprep.subr.mxu0 0.0
    %2900 = vmatpush1.msra.mxu0 0.0
    %2901 = vmatprep.subr.mxu0 0.0
    %2902 = vmatpush1.msra.mxu0 0.0
    %2903 = vmatprep.subr.mxu0 0.0
    %2904 = vmatpush1.msra.mxu0 0.0
    %2905 = vmatprep.subr.mxu0 0.0
    %2906 = vmatpush1.msra.mxu0 %v2870
    %2907 = vmatprep.subr.mxu0 0.0
    %2908 = vmatpush2.msra.mxu0 0.0
    %2909 = vmatprep.subr.mxu0 0.0
    %2910 = vmatpush2.msra.mxu0 0.0
    %2911 = vmatprep.subr.mxu0 0.0
    %2912 = vmatpush2.msra.mxu0 0.0
    %2913 = vmatprep.subr.mxu0 0.0
    %2914 = vmatpush2.msra.mxu0 0.0
    %2915 = vmatprep.subr.mxu0 0.0
    %2916 = vmatpush2.msra.mxu0 0.0
    %2917 = vmatprep.subr.mxu0 0.0
    %2918 = vmatpush2.msra.mxu0 0.0
    %2919 = vmatprep.subr.mxu0 0.0
    %2920 = vmatpush2.msra.mxu0 0.0
    %2921 = vmatprep.subr.mxu0 0.0
    %2922 = vmatpush2.msra.mxu0 0.0
    %2923 = vmatprep.subr.mxu0 0.0
    %2924 = vmatpush2.msra.mxu0 0.0
    %2925 = vmatprep.subr.mxu0 0.0
    %2926 = vmatpush2.msra.mxu0 0.0
    %2927 = vmatprep.subr.mxu0 0.0
    %2928 = vmatpush2.msra.mxu0 0.0
    %2929 = vmatprep.subr.mxu0 0.0
    %2930 = vmatpush2.msra.mxu0 0.0
    %2931 = vmatprep.subr.mxu0 0.0
    %2932 = vmatpush2.msra.mxu0 0.0
    %2933 = vmatprep.subr.mxu0 0.0
    %2934 = vmatpush2.msra.mxu0 0.0
    %2935 = vmatprep.subr.mxu0 0.0
    %2936 = vmatpush2.msra.mxu0 0.0
    %2937 = vmatprep.subr.mxu0 0.0
    %2938 = vmatpush2.msra.mxu0 0.0
    %2939 = vmatprep.mubr.f32.mxu0 0.0
    %2940 = vmatmul.mubr.f32.gmra.mxu0 %v2873
    %v2941 = vpop.f32.mrf.mxu0
    %v2942 = vadd.f32 0.0, %v2941
    %v2943 = vpop.f32.mrf.mxu0
    %2944 = vdwg.mxu0
    %2945 = vrot.lane.b32.xlu0 %v2018, 48
    %v2946 = vpop.permute.xlu0 %2945
    %v2949 = vsel %vm186, %v2868, 0
    %2951 = vmatprep.subr.mxu0 0.0
    %2952 = vmatpush1.msra.mxu0 0.0
    %2953 = vmatprep.subr.mxu0 0.0
    %2954 = vmatpush1.msra.mxu0 0.0
    %2955 = vmatprep.subr.mxu0 0.0
    %2956 = vmatpush1.msra.mxu0 0.0
    %2957 = vmatprep.subr.mxu0 0.0
    %2958 = vmatpush1.msra.mxu0 0.0
    %2959 = vmatprep.subr.mxu0 0.0
    %2960 = vmatpush1.msra.mxu0 0.0
    %2961 = vmatprep.subr.mxu0 0.0
    %2962 = vmatpush1.msra.mxu0 0.0
    %2963 = vmatprep.subr.mxu0 0.0
    %2964 = vmatpush1.msra.mxu0 0.0
    %2965 = vmatprep.subr.mxu0 0.0
    %2966 = vmatpush1.msra.mxu0 0.0
    %2967 = vmatprep.subr.mxu0 0.0
    %2968 = vmatpush1.msra.mxu0 0.0
    %2969 = vmatprep.subr.mxu0 0.0
    %2970 = vmatpush1.msra.mxu0 0.0
    %2971 = vmatprep.subr.mxu0 0.0
    %2972 = vmatpush1.msra.mxu0 0.0
    %2973 = vmatprep.subr.mxu0 0.0
    %2974 = vmatpush1.msra.mxu0 0.0
    %2975 = vmatprep.subr.mxu0 0.0
    %2976 = vmatpush1.msra.mxu0 0.0
    %2977 = vmatprep.subr.mxu0 0.0
    %2978 = vmatpush1.msra.mxu0 0.0
    %2979 = vmatprep.subr.mxu0 0.0
    %2980 = vmatpush1.msra.mxu0 0.0
    %2981 = vmatprep.subr.mxu0 0.0
    %2982 = vmatpush1.msra.mxu0 %v2946
    %2983 = vmatprep.subr.mxu0 0.0
    %2984 = vmatpush2.msra.mxu0 0.0
    %2985 = vmatprep.subr.mxu0 0.0
    %2986 = vmatpush2.msra.mxu0 0.0
    %2987 = vmatprep.subr.mxu0 0.0
    %2988 = vmatpush2.msra.mxu0 0.0
    %2989 = vmatprep.subr.mxu0 0.0
    %2990 = vmatpush2.msra.mxu0 0.0
    %2991 = vmatprep.subr.mxu0 0.0
    %2992 = vmatpush2.msra.mxu0 0.0
    %2993 = vmatprep.subr.mxu0 0.0
    %2994 = vmatpush2.msra.mxu0 0.0
    %2995 = vmatprep.subr.mxu0 0.0
    %2996 = vmatpush2.msra.mxu0 0.0
    %2997 = vmatprep.subr.mxu0 0.0
    %2998 = vmatpush2.msra.mxu0 0.0
    %2999 = vmatprep.subr.mxu0 0.0
    %3000 = vmatpush2.msra.mxu0 0.0
    %3001 = vmatprep.subr.mxu0 0.0
    %3002 = vmatpush2.msra.mxu0 0.0
    %3003 = vmatprep.subr.mxu0 0.0
    %3004 = vmatpush2.msra.mxu0 0.0
    %3005 = vmatprep.subr.mxu0 0.0
    %3006 = vmatpush2.msra.mxu0 0.0
    %3007 = vmatprep.subr.mxu0 0.0
    %3008 = vmatpush2.msra.mxu0 0.0
    %3009 = vmatprep.subr.mxu0 0.0
    %3010 = vmatpush2.msra.mxu0 0.0
    %3011 = vmatprep.subr.mxu0 0.0
    %3012 = vmatpush2.msra.mxu0 0.0
    %3013 = vmatprep.subr.mxu0 0.0
    %3014 = vmatpush2.msra.mxu0 0.0
    %3015 = vmatprep.mubr.f32.mxu0 0.0
    %3016 = vmatmul.mubr.f32.gmra.mxu0 %v2949
    %v3017 = vpop.f32.mrf.mxu0
    %v3018 = vadd.f32 0.0, %v3017
    %v3019 = vpop.f32.mrf.mxu0
    %3020 = vdwg.mxu0
    %3021 = vrot.lane.b32.xlu0 %v2013, 104
    %v3022 = vpop.permute.xlu0 %3021
    %3023 = vrot.lane.b32.xlu0 %v2013, 72
    %v3024 = vpop.permute.xlu0 %3023
    %v3025 = vsel %vm186, %v3022, 0
    %v3027 = vsel %vm186, %v3024, 0
    %3029 = vmatprep.subr.mxu0 0.0
    %3030 = vmatpush1.xpose.msra.mxu0 0.0
    %3031 = vmatprep.subr.mxu0 0.0
    %3032 = vmatpush1.xpose.msra.mxu0 0.0
    %3033 = vmatprep.subr.mxu0 0.0
    %3034 = vmatpush1.xpose.msra.mxu0 0.0
    %3035 = vmatprep.subr.mxu0 0.0
    %3036 = vmatpush1.xpose.msra.mxu0 0.0
    %3037 = vmatprep.subr.mxu0 0.0
    %3038 = vmatpush1.xpose.msra.mxu0 0.0
    %3039 = vmatprep.subr.mxu0 0.0
    %3040 = vmatpush1.xpose.msra.mxu0 0.0
    %3041 = vmatprep.subr.mxu0 0.0
    %3042 = vmatpush1.xpose.msra.mxu0 0.0
    %3043 = vmatprep.subr.mxu0 0.0
    %3044 = vmatpush1.xpose.msra.mxu0 0.0
    %3045 = vmatprep.subr.mxu0 0.0
    %3046 = vmatpush1.xpose.msra.mxu0 0.0
    %3047 = vmatprep.subr.mxu0 0.0
    %3048 = vmatpush1.xpose.msra.mxu0 0.0
    %3049 = vmatprep.subr.mxu0 0.0
    %3050 = vmatpush1.xpose.msra.mxu0 0.0
    %3051 = vmatprep.subr.mxu0 0.0
    %3052 = vmatpush1.xpose.msra.mxu0 0.0
    %3053 = vmatprep.subr.mxu0 0.0
    %3054 = vmatpush1.xpose.msra.mxu0 0.0
    %3055 = vmatprep.subr.mxu0 0.0
    %3056 = vmatpush1.xpose.msra.mxu0 0.0
    %3057 = vmatprep.subr.mxu0 0.0
    %3058 = vmatpush1.xpose.msra.mxu0 0.0
    %3059 = vmatprep.subr.mxu0 0.0
    %3060 = vmatpush1.xpose.msra.mxu0 %v3027
    %3061 = vmatprep.subr.mxu0 0.0
    %3062 = vmatpush2.xpose.msra.mxu0 0.0
    %3063 = vmatprep.subr.mxu0 0.0
    %3064 = vmatpush2.xpose.msra.mxu0 0.0
    %3065 = vmatprep.subr.mxu0 0.0
    %3066 = vmatpush2.xpose.msra.mxu0 0.0
    %3067 = vmatprep.subr.mxu0 0.0
    %3068 = vmatpush2.xpose.msra.mxu0 0.0
    %3069 = vmatprep.subr.mxu0 0.0
    %3070 = vmatpush2.xpose.msra.mxu0 0.0
    %3071 = vmatprep.subr.mxu0 0.0
    %3072 = vmatpush2.xpose.msra.mxu0 0.0
    %3073 = vmatprep.subr.mxu0 0.0
    %3074 = vmatpush2.xpose.msra.mxu0 0.0
    %3075 = vmatprep.subr.mxu0 0.0
    %3076 = vmatpush2.xpose.msra.mxu0 0.0
    %3077 = vmatprep.subr.mxu0 0.0
    %3078 = vmatpush2.xpose.msra.mxu0 0.0
    %3079 = vmatprep.subr.mxu0 0.0
    %3080 = vmatpush2.xpose.msra.mxu0 0.0
    %3081 = vmatprep.subr.mxu0 0.0
    %3082 = vmatpush2.xpose.msra.mxu0 0.0
    %3083 = vmatprep.subr.mxu0 0.0
    %3084 = vmatpush2.xpose.msra.mxu0 0.0
    %3085 = vmatprep.subr.mxu0 0.0
    %3086 = vmatpush2.xpose.msra.mxu0 0.0
    %3087 = vmatprep.subr.mxu0 0.0
    %3088 = vmatpush2.xpose.msra.mxu0 0.0
    %3089 = vmatprep.subr.mxu0 0.0
    %3090 = vmatpush2.xpose.msra.mxu0 0.0
    %3091 = vmatprep.subr.mxu0 0.0
    %3092 = vmatpush2.xpose.msra.mxu0 0.0
    %3093 = vmatprep.mubr.f32.mxu0 0.0
    %3094 = vmatmul.mubr.f32.gmra.mxu0 %v3025
    %v3095 = vpop.f32.mrf.mxu0
    %v3096 = vadd.f32 0.0, %v3095
    %v3097 = vpop.f32.mrf.mxu0
    %3098 = vdwg.mxu0
    %3099 = vrot.lane.b32.xlu0 %v2018, 104
    %v3100 = vpop.permute.xlu0 %3099
    %3101 = vrot.lane.b32.xlu0 %v2018, 72
    %v3102 = vpop.permute.xlu0 %3101
    %v3103 = vsel %vm186, %v3100, 0
    %v3105 = vsel %vm186, %v3102, 0
    %3107 = vmatprep.subr.mxu0 0.0
    %3108 = vmatpush1.xpose.msra.mxu0 0.0
    %3109 = vmatprep.subr.mxu0 0.0
    %3110 = vmatpush1.xpose.msra.mxu0 0.0
    %3111 = vmatprep.subr.mxu0 0.0
    %3112 = vmatpush1.xpose.msra.mxu0 0.0
    %3113 = vmatprep.subr.mxu0 0.0
    %3114 = vmatpush1.xpose.msra.mxu0 0.0
    %3115 = vmatprep.subr.mxu0 0.0
    %3116 = vmatpush1.xpose.msra.mxu0 0.0
    %3117 = vmatprep.subr.mxu0 0.0
    %3118 = vmatpush1.xpose.msra.mxu0 0.0
    %3119 = vmatprep.subr.mxu0 0.0
    %3120 = vmatpush1.xpose.msra.mxu0 0.0
    %3121 = vmatprep.subr.mxu0 0.0
    %3122 = vmatpush1.xpose.msra.mxu0 0.0
    %3123 = vmatprep.subr.mxu0 0.0
    %3124 = vmatpush1.xpose.msra.mxu0 0.0
    %3125 = vmatprep.subr.mxu0 0.0
    %3126 = vmatpush1.xpose.msra.mxu0 0.0
    %3127 = vmatprep.subr.mxu0 0.0
    %3128 = vmatpush1.xpose.msra.mxu0 0.0
    %3129 = vmatprep.subr.mxu0 0.0
    %3130 = vmatpush1.xpose.msra.mxu0 0.0
    %3131 = vmatprep.subr.mxu0 0.0
    %3132 = vmatpush1.xpose.msra.mxu0 0.0
    %3133 = vmatprep.subr.mxu0 0.0
    %3134 = vmatpush1.xpose.msra.mxu0 0.0
    %3135 = vmatprep.subr.mxu0 0.0
    %3136 = vmatpush1.xpose.msra.mxu0 0.0
    %3137 = vmatprep.subr.mxu0 0.0
    %3138 = vmatpush1.xpose.msra.mxu0 %v3105
    %3139 = vmatprep.subr.mxu0 0.0
    %3140 = vmatpush2.xpose.msra.mxu0 0.0
    %3141 = vmatprep.subr.mxu0 0.0
    %3142 = vmatpush2.xpose.msra.mxu0 0.0
    %3143 = vmatprep.subr.mxu0 0.0
    %3144 = vmatpush2.xpose.msra.mxu0 0.0
    %3145 = vmatprep.subr.mxu0 0.0
    %3146 = vmatpush2.xpose.msra.mxu0 0.0
    %3147 = vmatprep.subr.mxu0 0.0
    %3148 = vmatpush2.xpose.msra.mxu0 0.0
    %3149 = vmatprep.subr.mxu0 0.0
    %3150 = vmatpush2.xpose.msra.mxu0 0.0
    %3151 = vmatprep.subr.mxu0 0.0
    %3152 = vmatpush2.xpose.msra.mxu0 0.0
    %3153 = vmatprep.subr.mxu0 0.0
    %3154 = vmatpush2.xpose.msra.mxu0 0.0
    %3155 = vmatprep.subr.mxu0 0.0
    %3156 = vmatpush2.xpose.msra.mxu0 0.0
    %3157 = vmatprep.subr.mxu0 0.0
    %3158 = vmatpush2.xpose.msra.mxu0 0.0
    %3159 = vmatprep.subr.mxu0 0.0
    %3160 = vmatpush2.xpose.msra.mxu0 0.0
    %3161 = vmatprep.subr.mxu0 0.0
    %3162 = vmatpush2.xpose.msra.mxu0 0.0
    %3163 = vmatprep.subr.mxu0 0.0
    %3164 = vmatpush2.xpose.msra.mxu0 0.0
    %3165 = vmatprep.subr.mxu0 0.0
    %3166 = vmatpush2.xpose.msra.mxu0 0.0
    %3167 = vmatprep.subr.mxu0 0.0
    %3168 = vmatpush2.xpose.msra.mxu0 0.0
    %3169 = vmatprep.subr.mxu0 0.0
    %3170 = vmatpush2.xpose.msra.mxu0 0.0
    %3171 = vmatprep.mubr.f32.mxu0 0.0
    %3172 = vmatmul.mubr.f32.gmra.mxu0 %v3103
    %v3173 = vpop.f32.mrf.mxu0
    %v3174 = vadd.f32 0.0, %v3173
    %v3175 = vpop.f32.mrf.mxu0
    %3176 = vdwg.mxu0
    %v3177 = vmul.f32 %v3096, 0.35355338
    %v3178 = vmul.f32 %v3174, 0.35355338
    %v3179 = vadd.f32 %v3177, %v49
    %v3180 = vadd.f32 %v3178, %v49
    %v3181 = vsel %vm186, %v3179, -inf
    %3182 = vmax.xlane.f32.xlu0 %v3181
    %v3183 = vpop.xlane.xlu0 %3182
    %v3184 = vsel %vm186, %v3180, -inf
    %3185 = vmax.xlane.f32.xlu0 %v3184
    %v3186 = vpop.xlane.xlu0 %3185
    %v3187 = vsub.f32 %v3179, %v3183
    %v3188 = vsub.f32 %v3180, %v3186
    %v3189 = vmul.f32 %v3187, 1.442695
    %v3190 = vpow.pop %v3189
    %v3191 = vmul.f32 %v3188, 1.442695
    %v3192 = vpow.pop %v3191
    %v3193 = vsel %vm186, %v3190, 0.0
    %3194 = vadd.xlane.f32.xlu0 %v3193
    %v3195 = vpop.xlane.xlu0 %3194
    %v3196 = vsel %vm186, %v3192, 0.0
    %3197 = vadd.xlane.f32.xlu0 %v3196
    %v3198 = vpop.xlane.xlu0 %3197
    %v3199 = vrcp.pop %v3195
    %v3200 = vrcp.pop %v3198
    %v3201 = vmul.f32 %v3190, %v3199
    %v3202 = vmul.f32 %v3192, %v3200
    %3203 = vrot.lane.b32.xlu0 %v2013, 40
    %v3204 = vpop.permute.xlu0 %3203
    %v3207 = vsel %vm186, %v3201, 0
    %3209 = vmatprep.subr.mxu0 0.0
    %3210 = vmatpush1.msra.mxu0 0.0
    %3211 = vmatprep.subr.mxu0 0.0
    %3212 = vmatpush1.msra.mxu0 0.0
    %3213 = vmatprep.subr.mxu0 0.0
    %3214 = vmatpush1.msra.mxu0 0.0
    %3215 = vmatprep.subr.mxu0 0.0
    %3216 = vmatpush1.msra.mxu0 0.0
    %3217 = vmatprep.subr.mxu0 0.0
    %3218 = vmatpush1.msra.mxu0 0.0
    %3219 = vmatprep.subr.mxu0 0.0
    %3220 = vmatpush1.msra.mxu0 0.0
    %3221 = vmatprep.subr.mxu0 0.0
    %3222 = vmatpush1.msra.mxu0 0.0
    %3223 = vmatprep.subr.mxu0 0.0
    %3224 = vmatpush1.msra.mxu0 0.0
    %3225 = vmatprep.subr.mxu0 0.0
    %3226 = vmatpush1.msra.mxu0 0.0
    %3227 = vmatprep.subr.mxu0 0.0
    %3228 = vmatpush1.msra.mxu0 0.0
    %3229 = vmatprep.subr.mxu0 0.0
    %3230 = vmatpush1.msra.mxu0 0.0
    %3231 = vmatprep.subr.mxu0 0.0
    %3232 = vmatpush1.msra.mxu0 0.0
    %3233 = vmatprep.subr.mxu0 0.0
    %3234 = vmatpush1.msra.mxu0 0.0
    %3235 = vmatprep.subr.mxu0 0.0
    %3236 = vmatpush1.msra.mxu0 0.0
    %3237 = vmatprep.subr.mxu0 0.0
    %3238 = vmatpush1.msra.mxu0 0.0
    %3239 = vmatprep.subr.mxu0 0.0
    %3240 = vmatpush1.msra.mxu0 %v3204
    %3241 = vmatprep.subr.mxu0 0.0
    %3242 = vmatpush2.msra.mxu0 0.0
    %3243 = vmatprep.subr.mxu0 0.0
    %3244 = vmatpush2.msra.mxu0 0.0
    %3245 = vmatprep.subr.mxu0 0.0
    %3246 = vmatpush2.msra.mxu0 0.0
    %3247 = vmatprep.subr.mxu0 0.0
    %3248 = vmatpush2.msra.mxu0 0.0
    %3249 = vmatprep.subr.mxu0 0.0
    %3250 = vmatpush2.msra.mxu0 0.0
    %3251 = vmatprep.subr.mxu0 0.0
    %3252 = vmatpush2.msra.mxu0 0.0
    %3253 = vmatprep.subr.mxu0 0.0
    %3254 = vmatpush2.msra.mxu0 0.0
    %3255 = vmatprep.subr.mxu0 0.0
    %3256 = vmatpush2.msra.mxu0 0.0
    %3257 = vmatprep.subr.mxu0 0.0
    %3258 = vmatpush2.msra.mxu0 0.0
    %3259 = vmatprep.subr.mxu0 0.0
    %3260 = vmatpush2.msra.mxu0 0.0
    %3261 = vmatprep.subr.mxu0 0.0
    %3262 = vmatpush2.msra.mxu0 0.0
    %3263 = vmatprep.subr.mxu0 0.0
    %3264 = vmatpush2.msra.mxu0 0.0
    %3265 = vmatprep.subr.mxu0 0.0
    %3266 = vmatpush2.msra.mxu0 0.0
    %3267 = vmatprep.subr.mxu0 0.0
    %3268 = vmatpush2.msra.mxu0 0.0
    %3269 = vmatprep.subr.mxu0 0.0
    %3270 = vmatpush2.msra.mxu0 0.0
    %3271 = vmatprep.subr.mxu0 0.0
    %3272 = vmatpush2.msra.mxu0 0.0
    %3273 = vmatprep.mubr.f32.mxu0 0.0
    %3274 = vmatmul.mubr.f32.gmra.mxu0 %v3207
    %v3275 = vpop.f32.mrf.mxu0
    %v3276 = vadd.f32 0.0, %v3275
    %v3277 = vpop.f32.mrf.mxu0
    %3278 = vdwg.mxu0
    %3279 = vrot.lane.b32.xlu0 %v2018, 40
    %v3280 = vpop.permute.xlu0 %3279
    %v3283 = vsel %vm186, %v3202, 0
    %3285 = vmatprep.subr.mxu0 0.0
    %3286 = vmatpush1.msra.mxu0 0.0
    %3287 = vmatprep.subr.mxu0 0.0
    %3288 = vmatpush1.msra.mxu0 0.0
    %3289 = vmatprep.subr.mxu0 0.0
    %3290 = vmatpush1.msra.mxu0 0.0
    %3291 = vmatprep.subr.mxu0 0.0
    %3292 = vmatpush1.msra.mxu0 0.0
    %3293 = vmatprep.subr.mxu0 0.0
    %3294 = vmatpush1.msra.mxu0 0.0
    %3295 = vmatprep.subr.mxu0 0.0
    %3296 = vmatpush1.msra.mxu0 0.0
    %3297 = vmatprep.subr.mxu0 0.0
    %3298 = vmatpush1.msra.mxu0 0.0
    %3299 = vmatprep.subr.mxu0 0.0
    %3300 = vmatpush1.msra.mxu0 0.0
    %3301 = vmatprep.subr.mxu0 0.0
    %3302 = vmatpush1.msra.mxu0 0.0
    %3303 = vmatprep.subr.mxu0 0.0
    %3304 = vmatpush1.msra.mxu0 0.0
    %3305 = vmatprep.subr.mxu0 0.0
    %3306 = vmatpush1.msra.mxu0 0.0
    %3307 = vmatprep.subr.mxu0 0.0
    %3308 = vmatpush1.msra.mxu0 0.0
    %3309 = vmatprep.subr.mxu0 0.0
    %3310 = vmatpush1.msra.mxu0 0.0
    %3311 = vmatprep.subr.mxu0 0.0
    %3312 = vmatpush1.msra.mxu0 0.0
    %3313 = vmatprep.subr.mxu0 0.0
    %3314 = vmatpush1.msra.mxu0 0.0
    %3315 = vmatprep.subr.mxu0 0.0
    %3316 = vmatpush1.msra.mxu0 %v3280
    %3317 = vmatprep.subr.mxu0 0.0
    %3318 = vmatpush2.msra.mxu0 0.0
    %3319 = vmatprep.subr.mxu0 0.0
    %3320 = vmatpush2.msra.mxu0 0.0
    %3321 = vmatprep.subr.mxu0 0.0
    %3322 = vmatpush2.msra.mxu0 0.0
    %3323 = vmatprep.subr.mxu0 0.0
    %3324 = vmatpush2.msra.mxu0 0.0
    %3325 = vmatprep.subr.mxu0 0.0
    %3326 = vmatpush2.msra.mxu0 0.0
    %3327 = vmatprep.subr.mxu0 0.0
    %3328 = vmatpush2.msra.mxu0 0.0
    %3329 = vmatprep.subr.mxu0 0.0
    %3330 = vmatpush2.msra.mxu0 0.0
    %3331 = vmatprep.subr.mxu0 0.0
    %3332 = vmatpush2.msra.mxu0 0.0
    %3333 = vmatprep.subr.mxu0 0.0
    %3334 = vmatpush2.msra.mxu0 0.0
    %3335 = vmatprep.subr.mxu0 0.0
    %3336 = vmatpush2.msra.mxu0 0.0
    %3337 = vmatprep.subr.mxu0 0.0
    %3338 = vmatpush2.msra.mxu0 0.0
    %3339 = vmatprep.subr.mxu0 0.0
    %3340 = vmatpush2.msra.mxu0 0.0
    %3341 = vmatprep.subr.mxu0 0.0
    %3342 = vmatpush2.msra.mxu0 0.0
    %3343 = vmatprep.subr.mxu0 0.0
    %3344 = vmatpush2.msra.mxu0 0.0
    %3345 = vmatprep.subr.mxu0 0.0
    %3346 = vmatpush2.msra.mxu0 0.0
    %3347 = vmatprep.subr.mxu0 0.0
    %3348 = vmatpush2.msra.mxu0 0.0
    %3349 = vmatprep.mubr.f32.mxu0 0.0
    %3350 = vmatmul.mubr.f32.gmra.mxu0 %v3283
    %v3351 = vpop.f32.mrf.mxu0
    %v3352 = vadd.f32 0.0, %v3351
    %v3353 = vpop.f32.mrf.mxu0
    %3354 = vdwg.mxu0
    %3357 = vrot.lane.b32.xlu0 %v2608, 8
    %v3358 = vpop.permute.xlu0 %3357
    %3359 = vrot.lane.b32.xlu0 %v2684, 8
    %v3360 = vpop.permute.xlu0 %3359
    %3365 = vrot.lane.b32.xlu0 %v2942, 16
    %v3366 = vpop.permute.xlu0 %3365
    %3367 = vrot.lane.b32.xlu0 %v3018, 16
    %v3368 = vpop.permute.xlu0 %3367
    %3373 = vrot.lane.b32.xlu0 %v3276, 24
    %v3374 = vpop.permute.xlu0 %3373
    %3375 = vrot.lane.b32.xlu0 %v3352, 24
    %v3376 = vpop.permute.xlu0 %3375
    %v3379 = vsel %vm186, %v2274, %v3358
    %v3380 = vsel %vm186, %v2350, %v3360
    %v3381 = vsel %vm1544, %v3379, %v3366
    %v3382 = vsel %vm1544, %v3380, %v3368
    %v3383 = vsel %vm1547, %v3381, %v3374
    %v3384 = vsel %vm1547, %v3382, %v3376
    %s3385 = scalar_lea.vmem %s6, 32
    %v3386 = vld [vmem:[%s3385] sm:$0xff]
    %v3387 = vld [vmem:[%s3385 + $0x8] sm:$0xff]
    %v3388 = vld [vmem:[%s3385 + $0x10] sm:$0xff]
    %v3389 = vld [vmem:[%s3385 + $0x18] sm:$0xff]
    %v3391 = vsel %vm54, %v3383, 0
    %v3394 = vsel %vm54, %v3384, 0
    %3396 = vmatprep.subr.mxu0 0.0
    %3397 = vmatpush1.msra.mxu0 0.0
    %3398 = vmatprep.subr.mxu0 0.0
    %3399 = vmatpush1.msra.mxu0 0.0
    %3400 = vmatprep.subr.mxu0 0.0
    %3401 = vmatpush1.msra.mxu0 0.0
    %3402 = vmatprep.subr.mxu0 0.0
    %3403 = vmatpush1.msra.mxu0 0.0
    %3404 = vmatprep.subr.mxu0 0.0
    %3405 = vmatpush1.msra.mxu0 0.0
    %3406 = vmatprep.subr.mxu0 0.0
    %3407 = vmatpush1.msra.mxu0 0.0
    %3408 = vmatprep.subr.mxu0 0.0
    %3409 = vmatpush1.msra.mxu0 0.0
    %3410 = vmatprep.subr.mxu0 0.0
    %3411 = vmatpush1.msra.mxu0 0.0
    %3412 = vmatprep.subr.mxu0 0.0
    %3413 = vmatpush1.msra.mxu0 0.0
    %3414 = vmatprep.subr.mxu0 0.0
    %3415 = vmatpush1.msra.mxu0 0.0
    %3416 = vmatprep.subr.mxu0 0.0
    %3417 = vmatpush1.msra.mxu0 0.0
    %3418 = vmatprep.subr.mxu0 0.0
    %3419 = vmatpush1.msra.mxu0 0.0
    %3420 = vmatprep.subr.mxu0 0.0
    %3421 = vmatpush1.msra.mxu0 %v3389
    %3422 = vmatprep.subr.mxu0 0.0
    %3423 = vmatpush1.msra.mxu0 %v3388
    %3424 = vmatprep.subr.mxu0 0.0
    %3425 = vmatpush1.msra.mxu0 %v3387
    %3426 = vmatprep.subr.mxu0 0.0
    %3427 = vmatpush1.msra.mxu0 %v3386
    %3428 = vmatprep.subr.mxu0 0.0
    %3429 = vmatpush2.msra.mxu0 0.0
    %3430 = vmatprep.subr.mxu0 0.0
    %3431 = vmatpush2.msra.mxu0 0.0
    %3432 = vmatprep.subr.mxu0 0.0
    %3433 = vmatpush2.msra.mxu0 0.0
    %3434 = vmatprep.subr.mxu0 0.0
    %3435 = vmatpush2.msra.mxu0 0.0
    %3436 = vmatprep.subr.mxu0 0.0
    %3437 = vmatpush2.msra.mxu0 0.0
    %3438 = vmatprep.subr.mxu0 0.0
    %3439 = vmatpush2.msra.mxu0 0.0
    %3440 = vmatprep.subr.mxu0 0.0
    %3441 = vmatpush2.msra.mxu0 0.0
    %3442 = vmatprep.subr.mxu0 0.0
    %3443 = vmatpush2.msra.mxu0 0.0
    %3444 = vmatprep.subr.mxu0 0.0
    %3445 = vmatpush2.msra.mxu0 0.0
    %3446 = vmatprep.subr.mxu0 0.0
    %3447 = vmatpush2.msra.mxu0 0.0
    %3448 = vmatprep.subr.mxu0 0.0
    %3449 = vmatpush2.msra.mxu0 0.0
    %3450 = vmatprep.subr.mxu0 0.0
    %3451 = vmatpush2.msra.mxu0 0.0
    %3452 = vmatprep.subr.mxu0 0.0
    %3453 = vmatpush2.msra.mxu0 0.0
    %3454 = vmatprep.subr.mxu0 0.0
    %3455 = vmatpush2.msra.mxu0 0.0
    %3456 = vmatprep.subr.mxu0 0.0
    %3457 = vmatpush2.msra.mxu0 0.0
    %3458 = vmatprep.subr.mxu0 0.0
    %3459 = vmatpush2.msra.mxu0 0.0
    %3460 = vmatprep.mubr.f32.mxu0 0.0
    %3461 = vmatmul.mubr.f32.gmra.mxu0 %v3391
    %v3462 = vpop.f32.mrf.mxu0
    %v3463 = vadd.f32 0.0, %v3462
    %v3464 = vpop.f32.mrf.mxu0
    %3465 = vmatprep.mubr.f32.mxu0 0.0
    %3466 = vmatmul.mubr.f32.gmra.mxu0 %v3394
    %v3467 = vpop.f32.mrf.mxu0
    %v3468 = vadd.f32 0.0, %v3467
    %v3469 = vpop.f32.mrf.mxu0
    %3470 = vdwg.mxu0
    %v3471 = vadd.f32 %v1889, %v3463
    %v3472 = vadd.f32 %v1890, %v3468
    %v3473 = vlaneseq
    %v3474 = vshrl.u32 %v3473, 7
    %v3475 = vsub.s32 5, %v3474
    %v3476 = vrot.slane %v1892, %v3475
    %v3477 = vadd.f32 %v3471, %v3476
    %v3478 = vadd.f32 %v3472, %v3476
    %v3479 = vsel %vm54, %v3477, 0.0
    %3480 = vadd.xlane.f32.xlu0 %v3479
    %v3481 = vpop.xlane.xlu0 %3480
    %v3482 = vsel %vm54, %v3478, 0.0
    %3483 = vadd.xlane.f32.xlu0 %v3482
    %v3484 = vpop.xlane.xlu0 %3483
    %v3485 = vmul.f32 %v3481, %v61
    %v3486 = vmul.f32 %v3484, %v61
    %v3487 = vsub.f32 %v3477, %v3485
    %v3488 = vsub.f32 %v3478, %v3486
    %v3489 = vmul.f32 %v3487, %v3487
    %v3490 = vmul.f32 %v3488, %v3488
    %v3491 = vsel %vm54, %v3489, 0.0
    %3492 = vadd.xlane.f32.xlu0 %v3491
    %v3493 = vpop.xlane.xlu0 %3492
    %v3494 = vsel %vm54, %v3490, 0.0
    %3495 = vadd.xlane.f32.xlu0 %v3494
    %v3496 = vpop.xlane.xlu0 %3495
    %v3497 = vmul.f32 %v3493, %v61
    %v3498 = vmul.f32 %v3496, %v61
    %v3499 = vadd.f32 %v3497, 1e-05
    %v3500 = vadd.f32 %v3498, 1e-05
    %v3501 = vrsqrt.pop %v3499
    %v3502 = vrsqrt.pop %v3500
    %v3503 = vmul.f32 %v3487, %v3501
    %v3504 = vmul.f32 %v3488, %v3502
    %v3505 = vlaneseq
    %v3506 = vshrl.u32 %v3505, 7
    %v3507 = vsub.s32 2, %v3506
    %v3508 = vrot.slane %v1892, %v3507
    %v3509 = vmul.f32 %v3503, %v3508
    %v3510 = vmul.f32 %v3504, %v3508
    %v3511 = vlaneseq
    %v3512 = vshrl.u32 %v3511, 7
    %v3513 = vsub.s32 3, %v3512
    %v3514 = vrot.slane %v1892, %v3513
    %v3515 = vadd.f32 %v3509, %v3514
    %v3516 = vadd.f32 %v3510, %v3514
    %s3517 = scalar_lea.vmem %s7, 32
    %v3518 = vld [vmem:[%s3517] sm:$0xff]
    %v3519 = vld [vmem:[%s3517 + $0x8] sm:$0xff]
    %v3520 = vld [vmem:[%s3517 + $0x10] sm:$0xff]
    %v3521 = vld [vmem:[%s3517 + $0x18] sm:$0xff]
    %v3522 = vlaneseq
    %v3523 = vshrl.u32 %v3522, 7
    %v3524 = vsub.s32 6, %v3523
    %v3525 = vrot.slane %v1892, %v3524
    %v3527 = vsel %vm54, %v3515, 0
    %v3530 = vsel %vm54, %v3516, 0
    %3532 = vmatprep.subr.mxu0 0.0
    %3533 = vmatpush1.msra.mxu0 0.0
    %3534 = vmatprep.subr.mxu0 0.0
    %3535 = vmatpush1.msra.mxu0 0.0
    %3536 = vmatprep.subr.mxu0 0.0
    %3537 = vmatpush1.msra.mxu0 0.0
    %3538 = vmatprep.subr.mxu0 0.0
    %3539 = vmatpush1.msra.mxu0 0.0
    %3540 = vmatprep.subr.mxu0 0.0
    %3541 = vmatpush1.msra.mxu0 0.0
    %3542 = vmatprep.subr.mxu0 0.0
    %3543 = vmatpush1.msra.mxu0 0.0
    %3544 = vmatprep.subr.mxu0 0.0
    %3545 = vmatpush1.msra.mxu0 0.0
    %3546 = vmatprep.subr.mxu0 0.0
    %3547 = vmatpush1.msra.mxu0 0.0
    %3548 = vmatprep.subr.mxu0 0.0
    %3549 = vmatpush1.msra.mxu0 0.0
    %3550 = vmatprep.subr.mxu0 0.0
    %3551 = vmatpush1.msra.mxu0 0.0
    %3552 = vmatprep.subr.mxu0 0.0
    %3553 = vmatpush1.msra.mxu0 0.0
    %3554 = vmatprep.subr.mxu0 0.0
    %3555 = vmatpush1.msra.mxu0 0.0
    %3556 = vmatprep.subr.mxu0 0.0
    %3557 = vmatpush1.msra.mxu0 %v3521
    %3558 = vmatprep.subr.mxu0 0.0
    %3559 = vmatpush1.msra.mxu0 %v3520
    %3560 = vmatprep.subr.mxu0 0.0
    %3561 = vmatpush1.msra.mxu0 %v3519
    %3562 = vmatprep.subr.mxu0 0.0
    %3563 = vmatpush1.msra.mxu0 %v3518
    %3564 = vmatprep.subr.mxu0 0.0
    %3565 = vmatpush2.msra.mxu0 0.0
    %3566 = vmatprep.subr.mxu0 0.0
    %3567 = vmatpush2.msra.mxu0 0.0
    %3568 = vmatprep.subr.mxu0 0.0
    %3569 = vmatpush2.msra.mxu0 0.0
    %3570 = vmatprep.subr.mxu0 0.0
    %3571 = vmatpush2.msra.mxu0 0.0
    %3572 = vmatprep.subr.mxu0 0.0
    %3573 = vmatpush2.msra.mxu0 0.0
    %3574 = vmatprep.subr.mxu0 0.0
    %3575 = vmatpush2.msra.mxu0 0.0
    %3576 = vmatprep.subr.mxu0 0.0
    %3577 = vmatpush2.msra.mxu0 0.0
    %3578 = vmatprep.subr.mxu0 0.0
    %3579 = vmatpush2.msra.mxu0 0.0
    %3580 = vmatprep.subr.mxu0 0.0
    %3581 = vmatpush2.msra.mxu0 0.0
    %3582 = vmatprep.subr.mxu0 0.0
    %3583 = vmatpush2.msra.mxu0 0.0
    %3584 = vmatprep.subr.mxu0 0.0
    %3585 = vmatpush2.msra.mxu0 0.0
    %3586 = vmatprep.subr.mxu0 0.0
    %3587 = vmatpush2.msra.mxu0 0.0
    %3588 = vmatprep.subr.mxu0 0.0
    %3589 = vmatpush2.msra.mxu0 0.0
    %3590 = vmatprep.subr.mxu0 0.0
    %3591 = vmatpush2.msra.mxu0 0.0
    %3592 = vmatprep.subr.mxu0 0.0
    %3593 = vmatpush2.msra.mxu0 0.0
    %3594 = vmatprep.subr.mxu0 0.0
    %3595 = vmatpush2.msra.mxu0 0.0
    %3596 = vmatprep.mubr.f32.mxu0 0.0
    %3597 = vmatmul.mubr.f32.gmra.mxu0 %v3527
    %v3598 = vpop.f32.mrf.mxu0
    %v3599 = vadd.f32 %v3525, %v3598
    %v3600 = vpop.f32.mrf.mxu0
    %3601 = vmatprep.mubr.f32.mxu0 0.0
    %3602 = vmatmul.mubr.f32.gmra.mxu0 %v3530
    %v3603 = vpop.f32.mrf.mxu0
    %v3604 = vadd.f32 %v3525, %v3603
    %v3605 = vpop.f32.mrf.mxu0
    %3606 = vdwg.mxu0
    %v3607 = vmul.f32 %v3599, 1.702
    %v3608 = vmul.f32 %v3604, 1.702
    %v3609 = vxor.u32 %v3607, 2147483648
    %v3610 = vxor.u32 %v3608, 2147483648
    %v3611 = vmul.f32 %v3609, 1.442695
    %v3612 = vpow.pop %v3611
    %v3613 = vmul.f32 %v3610, 1.442695
    %v3614 = vpow.pop %v3613
    %v3615 = vadd.f32 %v3612, 1.0
    %v3616 = vadd.f32 %v3614, 1.0
    %v3617 = vrcp.pop %v3615
    %v3618 = vmul.f32 1.0, %v3617
    %v3619 = vrcp.pop %v3616
    %v3620 = vmul.f32 1.0, %v3619
    %v3621 = vmul.f32 %v3599, %v3618
    %v3622 = vmul.f32 %v3604, %v3620
    %s3623 = scalar_lea.vmem %s8, 128
    %v3624 = vld [vmem:[%s3623] sm:$0xff]
    %v3625 = vld [vmem:[%s3623 + $0x8] sm:$0xff]
    %v3626 = vld [vmem:[%s3623 + $0x10] sm:$0xff]
    %v3627 = vld [vmem:[%s3623 + $0x18] sm:$0xff]
    %v3628 = vld [vmem:[%s3623 + $0x20] sm:$0xff]
    %v3629 = vld [vmem:[%s3623 + $0x28] sm:$0xff]
    %v3630 = vld [vmem:[%s3623 + $0x30] sm:$0xff]
    %v3631 = vld [vmem:[%s3623 + $0x38] sm:$0xff]
    %v3632 = vld [vmem:[%s3623 + $0x40] sm:$0xff]
    %v3633 = vld [vmem:[%s3623 + $0x48] sm:$0xff]
    %v3634 = vld [vmem:[%s3623 + $0x50] sm:$0xff]
    %v3635 = vld [vmem:[%s3623 + $0x58] sm:$0xff]
    %v3636 = vld [vmem:[%s3623 + $0x60] sm:$0xff]
    %v3637 = vld [vmem:[%s3623 + $0x68] sm:$0xff]
    %v3638 = vld [vmem:[%s3623 + $0x70] sm:$0xff]
    %v3639 = vld [vmem:[%s3623 + $0x78] sm:$0xff]
    %3640 = vmatprep.subr.mxu0 0.0
    %3641 = vmatpush1.msra.mxu0 %v3639
    %3642 = vmatprep.subr.mxu0 0.0
    %3643 = vmatpush1.msra.mxu0 %v3638
    %3644 = vmatprep.subr.mxu0 0.0
    %3645 = vmatpush1.msra.mxu0 %v3637
    %3646 = vmatprep.subr.mxu0 0.0
    %3647 = vmatpush1.msra.mxu0 %v3636
    %3648 = vmatprep.subr.mxu0 0.0
    %3649 = vmatpush1.msra.mxu0 %v3635
    %3650 = vmatprep.subr.mxu0 0.0
    %3651 = vmatpush1.msra.mxu0 %v3634
    %3652 = vmatprep.subr.mxu0 0.0
    %3653 = vmatpush1.msra.mxu0 %v3633
    %3654 = vmatprep.subr.mxu0 0.0
    %3655 = vmatpush1.msra.mxu0 %v3632
    %3656 = vmatprep.subr.mxu0 0.0
    %3657 = vmatpush1.msra.mxu0 %v3631
    %3658 = vmatprep.subr.mxu0 0.0
    %3659 = vmatpush1.msra.mxu0 %v3630
    %3660 = vmatprep.subr.mxu0 0.0
    %3661 = vmatpush1.msra.mxu0 %v3629
    %3662 = vmatprep.subr.mxu0 0.0
    %3663 = vmatpush1.msra.mxu0 %v3628
    %3664 = vmatprep.subr.mxu0 0.0
    %3665 = vmatpush1.msra.mxu0 %v3627
    %3666 = vmatprep.subr.mxu0 0.0
    %3667 = vmatpush1.msra.mxu0 %v3626
    %3668 = vmatprep.subr.mxu0 0.0
    %3669 = vmatpush1.msra.mxu0 %v3625
    %3670 = vmatprep.subr.mxu0 0.0
    %3671 = vmatpush1.msra.mxu0 %v3624
    %3672 = vmatprep.subr.mxu0 0.0
    %3673 = vmatpush2.msra.mxu0 0.0
    %3674 = vmatprep.subr.mxu0 0.0
    %3675 = vmatpush2.msra.mxu0 0.0
    %3676 = vmatprep.subr.mxu0 0.0
    %3677 = vmatpush2.msra.mxu0 0.0
    %3678 = vmatprep.subr.mxu0 0.0
    %3679 = vmatpush2.msra.mxu0 0.0
    %3680 = vmatprep.subr.mxu0 0.0
    %3681 = vmatpush2.msra.mxu0 0.0
    %3682 = vmatprep.subr.mxu0 0.0
    %3683 = vmatpush2.msra.mxu0 0.0
    %3684 = vmatprep.subr.mxu0 0.0
    %3685 = vmatpush2.msra.mxu0 0.0
    %3686 = vmatprep.subr.mxu0 0.0
    %3687 = vmatpush2.msra.mxu0 0.0
    %3688 = vmatprep.subr.mxu0 0.0
    %3689 = vmatpush2.msra.mxu0 0.0
    %3690 = vmatprep.subr.mxu0 0.0
    %3691 = vmatpush2.msra.mxu0 0.0
    %3692 = vmatprep.subr.mxu0 0.0
    %3693 = vmatpush2.msra.mxu0 0.0
    %3694 = vmatprep.subr.mxu0 0.0
    %3695 = vmatpush2.msra.mxu0 0.0
    %3696 = vmatprep.subr.mxu0 0.0
    %3697 = vmatpush2.msra.mxu0 0.0
    %3698 = vmatprep.subr.mxu0 0.0
    %3699 = vmatpush2.msra.mxu0 0.0
    %3700 = vmatprep.subr.mxu0 0.0
    %3701 = vmatpush2.msra.mxu0 0.0
    %3702 = vmatprep.subr.mxu0 0.0
    %3703 = vmatpush2.msra.mxu0 0.0
    %3704 = vmatprep.mubr.f32.mxu0 0.0
    %3705 = vmatmul.mubr.f32.gmra.mxu0 %v3621
    %v3706 = vpop.f32.mrf.mxu0
    %v3707 = vadd.f32 0.0, %v3706
    %v3708 = vpop.f32.mrf.mxu0
    %3709 = vmatprep.mubr.f32.mxu0 0.0
    %3710 = vmatmul.mubr.f32.gmra.mxu0 %v3622
    %v3711 = vpop.f32.mrf.mxu0
    %v3712 = vadd.f32 0.0, %v3711
    %v3713 = vpop.f32.mrf.mxu0
    %3714 = vdwg.mxu0
    %v3715 = vadd.f32 %v3477, %v3707
    %v3716 = vadd.f32 %v3478, %v3712
    %v3717 = vlaneseq
    %v3718 = vshrl.u32 %v3717, 7
    %v3719 = vsub.s32 7, %v3718
    %v3720 = vrot.slane %v1892, %v3719
    %v3721 = vadd.f32 %v3715, %v3720
    %v3722 = vadd.f32 %v3716, %v3720
    %s3723 = scalar_lea.vmem %s2, 16
    %v3724 = vld [vmem:[%s3723] sm:$0xff]
    %v3725 = vld [vmem:[%s3723 + $0x8] sm:$0xff]
    %v3726 = vsel %vm1888, %v3724, %v3721
    %v3727 = vsel %vm1888, %v3725, %v3722
    %s3728 = scalar_lea.vmem %s4, 16
    %v3729 = vld [vmem:[%s3728] sm:$0xff]
    %v3730 = vsel %vm54, %v3726, 0.0
    %3731 = vadd.xlane.f32.xlu0 %v3730
    %v3732 = vpop.xlane.xlu0 %3731
    %v3733 = vsel %vm54, %v3727, 0.0
    %3734 = vadd.xlane.f32.xlu0 %v3733
    %v3735 = vpop.xlane.xlu0 %3734
    %v3736 = vmul.f32 %v3732, %v61
    %v3737 = vmul.f32 %v3735, %v61
    %v3738 = vsub.f32 %v3726, %v3736
    %v3739 = vsub.f32 %v3727, %v3737
    %v3740 = vmul.f32 %v3738, %v3738
    %v3741 = vmul.f32 %v3739, %v3739
    %v3742 = vsel %vm54, %v3740, 0.0
    %3743 = vadd.xlane.f32.xlu0 %v3742
    %v3744 = vpop.xlane.xlu0 %3743
    %v3745 = vsel %vm54, %v3741, 0.0
    %3746 = vadd.xlane.f32.xlu0 %v3745
    %v3747 = vpop.xlane.xlu0 %3746
    %v3748 = vmul.f32 %v3744, %v61
    %v3749 = vmul.f32 %v3747, %v61
    %v3750 = vadd.f32 %v3748, 1e-05
    %v3751 = vadd.f32 %v3749, 1e-05
    %v3752 = vrsqrt.pop %v3750
    %v3753 = vrsqrt.pop %v3751
    %v3754 = vmul.f32 %v3738, %v3752
    %v3755 = vmul.f32 %v3739, %v3753
    %v3756 = vlaneseq
    %v3757 = vshrl.u32 %v3756, 7
    %v3758 = vsub.s32 0, %v3757
    %v3759 = vrot.slane %v3729, %v3758
    %v3760 = vmul.f32 %v3754, %v3759
    %v3761 = vmul.f32 %v3755, %v3759
    %v3762 = vlaneseq
    %v3763 = vshrl.u32 %v3762, 7
    %v3764 = vsub.s32 1, %v3763
    %v3765 = vrot.slane %v3729, %v3764
    %v3766 = vadd.f32 %v3760, %v3765
    %v3767 = vadd.f32 %v3761, %v3765
    %s3768 = scalar_lea.vmem %s5, 64
    %v3769 = vld [vmem:[%s3768] sm:$0xff]
    %v3770 = vld [vmem:[%s3768 + $0x8] sm:$0xff]
    %v3771 = vld [vmem:[%s3768 + $0x10] sm:$0xff]
    %v3772 = vld [vmem:[%s3768 + $0x18] sm:$0xff]
    %v3773 = vlaneseq
    %v3774 = vshrl.u32 %v3773, 7
    %v3775 = vsub.s32 4, %v3774
    %v3776 = vrot.slane %v3729, %v3775
    %v3778 = vsel %vm54, %v3766, 0
    %v3781 = vsel %vm54, %v3767, 0
    %3783 = vmatprep.subr.mxu0 0.0
    %3784 = vmatpush1.msra.mxu0 0.0
    %3785 = vmatprep.subr.mxu0 0.0
    %3786 = vmatpush1.msra.mxu0 0.0
    %3787 = vmatprep.subr.mxu0 0.0
    %3788 = vmatpush1.msra.mxu0 0.0
    %3789 = vmatprep.subr.mxu0 0.0
    %3790 = vmatpush1.msra.mxu0 0.0
    %3791 = vmatprep.subr.mxu0 0.0
    %3792 = vmatpush1.msra.mxu0 0.0
    %3793 = vmatprep.subr.mxu0 0.0
    %3794 = vmatpush1.msra.mxu0 0.0
    %3795 = vmatprep.subr.mxu0 0.0
    %3796 = vmatpush1.msra.mxu0 0.0
    %3797 = vmatprep.subr.mxu0 0.0
    %3798 = vmatpush1.msra.mxu0 0.0
    %3799 = vmatprep.subr.mxu0 0.0
    %3800 = vmatpush1.msra.mxu0 0.0
    %3801 = vmatprep.subr.mxu0 0.0
    %3802 = vmatpush1.msra.mxu0 0.0
    %3803 = vmatprep.subr.mxu0 0.0
    %3804 = vmatpush1.msra.mxu0 0.0
    %3805 = vmatprep.subr.mxu0 0.0
    %3806 = vmatpush1.msra.mxu0 0.0
    %3807 = vmatprep.subr.mxu0 0.0
    %3808 = vmatpush1.msra.mxu0 %v3772
    %3809 = vmatprep.subr.mxu0 0.0
    %3810 = vmatpush1.msra.mxu0 %v3771
    %3811 = vmatprep.subr.mxu0 0.0
    %3812 = vmatpush1.msra.mxu0 %v3770
    %3813 = vmatprep.subr.mxu0 0.0
    %3814 = vmatpush1.msra.mxu0 %v3769
    %3815 = vmatprep.subr.mxu0 0.0
    %3816 = vmatpush2.msra.mxu0 0.0
    %3817 = vmatprep.subr.mxu0 0.0
    %3818 = vmatpush2.msra.mxu0 0.0
    %3819 = vmatprep.subr.mxu0 0.0
    %3820 = vmatpush2.msra.mxu0 0.0
    %3821 = vmatprep.subr.mxu0 0.0
    %3822 = vmatpush2.msra.mxu0 0.0
    %3823 = vmatprep.subr.mxu0 0.0
    %3824 = vmatpush2.msra.mxu0 0.0
    %3825 = vmatprep.subr.mxu0 0.0
    %3826 = vmatpush2.msra.mxu0 0.0
    %3827 = vmatprep.subr.mxu0 0.0
    %3828 = vmatpush2.msra.mxu0 0.0
    %3829 = vmatprep.subr.mxu0 0.0
    %3830 = vmatpush2.msra.mxu0 0.0
    %3831 = vmatprep.subr.mxu0 0.0
    %3832 = vmatpush2.msra.mxu0 0.0
    %3833 = vmatprep.subr.mxu0 0.0
    %3834 = vmatpush2.msra.mxu0 0.0
    %3835 = vmatprep.subr.mxu0 0.0
    %3836 = vmatpush2.msra.mxu0 0.0
    %3837 = vmatprep.subr.mxu0 0.0
    %3838 = vmatpush2.msra.mxu0 0.0
    %3839 = vmatprep.subr.mxu0 0.0
    %3840 = vmatpush2.msra.mxu0 0.0
    %3841 = vmatprep.subr.mxu0 0.0
    %3842 = vmatpush2.msra.mxu0 0.0
    %3843 = vmatprep.subr.mxu0 0.0
    %3844 = vmatpush2.msra.mxu0 0.0
    %3845 = vmatprep.subr.mxu0 0.0
    %3846 = vmatpush2.msra.mxu0 0.0
    %3847 = vmatprep.mubr.f32.mxu0 0.0
    %3848 = vmatmul.mubr.f32.gmra.mxu0 %v3778
    %v3849 = vpop.f32.mrf.mxu0
    %v3850 = vadd.f32 %v3776, %v3849
    %v3851 = vpop.f32.mrf.mxu0
    %3852 = vmatprep.mubr.f32.mxu0 0.0
    %3853 = vmatmul.mubr.f32.gmra.mxu0 %v3781
    %v3854 = vpop.f32.mrf.mxu0
    %v3855 = vadd.f32 %v3776, %v3854
    %v3856 = vpop.f32.mrf.mxu0
    %3857 = vdwg.mxu0
    %3859 = vrot.lane.b32.xlu0 %v3850, 96
    %v3860 = vpop.permute.xlu0 %3859
    %v3861 = vsel %vm186, %v3850, 0
    %v3863 = vsel %vm186, %v3860, 0
    %3865 = vmatprep.subr.mxu0 0.0
    %3866 = vmatpush1.xpose.msra.mxu0 0.0
    %3867 = vmatprep.subr.mxu0 0.0
    %3868 = vmatpush1.xpose.msra.mxu0 0.0
    %3869 = vmatprep.subr.mxu0 0.0
    %3870 = vmatpush1.xpose.msra.mxu0 0.0
    %3871 = vmatprep.subr.mxu0 0.0
    %3872 = vmatpush1.xpose.msra.mxu0 0.0
    %3873 = vmatprep.subr.mxu0 0.0
    %3874 = vmatpush1.xpose.msra.mxu0 0.0
    %3875 = vmatprep.subr.mxu0 0.0
    %3876 = vmatpush1.xpose.msra.mxu0 0.0
    %3877 = vmatprep.subr.mxu0 0.0
    %3878 = vmatpush1.xpose.msra.mxu0 0.0
    %3879 = vmatprep.subr.mxu0 0.0
    %3880 = vmatpush1.xpose.msra.mxu0 0.0
    %3881 = vmatprep.subr.mxu0 0.0
    %3882 = vmatpush1.xpose.msra.mxu0 0.0
    %3883 = vmatprep.subr.mxu0 0.0
    %3884 = vmatpush1.xpose.msra.mxu0 0.0
    %3885 = vmatprep.subr.mxu0 0.0
    %3886 = vmatpush1.xpose.msra.mxu0 0.0
    %3887 = vmatprep.subr.mxu0 0.0
    %3888 = vmatpush1.xpose.msra.mxu0 0.0
    %3889 = vmatprep.subr.mxu0 0.0
    %3890 = vmatpush1.xpose.msra.mxu0 0.0
    %3891 = vmatprep.subr.mxu0 0.0
    %3892 = vmatpush1.xpose.msra.mxu0 0.0
    %3893 = vmatprep.subr.mxu0 0.0
    %3894 = vmatpush1.xpose.msra.mxu0 0.0
    %3895 = vmatprep.subr.mxu0 0.0
    %3896 = vmatpush1.xpose.msra.mxu0 %v3863
    %3897 = vmatprep.subr.mxu0 0.0
    %3898 = vmatpush2.xpose.msra.mxu0 0.0
    %3899 = vmatprep.subr.mxu0 0.0
    %3900 = vmatpush2.xpose.msra.mxu0 0.0
    %3901 = vmatprep.subr.mxu0 0.0
    %3902 = vmatpush2.xpose.msra.mxu0 0.0
    %3903 = vmatprep.subr.mxu0 0.0
    %3904 = vmatpush2.xpose.msra.mxu0 0.0
    %3905 = vmatprep.subr.mxu0 0.0
    %3906 = vmatpush2.xpose.msra.mxu0 0.0
    %3907 = vmatprep.subr.mxu0 0.0
    %3908 = vmatpush2.xpose.msra.mxu0 0.0
    %3909 = vmatprep.subr.mxu0 0.0
    %3910 = vmatpush2.xpose.msra.mxu0 0.0
    %3911 = vmatprep.subr.mxu0 0.0
    %3912 = vmatpush2.xpose.msra.mxu0 0.0
    %3913 = vmatprep.subr.mxu0 0.0
    %3914 = vmatpush2.xpose.msra.mxu0 0.0
    %3915 = vmatprep.subr.mxu0 0.0
    %3916 = vmatpush2.xpose.msra.mxu0 0.0
    %3917 = vmatprep.subr.mxu0 0.0
    %3918 = vmatpush2.xpose.msra.mxu0 0.0
    %3919 = vmatprep.subr.mxu0 0.0
    %3920 = vmatpush2.xpose.msra.mxu0 0.0
    %3921 = vmatprep.subr.mxu0 0.0
    %3922 = vmatpush2.xpose.msra.mxu0 0.0
    %3923 = vmatprep.subr.mxu0 0.0
    %3924 = vmatpush2.xpose.msra.mxu0 0.0
    %3925 = vmatprep.subr.mxu0 0.0
    %3926 = vmatpush2.xpose.msra.mxu0 0.0
    %3927 = vmatprep.subr.mxu0 0.0
    %3928 = vmatpush2.xpose.msra.mxu0 0.0
    %3929 = vmatprep.mubr.f32.mxu0 0.0
    %3930 = vmatmul.mubr.f32.gmra.mxu0 %v3861
    %v3931 = vpop.f32.mrf.mxu0
    %v3932 = vadd.f32 0.0, %v3931
    %v3933 = vpop.f32.mrf.mxu0
    %3934 = vdwg.mxu0
    %3936 = vrot.lane.b32.xlu0 %v3855, 96
    %v3937 = vpop.permute.xlu0 %3936
    %v3938 = vsel %vm186, %v3855, 0
    %v3940 = vsel %vm186, %v3937, 0
    %3942 = vmatprep.subr.mxu0 0.0
    %3943 = vmatpush1.xpose.msra.mxu0 0.0
    %3944 = vmatprep.subr.mxu0 0.0
    %3945 = vmatpush1.xpose.msra.mxu0 0.0
    %3946 = vmatprep.subr.mxu0 0.0
    %3947 = vmatpush1.xpose.msra.mxu0 0.0
    %3948 = vmatprep.subr.mxu0 0.0
    %3949 = vmatpush1.xpose.msra.mxu0 0.0
    %3950 = vmatprep.subr.mxu0 0.0
    %3951 = vmatpush1.xpose.msra.mxu0 0.0
    %3952 = vmatprep.subr.mxu0 0.0
    %3953 = vmatpush1.xpose.msra.mxu0 0.0
    %3954 = vmatprep.subr.mxu0 0.0
    %3955 = vmatpush1.xpose.msra.mxu0 0.0
    %3956 = vmatprep.subr.mxu0 0.0
    %3957 = vmatpush1.xpose.msra.mxu0 0.0
    %3958 = vmatprep.subr.mxu0 0.0
    %3959 = vmatpush1.xpose.msra.mxu0 0.0
    %3960 = vmatprep.subr.mxu0 0.0
    %3961 = vmatpush1.xpose.msra.mxu0 0.0
    %3962 = vmatprep.subr.mxu0 0.0
    %3963 = vmatpush1.xpose.msra.mxu0 0.0
    %3964 = vmatprep.subr.mxu0 0.0
    %3965 = vmatpush1.xpose.msra.mxu0 0.0
    %3966 = vmatprep.subr.mxu0 0.0
    %3967 = vmatpush1.xpose.msra.mxu0 0.0
    %3968 = vmatprep.subr.mxu0 0.0
    %3969 = vmatpush1.xpose.msra.mxu0 0.0
    %3970 = vmatprep.subr.mxu0 0.0
    %3971 = vmatpush1.xpose.msra.mxu0 0.0
    %3972 = vmatprep.subr.mxu0 0.0
    %3973 = vmatpush1.xpose.msra.mxu0 %v3940
    %3974 = vmatprep.subr.mxu0 0.0
    %3975 = vmatpush2.xpose.msra.mxu0 0.0
    %3976 = vmatprep.subr.mxu0 0.0
    %3977 = vmatpush2.xpose.msra.mxu0 0.0
    %3978 = vmatprep.subr.mxu0 0.0
    %3979 = vmatpush2.xpose.msra.mxu0 0.0
    %3980 = vmatprep.subr.mxu0 0.0
    %3981 = vmatpush2.xpose.msra.mxu0 0.0
    %3982 = vmatprep.subr.mxu0 0.0
    %3983 = vmatpush2.xpose.msra.mxu0 0.0
    %3984 = vmatprep.subr.mxu0 0.0
    %3985 = vmatpush2.xpose.msra.mxu0 0.0
    %3986 = vmatprep.subr.mxu0 0.0
    %3987 = vmatpush2.xpose.msra.mxu0 0.0
    %3988 = vmatprep.subr.mxu0 0.0
    %3989 = vmatpush2.xpose.msra.mxu0 0.0
    %3990 = vmatprep.subr.mxu0 0.0
    %3991 = vmatpush2.xpose.msra.mxu0 0.0
    %3992 = vmatprep.subr.mxu0 0.0
    %3993 = vmatpush2.xpose.msra.mxu0 0.0
    %3994 = vmatprep.subr.mxu0 0.0
    %3995 = vmatpush2.xpose.msra.mxu0 0.0
    %3996 = vmatprep.subr.mxu0 0.0
    %3997 = vmatpush2.xpose.msra.mxu0 0.0
    %3998 = vmatprep.subr.mxu0 0.0
    %3999 = vmatpush2.xpose.msra.mxu0 0.0
    %4000 = vmatprep.subr.mxu0 0.0
    %4001 = vmatpush2.xpose.msra.mxu0 0.0
    %4002 = vmatprep.subr.mxu0 0.0
    %4003 = vmatpush2.xpose.msra.mxu0 0.0
    %4004 = vmatprep.subr.mxu0 0.0
    %4005 = vmatpush2.xpose.msra.mxu0 0.0
    %4006 = vmatprep.mubr.f32.mxu0 0.0
    %4007 = vmatmul.mubr.f32.gmra.mxu0 %v3938
    %v4008 = vpop.f32.mrf.mxu0
    %v4009 = vadd.f32 0.0, %v4008
    %v4010 = vpop.f32.mrf.mxu0
    %4011 = vdwg.mxu0
    %v4012 = vmul.f32 %v3932, 0.35355338
    %v4013 = vmul.f32 %v4009, 0.35355338
    %v4014 = vadd.f32 %v4012, %v49
    %v4015 = vadd.f32 %v4013, %v49
    %v4016 = vsel %vm186, %v4014, -inf
    %4017 = vmax.xlane.f32.xlu0 %v4016
    %v4018 = vpop.xlane.xlu0 %4017
    %v4019 = vsel %vm186, %v4015, -inf
    %4020 = vmax.xlane.f32.xlu0 %v4019
    %v4021 = vpop.xlane.xlu0 %4020
    %v4022 = vsub.f32 %v4014, %v4018
    %v4023 = vsub.f32 %v4015, %v4021
    %v4024 = vmul.f32 %v4022, 1.442695
    %v4025 = vpow.pop %v4024
    %v4026 = vmul.f32 %v4023, 1.442695
    %v4027 = vpow.pop %v4026
    %v4028 = vsel %vm186, %v4025, 0.0
    %4029 = vadd.xlane.f32.xlu0 %v4028
    %v4030 = vpop.xlane.xlu0 %4029
    %v4031 = vsel %vm186, %v4027, 0.0
    %4032 = vadd.xlane.f32.xlu0 %v4031
    %v4033 = vpop.xlane.xlu0 %4032
    %v4034 = vrcp.pop %v4030
    %v4035 = vrcp.pop %v4033
    %v4036 = vmul.f32 %v4025, %v4034
    %v4037 = vmul.f32 %v4027, %v4035
    %4038 = vrot.lane.b32.xlu0 %v3850, 64
    %v4039 = vpop.permute.xlu0 %4038
    %v4042 = vsel %vm186, %v4036, 0
    %4044 = vmatprep.subr.mxu0 0.0
    %4045 = vmatpush1.msra.mxu0 0.0
    %4046 = vmatprep.subr.mxu0 0.0
    %4047 = vmatpush1.msra.mxu0 0.0
    %4048 = vmatprep.subr.mxu0 0.0
    %4049 = vmatpush1.msra.mxu0 0.0
    %4050 = vmatprep.subr.mxu0 0.0
    %4051 = vmatpush1.msra.mxu0 0.0
    %4052 = vmatprep.subr.mxu0 0.0
    %4053 = vmatpush1.msra.mxu0 0.0
    %4054 = vmatprep.subr.mxu0 0.0
    %4055 = vmatpush1.msra.mxu0 0.0
    %4056 = vmatprep.subr.mxu0 0.0
    %4057 = vmatpush1.msra.mxu0 0.0
    %4058 = vmatprep.subr.mxu0 0.0
    %4059 = vmatpush1.msra.mxu0 0.0
    %4060 = vmatprep.subr.mxu0 0.0
    %4061 = vmatpush1.msra.mxu0 0.0
    %4062 = vmatprep.subr.mxu0 0.0
    %4063 = vmatpush1.msra.mxu0 0.0
    %4064 = vmatprep.subr.mxu0 0.0
    %4065 = vmatpush1.msra.mxu0 0.0
    %4066 = vmatprep.subr.mxu0 0.0
    %4067 = vmatpush1.msra.mxu0 0.0
    %4068 = vmatprep.subr.mxu0 0.0
    %4069 = vmatpush1.msra.mxu0 0.0
    %4070 = vmatprep.subr.mxu0 0.0
    %4071 = vmatpush1.msra.mxu0 0.0
    %4072 = vmatprep.subr.mxu0 0.0
    %4073 = vmatpush1.msra.mxu0 0.0
    %4074 = vmatprep.subr.mxu0 0.0
    %4075 = vmatpush1.msra.mxu0 %v4039
    %4076 = vmatprep.subr.mxu0 0.0
    %4077 = vmatpush2.msra.mxu0 0.0
    %4078 = vmatprep.subr.mxu0 0.0
    %4079 = vmatpush2.msra.mxu0 0.0
    %4080 = vmatprep.subr.mxu0 0.0
    %4081 = vmatpush2.msra.mxu0 0.0
    %4082 = vmatprep.subr.mxu0 0.0
    %4083 = vmatpush2.msra.mxu0 0.0
    %4084 = vmatprep.subr.mxu0 0.0
    %4085 = vmatpush2.msra.mxu0 0.0
    %4086 = vmatprep.subr.mxu0 0.0
    %4087 = vmatpush2.msra.mxu0 0.0
    %4088 = vmatprep.subr.mxu0 0.0
    %4089 = vmatpush2.msra.mxu0 0.0
    %4090 = vmatprep.subr.mxu0 0.0
    %4091 = vmatpush2.msra.mxu0 0.0
    %4092 = vmatprep.subr.mxu0 0.0
    %4093 = vmatpush2.msra.mxu0 0.0
    %4094 = vmatprep.subr.mxu0 0.0
    %4095 = vmatpush2.msra.mxu0 0.0
    %4096 = vmatprep.subr.mxu0 0.0
    %4097 = vmatpush2.msra.mxu0 0.0
    %4098 = vmatprep.subr.mxu0 0.0
    %4099 = vmatpush2.msra.mxu0 0.0
    %4100 = vmatprep.subr.mxu0 0.0
    %4101 = vmatpush2.msra.mxu0 0.0
    %4102 = vmatprep.subr.mxu0 0.0
    %4103 = vmatpush2.msra.mxu0 0.0
    %4104 = vmatprep.subr.mxu0 0.0
    %4105 = vmatpush2.msra.mxu0 0.0
    %4106 = vmatprep.subr.mxu0 0.0
    %4107 = vmatpush2.msra.mxu0 0.0
    %4108 = vmatprep.mubr.f32.mxu0 0.0
    %4109 = vmatmul.mubr.f32.gmra.mxu0 %v4042
    %v4110 = vpop.f32.mrf.mxu0
    %v4111 = vadd.f32 0.0, %v4110
    %v4112 = vpop.f32.mrf.mxu0
    %4113 = vdwg.mxu0
    %4114 = vrot.lane.b32.xlu0 %v3855, 64
    %v4115 = vpop.permute.xlu0 %4114
    %v4118 = vsel %vm186, %v4037, 0
    %4120 = vmatprep.subr.mxu0 0.0
    %4121 = vmatpush1.msra.mxu0 0.0
    %4122 = vmatprep.subr.mxu0 0.0
    %4123 = vmatpush1.msra.mxu0 0.0
    %4124 = vmatprep.subr.mxu0 0.0
    %4125 = vmatpush1.msra.mxu0 0.0
    %4126 = vmatprep.subr.mxu0 0.0
    %4127 = vmatpush1.msra.mxu0 0.0
    %4128 = vmatprep.subr.mxu0 0.0
    %4129 = vmatpush1.msra.mxu0 0.0
    %4130 = vmatprep.subr.mxu0 0.0
    %4131 = vmatpush1.msra.mxu0 0.0
    %4132 = vmatprep.subr.mxu0 0.0
    %4133 = vmatpush1.msra.mxu0 0.0
    %4134 = vmatprep.subr.mxu0 0.0
    %4135 = vmatpush1.msra.mxu0 0.0
    %4136 = vmatprep.subr.mxu0 0.0
    %4137 = vmatpush1.msra.mxu0 0.0
    %4138 = vmatprep.subr.mxu0 0.0
    %4139 = vmatpush1.msra.mxu0 0.0
    %4140 = vmatprep.subr.mxu0 0.0
    %4141 = vmatpush1.msra.mxu0 0.0
    %4142 = vmatprep.subr.mxu0 0.0
    %4143 = vmatpush1.msra.mxu0 0.0
    %4144 = vmatprep.subr.mxu0 0.0
    %4145 = vmatpush1.msra.mxu0 0.0
    %4146 = vmatprep.subr.mxu0 0.0
    %4147 = vmatpush1.msra.mxu0 0.0
    %4148 = vmatprep.subr.mxu0 0.0
    %4149 = vmatpush1.msra.mxu0 0.0
    %4150 = vmatprep.subr.mxu0 0.0
    %4151 = vmatpush1.msra.mxu0 %v4115
    %4152 = vmatprep.subr.mxu0 0.0
    %4153 = vmatpush2.msra.mxu0 0.0
    %4154 = vmatprep.subr.mxu0 0.0
    %4155 = vmatpush2.msra.mxu0 0.0
    %4156 = vmatprep.subr.mxu0 0.0
    %4157 = vmatpush2.msra.mxu0 0.0
    %4158 = vmatprep.subr.mxu0 0.0
    %4159 = vmatpush2.msra.mxu0 0.0
    %4160 = vmatprep.subr.mxu0 0.0
    %4161 = vmatpush2.msra.mxu0 0.0
    %4162 = vmatprep.subr.mxu0 0.0
    %4163 = vmatpush2.msra.mxu0 0.0
    %4164 = vmatprep.subr.mxu0 0.0
    %4165 = vmatpush2.msra.mxu0 0.0
    %4166 = vmatprep.subr.mxu0 0.0
    %4167 = vmatpush2.msra.mxu0 0.0
    %4168 = vmatprep.subr.mxu0 0.0
    %4169 = vmatpush2.msra.mxu0 0.0
    %4170 = vmatprep.subr.mxu0 0.0
    %4171 = vmatpush2.msra.mxu0 0.0
    %4172 = vmatprep.subr.mxu0 0.0
    %4173 = vmatpush2.msra.mxu0 0.0
    %4174 = vmatprep.subr.mxu0 0.0
    %4175 = vmatpush2.msra.mxu0 0.0
    %4176 = vmatprep.subr.mxu0 0.0
    %4177 = vmatpush2.msra.mxu0 0.0
    %4178 = vmatprep.subr.mxu0 0.0
    %4179 = vmatpush2.msra.mxu0 0.0
    %4180 = vmatprep.subr.mxu0 0.0
    %4181 = vmatpush2.msra.mxu0 0.0
    %4182 = vmatprep.subr.mxu0 0.0
    %4183 = vmatpush2.msra.mxu0 0.0
    %4184 = vmatprep.mubr.f32.mxu0 0.0
    %4185 = vmatmul.mubr.f32.gmra.mxu0 %v4118
    %v4186 = vpop.f32.mrf.mxu0
    %v4187 = vadd.f32 0.0, %v4186
    %v4188 = vpop.f32.mrf.mxu0
    %4189 = vdwg.mxu0
    %4190 = vrot.lane.b32.xlu0 %v3850, 120
    %v4191 = vpop.permute.xlu0 %4190
    %4192 = vrot.lane.b32.xlu0 %v3850, 88
    %v4193 = vpop.permute.xlu0 %4192
    %v4194 = vsel %vm186, %v4191, 0
    %v4196 = vsel %vm186, %v4193, 0
    %4198 = vmatprep.subr.mxu0 0.0
    %4199 = vmatpush1.xpose.msra.mxu0 0.0
    %4200 = vmatprep.subr.mxu0 0.0
    %4201 = vmatpush1.xpose.msra.mxu0 0.0
    %4202 = vmatprep.subr.mxu0 0.0
    %4203 = vmatpush1.xpose.msra.mxu0 0.0
    %4204 = vmatprep.subr.mxu0 0.0
    %4205 = vmatpush1.xpose.msra.mxu0 0.0
    %4206 = vmatprep.subr.mxu0 0.0
    %4207 = vmatpush1.xpose.msra.mxu0 0.0
    %4208 = vmatprep.subr.mxu0 0.0
    %4209 = vmatpush1.xpose.msra.mxu0 0.0
    %4210 = vmatprep.subr.mxu0 0.0
    %4211 = vmatpush1.xpose.msra.mxu0 0.0
    %4212 = vmatprep.subr.mxu0 0.0
    %4213 = vmatpush1.xpose.msra.mxu0 0.0
    %4214 = vmatprep.subr.mxu0 0.0
    %4215 = vmatpush1.xpose.msra.mxu0 0.0
    %4216 = vmatprep.subr.mxu0 0.0
    %4217 = vmatpush1.xpose.msra.mxu0 0.0
    %4218 = vmatprep.subr.mxu0 0.0
    %4219 = vmatpush1.xpose.msra.mxu0 0.0
    %4220 = vmatprep.subr.mxu0 0.0
    %4221 = vmatpush1.xpose.msra.mxu0 0.0
    %4222 = vmatprep.subr.mxu0 0.0
    %4223 = vmatpush1.xpose.msra.mxu0 0.0
    %4224 = vmatprep.subr.mxu0 0.0
    %4225 = vmatpush1.xpose.msra.mxu0 0.0
    %4226 = vmatprep.subr.mxu0 0.0
    %4227 = vmatpush1.xpose.msra.mxu0 0.0
    %4228 = vmatprep.subr.mxu0 0.0
    %4229 = vmatpush1.xpose.msra.mxu0 %v4196
    %4230 = vmatprep.subr.mxu0 0.0
    %4231 = vmatpush2.xpose.msra.mxu0 0.0
    %4232 = vmatprep.subr.mxu0 0.0
    %4233 = vmatpush2.xpose.msra.mxu0 0.0
    %4234 = vmatprep.subr.mxu0 0.0
    %4235 = vmatpush2.xpose.msra.mxu0 0.0
    %4236 = vmatprep.subr.mxu0 0.0
    %4237 = vmatpush2.xpose.msra.mxu0 0.0
    %4238 = vmatprep.subr.mxu0 0.0
    %4239 = vmatpush2.xpose.msra.mxu0 0.0
    %4240 = vmatprep.subr.mxu0 0.0
    %4241 = vmatpush2.xpose.msra.mxu0 0.0
    %4242 = vmatprep.subr.mxu0 0.0
    %4243 = vmatpush2.xpose.msra.mxu0 0.0
    %4244 = vmatprep.subr.mxu0 0.0
    %4245 = vmatpush2.xpose.msra.mxu0 0.0
    %4246 = vmatprep.subr.mxu0 0.0
    %4247 = vmatpush2.xpose.msra.mxu0 0.0
    %4248 = vmatprep.subr.mxu0 0.0
    %4249 = vmatpush2.xpose.msra.mxu0 0.0
    %4250 = vmatprep.subr.mxu0 0.0
    %4251 = vmatpush2.xpose.msra.mxu0 0.0
    %4252 = vmatprep.subr.mxu0 0.0
    %4253 = vmatpush2.xpose.msra.mxu0 0.0
    %4254 = vmatprep.subr.mxu0 0.0
    %4255 = vmatpush2.xpose.msra.mxu0 0.0
    %4256 = vmatprep.subr.mxu0 0.0
    %4257 = vmatpush2.xpose.msra.mxu0 0.0
    %4258 = vmatprep.subr.mxu0 0.0
    %4259 = vmatpush2.xpose.msra.mxu0 0.0
    %4260 = vmatprep.subr.mxu0 0.0
    %4261 = vmatpush2.xpose.msra.mxu0 0.0
    %4262 = vmatprep.mubr.f32.mxu0 0.0
    %4263 = vmatmul.mubr.f32.gmra.mxu0 %v4194
    %v4264 = vpop.f32.mrf.mxu0
    %v4265 = vadd.f32 0.0, %v4264
    %v4266 = vpop.f32.mrf.mxu0
    %4267 = vdwg.mxu0
    %4268 = vrot.lane.b32.xlu0 %v3855, 120
    %v4269 = vpop.permute.xlu0 %4268
    %4270 = vrot.lane.b32.xlu0 %v3855, 88
    %v4271 = vpop.permute.xlu0 %4270
    %v4272 = vsel %vm186, %v4269, 0
    %v4274 = vsel %vm186, %v4271, 0
    %4276 = vmatprep.subr.mxu0 0.0
    %4277 = vmatpush1.xpose.msra.mxu0 0.0
    %4278 = vmatprep.subr.mxu0 0.0
    %4279 = vmatpush1.xpose.msra.mxu0 0.0
    %4280 = vmatprep.subr.mxu0 0.0
    %4281 = vmatpush1.xpose.msra.mxu0 0.0
    %4282 = vmatprep.subr.mxu0 0.0
    %4283 = vmatpush1.xpose.msra.mxu0 0.0
    %4284 = vmatprep.subr.mxu0 0.0
    %4285 = vmatpush1.xpose.msra.mxu0 0.0
    %4286 = vmatprep.subr.mxu0 0.0
    %4287 = vmatpush1.xpose.msra.mxu0 0.0
    %4288 = vmatprep.subr.mxu0 0.0
    %4289 = vmatpush1.xpose.msra.mxu0 0.0
    %4290 = vmatprep.subr.mxu0 0.0
    %4291 = vmatpush1.xpose.msra.mxu0 0.0
    %4292 = vmatprep.subr.mxu0 0.0
    %4293 = vmatpush1.xpose.msra.mxu0 0.0
    %4294 = vmatprep.subr.mxu0 0.0
    %4295 = vmatpush1.xpose.msra.mxu0 0.0
    %4296 = vmatprep.subr.mxu0 0.0
    %4297 = vmatpush1.xpose.msra.mxu0 0.0
    %4298 = vmatprep.subr.mxu0 0.0
    %4299 = vmatpush1.xpose.msra.mxu0 0.0
    %4300 = vmatprep.subr.mxu0 0.0
    %4301 = vmatpush1.xpose.msra.mxu0 0.0
    %4302 = vmatprep.subr.mxu0 0.0
    %4303 = vmatpush1.xpose.msra.mxu0 0.0
    %4304 = vmatprep.subr.mxu0 0.0
    %4305 = vmatpush1.xpose.msra.mxu0 0.0
    %4306 = vmatprep.subr.mxu0 0.0
    %4307 = vmatpush1.xpose.msra.mxu0 %v4274
    %4308 = vmatprep.subr.mxu0 0.0
    %4309 = vmatpush2.xpose.msra.mxu0 0.0
    %4310 = vmatprep.subr.mxu0 0.0
    %4311 = vmatpush2.xpose.msra.mxu0 0.0
    %4312 = vmatprep.subr.mxu0 0.0
    %4313 = vmatpush2.xpose.msra.mxu0 0.0
    %4314 = vmatprep.subr.mxu0 0.0
    %4315 = vmatpush2.xpose.msra.mxu0 0.0
    %4316 = vmatprep.subr.mxu0 0.0
    %4317 = vmatpush2.xpose.msra.mxu0 0.0
    %4318 = vmatprep.subr.mxu0 0.0
    %4319 = vmatpush2.xpose.msra.mxu0 0.0
    %4320 = vmatprep.subr.mxu0 0.0
    %4321 = vmatpush2.xpose.msra.mxu0 0.0
    %4322 = vmatprep.subr.mxu0 0.0
    %4323 = vmatpush2.xpose.msra.mxu0 0.0
    %4324 = vmatprep.subr.mxu0 0.0
    %4325 = vmatpush2.xpose.msra.mxu0 0.0
    %4326 = vmatprep.subr.mxu0 0.0
    %4327 = vmatpush2.xpose.msra.mxu0 0.0
    %4328 = vmatprep.subr.mxu0 0.0
    %4329 = vmatpush2.xpose.msra.mxu0 0.0
    %4330 = vmatprep.subr.mxu0 0.0
    %4331 = vmatpush2.xpose.msra.mxu0 0.0
    %4332 = vmatprep.subr.mxu0 0.0
    %4333 = vmatpush2.xpose.msra.mxu0 0.0
    %4334 = vmatprep.subr.mxu0 0.0
    %4335 = vmatpush2.xpose.msra.mxu0 0.0
    %4336 = vmatprep.subr.mxu0 0.0
    %4337 = vmatpush2.xpose.msra.mxu0 0.0
    %4338 = vmatprep.subr.mxu0 0.0
    %4339 = vmatpush2.xpose.msra.mxu0 0.0
    %4340 = vmatprep.mubr.f32.mxu0 0.0
    %4341 = vmatmul.mubr.f32.gmra.mxu0 %v4272
    %v4342 = vpop.f32.mrf.mxu0
    %v4343 = vadd.f32 0.0, %v4342
    %v4344 = vpop.f32.mrf.mxu0
    %4345 = vdwg.mxu0
    %v4346 = vmul.f32 %v4265, 0.35355338
    %v4347 = vmul.f32 %v4343, 0.35355338
    %v4348 = vadd.f32 %v4346, %v49
    %v4349 = vadd.f32 %v4347, %v49
    %v4350 = vsel %vm186, %v4348, -inf
    %4351 = vmax.xlane.f32.xlu0 %v4350
    %v4352 = vpop.xlane.xlu0 %4351
    %v4353 = vsel %vm186, %v4349, -inf
    %4354 = vmax.xlane.f32.xlu0 %v4353
    %v4355 = vpop.xlane.xlu0 %4354
    %v4356 = vsub.f32 %v4348, %v4352
    %v4357 = vsub.f32 %v4349, %v4355
    %v4358 = vmul.f32 %v4356, 1.442695
    %v4359 = vpow.pop %v4358
    %v4360 = vmul.f32 %v4357, 1.442695
    %v4361 = vpow.pop %v4360
    %v4362 = vsel %vm186, %v4359, 0.0
    %4363 = vadd.xlane.f32.xlu0 %v4362
    %v4364 = vpop.xlane.xlu0 %4363
    %v4365 = vsel %vm186, %v4361, 0.0
    %4366 = vadd.xlane.f32.xlu0 %v4365
    %v4367 = vpop.xlane.xlu0 %4366
    %v4368 = vrcp.pop %v4364
    %v4369 = vrcp.pop %v4367
    %v4370 = vmul.f32 %v4359, %v4368
    %v4371 = vmul.f32 %v4361, %v4369
    %4372 = vrot.lane.b32.xlu0 %v3850, 56
    %v4373 = vpop.permute.xlu0 %4372
    %v4376 = vsel %vm186, %v4370, 0
    %4378 = vmatprep.subr.mxu0 0.0
    %4379 = vmatpush1.msra.mxu0 0.0
    %4380 = vmatprep.subr.mxu0 0.0
    %4381 = vmatpush1.msra.mxu0 0.0
    %4382 = vmatprep.subr.mxu0 0.0
    %4383 = vmatpush1.msra.mxu0 0.0
    %4384 = vmatprep.subr.mxu0 0.0
    %4385 = vmatpush1.msra.mxu0 0.0
    %4386 = vmatprep.subr.mxu0 0.0
    %4387 = vmatpush1.msra.mxu0 0.0
    %4388 = vmatprep.subr.mxu0 0.0
    %4389 = vmatpush1.msra.mxu0 0.0
    %4390 = vmatprep.subr.mxu0 0.0
    %4391 = vmatpush1.msra.mxu0 0.0
    %4392 = vmatprep.subr.mxu0 0.0
    %4393 = vmatpush1.msra.mxu0 0.0
    %4394 = vmatprep.subr.mxu0 0.0
    %4395 = vmatpush1.msra.mxu0 0.0
    %4396 = vmatprep.subr.mxu0 0.0
    %4397 = vmatpush1.msra.mxu0 0.0
    %4398 = vmatprep.subr.mxu0 0.0
    %4399 = vmatpush1.msra.mxu0 0.0
    %4400 = vmatprep.subr.mxu0 0.0
    %4401 = vmatpush1.msra.mxu0 0.0
    %4402 = vmatprep.subr.mxu0 0.0
    %4403 = vmatpush1.msra.mxu0 0.0
    %4404 = vmatprep.subr.mxu0 0.0
    %4405 = vmatpush1.msra.mxu0 0.0
    %4406 = vmatprep.subr.mxu0 0.0
    %4407 = vmatpush1.msra.mxu0 0.0
    %4408 = vmatprep.subr.mxu0 0.0
    %4409 = vmatpush1.msra.mxu0 %v4373
    %4410 = vmatprep.subr.mxu0 0.0
    %4411 = vmatpush2.msra.mxu0 0.0
    %4412 = vmatprep.subr.mxu0 0.0
    %4413 = vmatpush2.msra.mxu0 0.0
    %4414 = vmatprep.subr.mxu0 0.0
    %4415 = vmatpush2.msra.mxu0 0.0
    %4416 = vmatprep.subr.mxu0 0.0
    %4417 = vmatpush2.msra.mxu0 0.0
    %4418 = vmatprep.subr.mxu0 0.0
    %4419 = vmatpush2.msra.mxu0 0.0
    %4420 = vmatprep.subr.mxu0 0.0
    %4421 = vmatpush2.msra.mxu0 0.0
    %4422 = vmatprep.subr.mxu0 0.0
    %4423 = vmatpush2.msra.mxu0 0.0
    %4424 = vmatprep.subr.mxu0 0.0
    %4425 = vmatpush2.msra.mxu0 0.0
    %4426 = vmatprep.subr.mxu0 0.0
    %4427 = vmatpush2.msra.mxu0 0.0
    %4428 = vmatprep.subr.mxu0 0.0
    %4429 = vmatpush2.msra.mxu0 0.0
    %4430 = vmatprep.subr.mxu0 0.0
    %4431 = vmatpush2.msra.mxu0 0.0
    %4432 = vmatprep.subr.mxu0 0.0
    %4433 = vmatpush2.msra.mxu0 0.0
    %4434 = vmatprep.subr.mxu0 0.0
    %4435 = vmatpush2.msra.mxu0 0.0
    %4436 = vmatprep.subr.mxu0 0.0
    %4437 = vmatpush2.msra.mxu0 0.0
    %4438 = vmatprep.subr.mxu0 0.0
    %4439 = vmatpush2.msra.mxu0 0.0
    %4440 = vmatprep.subr.mxu0 0.0
    %4441 = vmatpush2.msra.mxu0 0.0
    %4442 = vmatprep.mubr.f32.mxu0 0.0
    %4443 = vmatmul.mubr.f32.gmra.mxu0 %v4376
    %v4444 = vpop.f32.mrf.mxu0
    %v4445 = vadd.f32 0.0, %v4444
    %v4446 = vpop.f32.mrf.mxu0
    %4447 = vdwg.mxu0
    %4448 = vrot.lane.b32.xlu0 %v3855, 56
    %v4449 = vpop.permute.xlu0 %4448
    %v4452 = vsel %vm186, %v4371, 0
    %4454 = vmatprep.subr.mxu0 0.0
    %4455 = vmatpush1.msra.mxu0 0.0
    %4456 = vmatprep.subr.mxu0 0.0
    %4457 = vmatpush1.msra.mxu0 0.0
    %4458 = vmatprep.subr.mxu0 0.0
    %4459 = vmatpush1.msra.mxu0 0.0
    %4460 = vmatprep.subr.mxu0 0.0
    %4461 = vmatpush1.msra.mxu0 0.0
    %4462 = vmatprep.subr.mxu0 0.0
    %4463 = vmatpush1.msra.mxu0 0.0
    %4464 = vmatprep.subr.mxu0 0.0
    %4465 = vmatpush1.msra.mxu0 0.0
    %4466 = vmatprep.subr.mxu0 0.0
    %4467 = vmatpush1.msra.mxu0 0.0
    %4468 = vmatprep.subr.mxu0 0.0
    %4469 = vmatpush1.msra.mxu0 0.0
    %4470 = vmatprep.subr.mxu0 0.0
    %4471 = vmatpush1.msra.mxu0 0.0
    %4472 = vmatprep.subr.mxu0 0.0
    %4473 = vmatpush1.msra.mxu0 0.0
    %4474 = vmatprep.subr.mxu0 0.0
    %4475 = vmatpush1.msra.mxu0 0.0
    %4476 = vmatprep.subr.mxu0 0.0
    %4477 = vmatpush1.msra.mxu0 0.0
    %4478 = vmatprep.subr.mxu0 0.0
    %4479 = vmatpush1.msra.mxu0 0.0
    %4480 = vmatprep.subr.mxu0 0.0
    %4481 = vmatpush1.msra.mxu0 0.0
    %4482 = vmatprep.subr.mxu0 0.0
    %4483 = vmatpush1.msra.mxu0 0.0
    %4484 = vmatprep.subr.mxu0 0.0
    %4485 = vmatpush1.msra.mxu0 %v4449
    %4486 = vmatprep.subr.mxu0 0.0
    %4487 = vmatpush2.msra.mxu0 0.0
    %4488 = vmatprep.subr.mxu0 0.0
    %4489 = vmatpush2.msra.mxu0 0.0
    %4490 = vmatprep.subr.mxu0 0.0
    %4491 = vmatpush2.msra.mxu0 0.0
    %4492 = vmatprep.subr.mxu0 0.0
    %4493 = vmatpush2.msra.mxu0 0.0
    %4494 = vmatprep.subr.mxu0 0.0
    %4495 = vmatpush2.msra.mxu0 0.0
    %4496 = vmatprep.subr.mxu0 0.0
    %4497 = vmatpush2.msra.mxu0 0.0
    %4498 = vmatprep.subr.mxu0 0.0
    %4499 = vmatpush2.msra.mxu0 0.0
    %4500 = vmatprep.subr.mxu0 0.0
    %4501 = vmatpush2.msra.mxu0 0.0
    %4502 = vmatprep.subr.mxu0 0.0
    %4503 = vmatpush2.msra.mxu0 0.0
    %4504 = vmatprep.subr.mxu0 0.0
    %4505 = vmatpush2.msra.mxu0 0.0
    %4506 = vmatprep.subr.mxu0 0.0
    %4507 = vmatpush2.msra.mxu0 0.0
    %4508 = vmatprep.subr.mxu0 0.0
    %4509 = vmatpush2.msra.mxu0 0.0
    %4510 = vmatprep.subr.mxu0 0.0
    %4511 = vmatpush2.msra.mxu0 0.0
    %4512 = vmatprep.subr.mxu0 0.0
    %4513 = vmatpush2.msra.mxu0 0.0
    %4514 = vmatprep.subr.mxu0 0.0
    %4515 = vmatpush2.msra.mxu0 0.0
    %4516 = vmatprep.subr.mxu0 0.0
    %4517 = vmatpush2.msra.mxu0 0.0
    %4518 = vmatprep.mubr.f32.mxu0 0.0
    %4519 = vmatmul.mubr.f32.gmra.mxu0 %v4452
    %v4520 = vpop.f32.mrf.mxu0
    %v4521 = vadd.f32 0.0, %v4520
    %v4522 = vpop.f32.mrf.mxu0
    %4523 = vdwg.mxu0
    %4524 = vrot.lane.b32.xlu0 %v3850, 112
    %v4525 = vpop.permute.xlu0 %4524
    %4526 = vrot.lane.b32.xlu0 %v3850, 80
    %v4527 = vpop.permute.xlu0 %4526
    %v4528 = vsel %vm186, %v4525, 0
    %v4530 = vsel %vm186, %v4527, 0
    %4532 = vmatprep.subr.mxu0 0.0
    %4533 = vmatpush1.xpose.msra.mxu0 0.0
    %4534 = vmatprep.subr.mxu0 0.0
    %4535 = vmatpush1.xpose.msra.mxu0 0.0
    %4536 = vmatprep.subr.mxu0 0.0
    %4537 = vmatpush1.xpose.msra.mxu0 0.0
    %4538 = vmatprep.subr.mxu0 0.0
    %4539 = vmatpush1.xpose.msra.mxu0 0.0
    %4540 = vmatprep.subr.mxu0 0.0
    %4541 = vmatpush1.xpose.msra.mxu0 0.0
    %4542 = vmatprep.subr.mxu0 0.0
    %4543 = vmatpush1.xpose.msra.mxu0 0.0
    %4544 = vmatprep.subr.mxu0 0.0
    %4545 = vmatpush1.xpose.msra.mxu0 0.0
    %4546 = vmatprep.subr.mxu0 0.0
    %4547 = vmatpush1.xpose.msra.mxu0 0.0
    %4548 = vmatprep.subr.mxu0 0.0
    %4549 = vmatpush1.xpose.msra.mxu0 0.0
    %4550 = vmatprep.subr.mxu0 0.0
    %4551 = vmatpush1.xpose.msra.mxu0 0.0
    %4552 = vmatprep.subr.mxu0 0.0
    %4553 = vmatpush1.xpose.msra.mxu0 0.0
    %4554 = vmatprep.subr.mxu0 0.0
    %4555 = vmatpush1.xpose.msra.mxu0 0.0
    %4556 = vmatprep.subr.mxu0 0.0
    %4557 = vmatpush1.xpose.msra.mxu0 0.0
    %4558 = vmatprep.subr.mxu0 0.0
    %4559 = vmatpush1.xpose.msra.mxu0 0.0
    %4560 = vmatprep.subr.mxu0 0.0
    %4561 = vmatpush1.xpose.msra.mxu0 0.0
    %4562 = vmatprep.subr.mxu0 0.0
    %4563 = vmatpush1.xpose.msra.mxu0 %v4530
    %4564 = vmatprep.subr.mxu0 0.0
    %4565 = vmatpush2.xpose.msra.mxu0 0.0
    %4566 = vmatprep.subr.mxu0 0.0
    %4567 = vmatpush2.xpose.msra.mxu0 0.0
    %4568 = vmatprep.subr.mxu0 0.0
    %4569 = vmatpush2.xpose.msra.mxu0 0.0
    %4570 = vmatprep.subr.mxu0 0.0
    %4571 = vmatpush2.xpose.msra.mxu0 0.0
    %4572 = vmatprep.subr.mxu0 0.0
    %4573 = vmatpush2.xpose.msra.mxu0 0.0
    %4574 = vmatprep.subr.mxu0 0.0
    %4575 = vmatpush2.xpose.msra.mxu0 0.0
    %4576 = vmatprep.subr.mxu0 0.0
    %4577 = vmatpush2.xpose.msra.mxu0 0.0
    %4578 = vmatprep.subr.mxu0 0.0
    %4579 = vmatpush2.xpose.msra.mxu0 0.0
    %4580 = vmatprep.subr.mxu0 0.0
    %4581 = vmatpush2.xpose.msra.mxu0 0.0
    %4582 = vmatprep.subr.mxu0 0.0
    %4583 = vmatpush2.xpose.msra.mxu0 0.0
    %4584 = vmatprep.subr.mxu0 0.0
    %4585 = vmatpush2.xpose.msra.mxu0 0.0
    %4586 = vmatprep.subr.mxu0 0.0
    %4587 = vmatpush2.xpose.msra.mxu0 0.0
    %4588 = vmatprep.subr.mxu0 0.0
    %4589 = vmatpush2.xpose.msra.mxu0 0.0
    %4590 = vmatprep.subr.mxu0 0.0
    %4591 = vmatpush2.xpose.msra.mxu0 0.0
    %4592 = vmatprep.subr.mxu0 0.0
    %4593 = vmatpush2.xpose.msra.mxu0 0.0
    %4594 = vmatprep.subr.mxu0 0.0
    %4595 = vmatpush2.xpose.msra.mxu0 0.0
    %4596 = vmatprep.mubr.f32.mxu0 0.0
    %4597 = vmatmul.mubr.f32.gmra.mxu0 %v4528
    %v4598 = vpop.f32.mrf.mxu0
    %v4599 = vadd.f32 0.0, %v4598
    %v4600 = vpop.f32.mrf.mxu0
    %4601 = vdwg.mxu0
    %4602 = vrot.lane.b32.xlu0 %v3855, 112
    %v4603 = vpop.permute.xlu0 %4602
    %4604 = vrot.lane.b32.xlu0 %v3855, 80
    %v4605 = vpop.permute.xlu0 %4604
    %v4606 = vsel %vm186, %v4603, 0
    %v4608 = vsel %vm186, %v4605, 0
    %4610 = vmatprep.subr.mxu0 0.0
    %4611 = vmatpush1.xpose.msra.mxu0 0.0
    %4612 = vmatprep.subr.mxu0 0.0
    %4613 = vmatpush1.xpose.msra.mxu0 0.0
    %4614 = vmatprep.subr.mxu0 0.0
    %4615 = vmatpush1.xpose.msra.mxu0 0.0
    %4616 = vmatprep.subr.mxu0 0.0
    %4617 = vmatpush1.xpose.msra.mxu0 0.0
    %4618 = vmatprep.subr.mxu0 0.0
    %4619 = vmatpush1.xpose.msra.mxu0 0.0
    %4620 = vmatprep.subr.mxu0 0.0
    %4621 = vmatpush1.xpose.msra.mxu0 0.0
    %4622 = vmatprep.subr.mxu0 0.0
    %4623 = vmatpush1.xpose.msra.mxu0 0.0
    %4624 = vmatprep.subr.mxu0 0.0
    %4625 = vmatpush1.xpose.msra.mxu0 0.0
    %4626 = vmatprep.subr.mxu0 0.0
    %4627 = vmatpush1.xpose.msra.mxu0 0.0
    %4628 = vmatprep.subr.mxu0 0.0
    %4629 = vmatpush1.xpose.msra.mxu0 0.0
    %4630 = vmatprep.subr.mxu0 0.0
    %4631 = vmatpush1.xpose.msra.mxu0 0.0
    %4632 = vmatprep.subr.mxu0 0.0
    %4633 = vmatpush1.xpose.msra.mxu0 0.0
    %4634 = vmatprep.subr.mxu0 0.0
    %4635 = vmatpush1.xpose.msra.mxu0 0.0
    %4636 = vmatprep.subr.mxu0 0.0
    %4637 = vmatpush1.xpose.msra.mxu0 0.0
    %4638 = vmatprep.subr.mxu0 0.0
    %4639 = vmatpush1.xpose.msra.mxu0 0.0
    %4640 = vmatprep.subr.mxu0 0.0
    %4641 = vmatpush1.xpose.msra.mxu0 %v4608
    %4642 = vmatprep.subr.mxu0 0.0
    %4643 = vmatpush2.xpose.msra.mxu0 0.0
    %4644 = vmatprep.subr.mxu0 0.0
    %4645 = vmatpush2.xpose.msra.mxu0 0.0
    %4646 = vmatprep.subr.mxu0 0.0
    %4647 = vmatpush2.xpose.msra.mxu0 0.0
    %4648 = vmatprep.subr.mxu0 0.0
    %4649 = vmatpush2.xpose.msra.mxu0 0.0
    %4650 = vmatprep.subr.mxu0 0.0
    %4651 = vmatpush2.xpose.msra.mxu0 0.0
    %4652 = vmatprep.subr.mxu0 0.0
    %4653 = vmatpush2.xpose.msra.mxu0 0.0
    %4654 = vmatprep.subr.mxu0 0.0
    %4655 = vmatpush2.xpose.msra.mxu0 0.0
    %4656 = vmatprep.subr.mxu0 0.0
    %4657 = vmatpush2.xpose.msra.mxu0 0.0
    %4658 = vmatprep.subr.mxu0 0.0
    %4659 = vmatpush2.xpose.msra.mxu0 0.0
    %4660 = vmatprep.subr.mxu0 0.0
    %4661 = vmatpush2.xpose.msra.mxu0 0.0
    %4662 = vmatprep.subr.mxu0 0.0
    %4663 = vmatpush2.xpose.msra.mxu0 0.0
    %4664 = vmatprep.subr.mxu0 0.0
    %4665 = vmatpush2.xpose.msra.mxu0 0.0
    %4666 = vmatprep.subr.mxu0 0.0
    %4667 = vmatpush2.xpose.msra.mxu0 0.0
    %4668 = vmatprep.subr.mxu0 0.0
    %4669 = vmatpush2.xpose.msra.mxu0 0.0
    %4670 = vmatprep.subr.mxu0 0.0
    %4671 = vmatpush2.xpose.msra.mxu0 0.0
    %4672 = vmatprep.subr.mxu0 0.0
    %4673 = vmatpush2.xpose.msra.mxu0 0.0
    %4674 = vmatprep.mubr.f32.mxu0 0.0
    %4675 = vmatmul.mubr.f32.gmra.mxu0 %v4606
    %v4676 = vpop.f32.mrf.mxu0
    %v4677 = vadd.f32 0.0, %v4676
    %v4678 = vpop.f32.mrf.mxu0
    %4679 = vdwg.mxu0
    %v4680 = vmul.f32 %v4599, 0.35355338
    %v4681 = vmul.f32 %v4677, 0.35355338
    %v4682 = vadd.f32 %v4680, %v49
    %v4683 = vadd.f32 %v4681, %v49
    %v4684 = vsel %vm186, %v4682, -inf
    %4685 = vmax.xlane.f32.xlu0 %v4684
    %v4686 = vpop.xlane.xlu0 %4685
    %v4687 = vsel %vm186, %v4683, -inf
    %4688 = vmax.xlane.f32.xlu0 %v4687
    %v4689 = vpop.xlane.xlu0 %4688
    %v4690 = vsub.f32 %v4682, %v4686
    %v4691 = vsub.f32 %v4683, %v4689
    %v4692 = vmul.f32 %v4690, 1.442695
    %v4693 = vpow.pop %v4692
    %v4694 = vmul.f32 %v4691, 1.442695
    %v4695 = vpow.pop %v4694
    %v4696 = vsel %vm186, %v4693, 0.0
    %4697 = vadd.xlane.f32.xlu0 %v4696
    %v4698 = vpop.xlane.xlu0 %4697
    %v4699 = vsel %vm186, %v4695, 0.0
    %4700 = vadd.xlane.f32.xlu0 %v4699
    %v4701 = vpop.xlane.xlu0 %4700
    %v4702 = vrcp.pop %v4698
    %v4703 = vrcp.pop %v4701
    %v4704 = vmul.f32 %v4693, %v4702
    %v4705 = vmul.f32 %v4695, %v4703
    %4706 = vrot.lane.b32.xlu0 %v3850, 48
    %v4707 = vpop.permute.xlu0 %4706
    %v4710 = vsel %vm186, %v4704, 0
    %4712 = vmatprep.subr.mxu0 0.0
    %4713 = vmatpush1.msra.mxu0 0.0
    %4714 = vmatprep.subr.mxu0 0.0
    %4715 = vmatpush1.msra.mxu0 0.0
    %4716 = vmatprep.subr.mxu0 0.0
    %4717 = vmatpush1.msra.mxu0 0.0
    %4718 = vmatprep.subr.mxu0 0.0
    %4719 = vmatpush1.msra.mxu0 0.0
    %4720 = vmatprep.subr.mxu0 0.0
    %4721 = vmatpush1.msra.mxu0 0.0
    %4722 = vmatprep.subr.mxu0 0.0
    %4723 = vmatpush1.msra.mxu0 0.0
    %4724 = vmatprep.subr.mxu0 0.0
    %4725 = vmatpush1.msra.mxu0 0.0
    %4726 = vmatprep.subr.mxu0 0.0
    %4727 = vmatpush1.msra.mxu0 0.0
    %4728 = vmatprep.subr.mxu0 0.0
    %4729 = vmatpush1.msra.mxu0 0.0
    %4730 = vmatprep.subr.mxu0 0.0
    %4731 = vmatpush1.msra.mxu0 0.0
    %4732 = vmatprep.subr.mxu0 0.0
    %4733 = vmatpush1.msra.mxu0 0.0
    %4734 = vmatprep.subr.mxu0 0.0
    %4735 = vmatpush1.msra.mxu0 0.0
    %4736 = vmatprep.subr.mxu0 0.0
    %4737 = vmatpush1.msra.mxu0 0.0
    %4738 = vmatprep.subr.mxu0 0.0
    %4739 = vmatpush1.msra.mxu0 0.0
    %4740 = vmatprep.subr.mxu0 0.0
    %4741 = vmatpush1.msra.mxu0 0.0
    %4742 = vmatprep.subr.mxu0 0.0
    %4743 = vmatpush1.msra.mxu0 %v4707
    %4744 = vmatprep.subr.mxu0 0.0
    %4745 = vmatpush2.msra.mxu0 0.0
    %4746 = vmatprep.subr.mxu0 0.0
    %4747 = vmatpush2.msra.mxu0 0.0
    %4748 = vmatprep.subr.mxu0 0.0
    %4749 = vmatpush2.msra.mxu0 0.0
    %4750 = vmatprep.subr.mxu0 0.0
    %4751 = vmatpush2.msra.mxu0 0.0
    %4752 = vmatprep.subr.mxu0 0.0
    %4753 = vmatpush2.msra.mxu0 0.0
    %4754 = vmatprep.subr.mxu0 0.0
    %4755 = vmatpush2.msra.mxu0 0.0
    %4756 = vmatprep.subr.mxu0 0.0
    %4757 = vmatpush2.msra.mxu0 0.0
    %4758 = vmatprep.subr.mxu0 0.0
    %4759 = vmatpush2.msra.mxu0 0.0
    %4760 = vmatprep.subr.mxu0 0.0
    %4761 = vmatpush2.msra.mxu0 0.0
    %4762 = vmatprep.subr.mxu0 0.0
    %4763 = vmatpush2.msra.mxu0 0.0
    %4764 = vmatprep.subr.mxu0 0.0
    %4765 = vmatpush2.msra.mxu0 0.0
    %4766 = vmatprep.subr.mxu0 0.0
    %4767 = vmatpush2.msra.mxu0 0.0
    %4768 = vmatprep.subr.mxu0 0.0
    %4769 = vmatpush2.msra.mxu0 0.0
    %4770 = vmatprep.subr.mxu0 0.0
    %4771 = vmatpush2.msra.mxu0 0.0
    %4772 = vmatprep.subr.mxu0 0.0
    %4773 = vmatpush2.msra.mxu0 0.0
    %4774 = vmatprep.subr.mxu0 0.0
    %4775 = vmatpush2.msra.mxu0 0.0
    %4776 = vmatprep.mubr.f32.mxu0 0.0
    %4777 = vmatmul.mubr.f32.gmra.mxu0 %v4710
    %v4778 = vpop.f32.mrf.mxu0
    %v4779 = vadd.f32 0.0, %v4778
    %v4780 = vpop.f32.mrf.mxu0
    %4781 = vdwg.mxu0
    %4782 = vrot.lane.b32.xlu0 %v3855, 48
    %v4783 = vpop.permute.xlu0 %4782
    %v4786 = vsel %vm186, %v4705, 0
    %4788 = vmatprep.subr.mxu0 0.0
    %4789 = vmatpush1.msra.mxu0 0.0
    %4790 = vmatprep.subr.mxu0 0.0
    %4791 = vmatpush1.msra.mxu0 0.0
    %4792 = vmatprep.subr.mxu0 0.0
    %4793 = vmatpush1.msra.mxu0 0.0
    %4794 = vmatprep.subr.mxu0 0.0
    %4795 = vmatpush1.msra.mxu0 0.0
    %4796 = vmatprep.subr.mxu0 0.0
    %4797 = vmatpush1.msra.mxu0 0.0
    %4798 = vmatprep.subr.mxu0 0.0
    %4799 = vmatpush1.msra.mxu0 0.0
    %4800 = vmatprep.subr.mxu0 0.0
    %4801 = vmatpush1.msra.mxu0 0.0
    %4802 = vmatprep.subr.mxu0 0.0
    %4803 = vmatpush1.msra.mxu0 0.0
    %4804 = vmatprep.subr.mxu0 0.0
    %4805 = vmatpush1.msra.mxu0 0.0
    %4806 = vmatprep.subr.mxu0 0.0
    %4807 = vmatpush1.msra.mxu0 0.0
    %4808 = vmatprep.subr.mxu0 0.0
    %4809 = vmatpush1.msra.mxu0 0.0
    %4810 = vmatprep.subr.mxu0 0.0
    %4811 = vmatpush1.msra.mxu0 0.0
    %4812 = vmatprep.subr.mxu0 0.0
    %4813 = vmatpush1.msra.mxu0 0.0
    %4814 = vmatprep.subr.mxu0 0.0
    %4815 = vmatpush1.msra.mxu0 0.0
    %4816 = vmatprep.subr.mxu0 0.0
    %4817 = vmatpush1.msra.mxu0 0.0
    %4818 = vmatprep.subr.mxu0 0.0
    %4819 = vmatpush1.msra.mxu0 %v4783
    %4820 = vmatprep.subr.mxu0 0.0
    %4821 = vmatpush2.msra.mxu0 0.0
    %4822 = vmatprep.subr.mxu0 0.0
    %4823 = vmatpush2.msra.mxu0 0.0
    %4824 = vmatprep.subr.mxu0 0.0
    %4825 = vmatpush2.msra.mxu0 0.0
    %4826 = vmatprep.subr.mxu0 0.0
    %4827 = vmatpush2.msra.mxu0 0.0
    %4828 = vmatprep.subr.mxu0 0.0
    %4829 = vmatpush2.msra.mxu0 0.0
    %4830 = vmatprep.subr.mxu0 0.0
    %4831 = vmatpush2.msra.mxu0 0.0
    %4832 = vmatprep.subr.mxu0 0.0
    %4833 = vmatpush2.msra.mxu0 0.0
    %4834 = vmatprep.subr.mxu0 0.0
    %4835 = vmatpush2.msra.mxu0 0.0
    %4836 = vmatprep.subr.mxu0 0.0
    %4837 = vmatpush2.msra.mxu0 0.0
    %4838 = vmatprep.subr.mxu0 0.0
    %4839 = vmatpush2.msra.mxu0 0.0
    %4840 = vmatprep.subr.mxu0 0.0
    %4841 = vmatpush2.msra.mxu0 0.0
    %4842 = vmatprep.subr.mxu0 0.0
    %4843 = vmatpush2.msra.mxu0 0.0
    %4844 = vmatprep.subr.mxu0 0.0
    %4845 = vmatpush2.msra.mxu0 0.0
    %4846 = vmatprep.subr.mxu0 0.0
    %4847 = vmatpush2.msra.mxu0 0.0
    %4848 = vmatprep.subr.mxu0 0.0
    %4849 = vmatpush2.msra.mxu0 0.0
    %4850 = vmatprep.subr.mxu0 0.0
    %4851 = vmatpush2.msra.mxu0 0.0
    %4852 = vmatprep.mubr.f32.mxu0 0.0
    %4853 = vmatmul.mubr.f32.gmra.mxu0 %v4786
    %v4854 = vpop.f32.mrf.mxu0
    %v4855 = vadd.f32 0.0, %v4854
    %v4856 = vpop.f32.mrf.mxu0
    %4857 = vdwg.mxu0
    %4858 = vrot.lane.b32.xlu0 %v3850, 104
    %v4859 = vpop.permute.xlu0 %4858
    %4860 = vrot.lane.b32.xlu0 %v3850, 72
    %v4861 = vpop.permute.xlu0 %4860
    %v4862 = vsel %vm186, %v4859, 0
    %v4864 = vsel %vm186, %v4861, 0
    %4866 = vmatprep.subr.mxu0 0.0
    %4867 = vmatpush1.xpose.msra.mxu0 0.0
    %4868 = vmatprep.subr.mxu0 0.0
    %4869 = vmatpush1.xpose.msra.mxu0 0.0
    %4870 = vmatprep.subr.mxu0 0.0
    %4871 = vmatpush1.xpose.msra.mxu0 0.0
    %4872 = vmatprep.subr.mxu0 0.0
    %4873 = vmatpush1.xpose.msra.mxu0 0.0
    %4874 = vmatprep.subr.mxu0 0.0
    %4875 = vmatpush1.xpose.msra.mxu0 0.0
    %4876 = vmatprep.subr.mxu0 0.0
    %4877 = vmatpush1.xpose.msra.mxu0 0.0
    %4878 = vmatprep.subr.mxu0 0.0
    %4879 = vmatpush1.xpose.msra.mxu0 0.0
    %4880 = vmatprep.subr.mxu0 0.0
    %4881 = vmatpush1.xpose.msra.mxu0 0.0
    %4882 = vmatprep.subr.mxu0 0.0
    %4883 = vmatpush1.xpose.msra.mxu0 0.0
    %4884 = vmatprep.subr.mxu0 0.0
    %4885 = vmatpush1.xpose.msra.mxu0 0.0
    %4886 = vmatprep.subr.mxu0 0.0
    %4887 = vmatpush1.xpose.msra.mxu0 0.0
    %4888 = vmatprep.subr.mxu0 0.0
    %4889 = vmatpush1.xpose.msra.mxu0 0.0
    %4890 = vmatprep.subr.mxu0 0.0
    %4891 = vmatpush1.xpose.msra.mxu0 0.0
    %4892 = vmatprep.subr.mxu0 0.0
    %4893 = vmatpush1.xpose.msra.mxu0 0.0
    %4894 = vmatprep.subr.mxu0 0.0
    %4895 = vmatpush1.xpose.msra.mxu0 0.0
    %4896 = vmatprep.subr.mxu0 0.0
    %4897 = vmatpush1.xpose.msra.mxu0 %v4864
    %4898 = vmatprep.subr.mxu0 0.0
    %4899 = vmatpush2.xpose.msra.mxu0 0.0
    %4900 = vmatprep.subr.mxu0 0.0
    %4901 = vmatpush2.xpose.msra.mxu0 0.0
    %4902 = vmatprep.subr.mxu0 0.0
    %4903 = vmatpush2.xpose.msra.mxu0 0.0
    %4904 = vmatprep.subr.mxu0 0.0
    %4905 = vmatpush2.xpose.msra.mxu0 0.0
    %4906 = vmatprep.subr.mxu0 0.0
    %4907 = vmatpush2.xpose.msra.mxu0 0.0
    %4908 = vmatprep.subr.mxu0 0.0
    %4909 = vmatpush2.xpose.msra.mxu0 0.0
    %4910 = vmatprep.subr.mxu0 0.0
    %4911 = vmatpush2.xpose.msra.mxu0 0.0
    %4912 = vmatprep.subr.mxu0 0.0
    %4913 = vmatpush2.xpose.msra.mxu0 0.0
    %4914 = vmatprep.subr.mxu0 0.0
    %4915 = vmatpush2.xpose.msra.mxu0 0.0
    %4916 = vmatprep.subr.mxu0 0.0
    %4917 = vmatpush2.xpose.msra.mxu0 0.0
    %4918 = vmatprep.subr.mxu0 0.0
    %4919 = vmatpush2.xpose.msra.mxu0 0.0
    %4920 = vmatprep.subr.mxu0 0.0
    %4921 = vmatpush2.xpose.msra.mxu0 0.0
    %4922 = vmatprep.subr.mxu0 0.0
    %4923 = vmatpush2.xpose.msra.mxu0 0.0
    %4924 = vmatprep.subr.mxu0 0.0
    %4925 = vmatpush2.xpose.msra.mxu0 0.0
    %4926 = vmatprep.subr.mxu0 0.0
    %4927 = vmatpush2.xpose.msra.mxu0 0.0
    %4928 = vmatprep.subr.mxu0 0.0
    %4929 = vmatpush2.xpose.msra.mxu0 0.0
    %4930 = vmatprep.mubr.f32.mxu0 0.0
    %4931 = vmatmul.mubr.f32.gmra.mxu0 %v4862
    %v4932 = vpop.f32.mrf.mxu0
    %v4933 = vadd.f32 0.0, %v4932
    %v4934 = vpop.f32.mrf.mxu0
    %4935 = vdwg.mxu0
    %4936 = vrot.lane.b32.xlu0 %v3855, 104
    %v4937 = vpop.permute.xlu0 %4936
    %4938 = vrot.lane.b32.xlu0 %v3855, 72
    %v4939 = vpop.permute.xlu0 %4938
    %v4940 = vsel %vm186, %v4937, 0
    %v4942 = vsel %vm186, %v4939, 0
    %4944 = vmatprep.subr.mxu0 0.0
    %4945 = vmatpush1.xpose.msra.mxu0 0.0
    %4946 = vmatprep.subr.mxu0 0.0
    %4947 = vmatpush1.xpose.msra.mxu0 0.0
    %4948 = vmatprep.subr.mxu0 0.0
    %4949 = vmatpush1.xpose.msra.mxu0 0.0
    %4950 = vmatprep.subr.mxu0 0.0
    %4951 = vmatpush1.xpose.msra.mxu0 0.0
    %4952 = vmatprep.subr.mxu0 0.0
    %4953 = vmatpush1.xpose.msra.mxu0 0.0
    %4954 = vmatprep.subr.mxu0 0.0
    %4955 = vmatpush1.xpose.msra.mxu0 0.0
    %4956 = vmatprep.subr.mxu0 0.0
    %4957 = vmatpush1.xpose.msra.mxu0 0.0
    %4958 = vmatprep.subr.mxu0 0.0
    %4959 = vmatpush1.xpose.msra.mxu0 0.0
    %4960 = vmatprep.subr.mxu0 0.0
    %4961 = vmatpush1.xpose.msra.mxu0 0.0
    %4962 = vmatprep.subr.mxu0 0.0
    %4963 = vmatpush1.xpose.msra.mxu0 0.0
    %4964 = vmatprep.subr.mxu0 0.0
    %4965 = vmatpush1.xpose.msra.mxu0 0.0
    %4966 = vmatprep.subr.mxu0 0.0
    %4967 = vmatpush1.xpose.msra.mxu0 0.0
    %4968 = vmatprep.subr.mxu0 0.0
    %4969 = vmatpush1.xpose.msra.mxu0 0.0
    %4970 = vmatprep.subr.mxu0 0.0
    %4971 = vmatpush1.xpose.msra.mxu0 0.0
    %4972 = vmatprep.subr.mxu0 0.0
    %4973 = vmatpush1.xpose.msra.mxu0 0.0
    %4974 = vmatprep.subr.mxu0 0.0
    %4975 = vmatpush1.xpose.msra.mxu0 %v4942
    %4976 = vmatprep.subr.mxu0 0.0
    %4977 = vmatpush2.xpose.msra.mxu0 0.0
    %4978 = vmatprep.subr.mxu0 0.0
    %4979 = vmatpush2.xpose.msra.mxu0 0.0
    %4980 = vmatprep.subr.mxu0 0.0
    %4981 = vmatpush2.xpose.msra.mxu0 0.0
    %4982 = vmatprep.subr.mxu0 0.0
    %4983 = vmatpush2.xpose.msra.mxu0 0.0
    %4984 = vmatprep.subr.mxu0 0.0
    %4985 = vmatpush2.xpose.msra.mxu0 0.0
    %4986 = vmatprep.subr.mxu0 0.0
    %4987 = vmatpush2.xpose.msra.mxu0 0.0
    %4988 = vmatprep.subr.mxu0 0.0
    %4989 = vmatpush2.xpose.msra.mxu0 0.0
    %4990 = vmatprep.subr.mxu0 0.0
    %4991 = vmatpush2.xpose.msra.mxu0 0.0
    %4992 = vmatprep.subr.mxu0 0.0
    %4993 = vmatpush2.xpose.msra.mxu0 0.0
    %4994 = vmatprep.subr.mxu0 0.0
    %4995 = vmatpush2.xpose.msra.mxu0 0.0
    %4996 = vmatprep.subr.mxu0 0.0
    %4997 = vmatpush2.xpose.msra.mxu0 0.0
    %4998 = vmatprep.subr.mxu0 0.0
    %4999 = vmatpush2.xpose.msra.mxu0 0.0
    %5000 = vmatprep.subr.mxu0 0.0
    %5001 = vmatpush2.xpose.msra.mxu0 0.0
    %5002 = vmatprep.subr.mxu0 0.0
    %5003 = vmatpush2.xpose.msra.mxu0 0.0
    %5004 = vmatprep.subr.mxu0 0.0
    %5005 = vmatpush2.xpose.msra.mxu0 0.0
    %5006 = vmatprep.subr.mxu0 0.0
    %5007 = vmatpush2.xpose.msra.mxu0 0.0
    %5008 = vmatprep.mubr.f32.mxu0 0.0
    %5009 = vmatmul.mubr.f32.gmra.mxu0 %v4940
    %v5010 = vpop.f32.mrf.mxu0
    %v5011 = vadd.f32 0.0, %v5010
    %v5012 = vpop.f32.mrf.mxu0
    %5013 = vdwg.mxu0
    %v5014 = vmul.f32 %v4933, 0.35355338
    %v5015 = vmul.f32 %v5011, 0.35355338
    %v5016 = vadd.f32 %v5014, %v49
    %v5017 = vadd.f32 %v5015, %v49
    %v5018 = vsel %vm186, %v5016, -inf
    %5019 = vmax.xlane.f32.xlu0 %v5018
    %v5020 = vpop.xlane.xlu0 %5019
    %v5021 = vsel %vm186, %v5017, -inf
    %5022 = vmax.xlane.f32.xlu0 %v5021
    %v5023 = vpop.xlane.xlu0 %5022
    %v5024 = vsub.f32 %v5016, %v5020
    %v5025 = vsub.f32 %v5017, %v5023
    %v5026 = vmul.f32 %v5024, 1.442695
    %v5027 = vpow.pop %v5026
    %v5028 = vmul.f32 %v5025, 1.442695
    %v5029 = vpow.pop %v5028
    %v5030 = vsel %vm186, %v5027, 0.0
    %5031 = vadd.xlane.f32.xlu0 %v5030
    %v5032 = vpop.xlane.xlu0 %5031
    %v5033 = vsel %vm186, %v5029, 0.0
    %5034 = vadd.xlane.f32.xlu0 %v5033
    %v5035 = vpop.xlane.xlu0 %5034
    %v5036 = vrcp.pop %v5032
    %v5037 = vrcp.pop %v5035
    %v5038 = vmul.f32 %v5027, %v5036
    %v5039 = vmul.f32 %v5029, %v5037
    %5040 = vrot.lane.b32.xlu0 %v3850, 40
    %v5041 = vpop.permute.xlu0 %5040
    %v5044 = vsel %vm186, %v5038, 0
    %5046 = vmatprep.subr.mxu0 0.0
    %5047 = vmatpush1.msra.mxu0 0.0
    %5048 = vmatprep.subr.mxu0 0.0
    %5049 = vmatpush1.msra.mxu0 0.0
    %5050 = vmatprep.subr.mxu0 0.0
    %5051 = vmatpush1.msra.mxu0 0.0
    %5052 = vmatprep.subr.mxu0 0.0
    %5053 = vmatpush1.msra.mxu0 0.0
    %5054 = vmatprep.subr.mxu0 0.0
    %5055 = vmatpush1.msra.mxu0 0.0
    %5056 = vmatprep.subr.mxu0 0.0
    %5057 = vmatpush1.msra.mxu0 0.0
    %5058 = vmatprep.subr.mxu0 0.0
    %5059 = vmatpush1.msra.mxu0 0.0
    %5060 = vmatprep.subr.mxu0 0.0
    %5061 = vmatpush1.msra.mxu0 0.0
    %5062 = vmatprep.subr.mxu0 0.0
    %5063 = vmatpush1.msra.mxu0 0.0
    %5064 = vmatprep.subr.mxu0 0.0
    %5065 = vmatpush1.msra.mxu0 0.0
    %5066 = vmatprep.subr.mxu0 0.0
    %5067 = vmatpush1.msra.mxu0 0.0
    %5068 = vmatprep.subr.mxu0 0.0
    %5069 = vmatpush1.msra.mxu0 0.0
    %5070 = vmatprep.subr.mxu0 0.0
    %5071 = vmatpush1.msra.mxu0 0.0
    %5072 = vmatprep.subr.mxu0 0.0
    %5073 = vmatpush1.msra.mxu0 0.0
    %5074 = vmatprep.subr.mxu0 0.0
    %5075 = vmatpush1.msra.mxu0 0.0
    %5076 = vmatprep.subr.mxu0 0.0
    %5077 = vmatpush1.msra.mxu0 %v5041
    %5078 = vmatprep.subr.mxu0 0.0
    %5079 = vmatpush2.msra.mxu0 0.0
    %5080 = vmatprep.subr.mxu0 0.0
    %5081 = vmatpush2.msra.mxu0 0.0
    %5082 = vmatprep.subr.mxu0 0.0
    %5083 = vmatpush2.msra.mxu0 0.0
    %5084 = vmatprep.subr.mxu0 0.0
    %5085 = vmatpush2.msra.mxu0 0.0
    %5086 = vmatprep.subr.mxu0 0.0
    %5087 = vmatpush2.msra.mxu0 0.0
    %5088 = vmatprep.subr.mxu0 0.0
    %5089 = vmatpush2.msra.mxu0 0.0
    %5090 = vmatprep.subr.mxu0 0.0
    %5091 = vmatpush2.msra.mxu0 0.0
    %5092 = vmatprep.subr.mxu0 0.0
    %5093 = vmatpush2.msra.mxu0 0.0
    %5094 = vmatprep.subr.mxu0 0.0
    %5095 = vmatpush2.msra.mxu0 0.0
    %5096 = vmatprep.subr.mxu0 0.0
    %5097 = vmatpush2.msra.mxu0 0.0
    %5098 = vmatprep.subr.mxu0 0.0
    %5099 = vmatpush2.msra.mxu0 0.0
    %5100 = vmatprep.subr.mxu0 0.0
    %5101 = vmatpush2.msra.mxu0 0.0
    %5102 = vmatprep.subr.mxu0 0.0
    %5103 = vmatpush2.msra.mxu0 0.0
    %5104 = vmatprep.subr.mxu0 0.0
    %5105 = vmatpush2.msra.mxu0 0.0
    %5106 = vmatprep.subr.mxu0 0.0
    %5107 = vmatpush2.msra.mxu0 0.0
    %5108 = vmatprep.subr.mxu0 0.0
    %5109 = vmatpush2.msra.mxu0 0.0
    %5110 = vmatprep.mubr.f32.mxu0 0.0
    %5111 = vmatmul.mubr.f32.gmra.mxu0 %v5044
    %v5112 = vpop.f32.mrf.mxu0
    %v5113 = vadd.f32 0.0, %v5112
    %v5114 = vpop.f32.mrf.mxu0
    %5115 = vdwg.mxu0
    %5116 = vrot.lane.b32.xlu0 %v3855, 40
    %v5117 = vpop.permute.xlu0 %5116
    %v5120 = vsel %vm186, %v5039, 0
    %5122 = vmatprep.subr.mxu0 0.0
    %5123 = vmatpush1.msra.mxu0 0.0
    %5124 = vmatprep.subr.mxu0 0.0
    %5125 = vmatpush1.msra.mxu0 0.0
    %5126 = vmatprep.subr.mxu0 0.0
    %5127 = vmatpush1.msra.mxu0 0.0
    %5128 = vmatprep.subr.mxu0 0.0
    %5129 = vmatpush1.msra.mxu0 0.0
    %5130 = vmatprep.subr.mxu0 0.0
    %5131 = vmatpush1.msra.mxu0 0.0
    %5132 = vmatprep.subr.mxu0 0.0
    %5133 = vmatpush1.msra.mxu0 0.0
    %5134 = vmatprep.subr.mxu0 0.0
    %5135 = vmatpush1.msra.mxu0 0.0
    %5136 = vmatprep.subr.mxu0 0.0
    %5137 = vmatpush1.msra.mxu0 0.0
    %5138 = vmatprep.subr.mxu0 0.0
    %5139 = vmatpush1.msra.mxu0 0.0
    %5140 = vmatprep.subr.mxu0 0.0
    %5141 = vmatpush1.msra.mxu0 0.0
    %5142 = vmatprep.subr.mxu0 0.0
    %5143 = vmatpush1.msra.mxu0 0.0
    %5144 = vmatprep.subr.mxu0 0.0
    %5145 = vmatpush1.msra.mxu0 0.0
    %5146 = vmatprep.subr.mxu0 0.0
    %5147 = vmatpush1.msra.mxu0 0.0
    %5148 = vmatprep.subr.mxu0 0.0
    %5149 = vmatpush1.msra.mxu0 0.0
    %5150 = vmatprep.subr.mxu0 0.0
    %5151 = vmatpush1.msra.mxu0 0.0
    %5152 = vmatprep.subr.mxu0 0.0
    %5153 = vmatpush1.msra.mxu0 %v5117
    %5154 = vmatprep.subr.mxu0 0.0
    %5155 = vmatpush2.msra.mxu0 0.0
    %5156 = vmatprep.subr.mxu0 0.0
    %5157 = vmatpush2.msra.mxu0 0.0
    %5158 = vmatprep.subr.mxu0 0.0
    %5159 = vmatpush2.msra.mxu0 0.0
    %5160 = vmatprep.subr.mxu0 0.0
    %5161 = vmatpush2.msra.mxu0 0.0
    %5162 = vmatprep.subr.mxu0 0.0
    %5163 = vmatpush2.msra.mxu0 0.0
    %5164 = vmatprep.subr.mxu0 0.0
    %5165 = vmatpush2.msra.mxu0 0.0
    %5166 = vmatprep.subr.mxu0 0.0
    %5167 = vmatpush2.msra.mxu0 0.0
    %5168 = vmatprep.subr.mxu0 0.0
    %5169 = vmatpush2.msra.mxu0 0.0
    %5170 = vmatprep.subr.mxu0 0.0
    %5171 = vmatpush2.msra.mxu0 0.0
    %5172 = vmatprep.subr.mxu0 0.0
    %5173 = vmatpush2.msra.mxu0 0.0
    %5174 = vmatprep.subr.mxu0 0.0
    %5175 = vmatpush2.msra.mxu0 0.0
    %5176 = vmatprep.subr.mxu0 0.0
    %5177 = vmatpush2.msra.mxu0 0.0
    %5178 = vmatprep.subr.mxu0 0.0
    %5179 = vmatpush2.msra.mxu0 0.0
    %5180 = vmatprep.subr.mxu0 0.0
    %5181 = vmatpush2.msra.mxu0 0.0
    %5182 = vmatprep.subr.mxu0 0.0
    %5183 = vmatpush2.msra.mxu0 0.0
    %5184 = vmatprep.subr.mxu0 0.0
    %5185 = vmatpush2.msra.mxu0 0.0
    %5186 = vmatprep.mubr.f32.mxu0 0.0
    %5187 = vmatmul.mubr.f32.gmra.mxu0 %v5120
    %v5188 = vpop.f32.mrf.mxu0
    %v5189 = vadd.f32 0.0, %v5188
    %v5190 = vpop.f32.mrf.mxu0
    %5191 = vdwg.mxu0
    %5194 = vrot.lane.b32.xlu0 %v4445, 8
    %v5195 = vpop.permute.xlu0 %5194
    %5196 = vrot.lane.b32.xlu0 %v4521, 8
    %v5197 = vpop.permute.xlu0 %5196
    %5202 = vrot.lane.b32.xlu0 %v4779, 16
    %v5203 = vpop.permute.xlu0 %5202
    %5204 = vrot.lane.b32.xlu0 %v4855, 16
    %v5205 = vpop.permute.xlu0 %5204
    %5210 = vrot.lane.b32.xlu0 %v5113, 24
    %v5211 = vpop.permute.xlu0 %5210
    %5212 = vrot.lane.b32.xlu0 %v5189, 24
    %v5213 = vpop.permute.xlu0 %5212
    %v5216 = vsel %vm186, %v4111, %v5195
    %v5217 = vsel %vm186, %v4187, %v5197
    %v5218 = vsel %vm1544, %v5216, %v5203
    %v5219 = vsel %vm1544, %v5217, %v5205
    %v5220 = vsel %vm1547, %v5218, %v5211
    %v5221 = vsel %vm1547, %v5219, %v5213
    %s5222 = scalar_lea.vmem %s6, 64
    %v5223 = vld [vmem:[%s5222] sm:$0xff]
    %v5224 = vld [vmem:[%s5222 + $0x8] sm:$0xff]
    %v5225 = vld [vmem:[%s5222 + $0x10] sm:$0xff]
    %v5226 = vld [vmem:[%s5222 + $0x18] sm:$0xff]
    %v5228 = vsel %vm54, %v5220, 0
    %v5231 = vsel %vm54, %v5221, 0
    %5233 = vmatprep.subr.mxu0 0.0
    %5234 = vmatpush1.msra.mxu0 0.0
    %5235 = vmatprep.subr.mxu0 0.0
    %5236 = vmatpush1.msra.mxu0 0.0
    %5237 = vmatprep.subr.mxu0 0.0
    %5238 = vmatpush1.msra.mxu0 0.0
    %5239 = vmatprep.subr.mxu0 0.0
    %5240 = vmatpush1.msra.mxu0 0.0
    %5241 = vmatprep.subr.mxu0 0.0
    %5242 = vmatpush1.msra.mxu0 0.0
    %5243 = vmatprep.subr.mxu0 0.0
    %5244 = vmatpush1.msra.mxu0 0.0
    %5245 = vmatprep.subr.mxu0 0.0
    %5246 = vmatpush1.msra.mxu0 0.0
    %5247 = vmatprep.subr.mxu0 0.0
    %5248 = vmatpush1.msra.mxu0 0.0
    %5249 = vmatprep.subr.mxu0 0.0
    %5250 = vmatpush1.msra.mxu0 0.0
    %5251 = vmatprep.subr.mxu0 0.0
    %5252 = vmatpush1.msra.mxu0 0.0
    %5253 = vmatprep.subr.mxu0 0.0
    %5254 = vmatpush1.msra.mxu0 0.0
    %5255 = vmatprep.subr.mxu0 0.0
    %5256 = vmatpush1.msra.mxu0 0.0
    %5257 = vmatprep.subr.mxu0 0.0
    %5258 = vmatpush1.msra.mxu0 %v5226
    %5259 = vmatprep.subr.mxu0 0.0
    %5260 = vmatpush1.msra.mxu0 %v5225
    %5261 = vmatprep.subr.mxu0 0.0
    %5262 = vmatpush1.msra.mxu0 %v5224
    %5263 = vmatprep.subr.mxu0 0.0
    %5264 = vmatpush1.msra.mxu0 %v5223
    %5265 = vmatprep.subr.mxu0 0.0
    %5266 = vmatpush2.msra.mxu0 0.0
    %5267 = vmatprep.subr.mxu0 0.0
    %5268 = vmatpush2.msra.mxu0 0.0
    %5269 = vmatprep.subr.mxu0 0.0
    %5270 = vmatpush2.msra.mxu0 0.0
    %5271 = vmatprep.subr.mxu0 0.0
    %5272 = vmatpush2.msra.mxu0 0.0
    %5273 = vmatprep.subr.mxu0 0.0
    %5274 = vmatpush2.msra.mxu0 0.0
    %5275 = vmatprep.subr.mxu0 0.0
    %5276 = vmatpush2.msra.mxu0 0.0
    %5277 = vmatprep.subr.mxu0 0.0
    %5278 = vmatpush2.msra.mxu0 0.0
    %5279 = vmatprep.subr.mxu0 0.0
    %5280 = vmatpush2.msra.mxu0 0.0
    %5281 = vmatprep.subr.mxu0 0.0
    %5282 = vmatpush2.msra.mxu0 0.0
    %5283 = vmatprep.subr.mxu0 0.0
    %5284 = vmatpush2.msra.mxu0 0.0
    %5285 = vmatprep.subr.mxu0 0.0
    %5286 = vmatpush2.msra.mxu0 0.0
    %5287 = vmatprep.subr.mxu0 0.0
    %5288 = vmatpush2.msra.mxu0 0.0
    %5289 = vmatprep.subr.mxu0 0.0
    %5290 = vmatpush2.msra.mxu0 0.0
    %5291 = vmatprep.subr.mxu0 0.0
    %5292 = vmatpush2.msra.mxu0 0.0
    %5293 = vmatprep.subr.mxu0 0.0
    %5294 = vmatpush2.msra.mxu0 0.0
    %5295 = vmatprep.subr.mxu0 0.0
    %5296 = vmatpush2.msra.mxu0 0.0
    %5297 = vmatprep.mubr.f32.mxu0 0.0
    %5298 = vmatmul.mubr.f32.gmra.mxu0 %v5228
    %v5299 = vpop.f32.mrf.mxu0
    %v5300 = vadd.f32 0.0, %v5299
    %v5301 = vpop.f32.mrf.mxu0
    %5302 = vmatprep.mubr.f32.mxu0 0.0
    %5303 = vmatmul.mubr.f32.gmra.mxu0 %v5231
    %v5304 = vpop.f32.mrf.mxu0
    %v5305 = vadd.f32 0.0, %v5304
    %v5306 = vpop.f32.mrf.mxu0
    %5307 = vdwg.mxu0
    %v5308 = vadd.f32 %v3726, %v5300
    %v5309 = vadd.f32 %v3727, %v5305
    %v5310 = vlaneseq
    %v5311 = vshrl.u32 %v5310, 7
    %v5312 = vsub.s32 5, %v5311
    %v5313 = vrot.slane %v3729, %v5312
    %v5314 = vadd.f32 %v5308, %v5313
    %v5315 = vadd.f32 %v5309, %v5313
    %v5316 = vsel %vm54, %v5314, 0.0
    %5317 = vadd.xlane.f32.xlu0 %v5316
    %v5318 = vpop.xlane.xlu0 %5317
    %v5319 = vsel %vm54, %v5315, 0.0
    %5320 = vadd.xlane.f32.xlu0 %v5319
    %v5321 = vpop.xlane.xlu0 %5320
    %v5322 = vmul.f32 %v5318, %v61
    %v5323 = vmul.f32 %v5321, %v61
    %v5324 = vsub.f32 %v5314, %v5322
    %v5325 = vsub.f32 %v5315, %v5323
    %v5326 = vmul.f32 %v5324, %v5324
    %v5327 = vmul.f32 %v5325, %v5325
    %v5328 = vsel %vm54, %v5326, 0.0
    %5329 = vadd.xlane.f32.xlu0 %v5328
    %v5330 = vpop.xlane.xlu0 %5329
    %v5331 = vsel %vm54, %v5327, 0.0
    %5332 = vadd.xlane.f32.xlu0 %v5331
    %v5333 = vpop.xlane.xlu0 %5332
    %v5334 = vmul.f32 %v5330, %v61
    %v5335 = vmul.f32 %v5333, %v61
    %v5336 = vadd.f32 %v5334, 1e-05
    %v5337 = vadd.f32 %v5335, 1e-05
    %v5338 = vrsqrt.pop %v5336
    %v5339 = vrsqrt.pop %v5337
    %v5340 = vmul.f32 %v5324, %v5338
    %v5341 = vmul.f32 %v5325, %v5339
    %v5342 = vlaneseq
    %v5343 = vshrl.u32 %v5342, 7
    %v5344 = vsub.s32 2, %v5343
    %v5345 = vrot.slane %v3729, %v5344
    %v5346 = vmul.f32 %v5340, %v5345
    %v5347 = vmul.f32 %v5341, %v5345
    %v5348 = vlaneseq
    %v5349 = vshrl.u32 %v5348, 7
    %v5350 = vsub.s32 3, %v5349
    %v5351 = vrot.slane %v3729, %v5350
    %v5352 = vadd.f32 %v5346, %v5351
    %v5353 = vadd.f32 %v5347, %v5351
    %s5354 = scalar_lea.vmem %s7, 64
    %v5355 = vld [vmem:[%s5354] sm:$0xff]
    %v5356 = vld [vmem:[%s5354 + $0x8] sm:$0xff]
    %v5357 = vld [vmem:[%s5354 + $0x10] sm:$0xff]
    %v5358 = vld [vmem:[%s5354 + $0x18] sm:$0xff]
    %v5359 = vlaneseq
    %v5360 = vshrl.u32 %v5359, 7
    %v5361 = vsub.s32 6, %v5360
    %v5362 = vrot.slane %v3729, %v5361
    %v5364 = vsel %vm54, %v5352, 0
    %v5367 = vsel %vm54, %v5353, 0
    %5369 = vmatprep.subr.mxu0 0.0
    %5370 = vmatpush1.msra.mxu0 0.0
    %5371 = vmatprep.subr.mxu0 0.0
    %5372 = vmatpush1.msra.mxu0 0.0
    %5373 = vmatprep.subr.mxu0 0.0
    %5374 = vmatpush1.msra.mxu0 0.0
    %5375 = vmatprep.subr.mxu0 0.0
    %5376 = vmatpush1.msra.mxu0 0.0
    %5377 = vmatprep.subr.mxu0 0.0
    %5378 = vmatpush1.msra.mxu0 0.0
    %5379 = vmatprep.subr.mxu0 0.0
    %5380 = vmatpush1.msra.mxu0 0.0
    %5381 = vmatprep.subr.mxu0 0.0
    %5382 = vmatpush1.msra.mxu0 0.0
    %5383 = vmatprep.subr.mxu0 0.0
    %5384 = vmatpush1.msra.mxu0 0.0
    %5385 = vmatprep.subr.mxu0 0.0
    %5386 = vmatpush1.msra.mxu0 0.0
    %5387 = vmatprep.subr.mxu0 0.0
    %5388 = vmatpush1.msra.mxu0 0.0
    %5389 = vmatprep.subr.mxu0 0.0
    %5390 = vmatpush1.msra.mxu0 0.0
    %5391 = vmatprep.subr.mxu0 0.0
    %5392 = vmatpush1.msra.mxu0 0.0
    %5393 = vmatprep.subr.mxu0 0.0
    %5394 = vmatpush1.msra.mxu0 %v5358
    %5395 = vmatprep.subr.mxu0 0.0
    %5396 = vmatpush1.msra.mxu0 %v5357
    %5397 = vmatprep.subr.mxu0 0.0
    %5398 = vmatpush1.msra.mxu0 %v5356
    %5399 = vmatprep.subr.mxu0 0.0
    %5400 = vmatpush1.msra.mxu0 %v5355
    %5401 = vmatprep.subr.mxu0 0.0
    %5402 = vmatpush2.msra.mxu0 0.0
    %5403 = vmatprep.subr.mxu0 0.0
    %5404 = vmatpush2.msra.mxu0 0.0
    %5405 = vmatprep.subr.mxu0 0.0
    %5406 = vmatpush2.msra.mxu0 0.0
    %5407 = vmatprep.subr.mxu0 0.0
    %5408 = vmatpush2.msra.mxu0 0.0
    %5409 = vmatprep.subr.mxu0 0.0
    %5410 = vmatpush2.msra.mxu0 0.0
    %5411 = vmatprep.subr.mxu0 0.0
    %5412 = vmatpush2.msra.mxu0 0.0
    %5413 = vmatprep.subr.mxu0 0.0
    %5414 = vmatpush2.msra.mxu0 0.0
    %5415 = vmatprep.subr.mxu0 0.0
    %5416 = vmatpush2.msra.mxu0 0.0
    %5417 = vmatprep.subr.mxu0 0.0
    %5418 = vmatpush2.msra.mxu0 0.0
    %5419 = vmatprep.subr.mxu0 0.0
    %5420 = vmatpush2.msra.mxu0 0.0
    %5421 = vmatprep.subr.mxu0 0.0
    %5422 = vmatpush2.msra.mxu0 0.0
    %5423 = vmatprep.subr.mxu0 0.0
    %5424 = vmatpush2.msra.mxu0 0.0
    %5425 = vmatprep.subr.mxu0 0.0
    %5426 = vmatpush2.msra.mxu0 0.0
    %5427 = vmatprep.subr.mxu0 0.0
    %5428 = vmatpush2.msra.mxu0 0.0
    %5429 = vmatprep.subr.mxu0 0.0
    %5430 = vmatpush2.msra.mxu0 0.0
    %5431 = vmatprep.subr.mxu0 0.0
    %5432 = vmatpush2.msra.mxu0 0.0
    %5433 = vmatprep.mubr.f32.mxu0 0.0
    %5434 = vmatmul.mubr.f32.gmra.mxu0 %v5364
    %v5435 = vpop.f32.mrf.mxu0
    %v5436 = vadd.f32 %v5362, %v5435
    %v5437 = vpop.f32.mrf.mxu0
    %5438 = vmatprep.mubr.f32.mxu0 0.0
    %5439 = vmatmul.mubr.f32.gmra.mxu0 %v5367
    %v5440 = vpop.f32.mrf.mxu0
    %v5441 = vadd.f32 %v5362, %v5440
    %v5442 = vpop.f32.mrf.mxu0
    %5443 = vdwg.mxu0
    %v5444 = vmul.f32 %v5436, 1.702
    %v5445 = vmul.f32 %v5441, 1.702
    %v5446 = vxor.u32 %v5444, 2147483648
    %v5447 = vxor.u32 %v5445, 2147483648
    %v5448 = vmul.f32 %v5446, 1.442695
    %v5449 = vpow.pop %v5448
    %v5450 = vmul.f32 %v5447, 1.442695
    %v5451 = vpow.pop %v5450
    %v5452 = vadd.f32 %v5449, 1.0
    %v5453 = vadd.f32 %v5451, 1.0
    %v5454 = vrcp.pop %v5452
    %v5455 = vmul.f32 1.0, %v5454
    %v5456 = vrcp.pop %v5453
    %v5457 = vmul.f32 1.0, %v5456
    %v5458 = vmul.f32 %v5436, %v5455
    %v5459 = vmul.f32 %v5441, %v5457
    %s5460 = scalar_lea.vmem %s8, 256
    %v5461 = vld [vmem:[%s5460] sm:$0xff]
    %v5462 = vld [vmem:[%s5460 + $0x8] sm:$0xff]
    %v5463 = vld [vmem:[%s5460 + $0x10] sm:$0xff]
    %v5464 = vld [vmem:[%s5460 + $0x18] sm:$0xff]
    %v5465 = vld [vmem:[%s5460 + $0x20] sm:$0xff]
    %v5466 = vld [vmem:[%s5460 + $0x28] sm:$0xff]
    %v5467 = vld [vmem:[%s5460 + $0x30] sm:$0xff]
    %v5468 = vld [vmem:[%s5460 + $0x38] sm:$0xff]
    %v5469 = vld [vmem:[%s5460 + $0x40] sm:$0xff]
    %v5470 = vld [vmem:[%s5460 + $0x48] sm:$0xff]
    %v5471 = vld [vmem:[%s5460 + $0x50] sm:$0xff]
    %v5472 = vld [vmem:[%s5460 + $0x58] sm:$0xff]
    %v5473 = vld [vmem:[%s5460 + $0x60] sm:$0xff]
    %v5474 = vld [vmem:[%s5460 + $0x68] sm:$0xff]
    %v5475 = vld [vmem:[%s5460 + $0x70] sm:$0xff]
    %v5476 = vld [vmem:[%s5460 + $0x78] sm:$0xff]
    %5477 = vmatprep.subr.mxu0 0.0
    %5478 = vmatpush1.msra.mxu0 %v5476
    %5479 = vmatprep.subr.mxu0 0.0
    %5480 = vmatpush1.msra.mxu0 %v5475
    %5481 = vmatprep.subr.mxu0 0.0
    %5482 = vmatpush1.msra.mxu0 %v5474
    %5483 = vmatprep.subr.mxu0 0.0
    %5484 = vmatpush1.msra.mxu0 %v5473
    %5485 = vmatprep.subr.mxu0 0.0
    %5486 = vmatpush1.msra.mxu0 %v5472
    %5487 = vmatprep.subr.mxu0 0.0
    %5488 = vmatpush1.msra.mxu0 %v5471
    %5489 = vmatprep.subr.mxu0 0.0
    %5490 = vmatpush1.msra.mxu0 %v5470
    %5491 = vmatprep.subr.mxu0 0.0
    %5492 = vmatpush1.msra.mxu0 %v5469
    %5493 = vmatprep.subr.mxu0 0.0
    %5494 = vmatpush1.msra.mxu0 %v5468
    %5495 = vmatprep.subr.mxu0 0.0
    %5496 = vmatpush1.msra.mxu0 %v5467
    %5497 = vmatprep.subr.mxu0 0.0
    %5498 = vmatpush1.msra.mxu0 %v5466
    %5499 = vmatprep.subr.mxu0 0.0
    %5500 = vmatpush1.msra.mxu0 %v5465
    %5501 = vmatprep.subr.mxu0 0.0
    %5502 = vmatpush1.msra.mxu0 %v5464
    %5503 = vmatprep.subr.mxu0 0.0
    %5504 = vmatpush1.msra.mxu0 %v5463
    %5505 = vmatprep.subr.mxu0 0.0
    %5506 = vmatpush1.msra.mxu0 %v5462
    %5507 = vmatprep.subr.mxu0 0.0
    %5508 = vmatpush1.msra.mxu0 %v5461
    %5509 = vmatprep.subr.mxu0 0.0
    %5510 = vmatpush2.msra.mxu0 0.0
    %5511 = vmatprep.subr.mxu0 0.0
    %5512 = vmatpush2.msra.mxu0 0.0
    %5513 = vmatprep.subr.mxu0 0.0
    %5514 = vmatpush2.msra.mxu0 0.0
    %5515 = vmatprep.subr.mxu0 0.0
    %5516 = vmatpush2.msra.mxu0 0.0
    %5517 = vmatprep.subr.mxu0 0.0
    %5518 = vmatpush2.msra.mxu0 0.0
    %5519 = vmatprep.subr.mxu0 0.0
    %5520 = vmatpush2.msra.mxu0 0.0
    %5521 = vmatprep.subr.mxu0 0.0
    %5522 = vmatpush2.msra.mxu0 0.0
    %5523 = vmatprep.subr.mxu0 0.0
    %5524 = vmatpush2.msra.mxu0 0.0
    %5525 = vmatprep.subr.mxu0 0.0
    %5526 = vmatpush2.msra.mxu0 0.0
    %5527 = vmatprep.subr.mxu0 0.0
    %5528 = vmatpush2.msra.mxu0 0.0
    %5529 = vmatprep.subr.mxu0 0.0
    %5530 = vmatpush2.msra.mxu0 0.0
    %5531 = vmatprep.subr.mxu0 0.0
    %5532 = vmatpush2.msra.mxu0 0.0
    %5533 = vmatprep.subr.mxu0 0.0
    %5534 = vmatpush2.msra.mxu0 0.0
    %5535 = vmatprep.subr.mxu0 0.0
    %5536 = vmatpush2.msra.mxu0 0.0
    %5537 = vmatprep.subr.mxu0 0.0
    %5538 = vmatpush2.msra.mxu0 0.0
    %5539 = vmatprep.subr.mxu0 0.0
    %5540 = vmatpush2.msra.mxu0 0.0
    %5541 = vmatprep.mubr.f32.mxu0 0.0
    %5542 = vmatmul.mubr.f32.gmra.mxu0 %v5458
    %v5543 = vpop.f32.mrf.mxu0
    %v5544 = vadd.f32 0.0, %v5543
    %v5545 = vpop.f32.mrf.mxu0
    %5546 = vmatprep.mubr.f32.mxu0 0.0
    %5547 = vmatmul.mubr.f32.gmra.mxu0 %v5459
    %v5548 = vpop.f32.mrf.mxu0
    %v5549 = vadd.f32 0.0, %v5548
    %v5550 = vpop.f32.mrf.mxu0
    %5551 = vdwg.mxu0
    %v5552 = vadd.f32 %v5314, %v5544
    %v5553 = vadd.f32 %v5315, %v5549
    %v5554 = vlaneseq
    %v5555 = vshrl.u32 %v5554, 7
    %v5556 = vsub.s32 7, %v5555
    %v5557 = vrot.slane %v3729, %v5556
    %v5558 = vadd.f32 %v5552, %v5557
    %v5559 = vadd.f32 %v5553, %v5557
    %v5560 = vld [vmem:[%s3] sm:$0xff]
    %v5561 = vld [vmem:[%s3 + $0x8] sm:$0xff]
    %5563 = vset.pattern.permute.xlu0 0
    %5564 = vperm.xlu0 %5563, %v5560
    %v5565 = vpop.permute.xlu0 %5564
    %5568 = vset.pattern.permute.xlu0 0
    %5569 = vperm.xlu0 %5568, %v5561
    %v5570 = vpop.permute.xlu0 %5569
    %v5572 = vmul.f32 %v5558, %v5565
    %v5573 = vmul.f32 %v5559, %v5570
    %v5574 = vsel %vm54, %v5572, 0.0
    %v5575 = vrot.slane %v5574, 4
    %v5576 = vadd.f32 %v5574, %v5575
    %v5577 = vrot.slane %v5576, 2
    %v5578 = vadd.f32 %v5576, %v5577
    %v5579 = vrot.slane %v5578, 1
    %v5580 = vadd.f32 %v5578, %v5579
    %v5581 = vsel %vm54, %v5573, 0.0
    %v5582 = vrot.slane %v5581, 4
    %v5583 = vadd.f32 %v5581, %v5582
    %v5584 = vrot.slane %v5583, 2
    %v5585 = vadd.f32 %v5583, %v5584
    %v5586 = vrot.slane %v5585, 1
    %v5587 = vadd.f32 %v5585, %v5586
    %v5588 = vld [vmem:[%s9] sm:$0x1]
    %v5589 = vld [vmem:[%s9 + $0x1] sm:$0x1]
    %vm5592 = vcmask 1041409
    %v5593 = vsel %vm5592, %v5587, %v5580
    %vm5595 = vcmask 254976
    %v5596 = vsel %vm5595, %v5593, 0.0
    %5597 = vadd.xlane.f32.xlu0 %v5596
    %v5598 = vpop.xlane.xlu0 %5597
    %v5599 = vmul.f32 %v5598, %v61
    %v5601 = vrot.slane %v5599, 1
    %v5604 = vsub.f32 %v5580, %v5599
    %v5605 = vsub.f32 %v5587, %v5601
    %v5606 = vmul.f32 %v5604, %v5604
    %v5607 = vmul.f32 %v5605, %v5605
    %v5610 = vrot.slane %v5607, 7
    %v5611 = vsel %vm5592, %v5610, %v5606
    %v5613 = vsel %vm5595, %v5611, 0.0
    %5614 = vadd.xlane.f32.xlu0 %v5613
    %v5615 = vpop.xlane.xlu0 %5614
    %v5616 = vmul.f32 %v5615, %v61
    %v5617 = vadd.f32 %v5616, 1e-05
    %v5618 = vrsqrt.pop %v5617
    %v5620 = vrot.slane %v5618, 1
    %v5623 = vmul.f32 %v5604, %v5618
    %v5624 = vmul.f32 %v5605, %v5620
    %v5625 = vlaneseq
    %v5626 = vshrl.u32 %v5625, 7
    %v5627 = vsub.s32 0, %v5626
    %v5628 = vrot.slane %v5588, %v5627
    %v5629 = vmul.f32 %v5623, %v5628
    %v5630 = vmul.f32 %v5624, %v5628
    %v5631 = vlaneseq
    %v5632 = vshrl.u32 %v5631, 7
    %v5633 = vsub.s32 0, %v5632
    %v5634 = vrot.slane %v5589, %v5633
    %v5635 = vadd.f32 %v5629, %v5634
    %v5636 = vadd.f32 %v5630, %v5634
    %v5637 = vld [vmem:[%s10] sm:$0xff]
    %v5638 = vld [vmem:[%s10 + $0x8] sm:$0xff]
    %v5639 = vld [vmem:[%s10 + $0x10] sm:$0xff]
    %v5640 = vld [vmem:[%s10 + $0x18] sm:$0xff]
    %v5643 = vrot.slane %v5636, 7
    %v5644 = vsel %vm5592, %v5643, %v5635
    %v5645 = vsel %vm54, %v5644, 0
    %5647 = vmatprep.subr.mxu0 0.0
    %5648 = vmatpush1.msra.mxu0 0.0
    %5649 = vmatprep.subr.mxu0 0.0
    %5650 = vmatpush1.msra.mxu0 0.0
    %5651 = vmatprep.subr.mxu0 0.0
    %5652 = vmatpush1.msra.mxu0 0.0
    %5653 = vmatprep.subr.mxu0 0.0
    %5654 = vmatpush1.msra.mxu0 0.0
    %5655 = vmatprep.subr.mxu0 0.0
    %5656 = vmatpush1.msra.mxu0 0.0
    %5657 = vmatprep.subr.mxu0 0.0
    %5658 = vmatpush1.msra.mxu0 0.0
    %5659 = vmatprep.subr.mxu0 0.0
    %5660 = vmatpush1.msra.mxu0 0.0
    %5661 = vmatprep.subr.mxu0 0.0
    %5662 = vmatpush1.msra.mxu0 0.0
    %5663 = vmatprep.subr.mxu0 0.0
    %5664 = vmatpush1.msra.mxu0 0.0
    %5665 = vmatprep.subr.mxu0 0.0
    %5666 = vmatpush1.msra.mxu0 0.0
    %5667 = vmatprep.subr.mxu0 0.0
    %5668 = vmatpush1.msra.mxu0 0.0
    %5669 = vmatprep.subr.mxu0 0.0
    %5670 = vmatpush1.msra.mxu0 0.0
    %5671 = vmatprep.subr.mxu0 0.0
    %5672 = vmatpush1.msra.mxu0 %v5640
    %5673 = vmatprep.subr.mxu0 0.0
    %5674 = vmatpush1.msra.mxu0 %v5639
    %5675 = vmatprep.subr.mxu0 0.0
    %5676 = vmatpush1.msra.mxu0 %v5638
    %5677 = vmatprep.subr.mxu0 0.0
    %5678 = vmatpush1.msra.mxu0 %v5637
    %5679 = vmatprep.subr.mxu0 0.0
    %5680 = vmatpush2.msra.mxu0 0.0
    %5681 = vmatprep.subr.mxu0 0.0
    %5682 = vmatpush2.msra.mxu0 0.0
    %5683 = vmatprep.subr.mxu0 0.0
    %5684 = vmatpush2.msra.mxu0 0.0
    %5685 = vmatprep.subr.mxu0 0.0
    %5686 = vmatpush2.msra.mxu0 0.0
    %5687 = vmatprep.subr.mxu0 0.0
    %5688 = vmatpush2.msra.mxu0 0.0
    %5689 = vmatprep.subr.mxu0 0.0
    %5690 = vmatpush2.msra.mxu0 0.0
    %5691 = vmatprep.subr.mxu0 0.0
    %5692 = vmatpush2.msra.mxu0 0.0
    %5693 = vmatprep.subr.mxu0 0.0
    %5694 = vmatpush2.msra.mxu0 0.0
    %5695 = vmatprep.subr.mxu0 0.0
    %5696 = vmatpush2.msra.mxu0 0.0
    %5697 = vmatprep.subr.mxu0 0.0
    %5698 = vmatpush2.msra.mxu0 0.0
    %5699 = vmatprep.subr.mxu0 0.0
    %5700 = vmatpush2.msra.mxu0 0.0
    %5701 = vmatprep.subr.mxu0 0.0
    %5702 = vmatpush2.msra.mxu0 0.0
    %5703 = vmatprep.subr.mxu0 0.0
    %5704 = vmatpush2.msra.mxu0 0.0
    %5705 = vmatprep.subr.mxu0 0.0
    %5706 = vmatpush2.msra.mxu0 0.0
    %5707 = vmatprep.subr.mxu0 0.0
    %5708 = vmatpush2.msra.mxu0 0.0
    %5709 = vmatprep.subr.mxu0 0.0
    %5710 = vmatpush2.msra.mxu0 0.0
    %5711 = vmatprep.mubr.f32.mxu0 0.0
    %5712 = vmatmul.mubr.f32.gmra.mxu0 %v5645
    %v5713 = vpop.f32.mrf.mxu0
    %v5714 = vadd.f32 0.0, %v5713
    %v5715 = vpop.f32.mrf.mxu0
    %5716 = vdwg.mxu0
    %vm5717 = vcmask 123904
    %5718 = vst.msk [vmem:[#allocation2] sm:$0x3] %vm5717, %v5714
    // Predicated region
    $region46: #{text_encoder_forward.1} parent=1 // pred_check
      _
    $region47: #{text_encoder_forward.1} parent=1 // pred_check_branch
      %5720 = sbr.rel (0) target = $region49
    $region48: #{text_encoder_forward.1} parent=1 // pred_region
      %s5722 = ssub.s32 32, 32
      %5723 = vsyncadd [#allocation3], %s5722
      %s5725 = sshll.u32 [#allocation2], 4
      %s5726 = int_to_ptr.vmem [resolvable:$true] %s5725
      %5728 = dma.vmem_to_hbm [thread:$0]  %s5726, 32, %s11, [#allocation3]
    $region49: #{text_encoder_forward.1} parent=1 // pred_fallthru
      _
    // Predicated region
    $region50: #{text_encoder_forward.1} parent=1 // pred_check
      _
    $region51: #{text_encoder_forward.1} parent=1 // pred_check_branch
      %5730 = sbr.rel (0) target = $region53
    $region52: #{text_encoder_forward.1} parent=1 // pred_region
      %5731 = dma.done [#allocation3], 32
    $region53: #{text_encoder_forward.1} parent=1 // pred_fallthru
      _
    %5732 = vsyncpa [#allocation3], 1

</llo_original>
